<compile_context>
chip_gen: v7x
topology: tpu7x:2x2x1
jax: 0.10.0
libtpu: 0.0.40
codegen_flags: <defaults>
</compile_context>

<pallas_src>
import functools
import math

import jax
import jax.numpy as jnp
from jax.experimental import pallas as pl
from jax.experimental.pallas import tpu as pltpu


# ---------------------------------------------------------------------------
# 3x3 conv (stride 1, pad 1) + bias + ReLU as 9 shift-and-matmul taps
# ---------------------------------------------------------------------------
def _conv3x3_taps(band_ref, w_ref, b_ref, n_rows, w_out, cin):
    """band_ref: (n_rows+2, w_out+2, cin) bf16, zero-padded on all four sides.
    w_ref: (9, cin, cout) bf16 tap-major (tap = ky*3 + kx);  b_ref: (1, cout) f32.
    Returns (n_rows * w_out, cout) f32 after fused bias + ReLU."""
    acc = None
    for ky in range(3):
        for kx in range(3):
            slab = band_ref[ky:ky + n_rows, kx:kx + w_out, :]
            part = jnp.dot(slab.reshape(n_rows * w_out, cin),
                           w_ref[ky * 3 + kx],
                           preferred_element_type=jnp.float32)
            acc = part if acc is None else acc + part
    return jnp.maximum(acc + b_ref[...], 0.0)


# ---------------------------------------------------------------------------
# Fused per-feature kernel: conv1 -> ReLU -> conv2 -> ReLU -> separate
# ---------------------------------------------------------------------------
def _separator_kernel(x_ref, m_ref, w1_ref, b1_ref, w2_ref, b2_ref, *refs,
                      th, n_row_tiles, emit_sf):
    # x_ref : (1, H, W, C) f32  full feature plane of one batch element
    # m_ref : (1, th, W, C) f32 mask (w[target]) rows of this tile
    # w*_ref: (9, C, C) bf16 tap-major weights;  b*_ref: (1, C) f32
    # outputs (1, th, W, C) f32: contents, styles[, S_F]
    # scratch: xband (th+4, W+2, C) bf16, hid band (th+2, W+2, C) bf16
    if emit_sf:
        cont_ref, sty_ref, sf_ref, xband_ref, hid_ref = refs
    else:
        cont_ref, sty_ref, xband_ref, hid_ref = refs
        sf_ref = None

    _, h, w, c = x_ref.shape
    r = pl.program_id(1)
    r0 = pl.multiple_of(r * th, th)

    # ---- input band: xband[m, 1+j, :] = x[r0-2+m, j, :]; zeros off-image -------
    xband_ref[...] = jnp.zeros_like(xband_ref)

    def copy_rows(src_start, dst_start, nrows):
        xband_ref[dst_start:dst_start + nrows, 1:w + 1, :] = (
            x_ref[0, pl.ds(src_start, nrows), :, :].astype(xband_ref.dtype))

    if n_row_tiles == 1:
        copy_rows(0, 2, h)
    else:
        @pl.when(r == 0)
        def _():
            copy_rows(0, 2, th + 2)

        @pl.when(r == n_row_tiles - 1)
        def _():
            copy_rows(h - th - 2, 0, th + 2)

        if n_row_tiles >= 3:
            @pl.when(jnp.logical_and(r > 0, r < n_row_tiles - 1))
            def _():
                copy_rows(r0 - 2, 0, th + 4)

    # ---- conv1 (+ReLU): hid rows [r0-1, r0+th+1) into the padded hid band ------
    hid = _conv3x3_taps(xband_ref, w1_ref, b1_ref, th + 2, w, c)
    hid_ref[...] = jnp.zeros_like(hid_ref)
    hid_ref[:, 1:w + 1, :] = hid.reshape(th + 2, w, c).astype(hid_ref.dtype)

    # hid rows -1 and H are conv2's zero padding (not ReLU(b1)): zero them.
    zero_row = jnp.zeros((1, w + 2, c), hid_ref.dtype)
    if n_row_tiles == 1:
        hid_ref[0:1, :, :] = zero_row
        hid_ref[th + 1:th + 2, :, :] = zero_row
    else:
        @pl.when(r == 0)
        def _():
            hid_ref[0:1, :, :] = zero_row

        @pl.when(r == n_row_tiles - 1)
        def _():
            hid_ref[th + 1:th + 2, :, :] = zero_row

    # ---- conv2 (+ReLU) and fused separate epilogue ------------------------------
    sf = _conv3x3_taps(hid_ref, w2_ref, b2_ref, th, w, c)        # (th*W, C) f32
    mask = m_ref[0].reshape(th * w, c)
    feat = x_ref[0, pl.ds(r0, th), :, :].reshape(th * w, c)      # f32 rows of input
    cont = mask * sf
    cont_ref[...] = cont.reshape(1, th, w, c)
    sty_ref[...] = (feat - cont).reshape(1, th, w, c)
    if emit_sf:
        sf_ref[...] = sf.reshape(1, th, w, c)


def _pick_row_tile(h, w, c):
    """Largest row tile (divisor of H, >=8 unless == H) keeping matmul M rows
    <= ~1024 and per-tile VMEM blocks within a fixed byte budget."""
    cands = sorted({d for d in range(8, h + 1) if h % d == 0} | {h})

    def tile_bytes(th):
        band = ((th + 4) + (th + 2)) * (w + 2) * c * 2            # bf16 scratch bands
        blocks = 2 * 4 * th * w * c * 4                           # mask + 3 outs, 2x buffered
        return band + blocks

    good = [d for d in cands if d * w <= 1024 and tile_bytes(d) <= (8 << 20)]
    if good:
        return max(good)
    ok = [d for d in cands if tile_bytes(d) <= (8 << 20)]
    return min(ok) if ok else min(cands)


def _vmem_limit_bytes(h, w, c, th):
    est = (2 * h * w * c * 4                          # x plane (double buffered)
           + 2 * 4 * th * w * c * 4                   # mask + 3 output row tiles
           + 2 * (2 * 9 * c * c * 2 + 2 * c * 4)      # bf16 weights + f32 biases
           + ((th + 4) + (th + 2)) * (w + 2) * c * 2) # band scratch
    return int(min(100 << 20, max(32 << 20, 2 * est)))


@functools.partial(jax.jit, static_argnames=("emit_sf",))
def separator_fused(x, mask, w1, b1, w2, b2, *, emit_sf=False):
    """Fused pad + conv1 + ReLU + conv2 + ReLU + separate for one feature key.
    x: (N, H, W, C) f32;  mask: (1, H, W, C) f32;  w*: (9, C, C) bf16; b*: (1, C)."""
    n, h, w, c = x.shape
    th = _pick_row_tile(h, w, c)
    r_tiles = h // th
    n_out = 3 if emit_sf else 2
    blk = pl.BlockSpec((1, th, w, c), lambda i, r: (i, r, 0, 0))
    kernel = functools.partial(_separator_kernel, th=th,
                               n_row_tiles=r_tiles, emit_sf=emit_sf)
    return pl.pallas_call(
        kernel,
        out_shape=tuple(jax.ShapeDtypeStruct((n, h, w, c), jnp.float32)
                        for _ in range(n_out)),
        grid_spec=pltpu.PrefetchScalarGridSpec(
            num_scalar_prefetch=0,
            grid=(n, r_tiles),
            in_specs=[
                # TODO(synk): at very large H,W switch this full-plane block to
                # memory_space=pl.ANY + manual halo-band DMA (v7x 64 MiB VMEM).
                pl.BlockSpec((1, h, w, c), lambda i, r: (i, 0, 0, 0)),
                pl.BlockSpec((1, th, w, c), lambda i, r: (0, r, 0, 0)),
                pl.BlockSpec((9, c, c), lambda i, r: (0, 0, 0)),
                pl.BlockSpec((1, c), lambda i, r: (0, 0)),
                pl.BlockSpec((9, c, c), lambda i, r: (0, 0, 0)),
                pl.BlockSpec((1, c), lambda i, r: (0, 0)),
            ],
            out_specs=tuple(blk for _ in range(n_out)),
            scratch_shapes=[
                pltpu.VMEM((th + 4, w + 2, c), jnp.bfloat16),
                pltpu.VMEM((th + 2, w + 2, c), jnp.bfloat16),
            ],
        ),
        compiler_params=pltpu.CompilerParams(
            dimension_semantics=("parallel", "parallel"),
            vmem_limit_bytes=_vmem_limit_bytes(h, w, c, th)),
    )(x, mask, w1, b1, w2, b2)


# ---------------------------------------------------------------------------
# converts path: contents[s2t] = w[target] * S_F[source]   (row-tiled)
# ---------------------------------------------------------------------------
def _masked_mul_kernel(s_ref, m_ref, o_ref):
    o_ref[...] = m_ref[...] * s_ref[...]


@jax.jit
def masked_mul(s, mask):
    n, h, w, c = s.shape
    cands = [d for d in range(1, h + 1) if h % d == 0 and d * w * c * 4 <= (2 << 20)]
    th = max(cands) if cands else 1
    spec_s = pl.BlockSpec((1, th, w, c), lambda i, r: (i, r, 0, 0))
    spec_m = pl.BlockSpec((1, th, w, c), lambda i, r: (0, r, 0, 0))
    return pl.pallas_call(
        _masked_mul_kernel,
        out_shape=jax.ShapeDtypeStruct((n, h, w, c), jnp.float32),
        grid_spec=pltpu.PrefetchScalarGridSpec(
            num_scalar_prefetch=0,
            grid=(n, h // th),
            in_specs=[spec_s, spec_m],
            out_specs=spec_s,
        ),
        compiler_params=pltpu.CompilerParams(
            dimension_semantics=("parallel", "parallel")),
    )(s, mask)


# ---------------------------------------------------------------------------
# spectral_norm (setup-time, plain JAX)
# ---------------------------------------------------------------------------
def _spectral_normalize(w_hwio, key, n_iter=8, eps=1e-12):
    # TODO(synk): PyTorch spectral_norm updates its persistent `u` by one power
    # iteration per forward; here it is applied once at setup (inference-style).
    cout = w_hwio.shape[-1]
    wm = jnp.transpose(w_hwio, (3, 2, 0, 1)).reshape(cout, -1)   # (Cout, Cin*3*3)
    u = jax.random.normal(key, (cout,), jnp.float32)
    u = u / (jnp.linalg.norm(u) + eps)
    v = wm.T @ u
    for _ in range(n_iter):
        v = wm.T @ u
        v = v / (jnp.linalg.norm(v) + eps)
        u = wm @ v
        u = u / (jnp.linalg.norm(u) + eps)
    sigma = u @ (wm @ v)
    return w_hwio / sigma


# ---------------------------------------------------------------------------
# Separator module port
# ---------------------------------------------------------------------------
class SeparatorPallas:
    def __init__(self, imsize, dsets, ch=64, key=None):
        if key is None:
            key = jax.random.PRNGKey(0)
        h, w = imsize
        self.ch = ch
        kw1, kb1, ku1, kw2, kb2, ku2 = jax.random.split(key, 6)
        bound = 1.0 / math.sqrt(9.0 * ch)

        def make_conv(kw, kb, ku):
            # TODO(synk): trained parameter values cannot be loaded in-script;
            # deterministic PyTorch-default-style init is used instead.
            wt = jax.random.uniform(kw, (3, 3, ch, ch), jnp.float32, -bound, bound)
            bs = jax.random.uniform(kb, (ch,), jnp.float32, -bound, bound)
            return _spectral_normalize(wt, ku), bs

        self.w1_hwio, b1 = make_conv(kw1, kb1, ku1)
        self.w2_hwio, b2 = make_conv(kw2, kb2, ku2)
        # tap-major bf16 weights for the MXU (f32 accumulation in-kernel)
        self.w1 = self.w1_hwio.reshape(9, ch, ch).astype(jnp.bfloat16)
        self.w2 = self.w2_hwio.reshape(9, ch, ch).astype(jnp.bfloat16)
        self.b1 = b1.reshape(1, ch)
        self.b2 = b2.reshape(1, ch)
        # nn.Parameter(torch.ones(1, ch, h, w)) -- stored in NHWC layout here.
        self.masks = {d: jnp.ones((1, h, w, ch), jnp.float32) for d in dsets}

    def __call__(self, features, converts=None):
        # TODO(synk): the NCHW<->NHWC transposes below remain only because the
        # PyTorch module contract is NCHW; keep NHWC end-to-end in the surrounding
        # model to drop these extra HBM passes.
        sf_needed = {cv.split('2')[0] for cv in converts} if converts else set()
        contents, styles, s_f = {}, {}, {}
        for key, feat in features.items():
            target = key.split('2')[1] if '2' in key else key
            f = jnp.transpose(feat.astype(jnp.float32), (0, 2, 3, 1))   # NCHW -> NHWC
            outs = separator_fused(f, self.masks[target], self.w1, self.b1,
                                   self.w2, self.b2, emit_sf=key in sf_needed)
            if key in sf_needed:
                cont, sty, s_f[key] = outs
            else:
                cont, sty = outs
            contents[key] = jnp.transpose(cont, (0, 3, 1, 2))           # NHWC -> NCHW
            styles[key] = jnp.transpose(sty, (0, 3, 1, 2))
        if converts is not None:
            for cv in converts:
                source, target = cv.split('2')
                cont = masked_mul(s_f[source], self.masks[target])
                contents[cv] = jnp.transpose(cont, (0, 3, 1, 2))
        return contents, styles


# ---------------------------------------------------------------------------
# pure-JAX f32 reference for validation
# ---------------------------------------------------------------------------
def _reference_forward(sep, features, converts=None):
    def conv(x, w_hwio, b):
        y = jax.lax.conv_general_dilated(
            x, w_hwio, window_strides=(1, 1), padding="SAME",
            dimension_numbers=("NHWC", "HWIO", "NHWC"),
            precision=jax.lax.Precision.HIGHEST)
        return jnp.maximum(y + b, 0.0)

    contents, styles, s_f = {}, {}, {}
    for key, feat in features.items():
        target = key.split('2')[1] if '2' in key else key
        f = jnp.transpose(feat.astype(jnp.float32), (0, 2, 3, 1))
        sf = conv(conv(f, sep.w1_hwio, sep.b1), sep.w2_hwio, sep.b2)
        s_f[key] = sf
        cont = sep.masks[target] * sf
        contents[key] = jnp.transpose(cont, (0, 3, 1, 2))
        styles[key] = jnp.transpose(f - cont, (0, 3, 1, 2))
    if converts is not None:
        for cv in converts:
            source, target = cv.split('2')
            contents[cv] = jnp.transpose(sep.masks[target] * s_f[source], (0, 3, 1, 2))
    return contents, styles


if __name__ == "__main__":
    key = jax.random.PRNGKey(0)
    kmod, ka, kb, kab = jax.random.split(key, 4)
    batch, ch, hh, ww = 2, 64, 16, 16
    sep = SeparatorPallas((hh, ww), ["A", "B"], ch=ch, key=kmod)
    features = {
        "A": jax.random.normal(ka, (batch, ch, hh, ww), jnp.float32),
        "B": jax.random.normal(kb, (batch, ch, hh, ww), jnp.float32),
        "A2B": jax.random.normal(kab, (batch, ch, hh, ww), jnp.float32),
    }
    contents, styles = sep(features, converts=["B2A"])
    contents, styles = jax.block_until_ready((contents, styles))

    # Validate against the f32 reference (bf16 MXU operands -> loose tolerance).
    ref_c, ref_s = _reference_forward(sep, features, converts=["B2A"])
    tol = 7.5e-2
    for k in ("A", "B", "A2B", "B2A"):
        assert contents[k].shape == (batch, ch, hh, ww), contents[k].shape
        assert contents[k].dtype == jnp.float32
        err = float(jnp.max(jnp.abs(contents[k] - ref_c[k])))
        assert err < tol, f"contents[{k}] max err {err}"
    for k in ("A", "B", "A2B"):
        assert styles[k].shape == (batch, ch, hh, ww), styles[k].shape
        err = float(jnp.max(jnp.abs(styles[k] - ref_s[k])))
        assert err < tol, f"styles[{k}] max err {err}"
    print("KERNEL_OK")
</pallas_src>

<mosaic_0001>
module attributes {stable_mosaic.version = 11 : i64} {
  func.func @_separator_kernel(%arg0: i32, %arg1: i32, %arg2: memref<1x16x16x64xf32, #tpu.memory_space<vmem>>, %arg3: memref<1x16x16x64xf32, #tpu.memory_space<vmem>>, %arg4: memref<9x64x64xbf16, #tpu.memory_space<vmem>>, %arg5: memref<1x64xf32, #tpu.memory_space<vmem>>, %arg6: memref<9x64x64xbf16, #tpu.memory_space<vmem>>, %arg7: memref<1x64xf32, #tpu.memory_space<vmem>>, %arg8: memref<1x16x16x64xf32, #tpu.memory_space<vmem>>, %arg9: memref<1x16x16x64xf32, #tpu.memory_space<vmem>>, %arg10: memref<20x18x64xbf16, #tpu.memory_space<vmem>>, %arg11: memref<18x18x64xbf16, #tpu.memory_space<vmem>>) attributes {dimension_semantics = [#tpu.dimension_semantics<parallel>, #tpu.dimension_semantics<parallel>], iteration_bounds = array<i64: 2, 1>, scalar_prefetch = 0 : i64, scratch_operands = 2 : i64, tpu.core_type = #tpu.core_type<tc>, window_params = [{transform_indices = @transform_0, window_bounds = array<i64: 1, 16, 16, 64>}, {transform_indices = @transform_1, window_bounds = array<i64: 1, 16, 16, 64>}, {pipeline_mode = #tpu.pipeline_mode<synchronous>, transform_indices = @transform_2, window_bounds = array<i64: 9, 64, 64>}, {pipeline_mode = #tpu.pipeline_mode<synchronous>, transform_indices = @transform_3, window_bounds = array<i64: 1, 64>}, {pipeline_mode = #tpu.pipeline_mode<synchronous>, transform_indices = @transform_4, window_bounds = array<i64: 9, 64, 64>}, {pipeline_mode = #tpu.pipeline_mode<synchronous>, transform_indices = @transform_5, window_bounds = array<i64: 1, 64>}, {transform_indices = @transform_6, window_bounds = array<i64: 1, 16, 16, 64>}, {transform_indices = @transform_7, window_bounds = array<i64: 1, 16, 16, 64>}]} {
    %c16_i32 = arith.constant 16 : i32
    %0 = arith.muli %arg1, %c16_i32 : i32
    %1 = tpu.assume_multiple %0, 16 : i32
    %cst = arith.constant 0.000000e+00 : bf16
    %2 = vector.broadcast %cst : bf16 to vector<20x18x64xbf16>
    %c0 = arith.constant 0 : index
    %c0_0 = arith.constant 0 : index
    %c0_1 = arith.constant 0 : index
    %3 = vector.load %arg10[%c0, %c0_0, %c0_1] : memref<20x18x64xbf16, #tpu.memory_space<vmem>>, vector<20x18x64xbf16>
    tpu.vector_store %arg10[%c0, %c0_0, %c0_1], %2 {strides = array<i32>} : memref<20x18x64xbf16, #tpu.memory_space<vmem>>, vector<20x18x64xbf16>,
    %c0_2 = arith.constant 0 : index
    %c0_3 = arith.constant 0 : index
    %c0_4 = arith.constant 0 : index
    %c0_5 = arith.constant 0 : index
    %4 = vector.load %arg2[%c0_2, %c0_3, %c0_4, %c0_5] : memref<1x16x16x64xf32, #tpu.memory_space<vmem>>, vector<1x16x16x64xf32>
    %5 = vector.shape_cast %4 : vector<1x16x16x64xf32> to vector<16x16x64xf32>
    %6 = arith.truncf %5 : vector<16x16x64xf32> to vector<16x16x64xbf16>
    %c2 = arith.constant 2 : index
    %c1 = arith.constant 1 : index
    %c0_6 = arith.constant 0 : index
    %7 = vector.load %arg10[%c2, %c1, %c0_6] : memref<20x18x64xbf16, #tpu.memory_space<vmem>>, vector<16x16x64xbf16>
    tpu.vector_store %arg10[%c2, %c1, %c0_6], %6 {strides = array<i32>} : memref<20x18x64xbf16, #tpu.memory_space<vmem>>, vector<16x16x64xbf16>,
    %c0_7 = arith.constant 0 : index
    %c0_8 = arith.constant 0 : index
    %c0_9 = arith.constant 0 : index
    %8 = vector.load %arg10[%c0_7, %c0_8, %c0_9] : memref<20x18x64xbf16, #tpu.memory_space<vmem>>, vector<18x16x64xbf16>
    %9 = vector.shape_cast %8 : vector<18x16x64xbf16> to vector<288x64xbf16>
    %c0_10 = arith.constant 0 : index
    %c0_11 = arith.constant 0 : index
    %c0_12 = arith.constant 0 : index
    %10 = vector.load %arg4[%c0_10, %c0_11, %c0_12] : memref<9x64x64xbf16, #tpu.memory_space<vmem>>, vector<1x64x64xbf16>
    %11 = vector.shape_cast %10 : vector<1x64x64xbf16> to vector<64x64xbf16>
    %cst_13 = arith.constant dense<0.000000e+00> : vector<288x64xf32>
    %12 = tpu.matmul %9, %11, %cst_13 {dimension_numbers = #tpu.dot_dimension_numbers<[1], [0], [0], [1], [0, 0, 1, 1], [], []>} : vector<288x64xbf16>, vector<64x64xbf16>, vector<288x64xf32> -> vector<288x64xf32>
    %c0_14 = arith.constant 0 : index
    %c1_15 = arith.constant 1 : index
    %c0_16 = arith.constant 0 : index
    %13 = vector.load %arg10[%c0_14, %c1_15, %c0_16] : memref<20x18x64xbf16, #tpu.memory_space<vmem>>, vector<18x16x64xbf16>
    %14 = vector.shape_cast %13 : vector<18x16x64xbf16> to vector<288x64xbf16>
    %c1_17 = arith.constant 1 : index
    %c0_18 = arith.constant 0 : index
    %c0_19 = arith.constant 0 : index
    %15 = vector.load %arg4[%c1_17, %c0_18, %c0_19] : memref<9x64x64xbf16, #tpu.memory_space<vmem>>, vector<1x64x64xbf16>
    %16 = vector.shape_cast %15 : vector<1x64x64xbf16> to vector<64x64xbf16>
    %cst_20 = arith.constant dense<0.000000e+00> : vector<288x64xf32>
    %17 = tpu.matmul %14, %16, %cst_20 {dimension_numbers = #tpu.dot_dimension_numbers<[1], [0], [0], [1], [0, 0, 1, 1], [], []>} : vector<288x64xbf16>, vector<64x64xbf16>, vector<288x64xf32> -> vector<288x64xf32>
    %18 = arith.addf %12, %17 : vector<288x64xf32>
    %c0_21 = arith.constant 0 : index
    %c2_22 = arith.constant 2 : index
    %c0_23 = arith.constant 0 : index
    %19 = vector.load %arg10[%c0_21, %c2_22, %c0_23] : memref<20x18x64xbf16, #tpu.memory_space<vmem>>, vector<18x16x64xbf16>
    %20 = vector.shape_cast %19 : vector<18x16x64xbf16> to vector<288x64xbf16>
    %c2_24 = arith.constant 2 : index
    %c0_25 = arith.constant 0 : index
    %c0_26 = arith.constant 0 : index
    %21 = vector.load %arg4[%c2_24, %c0_25, %c0_26] : memref<9x64x64xbf16, #tpu.memory_space<vmem>>, vector<1x64x64xbf16>
    %22 = vector.shape_cast %21 : vector<1x64x64xbf16> to vector<64x64xbf16>
    %cst_27 = arith.constant dense<0.000000e+00> : vector<288x64xf32>
    %23 = tpu.matmul %20, %22, %cst_27 {dimension_numbers = #tpu.dot_dimension_numbers<[1], [0], [0], [1], [0, 0, 1, 1], [], []>} : vector<288x64xbf16>, vector<64x64xbf16>, vector<288x64xf32> -> vector<288x64xf32>
    %24 = arith.addf %18, %23 : vector<288x64xf32>
    %c1_28 = arith.constant 1 : index
    %c0_29 = arith.constant 0 : index
    %c0_30 = arith.constant 0 : index
    %25 = vector.load %arg10[%c1_28, %c0_29, %c0_30] : memref<20x18x64xbf16, #tpu.memory_space<vmem>>, vector<18x16x64xbf16>
    %26 = vector.shape_cast %25 : vector<18x16x64xbf16> to vector<288x64xbf16>
    %c3 = arith.constant 3 : index
    %c0_31 = arith.constant 0 : index
    %c0_32 = arith.constant 0 : index
    %27 = vector.load %arg4[%c3, %c0_31, %c0_32] : memref<9x64x64xbf16, #tpu.memory_space<vmem>>, vector<1x64x64xbf16>
    %28 = vector.shape_cast %27 : vector<1x64x64xbf16> to vector<64x64xbf16>
    %cst_33 = arith.constant dense<0.000000e+00> : vector<288x64xf32>
    %29 = tpu.matmul %26, %28, %cst_33 {dimension_numbers = #tpu.dot_dimension_numbers<[1], [0], [0], [1], [0, 0, 1, 1], [], []>} : vector<288x64xbf16>, vector<64x64xbf16>, vector<288x64xf32> -> vector<288x64xf32>
    %30 = arith.addf %24, %29 : vector<288x64xf32>
    %c1_34 = arith.constant 1 : index
    %c1_35 = arith.constant 1 : index
    %c0_36 = arith.constant 0 : index
    %31 = vector.load %arg10[%c1_34, %c1_35, %c0_36] : memref<20x18x64xbf16, #tpu.memory_space<vmem>>, vector<18x16x64xbf16>
    %32 = vector.shape_cast %31 : vector<18x16x64xbf16> to vector<288x64xbf16>
    %c4 = arith.constant 4 : index
    %c0_37 = arith.constant 0 : index
    %c0_38 = arith.constant 0 : index
    %33 = vector.load %arg4[%c4, %c0_37, %c0_38] : memref<9x64x64xbf16, #tpu.memory_space<vmem>>, vector<1x64x64xbf16>
    %34 = vector.shape_cast %33 : vector<1x64x64xbf16> to vector<64x64xbf16>
    %cst_39 = arith.constant dense<0.000000e+00> : vector<288x64xf32>
    %35 = tpu.matmul %32, %34, %cst_39 {dimension_numbers = #tpu.dot_dimension_numbers<[1], [0], [0], [1], [0, 0, 1, 1], [], []>} : vector<288x64xbf16>, vector<64x64xbf16>, vector<288x64xf32> -> vector<288x64xf32>
    %36 = arith.addf %30, %35 : vector<288x64xf32>
    %c1_40 = arith.constant 1 : index
    %c2_41 = arith.constant 2 : index
    %c0_42 = arith.constant 0 : index
    %37 = vector.load %arg10[%c1_40, %c2_41, %c0_42] : memref<20x18x64xbf16, #tpu.memory_space<vmem>>, vector<18x16x64xbf16>
    %38 = vector.shape_cast %37 : vector<18x16x64xbf16> to vector<288x64xbf16>
    %c5 = arith.constant 5 : index
    %c0_43 = arith.constant 0 : index
    %c0_44 = arith.constant 0 : index
    %39 = vector.load %arg4[%c5, %c0_43, %c0_44] : memref<9x64x64xbf16, #tpu.memory_space<vmem>>, vector<1x64x64xbf16>
    %40 = vector.shape_cast %39 : vector<1x64x64xbf16> to vector<64x64xbf16>
    %cst_45 = arith.constant dense<0.000000e+00> : vector<288x64xf32>
    %41 = tpu.matmul %38, %40, %cst_45 {dimension_numbers = #tpu.dot_dimension_numbers<[1], [0], [0], [1], [0, 0, 1, 1], [], []>} : vector<288x64xbf16>, vector<64x64xbf16>, vector<288x64xf32> -> vector<288x64xf32>
    %42 = arith.addf %36, %41 : vector<288x64xf32>
    %c2_46 = arith.constant 2 : index
    %c0_47 = arith.constant 0 : index
    %c0_48 = arith.constant 0 : index
    %43 = vector.load %arg10[%c2_46, %c0_47, %c0_48] : memref<20x18x64xbf16, #tpu.memory_space<vmem>>, vector<18x16x64xbf16>
    %44 = vector.shape_cast %43 : vector<18x16x64xbf16> to vector<288x64xbf16>
    %c6 = arith.constant 6 : index
    %c0_49 = arith.constant 0 : index
    %c0_50 = arith.constant 0 : index
    %45 = vector.load %arg4[%c6, %c0_49, %c0_50] : memref<9x64x64xbf16, #tpu.memory_space<vmem>>, vector<1x64x64xbf16>
    %46 = vector.shape_cast %45 : vector<1x64x64xbf16> to vector<64x64xbf16>
    %cst_51 = arith.constant dense<0.000000e+00> : vector<288x64xf32>
    %47 = tpu.matmul %44, %46, %cst_51 {dimension_numbers = #tpu.dot_dimension_numbers<[1], [0], [0], [1], [0, 0, 1, 1], [], []>} : vector<288x64xbf16>, vector<64x64xbf16>, vector<288x64xf32> -> vector<288x64xf32>
    %48 = arith.addf %42, %47 : vector<288x64xf32>
    %c2_52 = arith.constant 2 : index
    %c1_53 = arith.constant 1 : index
    %c0_54 = arith.constant 0 : index
    %49 = vector.load %arg10[%c2_52, %c1_53, %c0_54] : memref<20x18x64xbf16, #tpu.memory_space<vmem>>, vector<18x16x64xbf16>
    %50 = vector.shape_cast %49 : vector<18x16x64xbf16> to vector<288x64xbf16>
    %c7 = arith.constant 7 : index
    %c0_55 = arith.constant 0 : index
    %c0_56 = arith.constant 0 : index
    %51 = vector.load %arg4[%c7, %c0_55, %c0_56] : memref<9x64x64xbf16, #tpu.memory_space<vmem>>, vector<1x64x64xbf16>
    %52 = vector.shape_cast %51 : vector<1x64x64xbf16> to vector<64x64xbf16>
    %cst_57 = arith.constant dense<0.000000e+00> : vector<288x64xf32>
    %53 = tpu.matmul %50, %52, %cst_57 {dimension_numbers = #tpu.dot_dimension_numbers<[1], [0], [0], [1], [0, 0, 1, 1], [], []>} : vector<288x64xbf16>, vector<64x64xbf16>, vector<288x64xf32> -> vector<288x64xf32>
    %54 = arith.addf %48, %53 : vector<288x64xf32>
    %c2_58 = arith.constant 2 : index
    %c2_59 = arith.constant 2 : index
    %c0_60 = arith.constant 0 : index
    %55 = vector.load %arg10[%c2_58, %c2_59, %c0_60] : memref<20x18x64xbf16, #tpu.memory_space<vmem>>, vector<18x16x64xbf16>
    %56 = vector.shape_cast %55 : vector<18x16x64xbf16> to vector<288x64xbf16>
    %c8 = arith.constant 8 : index
    %c0_61 = arith.constant 0 : index
    %c0_62 = arith.constant 0 : index
    %57 = vector.load %arg4[%c8, %c0_61, %c0_62] : memref<9x64x64xbf16, #tpu.memory_space<vmem>>, vector<1x64x64xbf16>
    %58 = vector.shape_cast %57 : vector<1x64x64xbf16> to vector<64x64xbf16>
    %cst_63 = arith.constant dense<0.000000e+00> : vector<288x64xf32>
    %59 = tpu.matmul %56, %58, %cst_63 {dimension_numbers = #tpu.dot_dimension_numbers<[1], [0], [0], [1], [0, 0, 1, 1], [], []>} : vector<288x64xbf16>, vector<64x64xbf16>, vector<288x64xf32> -> vector<288x64xf32>
    %60 = arith.addf %54, %59 : vector<288x64xf32>
    %c0_64 = arith.constant 0 : index
    %c0_65 = arith.constant 0 : index
    %61 = vector.load %arg5[%c0_64, %c0_65] : memref<1x64xf32, #tpu.memory_space<vmem>>, vector<1x64xf32>
    %62 = vector.broadcast %61 : vector<1x64xf32> to vector<288x64xf32>
    %63 = arith.addf %60, %62 : vector<288x64xf32>
    %cst_66 = arith.constant 0.000000e+00 : f32
    %64 = vector.broadcast %cst_66 : f32 to vector<288x64xf32>
    %65 = arith.maximumf %63, %64 : vector<288x64xf32>
    %cst_67 = arith.constant 0.000000e+00 : bf16
    %66 = vector.broadcast %cst_67 : bf16 to vector<18x18x64xbf16>
    %c0_68 = arith.constant 0 : index
    %c0_69 = arith.constant 0 : index
    %c0_70 = arith.constant 0 : index
    %67 = vector.load %arg11[%c0_68, %c0_69, %c0_70] : memref<18x18x64xbf16, #tpu.memory_space<vmem>>, vector<18x18x64xbf16>
    tpu.vector_store %arg11[%c0_68, %c0_69, %c0_70], %66 {strides = array<i32>} : memref<18x18x64xbf16, #tpu.memory_space<vmem>>, vector<18x18x64xbf16>,
    %68 = vector.shape_cast %65 : vector<288x64xf32> to vector<18x16x64xf32>
    %69 = arith.truncf %68 : vector<18x16x64xf32> to vector<18x16x64xbf16>
    %c0_71 = arith.constant 0 : index
    %c1_72 = arith.constant 1 : index
    %c0_73 = arith.constant 0 : index
    %70 = vector.load %arg11[%c0_71, %c1_72, %c0_73] : memref<18x18x64xbf16, #tpu.memory_space<vmem>>, vector<18x16x64xbf16>
    tpu.vector_store %arg11[%c0_71, %c1_72, %c0_73], %69 {strides = array<i32>} : memref<18x18x64xbf16, #tpu.memory_space<vmem>>, vector<18x16x64xbf16>,
    %cst_74 = arith.constant 0.000000e+00 : bf16
    %71 = vector.broadcast %cst_74 : bf16 to vector<1x18x64xbf16>
    %c0_75 = arith.constant 0 : index
    %c0_76 = arith.constant 0 : index
    %c0_77 = arith.constant 0 : index
    %72 = vector.load %arg11[%c0_75, %c0_76, %c0_77] : memref<18x18x64xbf16, #tpu.memory_space<vmem>>, vector<1x18x64xbf16>
    tpu.vector_store %arg11[%c0_75, %c0_76, %c0_77], %71 {strides = array<i32>} : memref<18x18x64xbf16, #tpu.memory_space<vmem>>, vector<1x18x64xbf16>,
    %c17 = arith.constant 17 : index
    %c0_78 = arith.constant 0 : index
    %c0_79 = arith.constant 0 : index
    %73 = vector.load %arg11[%c17, %c0_78, %c0_79] : memref<18x18x64xbf16, #tpu.memory_space<vmem>>, vector<1x18x64xbf16>
    tpu.vector_store %arg11[%c17, %c0_78, %c0_79], %71 {strides = array<i32>} : memref<18x18x64xbf16, #tpu.memory_space<vmem>>, vector<1x18x64xbf16>,
    %c0_80 = arith.constant 0 : index
    %c0_81 = arith.constant 0 : index
    %c0_82 = arith.constant 0 : index
    %74 = vector.load %arg11[%c0_80, %c0_81, %c0_82] : memref<18x18x64xbf16, #tpu.memory_space<vmem>>, vector<16x16x64xbf16>
    %75 = vector.shape_cast %74 : vector<16x16x64xbf16> to vector<256x64xbf16>
    %c0_83 = arith.constant 0 : index
    %c0_84 = arith.constant 0 : index
    %c0_85 = arith.constant 0 : index
    %76 = vector.load %arg6[%c0_83, %c0_84, %c0_85] : memref<9x64x64xbf16, #tpu.memory_space<vmem>>, vector<1x64x64xbf16>
    %77 = vector.shape_cast %76 : vector<1x64x64xbf16> to vector<64x64xbf16>
    %cst_86 = arith.constant dense<0.000000e+00> : vector<256x64xf32>
    %78 = tpu.matmul %75, %77, %cst_86 {dimension_numbers = #tpu.dot_dimension_numbers<[1], [0], [0], [1], [0, 0, 1, 1], [], []>} : vector<256x64xbf16>, vector<64x64xbf16>, vector<256x64xf32> -> vector<256x64xf32>
    %c0_87 = arith.constant 0 : index
    %c1_88 = arith.constant 1 : index
    %c0_89 = arith.constant 0 : index
    %79 = vector.load %arg11[%c0_87, %c1_88, %c0_89] : memref<18x18x64xbf16, #tpu.memory_space<vmem>>, vector<16x16x64xbf16>
    %80 = vector.shape_cast %79 : vector<16x16x64xbf16> to vector<256x64xbf16>
    %c1_90 = arith.constant 1 : index
    %c0_91 = arith.constant 0 : index
    %c0_92 = arith.constant 0 : index
    %81 = vector.load %arg6[%c1_90, %c0_91, %c0_92] : memref<9x64x64xbf16, #tpu.memory_space<vmem>>, vector<1x64x64xbf16>
    %82 = vector.shape_cast %81 : vector<1x64x64xbf16> to vector<64x64xbf16>
    %cst_93 = arith.constant dense<0.000000e+00> : vector<256x64xf32>
    %83 = tpu.matmul %80, %82, %cst_93 {dimension_numbers = #tpu.dot_dimension_numbers<[1], [0], [0], [1], [0, 0, 1, 1], [], []>} : vector<256x64xbf16>, vector<64x64xbf16>, vector<256x64xf32> -> vector<256x64xf32>
    %84 = arith.addf %78, %83 : vector<256x64xf32>
    %c0_94 = arith.constant 0 : index
    %c2_95 = arith.constant 2 : index
    %c0_96 = arith.constant 0 : index
    %85 = vector.load %arg11[%c0_94, %c2_95, %c0_96] : memref<18x18x64xbf16, #tpu.memory_space<vmem>>, vector<16x16x64xbf16>
    %86 = vector.shape_cast %85 : vector<16x16x64xbf16> to vector<256x64xbf16>
    %c2_97 = arith.constant 2 : index
    %c0_98 = arith.constant 0 : index
    %c0_99 = arith.constant 0 : index
    %87 = vector.load %arg6[%c2_97, %c0_98, %c0_99] : memref<9x64x64xbf16, #tpu.memory_space<vmem>>, vector<1x64x64xbf16>
    %88 = vector.shape_cast %87 : vector<1x64x64xbf16> to vector<64x64xbf16>
    %cst_100 = arith.constant dense<0.000000e+00> : vector<256x64xf32>
    %89 = tpu.matmul %86, %88, %cst_100 {dimension_numbers = #tpu.dot_dimension_numbers<[1], [0], [0], [1], [0, 0, 1, 1], [], []>} : vector<256x64xbf16>, vector<64x64xbf16>, vector<256x64xf32> -> vector<256x64xf32>
    %90 = arith.addf %84, %89 : vector<256x64xf32>
    %c1_101 = arith.constant 1 : index
    %c0_102 = arith.constant 0 : index
    %c0_103 = arith.constant 0 : index
    %91 = vector.load %arg11[%c1_101, %c0_102, %c0_103] : memref<18x18x64xbf16, #tpu.memory_space<vmem>>, vector<16x16x64xbf16>
    %92 = vector.shape_cast %91 : vector<16x16x64xbf16> to vector<256x64xbf16>
    %c3_104 = arith.constant 3 : index
    %c0_105 = arith.constant 0 : index
    %c0_106 = arith.constant 0 : index
    %93 = vector.load %arg6[%c3_104, %c0_105, %c0_106] : memref<9x64x64xbf16, #tpu.memory_space<vmem>>, vector<1x64x64xbf16>
    %94 = vector.shape_cast %93 : vector<1x64x64xbf16> to vector<64x64xbf16>
    %cst_107 = arith.constant dense<0.000000e+00> : vector<256x64xf32>
    %95 = tpu.matmul %92, %94, %cst_107 {dimension_numbers = #tpu.dot_dimension_numbers<[1], [0], [0], [1], [0, 0, 1, 1], [], []>} : vector<256x64xbf16>, vector<64x64xbf16>, vector<256x64xf32> -> vector<256x64xf32>
    %96 = arith.addf %90, %95 : vector<256x64xf32>
    %c1_108 = arith.constant 1 : index
    %c1_109 = arith.constant 1 : index
    %c0_110 = arith.constant 0 : index
    %97 = vector.load %arg11[%c1_108, %c1_109, %c0_110] : memref<18x18x64xbf16, #tpu.memory_space<vmem>>, vector<16x16x64xbf16>
    %98 = vector.shape_cast %97 : vector<16x16x64xbf16> to vector<256x64xbf16>
    %c4_111 = arith.constant 4 : index
    %c0_112 = arith.constant 0 : index
    %c0_113 = arith.constant 0 : index
    %99 = vector.load %arg6[%c4_111, %c0_112, %c0_113] : memref<9x64x64xbf16, #tpu.memory_space<vmem>>, vector<1x64x64xbf16>
    %100 = vector.shape_cast %99 : vector<1x64x64xbf16> to vector<64x64xbf16>
    %cst_114 = arith.constant dense<0.000000e+00> : vector<256x64xf32>
    %101 = tpu.matmul %98, %100, %cst_114 {dimension_numbers = #tpu.dot_dimension_numbers<[1], [0], [0], [1], [0, 0, 1, 1], [], []>} : vector<256x64xbf16>, vector<64x64xbf16>, vector<256x64xf32> -> vector<256x64xf32>
    %102 = arith.addf %96, %101 : vector<256x64xf32>
    %c1_115 = arith.constant 1 : index
    %c2_116 = arith.constant 2 : index
    %c0_117 = arith.constant 0 : index
    %103 = vector.load %arg11[%c1_115, %c2_116, %c0_117] : memref<18x18x64xbf16, #tpu.memory_space<vmem>>, vector<16x16x64xbf16>
    %104 = vector.shape_cast %103 : vector<16x16x64xbf16> to vector<256x64xbf16>
    %c5_118 = arith.constant 5 : index
    %c0_119 = arith.constant 0 : index
    %c0_120 = arith.constant 0 : index
    %105 = vector.load %arg6[%c5_118, %c0_119, %c0_120] : memref<9x64x64xbf16, #tpu.memory_space<vmem>>, vector<1x64x64xbf16>
    %106 = vector.shape_cast %105 : vector<1x64x64xbf16> to vector<64x64xbf16>
    %cst_121 = arith.constant dense<0.000000e+00> : vector<256x64xf32>
    %107 = tpu.matmul %104, %106, %cst_121 {dimension_numbers = #tpu.dot_dimension_numbers<[1], [0], [0], [1], [0, 0, 1, 1], [], []>} : vector<256x64xbf16>, vector<64x64xbf16>, vector<256x64xf32> -> vector<256x64xf32>
    %108 = arith.addf %102, %107 : vector<256x64xf32>
    %c2_122 = arith.constant 2 : index
    %c0_123 = arith.constant 0 : index
    %c0_124 = arith.constant 0 : index
    %109 = vector.load %arg11[%c2_122, %c0_123, %c0_124] : memref<18x18x64xbf16, #tpu.memory_space<vmem>>, vector<16x16x64xbf16>
    %110 = vector.shape_cast %109 : vector<16x16x64xbf16> to vector<256x64xbf16>
    %c6_125 = arith.constant 6 : index
    %c0_126 = arith.constant 0 : index
    %c0_127 = arith.constant 0 : index
    %111 = vector.load %arg6[%c6_125, %c0_126, %c0_127] : memref<9x64x64xbf16, #tpu.memory_space<vmem>>, vector<1x64x64xbf16>
    %112 = vector.shape_cast %111 : vector<1x64x64xbf16> to vector<64x64xbf16>
    %cst_128 = arith.constant dense<0.000000e+00> : vector<256x64xf32>
    %113 = tpu.matmul %110, %112, %cst_128 {dimension_numbers = #tpu.dot_dimension_numbers<[1], [0], [0], [1], [0, 0, 1, 1], [], []>} : vector<256x64xbf16>, vector<64x64xbf16>, vector<256x64xf32> -> vector<256x64xf32>
    %114 = arith.addf %108, %113 : vector<256x64xf32>
    %c2_129 = arith.constant 2 : index
    %c1_130 = arith.constant 1 : index
    %c0_131 = arith.constant 0 : index
    %115 = vector.load %arg11[%c2_129, %c1_130, %c0_131] : memref<18x18x64xbf16, #tpu.memory_space<vmem>>, vector<16x16x64xbf16>
    %116 = vector.shape_cast %115 : vector<16x16x64xbf16> to vector<256x64xbf16>
    %c7_132 = arith.constant 7 : index
    %c0_133 = arith.constant 0 : index
    %c0_134 = arith.constant 0 : index
    %117 = vector.load %arg6[%c7_132, %c0_133, %c0_134] : memref<9x64x64xbf16, #tpu.memory_space<vmem>>, vector<1x64x64xbf16>
    %118 = vector.shape_cast %117 : vector<1x64x64xbf16> to vector<64x64xbf16>
    %cst_135 = arith.constant dense<0.000000e+00> : vector<256x64xf32>
    %119 = tpu.matmul %116, %118, %cst_135 {dimension_numbers = #tpu.dot_dimension_numbers<[1], [0], [0], [1], [0, 0, 1, 1], [], []>} : vector<256x64xbf16>, vector<64x64xbf16>, vector<256x64xf32> -> vector<256x64xf32>
    %120 = arith.addf %114, %119 : vector<256x64xf32>
    %c2_136 = arith.constant 2 : index
    %c2_137 = arith.constant 2 : index
    %c0_138 = arith.constant 0 : index
    %121 = vector.load %arg11[%c2_136, %c2_137, %c0_138] : memref<18x18x64xbf16, #tpu.memory_space<vmem>>, vector<16x16x64xbf16>
    %122 = vector.shape_cast %121 : vector<16x16x64xbf16> to vector<256x64xbf16>
    %c8_139 = arith.constant 8 : index
    %c0_140 = arith.constant 0 : index
    %c0_141 = arith.constant 0 : index
    %123 = vector.load %arg6[%c8_139, %c0_140, %c0_141] : memref<9x64x64xbf16, #tpu.memory_space<vmem>>, vector<1x64x64xbf16>
    %124 = vector.shape_cast %123 : vector<1x64x64xbf16> to vector<64x64xbf16>
    %cst_142 = arith.constant dense<0.000000e+00> : vector<256x64xf32>
    %125 = tpu.matmul %122, %124, %cst_142 {dimension_numbers = #tpu.dot_dimension_numbers<[1], [0], [0], [1], [0, 0, 1, 1], [], []>} : vector<256x64xbf16>, vector<64x64xbf16>, vector<256x64xf32> -> vector<256x64xf32>
    %126 = arith.addf %120, %125 : vector<256x64xf32>
    %c0_143 = arith.constant 0 : index
    %c0_144 = arith.constant 0 : index
    %127 = vector.load %arg7[%c0_143, %c0_144] : memref<1x64xf32, #tpu.memory_space<vmem>>, vector<1x64xf32>
    %128 = vector.broadcast %127 : vector<1x64xf32> to vector<256x64xf32>
    %129 = arith.addf %126, %128 : vector<256x64xf32>
    %cst_145 = arith.constant 0.000000e+00 : f32
    %130 = vector.broadcast %cst_145 : f32 to vector<256x64xf32>
    %131 = arith.maximumf %129, %130 : vector<256x64xf32>
    %c0_146 = arith.constant 0 : index
    %c0_147 = arith.constant 0 : index
    %c0_148 = arith.constant 0 : index
    %c0_149 = arith.constant 0 : index
    %132 = vector.load %arg3[%c0_146, %c0_147, %c0_148, %c0_149] : memref<1x16x16x64xf32, #tpu.memory_space<vmem>>, vector<1x16x16x64xf32>
    %133 = vector.shape_cast %132 : vector<1x16x16x64xf32> to vector<16x16x64xf32>
    %134 = vector.shape_cast %133 : vector<16x16x64xf32> to vector<256x64xf32>
    %c0_150 = arith.constant 0 : index
    %135 = arith.index_cast %1 : i32 to index
    %c0_151 = arith.constant 0 : index
    %c0_152 = arith.constant 0 : index
    %136 = vector.load %arg2[%c0_150, %135, %c0_151, %c0_152] : memref<1x16x16x64xf32, #tpu.memory_space<vmem>>, vector<1x16x16x64xf32>
    %137 = vector.shape_cast %136 : vector<1x16x16x64xf32> to vector<16x16x64xf32>
    %138 = vector.shape_cast %137 : vector<16x16x64xf32> to vector<256x64xf32>
    %139 = arith.mulf %134, %131 : vector<256x64xf32>
    %140 = vector.shape_cast %139 : vector<256x64xf32> to vector<1x16x16x64xf32>
    %c0_153 = arith.constant 0 : index
    %c0_154 = arith.constant 0 : index
    %c0_155 = arith.constant 0 : index
    %c0_156 = arith.constant 0 : index
    %141 = vector.load %arg8[%c0_153, %c0_154, %c0_155, %c0_156] : memref<1x16x16x64xf32, #tpu.memory_space<vmem>>, vector<1x16x16x64xf32>
    tpu.vector_store %arg8[%c0_153, %c0_154, %c0_155, %c0_156], %140 {strides = array<i32>} : memref<1x16x16x64xf32, #tpu.memory_space<vmem>>, vector<1x16x16x64xf32>,
    %142 = arith.subf %138, %139 : vector<256x64xf32>
    %143 = vector.shape_cast %142 : vector<256x64xf32> to vector<1x16x16x64xf32>
    %c0_157 = arith.constant 0 : index
    %c0_158 = arith.constant 0 : index
    %c0_159 = arith.constant 0 : index
    %c0_160 = arith.constant 0 : index
    %144 = vector.load %arg9[%c0_157, %c0_158, %c0_159, %c0_160] : memref<1x16x16x64xf32, #tpu.memory_space<vmem>>, vector<1x16x16x64xf32>
    tpu.vector_store %arg9[%c0_157, %c0_158, %c0_159, %c0_160], %143 {strides = array<i32>} : memref<1x16x16x64xf32, #tpu.memory_space<vmem>>, vector<1x16x16x64xf32>,
    return
  }
  func.func @transform_0(%arg0: i32, %arg1: i32) -> (i32, i32, i32, i32) {
    %c0_i32 = arith.constant 0 : i32
    %c0_i32_0 = arith.constant 0 : i32
    %c0_i32_1 = arith.constant 0 : i32
    %c0_i32_2 = arith.constant 0 : i32
    return %arg0, %c0_i32, %c0_i32_0, %c0_i32_1 : i32, i32, i32, i32
  }
  func.func @transform_1(%arg0: i32, %arg1: i32) -> (i32, i32, i32, i32) {
    %c0_i32 = arith.constant 0 : i32
    %c0_i32_0 = arith.constant 0 : i32
    %c0_i32_1 = arith.constant 0 : i32
    %c0_i32_2 = arith.constant 0 : i32
    return %c0_i32, %arg1, %c0_i32_0, %c0_i32_1 : i32, i32, i32, i32
  }
  func.func @transform_2(%arg0: i32, %arg1: i32) -> (i32, i32, i32) {
    %c0_i32 = arith.constant 0 : i32
    %c0_i32_0 = arith.constant 0 : i32
    %c0_i32_1 = arith.constant 0 : i32
    %c0_i32_2 = arith.constant 0 : i32
    return %c0_i32, %c0_i32_0, %c0_i32_1 : i32, i32, i32
  }
  func.func @transform_3(%arg0: i32, %arg1: i32) -> (i32, i32) {
    %c0_i32 = arith.constant 0 : i32
    %c0_i32_0 = arith.constant 0 : i32
    %c0_i32_1 = arith.constant 0 : i32
    return %c0_i32, %c0_i32_0 : i32, i32
  }
  func.func @transform_4(%arg0: i32, %arg1: i32) -> (i32, i32, i32) {
    %c0_i32 = arith.constant 0 : i32
    %c0_i32_0 = arith.constant 0 : i32
    %c0_i32_1 = arith.constant 0 : i32
    %c0_i32_2 = arith.constant 0 : i32
    return %c0_i32, %c0_i32_0, %c0_i32_1 : i32, i32, i32
  }
  func.func @transform_5(%arg0: i32, %arg1: i32) -> (i32, i32) {
    %c0_i32 = arith.constant 0 : i32
    %c0_i32_0 = arith.constant 0 : i32
    %c0_i32_1 = arith.constant 0 : i32
    return %c0_i32, %c0_i32_0 : i32, i32
  }
  func.func @transform_6(%arg0: i32, %arg1: i32) -> (i32, i32, i32, i32) {
    %c0_i32 = arith.constant 0 : i32
    %c0_i32_0 = arith.constant 0 : i32
    %c0_i32_1 = arith.constant 0 : i32
    return %arg0, %arg1, %c0_i32, %c0_i32_0 : i32, i32, i32, i32
  }
  func.func @transform_7(%arg0: i32, %arg1: i32) -> (i32, i32, i32, i32) {
    %c0_i32 = arith.constant 0 : i32
    %c0_i32_0 = arith.constant 0 : i32
    %c0_i32_1 = arith.constant 0 : i32
    return %arg0, %arg1, %c0_i32, %c0_i32_0 : i32, i32, i32, i32
  }
}

</mosaic_0001>

<llo_original>
// kernel: separator_fused.1
$region0: #{separator_fused.1}
  #allocation0 [shape = 'u32[]', space=smem, size = 0x4, offset = 0x4, fixed_abs, tag = 'smem constant byte address 0x4 - core index']
  #allocation1 [shape = 'u32[144,128]{1,0:T(1,128)}', space=vmem, size = 0x12000, scoped, tag = 'internal scratch']
  #allocation2 [shape = 'bf16[20,18,64]{2,1,0:T(8,128)(2,1)}', space=vmem, size = 0x1e000, scoped, tag = 'scratch operand']
  #allocation3 [shape = 'bf16[18,18,64]{2,1,0:T(8,128)(2,1)}', space=vmem, size = 0x1b000, scoped, tag = 'scratch operand']
  %s0 = inlined_call_operand.hbm [shape: f32[2,16,16,64], index: 0, kind: input, shape index: {}]
  %s1 = inlined_call_operand.hbm [shape: f32[1,16,16,64], index: 1, kind: input, shape index: {}]
  %s2 = inlined_call_operand.hbm [shape: bf16[9,64,64], index: 2, kind: input, shape index: {}]
  %s3 = inlined_call_operand.vmem [shape: f32[1,64], index: 3, kind: input, shape index: {}]
  %s4 = inlined_call_operand.hbm [shape: bf16[9,64,64], index: 4, kind: input, shape index: {}]
  %s5 = inlined_call_operand.vmem [shape: f32[1,64], index: 5, kind: input, shape index: {}]
  %s6 = inlined_call_operand.hbm [shape: f32[2,16,16,64], index: 6, kind: output, shape index: {0}]
  %s7 = inlined_call_operand.hbm [shape: f32[2,16,16,64], index: 7, kind: output, shape index: {1}]
  %8 = xla_tuple %s6, %s7
  %s9 = sld [smem:[#allocation0]]
  $region81: #{separator_fused.1} parent=0
    _
  %s11 = ssub.s32 1, %s9
  %s12 = scalar_select 0, %s11, %s9
  $region1: #{separator_fused.1} parent=0
    #allocation4 [shape = 'u8[262144]{0}', space=vmem, size = 0x40000, scoped, tag = 'input window, operand 0']
    #allocation5 [shape = 's32[2]{0}', space=sflag, size = 0x8, scoped, tag = 'scoped memory for separator_fused.1']
    #allocation6 [shape = 's32[2]{0}', space=sflag, size = 0x8, scoped, tag = 'scoped memory for separator_fused.1']
    #allocation7 [shape = 'u8[131072]{0}', space=vmem, size = 0x20000, scoped, tag = 'input window, operand 1, single buffered']
    #allocation8 [shape = 's32[1]{0}', space=sflag, size = 0x4, scoped, tag = 'scoped memory for separator_fused.1']
    #allocation9 [shape = 'u8[147456]{0}', space=vmem, size = 0x24000, scoped, tag = 'input window, operand 2, single buffered']
    #allocation10 [shape = 'u8[147456]{0}', space=vmem, size = 0x24000, scoped, tag = 'input window, operand 4, single buffered']
    #allocation11 [shape = 's32[1]{0}', space=sflag, size = 0x4, scoped, tag = 'scoped memory for separator_fused.1']
    #allocation12 [shape = 'u8[262144]{0}', space=vmem, size = 0x40000, scoped, tag = 'output window, operand 0']
    #allocation13 [shape = 'u8[262144]{0}', space=vmem, size = 0x40000, scoped, tag = 'output window, operand 1']
    #allocation14 [shape = 's32[2]{0}', space=sflag, size = 0x8, scoped, tag = 'scoped memory for separator_fused.1']
    %13 = vsyncpa [#allocation5], 0
    %s14 = scalar_lea.sflag [#allocation5], 1
    %15 = vsyncpa %s14, 0
    %16 = vsyncpa [#allocation8], 0
    %17 = vsyncpa [#allocation11], 0
    %18 = vsyncpa [#allocation6], 0
    %s19 = scalar_lea.sflag [#allocation6], 1
    %20 = vsyncpa %s19, 0
    %21 = vsyncpa [#allocation14], 0
    %s22 = scalar_lea.sflag [#allocation14], 1
    %23 = vsyncpa %s22, 0
    loop: start=0, step=1, limit=4
    $region2: #{separator_fused.1} parent=1 // loop_pre_header
      _
    $region3: #{separator_fused.1} parent=1 // loop_header
      %s25 = sphi 0, %s29
      %p26 = scmp.ge.s32.totalorder %s25, 4
      %s32 = sphi 0, %s44
      %s33 = sphi 0, %s40
      %s34 = sphi 0, %s32
      %s35 = sphi 0, %s33
      %s36 = sphi 0, %s34
      %s37 = sphi 0, %s35
      %s47 = sphi 0, %s49
      %s50 = sphi 0, %s47
      %s51 = sphi 0, %s50
      %s67 = sphi 0, %s51
      %s73 = sphi 0, %s75
      %s76 = sphi 0, %s73
      %s77 = sphi 0, %s76
      %s93 = sphi 0, %s77
      %s97 = sphi 0, %s97
      %s99 = sphi 0, %s97
      %s100 = sphi 0, %s99
      %s114 = sphi 0, %s100
      %s118 = sphi 0, %s118
      %s120 = sphi 0, %s118
      %s121 = sphi 0, %s120
      %s135 = sphi 0, %s121
      %s139 = sphi 0, %s139
      %s141 = sphi 0, %s139
      %s142 = sphi 0, %s141
      %s156 = sphi 0, %s142
      %s160 = sphi 0, %s160
      %s162 = sphi 0, %s160
      %s163 = sphi 0, %s162
      %s177 = sphi 0, %s163
      %s185 = sphi 0, %s187
      %s188 = sphi 0, %s185
      %s189 = sphi 0, %s188
      %s205 = sphi 0, %s189
      %s213 = sphi 0, %s215
      %s216 = sphi 0, %s213
      %s217 = sphi 0, %s216
      %s233 = sphi 0, %s217
    $region4: #{separator_fused.1} parent=1 // loop_header_branch
      %28 = sbr.rel (%p26) target = $region8
    $region5: #{separator_fused.1} parent=1 // loop_body
      %s30 = ssub.s32 %s25, 1
      %s31 = ssub.s32 %s25, 2
      %s38 = sadd.s32 1, %s33
      %p39 = scmp.ge.s32.totalorder %s38, 1
      %s40 = scalar_select %p39, 0, %s38
      %s41 = sadd.s32 1, %s32
      %s42 = scalar_select %p39, %s41, %s32
      %p43 = scmp.ge.s32.totalorder %s42, 2
      %s44 = scalar_select %p43, 0, %s42
      %s45 = ssub.s32 %s32, %s44
      %p46 = scmp.eq.s32.totalorder %s45, 0
      %s48 = sadd.s32 %s47, 1
      %s49 = scalar_select %p46, %s47, %s48
      %p52 = pneg %p46
      %p53 = scmp.eq.s32.totalorder %s25, 1
      %p54 = por %p52, %p53
      %p55 = scmp.ne.s32.totalorder %s47, %s50
      %p56 = scmp.eq.s32.totalorder %s25, 0
      %p57 = por %p55, %p56
      %p58 = scmp.ne.s32.totalorder %s47, %s50
      %p59 = scmp.eq.s32.totalorder %s30, 1
      %p60 = por %p58, %p59
      %p61 = scmp.ne.s32.totalorder %s50, %s51
      %p62 = scmp.eq.s32.totalorder %s30, 0
      %p63 = por %p61, %p62
      %p64 = scmp.ne.s32.totalorder %s50, %s51
      %p65 = scmp.eq.s32.totalorder %s31, 1
      %p66 = por %p64, %p65
      %p68 = scmp.ne.s32.totalorder %s51, %s67
      %p69 = scmp.eq.s32.totalorder %s31, 0
      %p70 = por %p68, %p69
      %s71 = ssub.s32 %s33, %s40
      %p72 = scmp.eq.s32.totalorder %s71, 0
      %s74 = sadd.s32 %s73, 1
      %s75 = scalar_select %p72, %s73, %s74
      %p78 = pneg %p72
      %p79 = scmp.eq.s32.totalorder %s25, 1
      %p80 = por %p78, %p79
      %p81 = scmp.ne.s32.totalorder %s73, %s76
      %p82 = scmp.eq.s32.totalorder %s25, 0
      %p83 = por %p81, %p82
      %p84 = scmp.ne.s32.totalorder %s73, %s76
      %p85 = scmp.eq.s32.totalorder %s30, 1
      %p86 = por %p84, %p85
      %p87 = scmp.ne.s32.totalorder %s76, %s77
      %p88 = scmp.eq.s32.totalorder %s30, 0
      %p89 = por %p87, %p88
      %p90 = scmp.ne.s32.totalorder %s76, %s77
      %p91 = scmp.eq.s32.totalorder %s31, 1
      %p92 = por %p90, %p91
      %p94 = scmp.ne.s32.totalorder %s77, %s93
      %p95 = scmp.eq.s32.totalorder %s31, 0
      %p96 = por %p94, %p95
      %s98 = sadd.s32 %s97, 1
      %p101 = scmp.eq.s32.totalorder %s25, 1
      %p102 = scmp.ne.s32.totalorder %s97, %s99
      %p103 = scmp.eq.s32.totalorder %s25, 0
      %p104 = por %p102, %p103
      %p105 = scmp.ne.s32.totalorder %s97, %s99
      %p106 = scmp.eq.s32.totalorder %s30, 1
      %p107 = por %p105, %p106
      %p108 = scmp.ne.s32.totalorder %s99, %s100
      %p109 = scmp.eq.s32.totalorder %s30, 0
      %p110 = por %p108, %p109
      %p111 = scmp.ne.s32.totalorder %s99, %s100
      %p112 = scmp.eq.s32.totalorder %s31, 1
      %p113 = por %p111, %p112
      %p115 = scmp.ne.s32.totalorder %s100, %s114
      %p116 = scmp.eq.s32.totalorder %s31, 0
      %p117 = por %p115, %p116
      %s119 = sadd.s32 %s118, 1
      %p122 = scmp.eq.s32.totalorder %s25, 1
      %p123 = scmp.ne.s32.totalorder %s118, %s120
      %p124 = scmp.eq.s32.totalorder %s25, 0
      %p125 = por %p123, %p124
      %p126 = scmp.ne.s32.totalorder %s118, %s120
      %p127 = scmp.eq.s32.totalorder %s30, 1
      %p128 = por %p126, %p127
      %p129 = scmp.ne.s32.totalorder %s120, %s121
      %p130 = scmp.eq.s32.totalorder %s30, 0
      %p131 = por %p129, %p130
      %p132 = scmp.ne.s32.totalorder %s120, %s121
      %p133 = scmp.eq.s32.totalorder %s31, 1
      %p134 = por %p132, %p133
      %p136 = scmp.ne.s32.totalorder %s121, %s135
      %p137 = scmp.eq.s32.totalorder %s31, 0
      %p138 = por %p136, %p137
      %s140 = sadd.s32 %s139, 1
      %p143 = scmp.eq.s32.totalorder %s25, 1
      %p144 = scmp.ne.s32.totalorder %s139, %s141
      %p145 = scmp.eq.s32.totalorder %s25, 0
      %p146 = por %p144, %p145
      %p147 = scmp.ne.s32.totalorder %s139, %s141
      %p148 = scmp.eq.s32.totalorder %s30, 1
      %p149 = por %p147, %p148
      %p150 = scmp.ne.s32.totalorder %s141, %s142
      %p151 = scmp.eq.s32.totalorder %s30, 0
      %p152 = por %p150, %p151
      %p153 = scmp.ne.s32.totalorder %s141, %s142
      %p154 = scmp.eq.s32.totalorder %s31, 1
      %p155 = por %p153, %p154
      %p157 = scmp.ne.s32.totalorder %s142, %s156
      %p158 = scmp.eq.s32.totalorder %s31, 0
      %p159 = por %p157, %p158
      %s161 = sadd.s32 %s160, 1
      %p164 = scmp.eq.s32.totalorder %s25, 1
      %p165 = scmp.ne.s32.totalorder %s160, %s162
      %p166 = scmp.eq.s32.totalorder %s25, 0
      %p167 = por %p165, %p166
      %p168 = scmp.ne.s32.totalorder %s160, %s162
      %p169 = scmp.eq.s32.totalorder %s30, 1
      %p170 = por %p168, %p169
      %p171 = scmp.ne.s32.totalorder %s162, %s163
      %p172 = scmp.eq.s32.totalorder %s30, 0
      %p173 = por %p171, %p172
      %p174 = scmp.ne.s32.totalorder %s162, %s163
      %p175 = scmp.eq.s32.totalorder %s31, 1
      %p176 = por %p174, %p175
      %p178 = scmp.ne.s32.totalorder %s163, %s177
      %p179 = scmp.eq.s32.totalorder %s31, 0
      %p180 = por %p178, %p179
      %s181 = ssub.s32 %s32, %s44
      %s182 = ssub.s32 %s33, %s40
      %s183 = sor.u32 %s181, %s182
      %p184 = scmp.eq.s32.totalorder %s183, 0
      %s186 = sadd.s32 %s185, 1
      %s187 = scalar_select %p184, %s185, %s186
      %p190 = pneg %p184
      %p191 = scmp.eq.s32.totalorder %s25, 1
      %p192 = por %p190, %p191
      %p193 = scmp.ne.s32.totalorder %s185, %s188
      %p194 = scmp.eq.s32.totalorder %s25, 0
      %p195 = por %p193, %p194
      %p196 = scmp.ne.s32.totalorder %s185, %s188
      %p197 = scmp.eq.s32.totalorder %s30, 1
      %p198 = por %p196, %p197
      %p199 = scmp.ne.s32.totalorder %s188, %s189
      %p200 = scmp.eq.s32.totalorder %s30, 0
      %p201 = por %p199, %p200
      %p202 = scmp.ne.s32.totalorder %s188, %s189
      %p203 = scmp.eq.s32.totalorder %s31, 1
      %p204 = por %p202, %p203
      %p206 = scmp.ne.s32.totalorder %s189, %s205
      %p207 = scmp.eq.s32.totalorder %s31, 0
      %p208 = por %p206, %p207
      %s209 = ssub.s32 %s32, %s44
      %s210 = ssub.s32 %s33, %s40
      %s211 = sor.u32 %s209, %s210
      %p212 = scmp.eq.s32.totalorder %s211, 0
      %s214 = sadd.s32 %s213, 1
      %s215 = scalar_select %p212, %s213, %s214
      %p218 = pneg %p212
      %p219 = scmp.eq.s32.totalorder %s25, 1
      %p220 = por %p218, %p219
      %p221 = scmp.ne.s32.totalorder %s213, %s216
      %p222 = scmp.eq.s32.totalorder %s25, 0
      %p223 = por %p221, %p222
      %p224 = scmp.ne.s32.totalorder %s213, %s216
      %p225 = scmp.eq.s32.totalorder %s30, 1
      %p226 = por %p224, %p225
      %p227 = scmp.ne.s32.totalorder %s216, %s217
      %p228 = scmp.eq.s32.totalorder %s30, 0
      %p229 = por %p227, %p228
      %p230 = scmp.ne.s32.totalorder %s216, %s217
      %p231 = scmp.eq.s32.totalorder %s31, 1
      %p232 = por %p230, %p231
      %p234 = scmp.ne.s32.totalorder %s217, %s233
      %p235 = scmp.eq.s32.totalorder %s31, 0
      %p236 = por %p234, %p235
      %p237 = scmp.le.s32.totalorder 1, %s25
      %p238 = scmp.lt.s32.totalorder %s25, 3
      %p239 = pnand %p237, %p238
      %p240 = pneg %p239
      // Predicated region
      $region9: #{separator_fused.1} parent=5 // pred_check
        _
      $region10: #{separator_fused.1} parent=5 // pred_check_branch
        %242 = sbr.rel (%p239) target = $region12
      $region11: #{separator_fused.1} parent=5 // pred_region
        %s243 = ssub.s32 %s25, 1
        // Predicated region
        $region13: #{separator_fused.1} parent=11 // pred_check
          %p244 = pneg %p89
        $region14: #{separator_fused.1} parent=11 // pred_check_branch
          %246 = sbr.rel (%p244) target = $region16
        $region15: #{separator_fused.1} parent=11 // pred_region
          %s247 = smul.u32 16, %s35
          %s249 = ssub.s32 4096, 4096
          %250 = vsyncadd [#allocation8], %s249
          %s251 = smul.addr %s247, 2
          %s252 = smul.addr %s251, 128
          %s253 = scalar_lea.hbm %s1, %s252
          %s254 = sshll.u32 [#allocation7], 4
          %s255 = int_to_ptr.vmem [resolvable:$true] %s254
          %260 = dma.hbm_to_vmem [thread:$0]  %s253, 4096, %s255, [#allocation8], 128, 128, 8
        $region16: #{separator_fused.1} parent=11 // pred_fallthru
          _
        // Predicated region
        $region17: #{separator_fused.1} parent=11 // pred_check
          %p261 = pneg %p110
        $region18: #{separator_fused.1} parent=11 // pred_check_branch
          %263 = sbr.rel (%p261) target = $region20
        $region19: #{separator_fused.1} parent=11 // pred_region
          %s265 = ssub.s32 4608, 4608
          %266 = vsyncadd [#allocation8], %s265
          %s267 = sshll.u32 [#allocation9], 4
          %s268 = int_to_ptr.vmem [resolvable:$true] %s267
          %273 = dma.hbm_to_vmem [thread:$0]  %s2, 4608, %s268, [#allocation8], 64, 64, 4
        $region20: #{separator_fused.1} parent=11 // pred_fallthru
          _
        // Predicated region
        $region21: #{separator_fused.1} parent=11 // pred_check
          %p274 = pneg %p131
        $region22: #{separator_fused.1} parent=11 // pred_check_branch
          %276 = sbr.rel (%p274) target = $region24
        $region23: #{separator_fused.1} parent=11 // pred_region
          _
        $region24: #{separator_fused.1} parent=11 // pred_fallthru
          _
        // Predicated region
        $region25: #{separator_fused.1} parent=11 // pred_check
          %p277 = pneg %p152
        $region26: #{separator_fused.1} parent=11 // pred_check_branch
          %279 = sbr.rel (%p277) target = $region28
        $region27: #{separator_fused.1} parent=11 // pred_region
          %s281 = ssub.s32 4608, 4608
          %282 = vsyncadd [#allocation11], %s281
          %s283 = sshll.u32 [#allocation10], 4
          %s284 = int_to_ptr.vmem [resolvable:$true] %s283
          %289 = dma.hbm_to_vmem [thread:$0]  %s4, 4608, %s284, [#allocation11], 64, 64, 4
        $region28: #{separator_fused.1} parent=11 // pred_fallthru
          _
        // Predicated region
        $region29: #{separator_fused.1} parent=11 // pred_check
          %p290 = pneg %p173
        $region30: #{separator_fused.1} parent=11 // pred_check_branch
          %292 = sbr.rel (%p290) target = $region32
        $region31: #{separator_fused.1} parent=11 // pred_region
          _
        $region32: #{separator_fused.1} parent=11 // pred_fallthru
          _
      $region12: #{separator_fused.1} parent=5 // pred_fallthru
        _
      %p293 = scmp.lt.s32.totalorder %s25, 2
      // Predicated region
      $region33: #{separator_fused.1} parent=5 // pred_check
        %p294 = pneg %p293
      $region34: #{separator_fused.1} parent=5 // pred_check_branch
        %296 = sbr.rel (%p294) target = $region36
      $region35: #{separator_fused.1} parent=5 // pred_region
        // Predicated region
        $region37: #{separator_fused.1} parent=35 // pred_check
          %p297 = pneg %p57
        $region38: #{separator_fused.1} parent=35 // pred_check_branch
          %299 = sbr.rel (%p297) target = $region40
        $region39: #{separator_fused.1} parent=35 // pred_region
          %s300 = sand.u32 %s47, 1
          %s301 = scalar_lea.sflag [#allocation5], %s300
          %s302 = sand.u32 %s47, 1
          %s303 = smul.addr %s302, 256
          %s304 = scalar_lea.vmem [#allocation4], %s303
          %s306 = ssub.s32 4096, 4096
          %307 = vsyncadd %s301, %s306
          %s308 = smul.addr %s32, 32
          %s309 = smul.addr %s308, 128
          %s310 = scalar_lea.hbm %s0, %s309
          %s311 = sshll.u32 %s304, 4
          %s312 = int_to_ptr.vmem [resolvable:$true] %s311
          %317 = dma.hbm_to_vmem [thread:$0]  %s310, 4096, %s312, %s301, 128, 128, 8
        $region40: #{separator_fused.1} parent=35 // pred_fallthru
          _
      $region36: #{separator_fused.1} parent=5 // pred_fallthru
        _
      %p318 = scmp.le.s32.totalorder 1, %s25
      %p319 = scmp.lt.s32.totalorder %s25, 3
      %p320 = pnand %p318, %p319
      %p321 = pneg %p320
      // Predicated region
      $region41: #{separator_fused.1} parent=5 // pred_check
        _
      $region42: #{separator_fused.1} parent=5 // pred_check_branch
        %323 = sbr.rel (%p320) target = $region44
      $region43: #{separator_fused.1} parent=5 // pred_region
        %s324 = ssub.s32 %s25, 1
        %s325 = sand.u32 %s50, 1
        %s326 = scalar_lea.sflag [#allocation5], %s325
        %s327 = sand.u32 %s50, 1
        %s328 = smul.addr %s327, 256
        %s329 = scalar_lea.vmem [#allocation4], %s328
        // Predicated region
        $region45: #{separator_fused.1} parent=43 // pred_check
          %p330 = pneg %p63
        $region46: #{separator_fused.1} parent=43 // pred_check_branch
          %332 = sbr.rel (%p330) target = $region48
        $region47: #{separator_fused.1} parent=43 // pred_region
          %333 = dma.done %s326, 4096
        $region48: #{separator_fused.1} parent=43 // pred_fallthru
          _
        // Predicated region
        $region49: #{separator_fused.1} parent=43 // pred_check
          %p334 = pneg %p89
        $region50: #{separator_fused.1} parent=43 // pred_check_branch
          %336 = sbr.rel (%p334) target = $region52
        $region51: #{separator_fused.1} parent=43 // pred_region
          %337 = dma.done [#allocation8], 4096
        $region52: #{separator_fused.1} parent=43 // pred_fallthru
          _
        // Predicated region
        $region53: #{separator_fused.1} parent=43 // pred_check
          %p338 = pneg %p110
        $region54: #{separator_fused.1} parent=43 // pred_check_branch
          %340 = sbr.rel (%p338) target = $region56
        $region55: #{separator_fused.1} parent=43 // pred_region
          %341 = dma.done [#allocation8], 4608
        $region56: #{separator_fused.1} parent=43 // pred_fallthru
          _
        // Predicated region
        $region57: #{separator_fused.1} parent=43 // pred_check
          %p342 = pneg %p152
        $region58: #{separator_fused.1} parent=43 // pred_check_branch
          %344 = sbr.rel (%p342) target = $region60
        $region59: #{separator_fused.1} parent=43 // pred_region
          %345 = dma.done [#allocation11], 4608
        $region60: #{separator_fused.1} parent=43 // pred_fallthru
          _
        %s346 = sand.u32 %s50, 1
        %s347 = scalar_lea.sflag [#allocation5], %s346
        %s348 = sand.u32 %s50, 1
        %s349 = smul.addr %s348, 256
        %s350 = scalar_lea.vmem [#allocation4], %s349
        %p351 = pneg %p63
        %p352 = pneg %p60
        %p353 = pneg %p89
        %p354 = pneg %p86
        %p355 = pneg %p110
        %p356 = pneg %p107
        %p357 = pneg %p131
        %p358 = pneg %p128
        %p359 = pneg %p152
        %p360 = pneg %p149
        %p361 = pneg %p173
        %p362 = pneg %p170
        %p363 = pneg %p201
        %p364 = pneg %p198
        %s365 = sand.u32 %s188, 1
        %s366 = scalar_lea.sflag [#allocation6], %s365
        %s367 = sand.u32 %s188, 1
        %s368 = smul.addr %s367, 256
        %s369 = scalar_lea.vmem [#allocation12], %s368
        %p370 = pneg %p229
        %p371 = pneg %p226
        %s372 = sand.u32 %s216, 1
        %s373 = scalar_lea.sflag [#allocation14], %s372
        %s374 = sand.u32 %s216, 1
        %s375 = smul.addr %s374, 256
        %s376 = scalar_lea.vmem [#allocation13], %s375
        %s377 = smul.u32 16, %s35
        %s378 = smul.u32 16, %s35
        %s379 = smul.u32 16, %s35
        %s381 = smul.u32 %s35, 16
        %vm382 = vcmask 519168
        %383 = vst.msk [vmem:[#allocation2] sm:$0xf] %vm382, 0
        %384 = vst.msk [vmem:[#allocation2 + $0x4] sm:$0xf] %vm382, 0
        %vm385 = vcmask 516096
        %386 = vst.msk [vmem:[#allocation2 + $0x8] sm:$0x1] %vm385, 0
        %387 = vst.msk [vmem:[#allocation2 + $0xc] sm:$0xf] %vm382, 0
        %388 = vst.msk [vmem:[#allocation2 + $0x10] sm:$0xf] %vm382, 0
        %389 = vst.msk [vmem:[#allocation2 + $0x14] sm:$0x1] %vm385, 0
        %390 = vst.msk [vmem:[#allocation2 + $0x18] sm:$0xf] %vm382, 0
        %391 = vst.msk [vmem:[#allocation2 + $0x1c] sm:$0xf] %vm382, 0
        %392 = vst.msk [vmem:[#allocation2 + $0x20] sm:$0x1] %vm385, 0
        %393 = vst.msk [vmem:[#allocation2 + $0x24] sm:$0xf] %vm382, 0
        %394 = vst.msk [vmem:[#allocation2 + $0x28] sm:$0xf] %vm382, 0
        %395 = vst.msk [vmem:[#allocation2 + $0x2c] sm:$0x1] %vm385, 0
        %396 = vst.msk [vmem:[#allocation2 + $0x30] sm:$0xf] %vm382, 0
        %397 = vst.msk [vmem:[#allocation2 + $0x34] sm:$0xf] %vm382, 0
        %398 = vst.msk [vmem:[#allocation2 + $0x38] sm:$0x1] %vm385, 0
        %399 = vst.msk [vmem:[#allocation2 + $0x3c] sm:$0xf] %vm382, 0
        %400 = vst.msk [vmem:[#allocation2 + $0x40] sm:$0xf] %vm382, 0
        %401 = vst.msk [vmem:[#allocation2 + $0x44] sm:$0x1] %vm385, 0
        %402 = vst.msk [vmem:[#allocation2 + $0x48] sm:$0xf] %vm382, 0
        %403 = vst.msk [vmem:[#allocation2 + $0x4c] sm:$0xf] %vm382, 0
        %404 = vst.msk [vmem:[#allocation2 + $0x50] sm:$0x1] %vm385, 0
        %405 = vst.msk [vmem:[#allocation2 + $0x54] sm:$0xf] %vm382, 0
        %406 = vst.msk [vmem:[#allocation2 + $0x58] sm:$0xf] %vm382, 0
        %407 = vst.msk [vmem:[#allocation2 + $0x5c] sm:$0x1] %vm385, 0
        %408 = vst.msk [vmem:[#allocation2 + $0x60] sm:$0xf] %vm382, 0
        %409 = vst.msk [vmem:[#allocation2 + $0x64] sm:$0xf] %vm382, 0
        %410 = vst.msk [vmem:[#allocation2 + $0x68] sm:$0x1] %vm385, 0
        %411 = vst.msk [vmem:[#allocation2 + $0x6c] sm:$0xf] %vm382, 0
        %412 = vst.msk [vmem:[#allocation2 + $0x70] sm:$0xf] %vm382, 0
        %413 = vst.msk [vmem:[#allocation2 + $0x74] sm:$0x1] %vm385, 0
        %414 = vst.msk [vmem:[#allocation2 + $0x78] sm:$0xf] %vm382, 0
        %415 = vst.msk [vmem:[#allocation2 + $0x7c] sm:$0xf] %vm382, 0
        %416 = vst.msk [vmem:[#allocation2 + $0x80] sm:$0x1] %vm385, 0
        %417 = vst.msk [vmem:[#allocation2 + $0x84] sm:$0xf] %vm382, 0
        %418 = vst.msk [vmem:[#allocation2 + $0x88] sm:$0xf] %vm382, 0
        %419 = vst.msk [vmem:[#allocation2 + $0x8c] sm:$0x1] %vm385, 0
        %420 = vst.msk [vmem:[#allocation2 + $0x90] sm:$0xf] %vm382, 0
        %421 = vst.msk [vmem:[#allocation2 + $0x94] sm:$0xf] %vm382, 0
        %422 = vst.msk [vmem:[#allocation2 + $0x98] sm:$0x1] %vm385, 0
        %423 = vst.msk [vmem:[#allocation2 + $0x9c] sm:$0xf] %vm382, 0
        %424 = vst.msk [vmem:[#allocation2 + $0xa0] sm:$0xf] %vm382, 0
        %425 = vst.msk [vmem:[#allocation2 + $0xa4] sm:$0x1] %vm385, 0
        %426 = vst.msk [vmem:[#allocation2 + $0xa8] sm:$0xf] %vm382, 0
        %427 = vst.msk [vmem:[#allocation2 + $0xac] sm:$0xf] %vm382, 0
        %428 = vst.msk [vmem:[#allocation2 + $0xb0] sm:$0x1] %vm385, 0
        %429 = vst.msk [vmem:[#allocation2 + $0xb4] sm:$0xf] %vm382, 0
        %430 = vst.msk [vmem:[#allocation2 + $0xb8] sm:$0xf] %vm382, 0
        %431 = vst.msk [vmem:[#allocation2 + $0xbc] sm:$0x1] %vm385, 0
        %432 = vst.msk [vmem:[#allocation2 + $0xc0] sm:$0xf] %vm382, 0
        %433 = vst.msk [vmem:[#allocation2 + $0xc4] sm:$0xf] %vm382, 0
        %434 = vst.msk [vmem:[#allocation2 + $0xc8] sm:$0x1] %vm385, 0
        %435 = vst.msk [vmem:[#allocation2 + $0xcc] sm:$0xf] %vm382, 0
        %436 = vst.msk [vmem:[#allocation2 + $0xd0] sm:$0xf] %vm382, 0
        %437 = vst.msk [vmem:[#allocation2 + $0xd4] sm:$0x1] %vm385, 0
        %438 = vst.msk [vmem:[#allocation2 + $0xd8] sm:$0xf] %vm382, 0
        %439 = vst.msk [vmem:[#allocation2 + $0xdc] sm:$0xf] %vm382, 0
        %440 = vst.msk [vmem:[#allocation2 + $0xe0] sm:$0x1] %vm385, 0
        %441 = vst.msk [vmem:[#allocation2 + $0xe4] sm:$0xf] %vm382, 0
        %442 = vst.msk [vmem:[#allocation2 + $0xe8] sm:$0xf] %vm382, 0
        %443 = vst.msk [vmem:[#allocation2 + $0xec] sm:$0x1] %vm385, 0
        %v444 = vld [vmem:[%s329] sm:$0xff]
        %v445 = vld [vmem:[%s329 + $0x8] sm:$0xff]
        %v446 = vld [vmem:[%s329 + $0x10] sm:$0xff]
        %v447 = vld [vmem:[%s329 + $0x18] sm:$0xff]
        %v448 = vld [vmem:[%s329 + $0x20] sm:$0xff]
        %v449 = vld [vmem:[%s329 + $0x28] sm:$0xff]
        %v450 = vld [vmem:[%s329 + $0x30] sm:$0xff]
        %v451 = vld [vmem:[%s329 + $0x38] sm:$0xff]
        %v452 = vld [vmem:[%s329 + $0x40] sm:$0xff]
        %v453 = vld [vmem:[%s329 + $0x48] sm:$0xff]
        %v454 = vld [vmem:[%s329 + $0x50] sm:$0xff]
        %v455 = vld [vmem:[%s329 + $0x58] sm:$0xff]
        %v456 = vld [vmem:[%s329 + $0x60] sm:$0xff]
        %v457 = vld [vmem:[%s329 + $0x68] sm:$0xff]
        %v458 = vld [vmem:[%s329 + $0x70] sm:$0xff]
        %v459 = vld [vmem:[%s329 + $0x78] sm:$0xff]
        %v460 = vld [vmem:[%s329 + $0x80] sm:$0xff]
        %v461 = vld [vmem:[%s329 + $0x88] sm:$0xff]
        %v462 = vld [vmem:[%s329 + $0x90] sm:$0xff]
        %v463 = vld [vmem:[%s329 + $0x98] sm:$0xff]
        %v464 = vld [vmem:[%s329 + $0xa0] sm:$0xff]
        %v465 = vld [vmem:[%s329 + $0xa8] sm:$0xff]
        %v466 = vld [vmem:[%s329 + $0xb0] sm:$0xff]
        %v467 = vld [vmem:[%s329 + $0xb8] sm:$0xff]
        %v468 = vld [vmem:[%s329 + $0xc0] sm:$0xff]
        %v469 = vld [vmem:[%s329 + $0xc8] sm:$0xff]
        %v470 = vld [vmem:[%s329 + $0xd0] sm:$0xff]
        %v471 = vld [vmem:[%s329 + $0xd8] sm:$0xff]
        %v472 = vld [vmem:[%s329 + $0xe0] sm:$0xff]
        %v473 = vld [vmem:[%s329 + $0xe8] sm:$0xff]
        %v474 = vld [vmem:[%s329 + $0xf0] sm:$0xff]
        %v475 = vld [vmem:[%s329 + $0xf8] sm:$0xff]
        %v476 = vpack.c.bf16 %v445, %v444
        %v477 = vpack.c.bf16 %v447, %v446
        %v478 = vpack.c.bf16 %v449, %v448
        %v479 = vpack.c.bf16 %v451, %v450
        %v480 = vpack.c.bf16 %v453, %v452
        %v481 = vpack.c.bf16 %v455, %v454
        %v482 = vpack.c.bf16 %v457, %v456
        %v483 = vpack.c.bf16 %v459, %v458
        %v484 = vpack.c.bf16 %v461, %v460
        %v485 = vpack.c.bf16 %v463, %v462
        %v486 = vpack.c.bf16 %v465, %v464
        %v487 = vpack.c.bf16 %v467, %v466
        %v488 = vpack.c.bf16 %v469, %v468
        %v489 = vpack.c.bf16 %v471, %v470
        %v490 = vpack.c.bf16 %v473, %v472
        %v491 = vpack.c.bf16 %v475, %v474
        %v508 = vunpack.c.l.b16 %v476
        %v509 = vunpack.c.h.b16 %v476
        %v510 = vunpack.c.l.b16 %v477
        %v511 = vunpack.c.h.b16 %v477
        %v512 = vunpack.c.l.b16 %v478
        %v513 = vunpack.c.h.b16 %v478
        %v514 = vunpack.c.l.b16 %v479
        %v515 = vunpack.c.h.b16 %v479
        %v516 = vunpack.c.l.b16 %v480
        %v517 = vunpack.c.h.b16 %v480
        %v518 = vunpack.c.l.b16 %v481
        %v519 = vunpack.c.h.b16 %v481
        %v520 = vunpack.c.l.b16 %v482
        %v521 = vunpack.c.h.b16 %v482
        %v522 = vunpack.c.l.b16 %v483
        %v523 = vunpack.c.h.b16 %v483
        %v524 = vunpack.c.l.b16 %v484
        %v525 = vunpack.c.h.b16 %v484
        %v526 = vunpack.c.l.b16 %v485
        %v527 = vunpack.c.h.b16 %v485
        %v528 = vunpack.c.l.b16 %v486
        %v529 = vunpack.c.h.b16 %v486
        %v530 = vunpack.c.l.b16 %v487
        %v531 = vunpack.c.h.b16 %v487
        %v532 = vunpack.c.l.b16 %v488
        %v533 = vunpack.c.h.b16 %v488
        %v534 = vunpack.c.l.b16 %v489
        %v535 = vunpack.c.h.b16 %v489
        %v536 = vunpack.c.l.b16 %v490
        %v537 = vunpack.c.h.b16 %v490
        %v538 = vunpack.c.l.b16 %v491
        %v539 = vunpack.c.h.b16 %v491
        %v540 = vpack.c.b16 %v508, %v508
        %v541 = vpack.c.b16 %v509, %v509
        %v542 = vpack.c.b16 %v510, %v510
        %v543 = vpack.c.b16 %v511, %v511
        %v544 = vpack.c.b16 %v512, %v512
        %v545 = vpack.c.b16 %v513, %v513
        %v546 = vpack.c.b16 %v514, %v514
        %v547 = vpack.c.b16 %v515, %v515
        %v548 = vpack.c.b16 %v516, %v516
        %v549 = vpack.c.b16 %v517, %v517
        %v550 = vpack.c.b16 %v518, %v518
        %v551 = vpack.c.b16 %v519, %v519
        %v552 = vpack.c.b16 %v520, %v520
        %v553 = vpack.c.b16 %v521, %v521
        %v554 = vpack.c.b16 %v522, %v522
        %v555 = vpack.c.b16 %v523, %v523
        %v556 = vpack.c.b16 %v524, %v524
        %v557 = vpack.c.b16 %v525, %v525
        %v558 = vpack.c.b16 %v526, %v526
        %v559 = vpack.c.b16 %v527, %v527
        %v560 = vpack.c.b16 %v528, %v528
        %v561 = vpack.c.b16 %v529, %v529
        %v562 = vpack.c.b16 %v530, %v530
        %v563 = vpack.c.b16 %v531, %v531
        %v564 = vpack.c.b16 %v532, %v532
        %v565 = vpack.c.b16 %v533, %v533
        %v566 = vpack.c.b16 %v534, %v534
        %v567 = vpack.c.b16 %v535, %v535
        %v568 = vpack.c.b16 %v536, %v536
        %v569 = vpack.c.b16 %v537, %v537
        %v570 = vpack.c.b16 %v538, %v538
        %v571 = vpack.c.b16 %v539, %v539
        %vm572 = vsmask.f32 256
        %vm573 = vsmask.f32 4368
        %vm574 = vmor %vm572, %vm573
        %v576 = vshrl.u32 %v540, 16
        %v578 = vrot.slane %v576, 7
        %v579 = vshll.u32 %v540, 16
        %v581 = vor.u32 %v578, %v579
        %v582 = vrot.slane %v578, 4
        %v584 = vshrl.u32 %v541, 16
        %v586 = vrot.slane %v584, 7
        %v587 = vshll.u32 %v541, 16
        %v589 = vor.u32 %v586, %v587
        %v590 = vsel %vm574, %v582, %v589
        %v591 = vrot.slane %v586, 4
        %v593 = vshrl.u32 %v542, 16
        %v595 = vrot.slane %v593, 7
        %v596 = vshll.u32 %v542, 16
        %v598 = vor.u32 %v595, %v596
        %v599 = vrot.slane %v595, 4
        %v601 = vshrl.u32 %v543, 16
        %v603 = vrot.slane %v601, 7
        %v604 = vshll.u32 %v543, 16
        %v606 = vor.u32 %v603, %v604
        %v607 = vsel %vm574, %v599, %v606
        %v608 = vrot.slane %v603, 4
        %v610 = vshrl.u32 %v544, 16
        %v612 = vrot.slane %v610, 7
        %v613 = vshll.u32 %v544, 16
        %v615 = vor.u32 %v612, %v613
        %v616 = vrot.slane %v612, 4
        %v618 = vshrl.u32 %v545, 16
        %v620 = vrot.slane %v618, 7
        %v621 = vshll.u32 %v545, 16
        %v623 = vor.u32 %v620, %v621
        %v624 = vsel %vm574, %v616, %v623
        %v625 = vrot.slane %v620, 4
        %v627 = vshrl.u32 %v546, 16
        %v629 = vrot.slane %v627, 7
        %v630 = vshll.u32 %v546, 16
        %v632 = vor.u32 %v629, %v630
        %v633 = vrot.slane %v629, 4
        %v635 = vshrl.u32 %v547, 16
        %v637 = vrot.slane %v635, 7
        %v638 = vshll.u32 %v547, 16
        %v640 = vor.u32 %v637, %v638
        %v641 = vsel %vm574, %v633, %v640
        %v642 = vrot.slane %v637, 4
        %v644 = vshrl.u32 %v548, 16
        %v646 = vrot.slane %v644, 7
        %v647 = vshll.u32 %v548, 16
        %v649 = vor.u32 %v646, %v647
        %v650 = vrot.slane %v646, 4
        %v652 = vshrl.u32 %v549, 16
        %v654 = vrot.slane %v652, 7
        %v655 = vshll.u32 %v549, 16
        %v657 = vor.u32 %v654, %v655
        %v658 = vsel %vm574, %v650, %v657
        %v659 = vrot.slane %v654, 4
        %v661 = vshrl.u32 %v550, 16
        %v663 = vrot.slane %v661, 7
        %v664 = vshll.u32 %v550, 16
        %v666 = vor.u32 %v663, %v664
        %v667 = vrot.slane %v663, 4
        %v669 = vshrl.u32 %v551, 16
        %v671 = vrot.slane %v669, 7
        %v672 = vshll.u32 %v551, 16
        %v674 = vor.u32 %v671, %v672
        %v675 = vsel %vm574, %v667, %v674
        %v676 = vrot.slane %v671, 4
        %v678 = vshrl.u32 %v552, 16
        %v680 = vrot.slane %v678, 7
        %v681 = vshll.u32 %v552, 16
        %v683 = vor.u32 %v680, %v681
        %v684 = vrot.slane %v680, 4
        %v686 = vshrl.u32 %v553, 16
        %v688 = vrot.slane %v686, 7
        %v689 = vshll.u32 %v553, 16
        %v691 = vor.u32 %v688, %v689
        %v692 = vsel %vm574, %v684, %v691
        %v693 = vrot.slane %v688, 4
        %v695 = vshrl.u32 %v554, 16
        %v697 = vrot.slane %v695, 7
        %v698 = vshll.u32 %v554, 16
        %v700 = vor.u32 %v697, %v698
        %v701 = vrot.slane %v697, 4
        %v703 = vshrl.u32 %v555, 16
        %v705 = vrot.slane %v703, 7
        %v706 = vshll.u32 %v555, 16
        %v708 = vor.u32 %v705, %v706
        %v709 = vsel %vm574, %v701, %v708
        %v710 = vrot.slane %v705, 4
        %v712 = vshrl.u32 %v556, 16
        %v714 = vrot.slane %v712, 7
        %v715 = vshll.u32 %v556, 16
        %v717 = vor.u32 %v714, %v715
        %v718 = vrot.slane %v714, 4
        %v720 = vshrl.u32 %v557, 16
        %v722 = vrot.slane %v720, 7
        %v723 = vshll.u32 %v557, 16
        %v725 = vor.u32 %v722, %v723
        %v726 = vsel %vm574, %v718, %v725
        %v727 = vrot.slane %v722, 4
        %v729 = vshrl.u32 %v558, 16
        %v731 = vrot.slane %v729, 7
        %v732 = vshll.u32 %v558, 16
        %v734 = vor.u32 %v731, %v732
        %v735 = vrot.slane %v731, 4
        %v737 = vshrl.u32 %v559, 16
        %v739 = vrot.slane %v737, 7
        %v740 = vshll.u32 %v559, 16
        %v742 = vor.u32 %v739, %v740
        %v743 = vsel %vm574, %v735, %v742
        %v744 = vrot.slane %v739, 4
        %v746 = vshrl.u32 %v560, 16
        %v748 = vrot.slane %v746, 7
        %v749 = vshll.u32 %v560, 16
        %v751 = vor.u32 %v748, %v749
        %v752 = vrot.slane %v748, 4
        %v754 = vshrl.u32 %v561, 16
        %v756 = vrot.slane %v754, 7
        %v757 = vshll.u32 %v561, 16
        %v759 = vor.u32 %v756, %v757
        %v760 = vsel %vm574, %v752, %v759
        %v761 = vrot.slane %v756, 4
        %v763 = vshrl.u32 %v562, 16
        %v765 = vrot.slane %v763, 7
        %v766 = vshll.u32 %v562, 16
        %v768 = vor.u32 %v765, %v766
        %v769 = vrot.slane %v765, 4
        %v771 = vshrl.u32 %v563, 16
        %v773 = vrot.slane %v771, 7
        %v774 = vshll.u32 %v563, 16
        %v776 = vor.u32 %v773, %v774
        %v777 = vsel %vm574, %v769, %v776
        %v778 = vrot.slane %v773, 4
        %v780 = vshrl.u32 %v564, 16
        %v782 = vrot.slane %v780, 7
        %v783 = vshll.u32 %v564, 16
        %v785 = vor.u32 %v782, %v783
        %v786 = vrot.slane %v782, 4
        %v788 = vshrl.u32 %v565, 16
        %v790 = vrot.slane %v788, 7
        %v791 = vshll.u32 %v565, 16
        %v793 = vor.u32 %v790, %v791
        %v794 = vsel %vm574, %v786, %v793
        %v795 = vrot.slane %v790, 4
        %v797 = vshrl.u32 %v566, 16
        %v799 = vrot.slane %v797, 7
        %v800 = vshll.u32 %v566, 16
        %v802 = vor.u32 %v799, %v800
        %v803 = vrot.slane %v799, 4
        %v805 = vshrl.u32 %v567, 16
        %v807 = vrot.slane %v805, 7
        %v808 = vshll.u32 %v567, 16
        %v810 = vor.u32 %v807, %v808
        %v811 = vsel %vm574, %v803, %v810
        %v812 = vrot.slane %v807, 4
        %v814 = vshrl.u32 %v568, 16
        %v816 = vrot.slane %v814, 7
        %v817 = vshll.u32 %v568, 16
        %v819 = vor.u32 %v816, %v817
        %v820 = vrot.slane %v816, 4
        %v822 = vshrl.u32 %v569, 16
        %v824 = vrot.slane %v822, 7
        %v825 = vshll.u32 %v569, 16
        %v827 = vor.u32 %v824, %v825
        %v828 = vsel %vm574, %v820, %v827
        %v829 = vrot.slane %v824, 4
        %v831 = vshrl.u32 %v570, 16
        %v833 = vrot.slane %v831, 7
        %v834 = vshll.u32 %v570, 16
        %v836 = vor.u32 %v833, %v834
        %v837 = vrot.slane %v833, 4
        %v839 = vshrl.u32 %v571, 16
        %v841 = vrot.slane %v839, 7
        %v842 = vshll.u32 %v571, 16
        %v844 = vor.u32 %v841, %v842
        %v845 = vsel %vm574, %v837, %v844
        %v846 = vrot.slane %v841, 4
        %s895 = scalar_lea.vmem [#allocation2], 24
        %vm896 = vcmask 519168
        %vm897 = vsmask.f32 7938
        %vm898 = vmand %vm896, %vm897
        %v899 = vld [vmem:[%s895] sm:$0xf]
        %v900 = vsel %vm898, %v581, %v899
        %901 = vst [vmem:[%s895] sm:$0xf] %v900
        %902 = vst.msk [vmem:[%s895 + $0x4] sm:$0xf] %vm382, %v590
        %vm903 = vcmask 516096
        %vm904 = vmand %vm903, %vm572
        %v905 = vld [vmem:[%s895 + $0x8] sm:$0x1]
        %v906 = vsel %vm904, %v591, %v905
        %907 = vst [vmem:[%s895 + $0x8] sm:$0x1] %v906
        %v908 = vld [vmem:[%s895 + $0xc] sm:$0xf]
        %v909 = vsel %vm898, %v598, %v908
        %910 = vst [vmem:[%s895 + $0xc] sm:$0xf] %v909
        %911 = vst.msk [vmem:[%s895 + $0x10] sm:$0xf] %vm382, %v607
        %v912 = vld [vmem:[%s895 + $0x14] sm:$0x1]
        %v913 = vsel %vm904, %v608, %v912
        %914 = vst [vmem:[%s895 + $0x14] sm:$0x1] %v913
        %v915 = vld [vmem:[%s895 + $0x18] sm:$0xf]
        %v916 = vsel %vm898, %v615, %v915
        %917 = vst [vmem:[%s895 + $0x18] sm:$0xf] %v916
        %918 = vst.msk [vmem:[%s895 + $0x1c] sm:$0xf] %vm382, %v624
        %v919 = vld [vmem:[%s895 + $0x20] sm:$0x1]
        %v920 = vsel %vm904, %v625, %v919
        %921 = vst [vmem:[%s895 + $0x20] sm:$0x1] %v920
        %v922 = vld [vmem:[%s895 + $0x24] sm:$0xf]
        %v923 = vsel %vm898, %v632, %v922
        %924 = vst [vmem:[%s895 + $0x24] sm:$0xf] %v923
        %925 = vst.msk [vmem:[%s895 + $0x28] sm:$0xf] %vm382, %v641
        %v926 = vld [vmem:[%s895 + $0x2c] sm:$0x1]
        %v927 = vsel %vm904, %v642, %v926
        %928 = vst [vmem:[%s895 + $0x2c] sm:$0x1] %v927
        %v929 = vld [vmem:[%s895 + $0x30] sm:$0xf]
        %v930 = vsel %vm898, %v649, %v929
        %931 = vst [vmem:[%s895 + $0x30] sm:$0xf] %v930
        %932 = vst.msk [vmem:[%s895 + $0x34] sm:$0xf] %vm382, %v658
        %v933 = vld [vmem:[%s895 + $0x38] sm:$0x1]
        %v934 = vsel %vm904, %v659, %v933
        %935 = vst [vmem:[%s895 + $0x38] sm:$0x1] %v934
        %v936 = vld [vmem:[%s895 + $0x3c] sm:$0xf]
        %v937 = vsel %vm898, %v666, %v936
        %938 = vst [vmem:[%s895 + $0x3c] sm:$0xf] %v937
        %939 = vst.msk [vmem:[%s895 + $0x40] sm:$0xf] %vm382, %v675
        %v940 = vld [vmem:[%s895 + $0x44] sm:$0x1]
        %v941 = vsel %vm904, %v676, %v940
        %942 = vst [vmem:[%s895 + $0x44] sm:$0x1] %v941
        %v943 = vld [vmem:[%s895 + $0x48] sm:$0xf]
        %v944 = vsel %vm898, %v683, %v943
        %945 = vst [vmem:[%s895 + $0x48] sm:$0xf] %v944
        %946 = vst.msk [vmem:[%s895 + $0x4c] sm:$0xf] %vm382, %v692
        %v947 = vld [vmem:[%s895 + $0x50] sm:$0x1]
        %v948 = vsel %vm904, %v693, %v947
        %949 = vst [vmem:[%s895 + $0x50] sm:$0x1] %v948
        %v950 = vld [vmem:[%s895 + $0x54] sm:$0xf]
        %v951 = vsel %vm898, %v700, %v950
        %952 = vst [vmem:[%s895 + $0x54] sm:$0xf] %v951
        %953 = vst.msk [vmem:[%s895 + $0x58] sm:$0xf] %vm382, %v709
        %v954 = vld [vmem:[%s895 + $0x5c] sm:$0x1]
        %v955 = vsel %vm904, %v710, %v954
        %956 = vst [vmem:[%s895 + $0x5c] sm:$0x1] %v955
        %v957 = vld [vmem:[%s895 + $0x60] sm:$0xf]
        %v958 = vsel %vm898, %v717, %v957
        %959 = vst [vmem:[%s895 + $0x60] sm:$0xf] %v958
        %960 = vst.msk [vmem:[%s895 + $0x64] sm:$0xf] %vm382, %v726
        %v961 = vld [vmem:[%s895 + $0x68] sm:$0x1]
        %v962 = vsel %vm904, %v727, %v961
        %963 = vst [vmem:[%s895 + $0x68] sm:$0x1] %v962
        %v964 = vld [vmem:[%s895 + $0x6c] sm:$0xf]
        %v965 = vsel %vm898, %v734, %v964
        %966 = vst [vmem:[%s895 + $0x6c] sm:$0xf] %v965
        %967 = vst.msk [vmem:[%s895 + $0x70] sm:$0xf] %vm382, %v743
        %v968 = vld [vmem:[%s895 + $0x74] sm:$0x1]
        %v969 = vsel %vm904, %v744, %v968
        %970 = vst [vmem:[%s895 + $0x74] sm:$0x1] %v969
        %v971 = vld [vmem:[%s895 + $0x78] sm:$0xf]
        %v972 = vsel %vm898, %v751, %v971
        %973 = vst [vmem:[%s895 + $0x78] sm:$0xf] %v972
        %974 = vst.msk [vmem:[%s895 + $0x7c] sm:$0xf] %vm382, %v760
        %v975 = vld [vmem:[%s895 + $0x80] sm:$0x1]
        %v976 = vsel %vm904, %v761, %v975
        %977 = vst [vmem:[%s895 + $0x80] sm:$0x1] %v976
        %v978 = vld [vmem:[%s895 + $0x84] sm:$0xf]
        %v979 = vsel %vm898, %v768, %v978
        %980 = vst [vmem:[%s895 + $0x84] sm:$0xf] %v979
        %981 = vst.msk [vmem:[%s895 + $0x88] sm:$0xf] %vm382, %v777
        %v982 = vld [vmem:[%s895 + $0x8c] sm:$0x1]
        %v983 = vsel %vm904, %v778, %v982
        %984 = vst [vmem:[%s895 + $0x8c] sm:$0x1] %v983
        %v985 = vld [vmem:[%s895 + $0x90] sm:$0xf]
        %v986 = vsel %vm898, %v785, %v985
        %987 = vst [vmem:[%s895 + $0x90] sm:$0xf] %v986
        %988 = vst.msk [vmem:[%s895 + $0x94] sm:$0xf] %vm382, %v794
        %v989 = vld [vmem:[%s895 + $0x98] sm:$0x1]
        %v990 = vsel %vm904, %v795, %v989
        %991 = vst [vmem:[%s895 + $0x98] sm:$0x1] %v990
        %v992 = vld [vmem:[%s895 + $0x9c] sm:$0xf]
        %v993 = vsel %vm898, %v802, %v992
        %994 = vst [vmem:[%s895 + $0x9c] sm:$0xf] %v993
        %995 = vst.msk [vmem:[%s895 + $0xa0] sm:$0xf] %vm382, %v811
        %v996 = vld [vmem:[%s895 + $0xa4] sm:$0x1]
        %v997 = vsel %vm904, %v812, %v996
        %998 = vst [vmem:[%s895 + $0xa4] sm:$0x1] %v997
        %v999 = vld [vmem:[%s895 + $0xa8] sm:$0xf]
        %v1000 = vsel %vm898, %v819, %v999
        %1001 = vst [vmem:[%s895 + $0xa8] sm:$0xf] %v1000
        %1002 = vst.msk [vmem:[%s895 + $0xac] sm:$0xf] %vm382, %v828
        %v1003 = vld [vmem:[%s895 + $0xb0] sm:$0x1]
        %v1004 = vsel %vm904, %v829, %v1003
        %1005 = vst [vmem:[%s895 + $0xb0] sm:$0x1] %v1004
        %v1006 = vld [vmem:[%s895 + $0xb4] sm:$0xf]
        %v1007 = vsel %vm898, %v836, %v1006
        %1008 = vst [vmem:[%s895 + $0xb4] sm:$0xf] %v1007
        %1009 = vst.msk [vmem:[%s895 + $0xb8] sm:$0xf] %vm382, %v845
        %v1010 = vld [vmem:[%s895 + $0xbc] sm:$0x1]
        %v1011 = vsel %vm904, %v846, %v1010
        %1012 = vst [vmem:[%s895 + $0xbc] sm:$0x1] %v1011
        %v1013 = vld [vmem:[#allocation2] sm:$0xf]
        %v1014 = vld [vmem:[#allocation2 + $0x4] sm:$0xf]
        %v1015 = vld [vmem:[#allocation2 + $0xc] sm:$0xf]
        %v1016 = vld [vmem:[#allocation2 + $0x10] sm:$0xf]
        %v1017 = vld [vmem:[#allocation2 + $0x18] sm:$0xf]
        %v1018 = vld [vmem:[#allocation2 + $0x1c] sm:$0xf]
        %v1019 = vld [vmem:[#allocation2 + $0x24] sm:$0xf]
        %v1020 = vld [vmem:[#allocation2 + $0x28] sm:$0xf]
        %v1021 = vld [vmem:[#allocation2 + $0x30] sm:$0xf]
        %v1022 = vld [vmem:[#allocation2 + $0x34] sm:$0xf]
        %v1023 = vld [vmem:[#allocation2 + $0x3c] sm:$0xf]
        %v1024 = vld [vmem:[#allocation2 + $0x40] sm:$0xf]
        %v1025 = vld [vmem:[#allocation2 + $0x48] sm:$0xf]
        %v1026 = vld [vmem:[#allocation2 + $0x4c] sm:$0xf]
        %v1027 = vld [vmem:[#allocation2 + $0x54] sm:$0xf]
        %v1028 = vld [vmem:[#allocation2 + $0x58] sm:$0xf]
        %v1029 = vld [vmem:[#allocation2 + $0x60] sm:$0xf]
        %v1030 = vld [vmem:[#allocation2 + $0x64] sm:$0xf]
        %v1031 = vld [vmem:[#allocation2 + $0x6c] sm:$0xf]
        %v1032 = vld [vmem:[#allocation2 + $0x70] sm:$0xf]
        %v1033 = vld [vmem:[#allocation2 + $0x78] sm:$0xf]
        %v1034 = vld [vmem:[#allocation2 + $0x7c] sm:$0xf]
        %v1035 = vld [vmem:[#allocation2 + $0x84] sm:$0xf]
        %v1036 = vld [vmem:[#allocation2 + $0x88] sm:$0xf]
        %v1037 = vld [vmem:[#allocation2 + $0x90] sm:$0xf]
        %v1038 = vld [vmem:[#allocation2 + $0x94] sm:$0xf]
        %v1039 = vld [vmem:[#allocation2 + $0x9c] sm:$0xf]
        %v1040 = vld [vmem:[#allocation2 + $0xa0] sm:$0xf]
        %v1041 = vld [vmem:[#allocation2 + $0xa8] sm:$0xf]
        %v1042 = vld [vmem:[#allocation2 + $0xac] sm:$0xf]
        %v1043 = vld [vmem:[#allocation2 + $0xb4] sm:$0xf]
        %v1044 = vld [vmem:[#allocation2 + $0xb8] sm:$0xf]
        %v1045 = vld [vmem:[#allocation2 + $0xc0] sm:$0xf]
        %v1046 = vld [vmem:[#allocation2 + $0xc4] sm:$0xf]
        %v1047 = vld [vmem:[#allocation2 + $0xcc] sm:$0xf]
        %v1048 = vld [vmem:[#allocation2 + $0xd0] sm:$0xf]
        %v1049 = vld [vmem:[#allocation9] sm:$0xf]
        %v1050 = vld [vmem:[#allocation9 + $0x4] sm:$0xf]
        %v1051 = vld [vmem:[#allocation9 + $0x8] sm:$0xf]
        %v1052 = vld [vmem:[#allocation9 + $0xc] sm:$0xf]
        %v1053 = vld [vmem:[#allocation9 + $0x10] sm:$0xf]
        %v1054 = vld [vmem:[#allocation9 + $0x14] sm:$0xf]
        %v1055 = vld [vmem:[#allocation9 + $0x18] sm:$0xf]
        %v1056 = vld [vmem:[#allocation9 + $0x1c] sm:$0xf]
        %v1057 = vld [vmem:[#allocation2 + $0x8] sm:$0x1]
        %v1058 = vld [vmem:[#allocation2 + $0x14] sm:$0x1]
        %v1059 = vld [vmem:[#allocation2 + $0x20] sm:$0x1]
        %v1060 = vld [vmem:[#allocation2 + $0x2c] sm:$0x1]
        %v1061 = vld [vmem:[#allocation2 + $0x38] sm:$0x1]
        %v1062 = vld [vmem:[#allocation2 + $0x44] sm:$0x1]
        %v1063 = vld [vmem:[#allocation2 + $0x50] sm:$0x1]
        %v1064 = vld [vmem:[#allocation2 + $0x5c] sm:$0x1]
        %v1065 = vld [vmem:[#allocation2 + $0x68] sm:$0x1]
        %v1066 = vld [vmem:[#allocation2 + $0x74] sm:$0x1]
        %v1067 = vld [vmem:[#allocation2 + $0x80] sm:$0x1]
        %v1068 = vld [vmem:[#allocation2 + $0x8c] sm:$0x1]
        %v1069 = vld [vmem:[#allocation2 + $0x98] sm:$0x1]
        %v1070 = vld [vmem:[#allocation2 + $0xa4] sm:$0x1]
        %v1071 = vld [vmem:[#allocation2 + $0xb0] sm:$0x1]
        %v1072 = vld [vmem:[#allocation2 + $0xbc] sm:$0x1]
        %v1073 = vld [vmem:[#allocation2 + $0xc8] sm:$0x1]
        %v1074 = vld [vmem:[#allocation2 + $0xd4] sm:$0x1]
        %vm1075 = vsmask.f32 3328
        %vm1076 = vsmask.f32 7440
        %vm1077 = vmor %vm1075, %vm1076
        %v1079 = vshrl.u32 %v1013, 16
        %v1081 = vrot.slane %v1079, 4
        %v1082 = vshll.u32 %v1013, 16
        %v1084 = vrot.slane %v1082, 5
        %v1085 = vor.u32 %v1081, %v1084
        %v1086 = vrot.slane %v1085, 4
        %v1088 = vshll.u32 %v1014, 16
        %v1090 = vrot.slane %v1088, 5
        %v1091 = vsel %vm1077, %v1086, %v1090
        %v1092 = vshrl.u32 %v1014, 16
        %v1094 = vrot.slane %v1092, 4
        %v1095 = vor.u32 %v1094, %v1090
        %v1096 = vrot.slane %v1095, 4
        %v1098 = vshll.u32 %v1057, 16
        %v1100 = vrot.slane %v1098, 5
        %v1101 = vsel %vm1077, %v1096, %v1100
        %v1103 = vshrl.u32 %v1015, 16
        %v1105 = vrot.slane %v1103, 4
        %v1106 = vshll.u32 %v1015, 16
        %v1108 = vrot.slane %v1106, 5
        %v1109 = vor.u32 %v1105, %v1108
        %v1110 = vrot.slane %v1109, 4
        %v1112 = vshll.u32 %v1016, 16
        %v1114 = vrot.slane %v1112, 5
        %v1115 = vsel %vm1077, %v1110, %v1114
        %v1116 = vshrl.u32 %v1016, 16
        %v1118 = vrot.slane %v1116, 4
        %v1119 = vor.u32 %v1118, %v1114
        %v1120 = vrot.slane %v1119, 4
        %v1122 = vshll.u32 %v1058, 16
        %v1124 = vrot.slane %v1122, 5
        %v1125 = vsel %vm1077, %v1120, %v1124
        %v1127 = vshrl.u32 %v1017, 16
        %v1129 = vrot.slane %v1127, 4
        %v1130 = vshll.u32 %v1017, 16
        %v1132 = vrot.slane %v1130, 5
        %v1133 = vor.u32 %v1129, %v1132
        %v1134 = vrot.slane %v1133, 4
        %v1136 = vshll.u32 %v1018, 16
        %v1138 = vrot.slane %v1136, 5
        %v1139 = vsel %vm1077, %v1134, %v1138
        %v1140 = vshrl.u32 %v1018, 16
        %v1142 = vrot.slane %v1140, 4
        %v1143 = vor.u32 %v1142, %v1138
        %v1144 = vrot.slane %v1143, 4
        %v1146 = vshll.u32 %v1059, 16
        %v1148 = vrot.slane %v1146, 5
        %v1149 = vsel %vm1077, %v1144, %v1148
        %v1151 = vshrl.u32 %v1019, 16
        %v1153 = vrot.slane %v1151, 4
        %v1154 = vshll.u32 %v1019, 16
        %v1156 = vrot.slane %v1154, 5
        %v1157 = vor.u32 %v1153, %v1156
        %v1158 = vrot.slane %v1157, 4
        %v1160 = vshll.u32 %v1020, 16
        %v1162 = vrot.slane %v1160, 5
        %v1163 = vsel %vm1077, %v1158, %v1162
        %v1164 = vshrl.u32 %v1020, 16
        %v1166 = vrot.slane %v1164, 4
        %v1167 = vor.u32 %v1166, %v1162
        %v1168 = vrot.slane %v1167, 4
        %v1170 = vshll.u32 %v1060, 16
        %v1172 = vrot.slane %v1170, 5
        %v1173 = vsel %vm1077, %v1168, %v1172
        %v1175 = vshrl.u32 %v1021, 16
        %v1177 = vrot.slane %v1175, 4
        %v1178 = vshll.u32 %v1021, 16
        %v1180 = vrot.slane %v1178, 5
        %v1181 = vor.u32 %v1177, %v1180
        %v1182 = vrot.slane %v1181, 4
        %v1184 = vshll.u32 %v1022, 16
        %v1186 = vrot.slane %v1184, 5
        %v1187 = vsel %vm1077, %v1182, %v1186
        %v1188 = vshrl.u32 %v1022, 16
        %v1190 = vrot.slane %v1188, 4
        %v1191 = vor.u32 %v1190, %v1186
        %v1192 = vrot.slane %v1191, 4
        %v1194 = vshll.u32 %v1061, 16
        %v1196 = vrot.slane %v1194, 5
        %v1197 = vsel %vm1077, %v1192, %v1196
        %v1199 = vshrl.u32 %v1023, 16
        %v1201 = vrot.slane %v1199, 4
        %v1202 = vshll.u32 %v1023, 16
        %v1204 = vrot.slane %v1202, 5
        %v1205 = vor.u32 %v1201, %v1204
        %v1206 = vrot.slane %v1205, 4
        %v1208 = vshll.u32 %v1024, 16
        %v1210 = vrot.slane %v1208, 5
        %v1211 = vsel %vm1077, %v1206, %v1210
        %v1212 = vshrl.u32 %v1024, 16
        %v1214 = vrot.slane %v1212, 4
        %v1215 = vor.u32 %v1214, %v1210
        %v1216 = vrot.slane %v1215, 4
        %v1218 = vshll.u32 %v1062, 16
        %v1220 = vrot.slane %v1218, 5
        %v1221 = vsel %vm1077, %v1216, %v1220
        %v1223 = vshrl.u32 %v1025, 16
        %v1225 = vrot.slane %v1223, 4
        %v1226 = vshll.u32 %v1025, 16
        %v1228 = vrot.slane %v1226, 5
        %v1229 = vor.u32 %v1225, %v1228
        %v1230 = vrot.slane %v1229, 4
        %v1232 = vshll.u32 %v1026, 16
        %v1234 = vrot.slane %v1232, 5
        %v1235 = vsel %vm1077, %v1230, %v1234
        %v1236 = vshrl.u32 %v1026, 16
        %v1238 = vrot.slane %v1236, 4
        %v1239 = vor.u32 %v1238, %v1234
        %v1240 = vrot.slane %v1239, 4
        %v1242 = vshll.u32 %v1063, 16
        %v1244 = vrot.slane %v1242, 5
        %v1245 = vsel %vm1077, %v1240, %v1244
        %v1247 = vshrl.u32 %v1027, 16
        %v1249 = vrot.slane %v1247, 4
        %v1250 = vshll.u32 %v1027, 16
        %v1252 = vrot.slane %v1250, 5
        %v1253 = vor.u32 %v1249, %v1252
        %v1254 = vrot.slane %v1253, 4
        %v1256 = vshll.u32 %v1028, 16
        %v1258 = vrot.slane %v1256, 5
        %v1259 = vsel %vm1077, %v1254, %v1258
        %v1260 = vshrl.u32 %v1028, 16
        %v1262 = vrot.slane %v1260, 4
        %v1263 = vor.u32 %v1262, %v1258
        %v1264 = vrot.slane %v1263, 4
        %v1266 = vshll.u32 %v1064, 16
        %v1268 = vrot.slane %v1266, 5
        %v1269 = vsel %vm1077, %v1264, %v1268
        %v1271 = vshrl.u32 %v1029, 16
        %v1273 = vrot.slane %v1271, 4
        %v1274 = vshll.u32 %v1029, 16
        %v1276 = vrot.slane %v1274, 5
        %v1277 = vor.u32 %v1273, %v1276
        %v1278 = vrot.slane %v1277, 4
        %v1280 = vshll.u32 %v1030, 16
        %v1282 = vrot.slane %v1280, 5
        %v1283 = vsel %vm1077, %v1278, %v1282
        %v1284 = vshrl.u32 %v1030, 16
        %v1286 = vrot.slane %v1284, 4
        %v1287 = vor.u32 %v1286, %v1282
        %v1288 = vrot.slane %v1287, 4
        %v1290 = vshll.u32 %v1065, 16
        %v1292 = vrot.slane %v1290, 5
        %v1293 = vsel %vm1077, %v1288, %v1292
        %v1295 = vshrl.u32 %v1031, 16
        %v1297 = vrot.slane %v1295, 4
        %v1298 = vshll.u32 %v1031, 16
        %v1300 = vrot.slane %v1298, 5
        %v1301 = vor.u32 %v1297, %v1300
        %v1302 = vrot.slane %v1301, 4
        %v1304 = vshll.u32 %v1032, 16
        %v1306 = vrot.slane %v1304, 5
        %v1307 = vsel %vm1077, %v1302, %v1306
        %v1308 = vshrl.u32 %v1032, 16
        %v1310 = vrot.slane %v1308, 4
        %v1311 = vor.u32 %v1310, %v1306
        %v1312 = vrot.slane %v1311, 4
        %v1314 = vshll.u32 %v1066, 16
        %v1316 = vrot.slane %v1314, 5
        %v1317 = vsel %vm1077, %v1312, %v1316
        %v1319 = vshrl.u32 %v1033, 16
        %v1321 = vrot.slane %v1319, 4
        %v1322 = vshll.u32 %v1033, 16
        %v1324 = vrot.slane %v1322, 5
        %v1325 = vor.u32 %v1321, %v1324
        %v1326 = vrot.slane %v1325, 4
        %v1328 = vshll.u32 %v1034, 16
        %v1330 = vrot.slane %v1328, 5
        %v1331 = vsel %vm1077, %v1326, %v1330
        %v1332 = vshrl.u32 %v1034, 16
        %v1334 = vrot.slane %v1332, 4
        %v1335 = vor.u32 %v1334, %v1330
        %v1336 = vrot.slane %v1335, 4
        %v1338 = vshll.u32 %v1067, 16
        %v1340 = vrot.slane %v1338, 5
        %v1341 = vsel %vm1077, %v1336, %v1340
        %v1343 = vshrl.u32 %v1035, 16
        %v1345 = vrot.slane %v1343, 4
        %v1346 = vshll.u32 %v1035, 16
        %v1348 = vrot.slane %v1346, 5
        %v1349 = vor.u32 %v1345, %v1348
        %v1350 = vrot.slane %v1349, 4
        %v1352 = vshll.u32 %v1036, 16
        %v1354 = vrot.slane %v1352, 5
        %v1355 = vsel %vm1077, %v1350, %v1354
        %v1356 = vshrl.u32 %v1036, 16
        %v1358 = vrot.slane %v1356, 4
        %v1359 = vor.u32 %v1358, %v1354
        %v1360 = vrot.slane %v1359, 4
        %v1362 = vshll.u32 %v1068, 16
        %v1364 = vrot.slane %v1362, 5
        %v1365 = vsel %vm1077, %v1360, %v1364
        %v1367 = vshrl.u32 %v1037, 16
        %v1369 = vrot.slane %v1367, 4
        %v1370 = vshll.u32 %v1037, 16
        %v1372 = vrot.slane %v1370, 5
        %v1373 = vor.u32 %v1369, %v1372
        %v1374 = vrot.slane %v1373, 4
        %v1376 = vshll.u32 %v1038, 16
        %v1378 = vrot.slane %v1376, 5
        %v1379 = vsel %vm1077, %v1374, %v1378
        %v1380 = vshrl.u32 %v1038, 16
        %v1382 = vrot.slane %v1380, 4
        %v1383 = vor.u32 %v1382, %v1378
        %v1384 = vrot.slane %v1383, 4
        %v1386 = vshll.u32 %v1069, 16
        %v1388 = vrot.slane %v1386, 5
        %v1389 = vsel %vm1077, %v1384, %v1388
        %v1391 = vshrl.u32 %v1039, 16
        %v1393 = vrot.slane %v1391, 4
        %v1394 = vshll.u32 %v1039, 16
        %v1396 = vrot.slane %v1394, 5
        %v1397 = vor.u32 %v1393, %v1396
        %v1398 = vrot.slane %v1397, 4
        %v1400 = vshll.u32 %v1040, 16
        %v1402 = vrot.slane %v1400, 5
        %v1403 = vsel %vm1077, %v1398, %v1402
        %v1404 = vshrl.u32 %v1040, 16
        %v1406 = vrot.slane %v1404, 4
        %v1407 = vor.u32 %v1406, %v1402
        %v1408 = vrot.slane %v1407, 4
        %v1410 = vshll.u32 %v1070, 16
        %v1412 = vrot.slane %v1410, 5
        %v1413 = vsel %vm1077, %v1408, %v1412
        %v1415 = vshrl.u32 %v1041, 16
        %v1417 = vrot.slane %v1415, 4
        %v1418 = vshll.u32 %v1041, 16
        %v1420 = vrot.slane %v1418, 5
        %v1421 = vor.u32 %v1417, %v1420
        %v1422 = vrot.slane %v1421, 4
        %v1424 = vshll.u32 %v1042, 16
        %v1426 = vrot.slane %v1424, 5
        %v1427 = vsel %vm1077, %v1422, %v1426
        %v1428 = vshrl.u32 %v1042, 16
        %v1430 = vrot.slane %v1428, 4
        %v1431 = vor.u32 %v1430, %v1426
        %v1432 = vrot.slane %v1431, 4
        %v1434 = vshll.u32 %v1071, 16
        %v1436 = vrot.slane %v1434, 5
        %v1437 = vsel %vm1077, %v1432, %v1436
        %v1439 = vshrl.u32 %v1043, 16
        %v1441 = vrot.slane %v1439, 4
        %v1442 = vshll.u32 %v1043, 16
        %v1444 = vrot.slane %v1442, 5
        %v1445 = vor.u32 %v1441, %v1444
        %v1446 = vrot.slane %v1445, 4
        %v1448 = vshll.u32 %v1044, 16
        %v1450 = vrot.slane %v1448, 5
        %v1451 = vsel %vm1077, %v1446, %v1450
        %v1452 = vshrl.u32 %v1044, 16
        %v1454 = vrot.slane %v1452, 4
        %v1455 = vor.u32 %v1454, %v1450
        %v1456 = vrot.slane %v1455, 4
        %v1458 = vshll.u32 %v1072, 16
        %v1460 = vrot.slane %v1458, 5
        %v1461 = vsel %vm1077, %v1456, %v1460
        %v1463 = vshrl.u32 %v1045, 16
        %v1465 = vrot.slane %v1463, 4
        %v1466 = vshll.u32 %v1045, 16
        %v1468 = vrot.slane %v1466, 5
        %v1469 = vor.u32 %v1465, %v1468
        %v1470 = vrot.slane %v1469, 4
        %v1472 = vshll.u32 %v1046, 16
        %v1474 = vrot.slane %v1472, 5
        %v1475 = vsel %vm1077, %v1470, %v1474
        %v1476 = vshrl.u32 %v1046, 16
        %v1478 = vrot.slane %v1476, 4
        %v1479 = vor.u32 %v1478, %v1474
        %v1480 = vrot.slane %v1479, 4
        %v1482 = vshll.u32 %v1073, 16
        %v1484 = vrot.slane %v1482, 5
        %v1485 = vsel %vm1077, %v1480, %v1484
        %v1487 = vshrl.u32 %v1047, 16
        %v1489 = vrot.slane %v1487, 4
        %v1490 = vshll.u32 %v1047, 16
        %v1492 = vrot.slane %v1490, 5
        %v1493 = vor.u32 %v1489, %v1492
        %v1494 = vrot.slane %v1493, 4
        %v1496 = vshll.u32 %v1048, 16
        %v1498 = vrot.slane %v1496, 5
        %v1499 = vsel %vm1077, %v1494, %v1498
        %v1500 = vshrl.u32 %v1048, 16
        %v1502 = vrot.slane %v1500, 4
        %v1503 = vor.u32 %v1502, %v1498
        %v1504 = vrot.slane %v1503, 4
        %v1506 = vshll.u32 %v1074, 16
        %v1508 = vrot.slane %v1506, 5
        %v1509 = vsel %vm1077, %v1504, %v1508
        %s1510 = scalar_lea.vmem [#allocation9], 32
        %v1511 = vld [vmem:[%s1510] sm:$0xf]
        %v1512 = vld [vmem:[%s1510 + $0x4] sm:$0xf]
        %v1513 = vld [vmem:[%s1510 + $0x8] sm:$0xf]
        %v1514 = vld [vmem:[%s1510 + $0xc] sm:$0xf]
        %v1515 = vld [vmem:[%s1510 + $0x10] sm:$0xf]
        %v1516 = vld [vmem:[%s1510 + $0x14] sm:$0xf]
        %v1517 = vld [vmem:[%s1510 + $0x18] sm:$0xf]
        %v1518 = vld [vmem:[%s1510 + $0x1c] sm:$0xf]
        %v1519 = vunpack.c.l.b16 %v1091
        %v1520 = vunpack.c.l.b16 %v1101
        %v1521 = vunpack.c.l.b16 %v1115
        %v1522 = vunpack.c.l.b16 %v1125
        %v1523 = vunpack.c.l.b16 %v1139
        %v1524 = vunpack.c.l.b16 %v1149
        %v1525 = vunpack.c.l.b16 %v1163
        %v1526 = vunpack.c.l.b16 %v1173
        %v1527 = vunpack.c.l.b16 %v1187
        %v1528 = vunpack.c.l.b16 %v1197
        %v1529 = vunpack.c.l.b16 %v1211
        %v1530 = vunpack.c.l.b16 %v1221
        %v1531 = vunpack.c.l.b16 %v1235
        %v1532 = vunpack.c.l.b16 %v1245
        %v1533 = vunpack.c.l.b16 %v1259
        %v1534 = vunpack.c.l.b16 %v1269
        %v1535 = vunpack.c.l.b16 %v1283
        %v1536 = vunpack.c.l.b16 %v1293
        %v1537 = vunpack.c.l.b16 %v1307
        %v1538 = vunpack.c.l.b16 %v1317
        %v1539 = vunpack.c.l.b16 %v1331
        %v1540 = vunpack.c.l.b16 %v1341
        %v1541 = vunpack.c.l.b16 %v1355
        %v1542 = vunpack.c.l.b16 %v1365
        %v1543 = vunpack.c.l.b16 %v1379
        %v1544 = vunpack.c.l.b16 %v1389
        %v1545 = vunpack.c.l.b16 %v1403
        %v1546 = vunpack.c.l.b16 %v1413
        %v1547 = vunpack.c.l.b16 %v1427
        %v1548 = vunpack.c.l.b16 %v1437
        %v1549 = vunpack.c.l.b16 %v1451
        %v1550 = vunpack.c.l.b16 %v1461
        %v1551 = vunpack.c.l.b16 %v1475
        %v1552 = vunpack.c.l.b16 %v1485
        %v1553 = vunpack.c.l.b16 %v1499
        %v1554 = vunpack.c.l.b16 %v1509
        %v1555 = vpack.c.b16 %v1520, %v1519
        %v1556 = vpack.c.b16 %v1522, %v1521
        %v1557 = vpack.c.b16 %v1524, %v1523
        %v1558 = vpack.c.b16 %v1526, %v1525
        %v1559 = vpack.c.b16 %v1528, %v1527
        %v1560 = vpack.c.b16 %v1530, %v1529
        %v1561 = vpack.c.b16 %v1532, %v1531
        %v1562 = vpack.c.b16 %v1534, %v1533
        %v1563 = vpack.c.b16 %v1536, %v1535
        %v1564 = vpack.c.b16 %v1538, %v1537
        %v1565 = vpack.c.b16 %v1540, %v1539
        %v1566 = vpack.c.b16 %v1542, %v1541
        %v1567 = vpack.c.b16 %v1544, %v1543
        %v1568 = vpack.c.b16 %v1546, %v1545
        %v1569 = vpack.c.b16 %v1548, %v1547
        %v1570 = vpack.c.b16 %v1550, %v1549
        %v1571 = vpack.c.b16 %v1552, %v1551
        %v1572 = vpack.c.b16 %v1554, %v1553
        %v1581 = vunpack.c.l.b16 %v1511
        %v1582 = vunpack.c.l.b16 %v1512
        %v1583 = vunpack.c.l.b16 %v1513
        %v1584 = vunpack.c.l.b16 %v1514
        %v1585 = vunpack.c.l.b16 %v1515
        %v1586 = vunpack.c.l.b16 %v1516
        %v1587 = vunpack.c.l.b16 %v1517
        %v1588 = vunpack.c.l.b16 %v1518
        %v1589 = vpack.c.b16 %v1582, %v1581
        %v1590 = vpack.c.b16 %v1584, %v1583
        %v1591 = vpack.c.b16 %v1586, %v1585
        %v1592 = vpack.c.b16 %v1588, %v1587
        %vm1597 = vcmask 523264
        %v1599 = vsel %vm1597, %v1555, 0
        %v1602 = vsel %vm1597, %v1556, 0
        %v1605 = vsel %vm1597, %v1557, 0
        %v1608 = vsel %vm1597, %v1558, 0
        %v1611 = vsel %vm1597, %v1559, 0
        %v1614 = vsel %vm1597, %v1560, 0
        %v1617 = vsel %vm1597, %v1561, 0
        %v1620 = vsel %vm1597, %v1562, 0
        %v1623 = vsel %vm1597, %v1563, 0
        %v1626 = vsel %vm1597, %v1564, 0
        %v1629 = vsel %vm1597, %v1565, 0
        %v1632 = vsel %vm1597, %v1566, 0
        %v1635 = vsel %vm1597, %v1567, 0
        %v1638 = vsel %vm1597, %v1568, 0
        %v1641 = vsel %vm1597, %v1569, 0
        %v1644 = vsel %vm1597, %v1570, 0
        %v1647 = vsel %vm1597, %v1571, 0
        %v1650 = vsel %vm1597, %v1572, 0
        %1652 = vmatprep.subr.bf16.mxu0 0
        %1653 = vmatpush1.bf16.msra.mxu0 %v1589
        %1654 = vmatprep.subr.bf16.mxu0 0
        %1655 = vmatpush1.bf16.msra.mxu0 %v1590
        %1656 = vmatprep.subr.bf16.mxu0 0
        %1657 = vmatpush1.bf16.msra.mxu0 %v1591
        %1658 = vmatprep.subr.bf16.mxu0 0
        %1659 = vmatpush1.bf16.msra.mxu0 %v1592
        %1660 = vmatprep.subr.bf16.mxu0 0
        %1661 = vmatpush1.bf16.msra.mxu0 0
        %1662 = vmatprep.subr.bf16.mxu0 0
        %1663 = vmatpush1.bf16.msra.mxu0 0
        %1664 = vmatprep.subr.bf16.mxu0 0
        %1665 = vmatpush1.bf16.msra.mxu0 0
        %1666 = vmatprep.subr.bf16.mxu0 0
        %1667 = vmatpush1.bf16.msra.mxu0 0
        %1668 = vmatprep.subr.bf16.mxu0 0
        %1669 = vmatpush1.bf16.msra.mxu0 0
        %1670 = vmatprep.subr.bf16.mxu0 0
        %1671 = vmatpush1.bf16.msra.mxu0 0
        %1672 = vmatprep.subr.bf16.mxu0 0
        %1673 = vmatpush1.bf16.msra.mxu0 0
        %1674 = vmatprep.subr.bf16.mxu0 0
        %1675 = vmatpush1.bf16.msra.mxu0 0
        %1676 = vmatprep.subr.bf16.mxu0 0
        %1677 = vmatpush1.bf16.msra.mxu0 0
        %1678 = vmatprep.subr.bf16.mxu0 0
        %1679 = vmatpush1.bf16.msra.mxu0 0
        %1680 = vmatprep.subr.bf16.mxu0 0
        %1681 = vmatpush1.bf16.msra.mxu0 0
        %1682 = vmatprep.subr.bf16.mxu0 0
        %1683 = vmatpush1.bf16.msra.mxu0 0
        %1684 = vmatprep.mubr.bf16.mxu0 0
        %1685 = vmatmul.mubr.bf16.gmra.mrb[0].mxu0 %v1599
        %v1686 = vpop.f32.mrb[0].mxu0
        %v1687 = vadd.f32 0.0, %v1686
        %v1688 = vpop.f32.mrb[0].mxu0
        %v1689 = vpop.f32.mrb[0].mxu0
        %v1690 = vadd.f32 0.0, %v1689
        %v1691 = vpop.f32.mrb[0].mxu0
        %1692 = vmatprep.mubr.bf16.mxu0 0
        %1693 = vmatmul.mubr.bf16.gmra.mrb[0].mxu0 %v1602
        %v1694 = vpop.f32.mrb[0].mxu0
        %v1695 = vadd.f32 0.0, %v1694
        %v1696 = vpop.f32.mrb[0].mxu0
        %v1697 = vpop.f32.mrb[0].mxu0
        %v1698 = vadd.f32 0.0, %v1697
        %v1699 = vpop.f32.mrb[0].mxu0
        %1700 = vmatprep.mubr.bf16.mxu0 0
        %1701 = vmatmul.mubr.bf16.gmra.mrb[0].mxu0 %v1605
        %v1702 = vpop.f32.mrb[0].mxu0
        %v1703 = vadd.f32 0.0, %v1702
        %v1704 = vpop.f32.mrb[0].mxu0
        %v1705 = vpop.f32.mrb[0].mxu0
        %v1706 = vadd.f32 0.0, %v1705
        %v1707 = vpop.f32.mrb[0].mxu0
        %1708 = vmatprep.mubr.bf16.mxu0 0
        %1709 = vmatmul.mubr.bf16.gmra.mrb[0].mxu0 %v1608
        %v1710 = vpop.f32.mrb[0].mxu0
        %v1711 = vadd.f32 0.0, %v1710
        %v1712 = vpop.f32.mrb[0].mxu0
        %v1713 = vpop.f32.mrb[0].mxu0
        %v1714 = vadd.f32 0.0, %v1713
        %v1715 = vpop.f32.mrb[0].mxu0
        %1716 = vmatprep.mubr.bf16.mxu0 0
        %1717 = vmatmul.mubr.bf16.gmra.mrb[0].mxu0 %v1611
        %v1718 = vpop.f32.mrb[0].mxu0
        %v1719 = vadd.f32 0.0, %v1718
        %v1720 = vpop.f32.mrb[0].mxu0
        %v1721 = vpop.f32.mrb[0].mxu0
        %v1722 = vadd.f32 0.0, %v1721
        %v1723 = vpop.f32.mrb[0].mxu0
        %1724 = vmatprep.mubr.bf16.mxu0 0
        %1725 = vmatmul.mubr.bf16.gmra.mrb[0].mxu0 %v1614
        %v1726 = vpop.f32.mrb[0].mxu0
        %v1727 = vadd.f32 0.0, %v1726
        %v1728 = vpop.f32.mrb[0].mxu0
        %v1729 = vpop.f32.mrb[0].mxu0
        %v1730 = vadd.f32 0.0, %v1729
        %v1731 = vpop.f32.mrb[0].mxu0
        %1732 = vmatprep.mubr.bf16.mxu0 0
        %1733 = vmatmul.mubr.bf16.gmra.mrb[0].mxu0 %v1617
        %v1734 = vpop.f32.mrb[0].mxu0
        %v1735 = vadd.f32 0.0, %v1734
        %v1736 = vpop.f32.mrb[0].mxu0
        %v1737 = vpop.f32.mrb[0].mxu0
        %v1738 = vadd.f32 0.0, %v1737
        %v1739 = vpop.f32.mrb[0].mxu0
        %1740 = vmatprep.mubr.bf16.mxu0 0
        %1741 = vmatmul.mubr.bf16.gmra.mrb[0].mxu0 %v1620
        %v1742 = vpop.f32.mrb[0].mxu0
        %v1743 = vadd.f32 0.0, %v1742
        %v1744 = vpop.f32.mrb[0].mxu0
        %v1745 = vpop.f32.mrb[0].mxu0
        %v1746 = vadd.f32 0.0, %v1745
        %v1747 = vpop.f32.mrb[0].mxu0
        %1748 = vmatprep.mubr.bf16.mxu0 0
        %1749 = vmatmul.mubr.bf16.gmra.mrb[0].mxu0 %v1623
        %v1750 = vpop.f32.mrb[0].mxu0
        %v1751 = vadd.f32 0.0, %v1750
        %v1752 = vpop.f32.mrb[0].mxu0
        %v1753 = vpop.f32.mrb[0].mxu0
        %v1754 = vadd.f32 0.0, %v1753
        %v1755 = vpop.f32.mrb[0].mxu0
        %1756 = vmatprep.mubr.bf16.mxu0 0
        %1757 = vmatmul.mubr.bf16.gmra.mrb[0].mxu0 %v1626
        %v1758 = vpop.f32.mrb[0].mxu0
        %v1759 = vadd.f32 0.0, %v1758
        %v1760 = vpop.f32.mrb[0].mxu0
        %v1761 = vpop.f32.mrb[0].mxu0
        %v1762 = vadd.f32 0.0, %v1761
        %v1763 = vpop.f32.mrb[0].mxu0
        %1764 = vmatprep.mubr.bf16.mxu0 0
        %1765 = vmatmul.mubr.bf16.gmra.mrb[0].mxu0 %v1629
        %v1766 = vpop.f32.mrb[0].mxu0
        %v1767 = vadd.f32 0.0, %v1766
        %v1768 = vpop.f32.mrb[0].mxu0
        %v1769 = vpop.f32.mrb[0].mxu0
        %v1770 = vadd.f32 0.0, %v1769
        %v1771 = vpop.f32.mrb[0].mxu0
        %1772 = vmatprep.mubr.bf16.mxu0 0
        %1773 = vmatmul.mubr.bf16.gmra.mrb[0].mxu0 %v1632
        %v1774 = vpop.f32.mrb[0].mxu0
        %v1775 = vadd.f32 0.0, %v1774
        %v1776 = vpop.f32.mrb[0].mxu0
        %v1777 = vpop.f32.mrb[0].mxu0
        %v1778 = vadd.f32 0.0, %v1777
        %v1779 = vpop.f32.mrb[0].mxu0
        %1780 = vmatprep.mubr.bf16.mxu0 0
        %1781 = vmatmul.mubr.bf16.gmra.mrb[0].mxu0 %v1635
        %v1782 = vpop.f32.mrb[0].mxu0
        %v1783 = vadd.f32 0.0, %v1782
        %v1784 = vpop.f32.mrb[0].mxu0
        %v1785 = vpop.f32.mrb[0].mxu0
        %v1786 = vadd.f32 0.0, %v1785
        %v1787 = vpop.f32.mrb[0].mxu0
        %1788 = vmatprep.mubr.bf16.mxu0 0
        %1789 = vmatmul.mubr.bf16.gmra.mrb[0].mxu0 %v1638
        %v1790 = vpop.f32.mrb[0].mxu0
        %v1791 = vadd.f32 0.0, %v1790
        %v1792 = vpop.f32.mrb[0].mxu0
        %v1793 = vpop.f32.mrb[0].mxu0
        %v1794 = vadd.f32 0.0, %v1793
        %v1795 = vpop.f32.mrb[0].mxu0
        %1796 = vmatprep.mubr.bf16.mxu0 0
        %1797 = vmatmul.mubr.bf16.gmra.mrb[0].mxu0 %v1641
        %v1798 = vpop.f32.mrb[0].mxu0
        %v1799 = vadd.f32 0.0, %v1798
        %v1800 = vpop.f32.mrb[0].mxu0
        %v1801 = vpop.f32.mrb[0].mxu0
        %v1802 = vadd.f32 0.0, %v1801
        %v1803 = vpop.f32.mrb[0].mxu0
        %1804 = vmatprep.mubr.bf16.mxu0 0
        %1805 = vmatmul.mubr.bf16.gmra.mrb[0].mxu0 %v1644
        %v1806 = vpop.f32.mrb[0].mxu0
        %v1807 = vadd.f32 0.0, %v1806
        %v1808 = vpop.f32.mrb[0].mxu0
        %v1809 = vpop.f32.mrb[0].mxu0
        %v1810 = vadd.f32 0.0, %v1809
        %v1811 = vpop.f32.mrb[0].mxu0
        %1812 = vmatprep.mubr.bf16.mxu0 0
        %1813 = vmatmul.mubr.bf16.gmra.mrb[0].mxu0 %v1647
        %v1814 = vpop.f32.mrb[0].mxu0
        %v1815 = vadd.f32 0.0, %v1814
        %v1816 = vpop.f32.mrb[0].mxu0
        %v1817 = vpop.f32.mrb[0].mxu0
        %v1818 = vadd.f32 0.0, %v1817
        %v1819 = vpop.f32.mrb[0].mxu0
        %1820 = vmatprep.mubr.bf16.mxu0 0
        %1821 = vmatmul.mubr.bf16.gmra.mrb[0].mxu0 %v1650
        %v1822 = vpop.f32.mrb[0].mxu0
        %v1823 = vadd.f32 0.0, %v1822
        %v1824 = vpop.f32.mrb[0].mxu0
        %v1825 = vpop.f32.mrb[0].mxu0
        %v1826 = vadd.f32 0.0, %v1825
        %v1827 = vpop.f32.mrb[0].mxu0
        %1828 = vdwg.mxu0
        %v1865 = vunpack.c.l.b16 %v1013
        %v1866 = vunpack.c.l.b16 %v1014
        %v1867 = vunpack.c.l.b16 %v1015
        %v1868 = vunpack.c.l.b16 %v1016
        %v1869 = vunpack.c.l.b16 %v1017
        %v1870 = vunpack.c.l.b16 %v1018
        %v1871 = vunpack.c.l.b16 %v1019
        %v1872 = vunpack.c.l.b16 %v1020
        %v1873 = vunpack.c.l.b16 %v1021
        %v1874 = vunpack.c.l.b16 %v1022
        %v1875 = vunpack.c.l.b16 %v1023
        %v1876 = vunpack.c.l.b16 %v1024
        %v1877 = vunpack.c.l.b16 %v1025
        %v1878 = vunpack.c.l.b16 %v1026
        %v1879 = vunpack.c.l.b16 %v1027
        %v1880 = vunpack.c.l.b16 %v1028
        %v1881 = vunpack.c.l.b16 %v1029
        %v1882 = vunpack.c.l.b16 %v1030
        %v1883 = vunpack.c.l.b16 %v1031
        %v1884 = vunpack.c.l.b16 %v1032
        %v1885 = vunpack.c.l.b16 %v1033
        %v1886 = vunpack.c.l.b16 %v1034
        %v1887 = vunpack.c.l.b16 %v1035
        %v1888 = vunpack.c.l.b16 %v1036
        %v1889 = vunpack.c.l.b16 %v1037
        %v1890 = vunpack.c.l.b16 %v1038
        %v1891 = vunpack.c.l.b16 %v1039
        %v1892 = vunpack.c.l.b16 %v1040
        %v1893 = vunpack.c.l.b16 %v1041
        %v1894 = vunpack.c.l.b16 %v1042
        %v1895 = vunpack.c.l.b16 %v1043
        %v1896 = vunpack.c.l.b16 %v1044
        %v1897 = vunpack.c.l.b16 %v1045
        %v1898 = vunpack.c.l.b16 %v1046
        %v1899 = vunpack.c.l.b16 %v1047
        %v1900 = vunpack.c.l.b16 %v1048
        %v1901 = vpack.c.b16 %v1866, %v1865
        %v1902 = vpack.c.b16 %v1868, %v1867
        %v1903 = vpack.c.b16 %v1870, %v1869
        %v1904 = vpack.c.b16 %v1872, %v1871
        %v1905 = vpack.c.b16 %v1874, %v1873
        %v1906 = vpack.c.b16 %v1876, %v1875
        %v1907 = vpack.c.b16 %v1878, %v1877
        %v1908 = vpack.c.b16 %v1880, %v1879
        %v1909 = vpack.c.b16 %v1882, %v1881
        %v1910 = vpack.c.b16 %v1884, %v1883
        %v1911 = vpack.c.b16 %v1886, %v1885
        %v1912 = vpack.c.b16 %v1888, %v1887
        %v1913 = vpack.c.b16 %v1890, %v1889
        %v1914 = vpack.c.b16 %v1892, %v1891
        %v1915 = vpack.c.b16 %v1894, %v1893
        %v1916 = vpack.c.b16 %v1896, %v1895
        %v1917 = vpack.c.b16 %v1898, %v1897
        %v1918 = vpack.c.b16 %v1900, %v1899
        %v1927 = vunpack.c.l.b16 %v1049
        %v1928 = vunpack.c.l.b16 %v1050
        %v1929 = vunpack.c.l.b16 %v1051
        %v1930 = vunpack.c.l.b16 %v1052
        %v1931 = vunpack.c.l.b16 %v1053
        %v1932 = vunpack.c.l.b16 %v1054
        %v1933 = vunpack.c.l.b16 %v1055
        %v1934 = vunpack.c.l.b16 %v1056
        %v1935 = vpack.c.b16 %v1928, %v1927
        %v1936 = vpack.c.b16 %v1930, %v1929
        %v1937 = vpack.c.b16 %v1932, %v1931
        %v1938 = vpack.c.b16 %v1934, %v1933
        %v1944 = vsel %vm1597, %v1901, 0
        %v1947 = vsel %vm1597, %v1902, 0
        %v1950 = vsel %vm1597, %v1903, 0
        %v1953 = vsel %vm1597, %v1904, 0
        %v1956 = vsel %vm1597, %v1905, 0
        %v1959 = vsel %vm1597, %v1906, 0
        %v1962 = vsel %vm1597, %v1907, 0
        %v1965 = vsel %vm1597, %v1908, 0
        %v1968 = vsel %vm1597, %v1909, 0
        %v1971 = vsel %vm1597, %v1910, 0
        %v1974 = vsel %vm1597, %v1911, 0
        %v1977 = vsel %vm1597, %v1912, 0
        %v1980 = vsel %vm1597, %v1913, 0
        %v1983 = vsel %vm1597, %v1914, 0
        %v1986 = vsel %vm1597, %v1915, 0
        %v1989 = vsel %vm1597, %v1916, 0
        %v1992 = vsel %vm1597, %v1917, 0
        %v1995 = vsel %vm1597, %v1918, 0
        %1997 = vmatprep.subr.bf16.mxu0 0
        %1998 = vmatpush1.bf16.msra.mxu0 %v1935
        %1999 = vmatprep.subr.bf16.mxu0 0
        %2000 = vmatpush1.bf16.msra.mxu0 %v1936
        %2001 = vmatprep.subr.bf16.mxu0 0
        %2002 = vmatpush1.bf16.msra.mxu0 %v1937
        %2003 = vmatprep.subr.bf16.mxu0 0
        %2004 = vmatpush1.bf16.msra.mxu0 %v1938
        %2005 = vmatprep.subr.bf16.mxu0 0
        %2006 = vmatpush1.bf16.msra.mxu0 0
        %2007 = vmatprep.subr.bf16.mxu0 0
        %2008 = vmatpush1.bf16.msra.mxu0 0
        %2009 = vmatprep.subr.bf16.mxu0 0
        %2010 = vmatpush1.bf16.msra.mxu0 0
        %2011 = vmatprep.subr.bf16.mxu0 0
        %2012 = vmatpush1.bf16.msra.mxu0 0
        %2013 = vmatprep.subr.bf16.mxu0 0
        %2014 = vmatpush1.bf16.msra.mxu0 0
        %2015 = vmatprep.subr.bf16.mxu0 0
        %2016 = vmatpush1.bf16.msra.mxu0 0
        %2017 = vmatprep.subr.bf16.mxu0 0
        %2018 = vmatpush1.bf16.msra.mxu0 0
        %2019 = vmatprep.subr.bf16.mxu0 0
        %2020 = vmatpush1.bf16.msra.mxu0 0
        %2021 = vmatprep.subr.bf16.mxu0 0
        %2022 = vmatpush1.bf16.msra.mxu0 0
        %2023 = vmatprep.subr.bf16.mxu0 0
        %2024 = vmatpush1.bf16.msra.mxu0 0
        %2025 = vmatprep.subr.bf16.mxu0 0
        %2026 = vmatpush1.bf16.msra.mxu0 0
        %2027 = vmatprep.subr.bf16.mxu0 0
        %2028 = vmatpush1.bf16.msra.mxu0 0
        %2029 = vmatprep.mubr.bf16.mxu0 0
        %2030 = vmatmul.mubr.bf16.gmra.mrb[0].mxu0 %v1944
        %v2031 = vpop.f32.mrb[0].mxu0
        %v2032 = vadd.f32 %v1687, %v2031
        %v2033 = vpop.f32.mrb[0].mxu0
        %v2034 = vpop.f32.mrb[0].mxu0
        %v2035 = vadd.f32 %v1690, %v2034
        %v2036 = vpop.f32.mrb[0].mxu0
        %2037 = vmatprep.mubr.bf16.mxu0 0
        %2038 = vmatmul.mubr.bf16.gmra.mrb[0].mxu0 %v1947
        %v2039 = vpop.f32.mrb[0].mxu0
        %v2040 = vadd.f32 %v1695, %v2039
        %v2041 = vpop.f32.mrb[0].mxu0
        %v2042 = vpop.f32.mrb[0].mxu0
        %v2043 = vadd.f32 %v1698, %v2042
        %v2044 = vpop.f32.mrb[0].mxu0
        %2045 = vmatprep.mubr.bf16.mxu0 0
        %2046 = vmatmul.mubr.bf16.gmra.mrb[0].mxu0 %v1950
        %v2047 = vpop.f32.mrb[0].mxu0
        %v2048 = vadd.f32 %v1703, %v2047
        %v2049 = vpop.f32.mrb[0].mxu0
        %v2050 = vpop.f32.mrb[0].mxu0
        %v2051 = vadd.f32 %v1706, %v2050
        %v2052 = vpop.f32.mrb[0].mxu0
        %2053 = vmatprep.mubr.bf16.mxu0 0
        %2054 = vmatmul.mubr.bf16.gmra.mrb[0].mxu0 %v1953
        %v2055 = vpop.f32.mrb[0].mxu0
        %v2056 = vadd.f32 %v1711, %v2055
        %v2057 = vpop.f32.mrb[0].mxu0
        %v2058 = vpop.f32.mrb[0].mxu0
        %v2059 = vadd.f32 %v1714, %v2058
        %v2060 = vpop.f32.mrb[0].mxu0
        %2061 = vmatprep.mubr.bf16.mxu0 0
        %2062 = vmatmul.mubr.bf16.gmra.mrb[0].mxu0 %v1956
        %v2063 = vpop.f32.mrb[0].mxu0
        %v2064 = vadd.f32 %v1719, %v2063
        %v2065 = vpop.f32.mrb[0].mxu0
        %v2066 = vpop.f32.mrb[0].mxu0
        %v2067 = vadd.f32 %v1722, %v2066
        %v2068 = vpop.f32.mrb[0].mxu0
        %2069 = vmatprep.mubr.bf16.mxu0 0
        %2070 = vmatmul.mubr.bf16.gmra.mrb[0].mxu0 %v1959
        %v2071 = vpop.f32.mrb[0].mxu0
        %v2072 = vadd.f32 %v1727, %v2071
        %v2073 = vpop.f32.mrb[0].mxu0
        %v2074 = vpop.f32.mrb[0].mxu0
        %v2075 = vadd.f32 %v1730, %v2074
        %v2076 = vpop.f32.mrb[0].mxu0
        %2077 = vmatprep.mubr.bf16.mxu0 0
        %2078 = vmatmul.mubr.bf16.gmra.mrb[0].mxu0 %v1962
        %v2079 = vpop.f32.mrb[0].mxu0
        %v2080 = vadd.f32 %v1735, %v2079
        %v2081 = vpop.f32.mrb[0].mxu0
        %v2082 = vpop.f32.mrb[0].mxu0
        %v2083 = vadd.f32 %v1738, %v2082
        %v2084 = vpop.f32.mrb[0].mxu0
        %2085 = vmatprep.mubr.bf16.mxu0 0
        %2086 = vmatmul.mubr.bf16.gmra.mrb[0].mxu0 %v1965
        %v2087 = vpop.f32.mrb[0].mxu0
        %v2088 = vadd.f32 %v1743, %v2087
        %v2089 = vpop.f32.mrb[0].mxu0
        %v2090 = vpop.f32.mrb[0].mxu0
        %v2091 = vadd.f32 %v1746, %v2090
        %v2092 = vpop.f32.mrb[0].mxu0
        %2093 = vmatprep.mubr.bf16.mxu0 0
        %2094 = vmatmul.mubr.bf16.gmra.mrb[0].mxu0 %v1968
        %v2095 = vpop.f32.mrb[0].mxu0
        %v2096 = vadd.f32 %v1751, %v2095
        %v2097 = vpop.f32.mrb[0].mxu0
        %v2098 = vpop.f32.mrb[0].mxu0
        %v2099 = vadd.f32 %v1754, %v2098
        %v2100 = vpop.f32.mrb[0].mxu0
        %2101 = vmatprep.mubr.bf16.mxu0 0
        %2102 = vmatmul.mubr.bf16.gmra.mrb[0].mxu0 %v1971
        %v2103 = vpop.f32.mrb[0].mxu0
        %v2104 = vadd.f32 %v1759, %v2103
        %v2105 = vpop.f32.mrb[0].mxu0
        %v2106 = vpop.f32.mrb[0].mxu0
        %v2107 = vadd.f32 %v1762, %v2106
        %v2108 = vpop.f32.mrb[0].mxu0
        %2109 = vmatprep.mubr.bf16.mxu0 0
        %2110 = vmatmul.mubr.bf16.gmra.mrb[0].mxu0 %v1974
        %v2111 = vpop.f32.mrb[0].mxu0
        %v2112 = vadd.f32 %v1767, %v2111
        %v2113 = vpop.f32.mrb[0].mxu0
        %v2114 = vpop.f32.mrb[0].mxu0
        %v2115 = vadd.f32 %v1770, %v2114
        %v2116 = vpop.f32.mrb[0].mxu0
        %2117 = vmatprep.mubr.bf16.mxu0 0
        %2118 = vmatmul.mubr.bf16.gmra.mrb[0].mxu0 %v1977
        %v2119 = vpop.f32.mrb[0].mxu0
        %v2120 = vadd.f32 %v1775, %v2119
        %v2121 = vpop.f32.mrb[0].mxu0
        %v2122 = vpop.f32.mrb[0].mxu0
        %v2123 = vadd.f32 %v1778, %v2122
        %v2124 = vpop.f32.mrb[0].mxu0
        %2125 = vmatprep.mubr.bf16.mxu0 0
        %2126 = vmatmul.mubr.bf16.gmra.mrb[0].mxu0 %v1980
        %v2127 = vpop.f32.mrb[0].mxu0
        %v2128 = vadd.f32 %v1783, %v2127
        %v2129 = vpop.f32.mrb[0].mxu0
        %v2130 = vpop.f32.mrb[0].mxu0
        %v2131 = vadd.f32 %v1786, %v2130
        %v2132 = vpop.f32.mrb[0].mxu0
        %2133 = vmatprep.mubr.bf16.mxu0 0
        %2134 = vmatmul.mubr.bf16.gmra.mrb[0].mxu0 %v1983
        %v2135 = vpop.f32.mrb[0].mxu0
        %v2136 = vadd.f32 %v1791, %v2135
        %v2137 = vpop.f32.mrb[0].mxu0
        %v2138 = vpop.f32.mrb[0].mxu0
        %v2139 = vadd.f32 %v1794, %v2138
        %v2140 = vpop.f32.mrb[0].mxu0
        %2141 = vmatprep.mubr.bf16.mxu0 0
        %2142 = vmatmul.mubr.bf16.gmra.mrb[0].mxu0 %v1986
        %v2143 = vpop.f32.mrb[0].mxu0
        %v2144 = vadd.f32 %v1799, %v2143
        %v2145 = vpop.f32.mrb[0].mxu0
        %v2146 = vpop.f32.mrb[0].mxu0
        %v2147 = vadd.f32 %v1802, %v2146
        %v2148 = vpop.f32.mrb[0].mxu0
        %2149 = vmatprep.mubr.bf16.mxu0 0
        %2150 = vmatmul.mubr.bf16.gmra.mrb[0].mxu0 %v1989
        %v2151 = vpop.f32.mrb[0].mxu0
        %v2152 = vadd.f32 %v1807, %v2151
        %v2153 = vpop.f32.mrb[0].mxu0
        %v2154 = vpop.f32.mrb[0].mxu0
        %v2155 = vadd.f32 %v1810, %v2154
        %v2156 = vpop.f32.mrb[0].mxu0
        %2157 = vmatprep.mubr.bf16.mxu0 0
        %2158 = vmatmul.mubr.bf16.gmra.mrb[0].mxu0 %v1992
        %v2159 = vpop.f32.mrb[0].mxu0
        %v2160 = vadd.f32 %v1815, %v2159
        %v2161 = vpop.f32.mrb[0].mxu0
        %v2162 = vpop.f32.mrb[0].mxu0
        %v2163 = vadd.f32 %v1818, %v2162
        %v2164 = vpop.f32.mrb[0].mxu0
        %2165 = vmatprep.mubr.bf16.mxu0 0
        %2166 = vmatmul.mubr.bf16.gmra.mrb[0].mxu0 %v1995
        %v2167 = vpop.f32.mrb[0].mxu0
        %v2168 = vadd.f32 %v1823, %v2167
        %v2169 = vpop.f32.mrb[0].mxu0
        %v2170 = vpop.f32.mrb[0].mxu0
        %v2171 = vadd.f32 %v1826, %v2170
        %v2172 = vpop.f32.mrb[0].mxu0
        %2173 = vdwg.mxu0
        %v2174 = vld [vmem:[#allocation2] sm:$0xe]
        %v2175 = vld [vmem:[#allocation2 + $0xc] sm:$0xe]
        %v2176 = vld [vmem:[#allocation2 + $0x18] sm:$0xe]
        %v2177 = vld [vmem:[#allocation2 + $0x24] sm:$0xe]
        %v2178 = vld [vmem:[#allocation2 + $0x30] sm:$0xe]
        %v2179 = vld [vmem:[#allocation2 + $0x3c] sm:$0xe]
        %v2180 = vld [vmem:[#allocation2 + $0x48] sm:$0xe]
        %v2181 = vld [vmem:[#allocation2 + $0x54] sm:$0xe]
        %v2182 = vld [vmem:[#allocation2 + $0x60] sm:$0xe]
        %v2183 = vld [vmem:[#allocation2 + $0x6c] sm:$0xe]
        %v2184 = vld [vmem:[#allocation2 + $0x78] sm:$0xe]
        %v2185 = vld [vmem:[#allocation2 + $0x84] sm:$0xe]
        %v2186 = vld [vmem:[#allocation2 + $0x90] sm:$0xe]
        %v2187 = vld [vmem:[#allocation2 + $0x9c] sm:$0xe]
        %v2188 = vld [vmem:[#allocation2 + $0xa8] sm:$0xe]
        %v2189 = vld [vmem:[#allocation2 + $0xb4] sm:$0xe]
        %v2190 = vld [vmem:[#allocation2 + $0xc0] sm:$0xe]
        %v2191 = vld [vmem:[#allocation2 + $0xcc] sm:$0xe]
        %vm2228 = vcmask 1042432
        %vm2229 = vcmask 1046532
        %vm2230 = vmor %vm2228, %vm2229
        %v2231 = vrot.slane %v2174, 5
        %v2232 = vrot.slane %v2231, 4
        %v2233 = vrot.slane %v1014, 5
        %v2234 = vsel %vm2230, %v2232, %v2233
        %v2235 = vrot.slane %v2233, 4
        %v2236 = vrot.slane %v1057, 5
        %v2237 = vsel %vm2230, %v2235, %v2236
        %v2238 = vrot.slane %v2175, 5
        %v2239 = vrot.slane %v2238, 4
        %v2240 = vrot.slane %v1016, 5
        %v2241 = vsel %vm2230, %v2239, %v2240
        %v2242 = vrot.slane %v2240, 4
        %v2243 = vrot.slane %v1058, 5
        %v2244 = vsel %vm2230, %v2242, %v2243
        %v2245 = vrot.slane %v2176, 5
        %v2246 = vrot.slane %v2245, 4
        %v2247 = vrot.slane %v1018, 5
        %v2248 = vsel %vm2230, %v2246, %v2247
        %v2249 = vrot.slane %v2247, 4
        %v2250 = vrot.slane %v1059, 5
        %v2251 = vsel %vm2230, %v2249, %v2250
        %v2252 = vrot.slane %v2177, 5
        %v2253 = vrot.slane %v2252, 4
        %v2254 = vrot.slane %v1020, 5
        %v2255 = vsel %vm2230, %v2253, %v2254
        %v2256 = vrot.slane %v2254, 4
        %v2257 = vrot.slane %v1060, 5
        %v2258 = vsel %vm2230, %v2256, %v2257
        %v2259 = vrot.slane %v2178, 5
        %v2260 = vrot.slane %v2259, 4
        %v2261 = vrot.slane %v1022, 5
        %v2262 = vsel %vm2230, %v2260, %v2261
        %v2263 = vrot.slane %v2261, 4
        %v2264 = vrot.slane %v1061, 5
        %v2265 = vsel %vm2230, %v2263, %v2264
        %v2266 = vrot.slane %v2179, 5
        %v2267 = vrot.slane %v2266, 4
        %v2268 = vrot.slane %v1024, 5
        %v2269 = vsel %vm2230, %v2267, %v2268
        %v2270 = vrot.slane %v2268, 4
        %v2271 = vrot.slane %v1062, 5
        %v2272 = vsel %vm2230, %v2270, %v2271
        %v2273 = vrot.slane %v2180, 5
        %v2274 = vrot.slane %v2273, 4
        %v2275 = vrot.slane %v1026, 5
        %v2276 = vsel %vm2230, %v2274, %v2275
        %v2277 = vrot.slane %v2275, 4
        %v2278 = vrot.slane %v1063, 5
        %v2279 = vsel %vm2230, %v2277, %v2278
        %v2280 = vrot.slane %v2181, 5
        %v2281 = vrot.slane %v2280, 4
        %v2282 = vrot.slane %v1028, 5
        %v2283 = vsel %vm2230, %v2281, %v2282
        %v2284 = vrot.slane %v2282, 4
        %v2285 = vrot.slane %v1064, 5
        %v2286 = vsel %vm2230, %v2284, %v2285
        %v2287 = vrot.slane %v2182, 5
        %v2288 = vrot.slane %v2287, 4
        %v2289 = vrot.slane %v1030, 5
        %v2290 = vsel %vm2230, %v2288, %v2289
        %v2291 = vrot.slane %v2289, 4
        %v2292 = vrot.slane %v1065, 5
        %v2293 = vsel %vm2230, %v2291, %v2292
        %v2294 = vrot.slane %v2183, 5
        %v2295 = vrot.slane %v2294, 4
        %v2296 = vrot.slane %v1032, 5
        %v2297 = vsel %vm2230, %v2295, %v2296
        %v2298 = vrot.slane %v2296, 4
        %v2299 = vrot.slane %v1066, 5
        %v2300 = vsel %vm2230, %v2298, %v2299
        %v2301 = vrot.slane %v2184, 5
        %v2302 = vrot.slane %v2301, 4
        %v2303 = vrot.slane %v1034, 5
        %v2304 = vsel %vm2230, %v2302, %v2303
        %v2305 = vrot.slane %v2303, 4
        %v2306 = vrot.slane %v1067, 5
        %v2307 = vsel %vm2230, %v2305, %v2306
        %v2308 = vrot.slane %v2185, 5
        %v2309 = vrot.slane %v2308, 4
        %v2310 = vrot.slane %v1036, 5
        %v2311 = vsel %vm2230, %v2309, %v2310
        %v2312 = vrot.slane %v2310, 4
        %v2313 = vrot.slane %v1068, 5
        %v2314 = vsel %vm2230, %v2312, %v2313
        %v2315 = vrot.slane %v2186, 5
        %v2316 = vrot.slane %v2315, 4
        %v2317 = vrot.slane %v1038, 5
        %v2318 = vsel %vm2230, %v2316, %v2317
        %v2319 = vrot.slane %v2317, 4
        %v2320 = vrot.slane %v1069, 5
        %v2321 = vsel %vm2230, %v2319, %v2320
        %v2322 = vrot.slane %v2187, 5
        %v2323 = vrot.slane %v2322, 4
        %v2324 = vrot.slane %v1040, 5
        %v2325 = vsel %vm2230, %v2323, %v2324
        %v2326 = vrot.slane %v2324, 4
        %v2327 = vrot.slane %v1070, 5
        %v2328 = vsel %vm2230, %v2326, %v2327
        %v2329 = vrot.slane %v2188, 5
        %v2330 = vrot.slane %v2329, 4
        %v2331 = vrot.slane %v1042, 5
        %v2332 = vsel %vm2230, %v2330, %v2331
        %v2333 = vrot.slane %v2331, 4
        %v2334 = vrot.slane %v1071, 5
        %v2335 = vsel %vm2230, %v2333, %v2334
        %v2336 = vrot.slane %v2189, 5
        %v2337 = vrot.slane %v2336, 4
        %v2338 = vrot.slane %v1044, 5
        %v2339 = vsel %vm2230, %v2337, %v2338
        %v2340 = vrot.slane %v2338, 4
        %v2341 = vrot.slane %v1072, 5
        %v2342 = vsel %vm2230, %v2340, %v2341
        %v2343 = vrot.slane %v2190, 5
        %v2344 = vrot.slane %v2343, 4
        %v2345 = vrot.slane %v1046, 5
        %v2346 = vsel %vm2230, %v2344, %v2345
        %v2347 = vrot.slane %v2345, 4
        %v2348 = vrot.slane %v1073, 5
        %v2349 = vsel %vm2230, %v2347, %v2348
        %v2350 = vrot.slane %v2191, 5
        %v2351 = vrot.slane %v2350, 4
        %v2352 = vrot.slane %v1048, 5
        %v2353 = vsel %vm2230, %v2351, %v2352
        %v2354 = vrot.slane %v2352, 4
        %v2355 = vrot.slane %v1074, 5
        %v2356 = vsel %vm2230, %v2354, %v2355
        %s2357 = scalar_lea.vmem [#allocation9], 64
        %v2358 = vld [vmem:[%s2357] sm:$0xf]
        %v2359 = vld [vmem:[%s2357 + $0x4] sm:$0xf]
        %v2360 = vld [vmem:[%s2357 + $0x8] sm:$0xf]
        %v2361 = vld [vmem:[%s2357 + $0xc] sm:$0xf]
        %v2362 = vld [vmem:[%s2357 + $0x10] sm:$0xf]
        %v2363 = vld [vmem:[%s2357 + $0x14] sm:$0xf]
        %v2364 = vld [vmem:[%s2357 + $0x18] sm:$0xf]
        %v2365 = vld [vmem:[%s2357 + $0x1c] sm:$0xf]
        %v2366 = vunpack.c.l.b16 %v2234
        %v2367 = vunpack.c.l.b16 %v2237
        %v2368 = vunpack.c.l.b16 %v2241
        %v2369 = vunpack.c.l.b16 %v2244
        %v2370 = vunpack.c.l.b16 %v2248
        %v2371 = vunpack.c.l.b16 %v2251
        %v2372 = vunpack.c.l.b16 %v2255
        %v2373 = vunpack.c.l.b16 %v2258
        %v2374 = vunpack.c.l.b16 %v2262
        %v2375 = vunpack.c.l.b16 %v2265
        %v2376 = vunpack.c.l.b16 %v2269
        %v2377 = vunpack.c.l.b16 %v2272
        %v2378 = vunpack.c.l.b16 %v2276
        %v2379 = vunpack.c.l.b16 %v2279
        %v2380 = vunpack.c.l.b16 %v2283
        %v2381 = vunpack.c.l.b16 %v2286
        %v2382 = vunpack.c.l.b16 %v2290
        %v2383 = vunpack.c.l.b16 %v2293
        %v2384 = vunpack.c.l.b16 %v2297
        %v2385 = vunpack.c.l.b16 %v2300
        %v2386 = vunpack.c.l.b16 %v2304
        %v2387 = vunpack.c.l.b16 %v2307
        %v2388 = vunpack.c.l.b16 %v2311
        %v2389 = vunpack.c.l.b16 %v2314
        %v2390 = vunpack.c.l.b16 %v2318
        %v2391 = vunpack.c.l.b16 %v2321
        %v2392 = vunpack.c.l.b16 %v2325
        %v2393 = vunpack.c.l.b16 %v2328
        %v2394 = vunpack.c.l.b16 %v2332
        %v2395 = vunpack.c.l.b16 %v2335
        %v2396 = vunpack.c.l.b16 %v2339
        %v2397 = vunpack.c.l.b16 %v2342
        %v2398 = vunpack.c.l.b16 %v2346
        %v2399 = vunpack.c.l.b16 %v2349
        %v2400 = vunpack.c.l.b16 %v2353
        %v2401 = vunpack.c.l.b16 %v2356
        %v2402 = vpack.c.b16 %v2367, %v2366
        %v2403 = vpack.c.b16 %v2369, %v2368
        %v2404 = vpack.c.b16 %v2371, %v2370
        %v2405 = vpack.c.b16 %v2373, %v2372
        %v2406 = vpack.c.b16 %v2375, %v2374
        %v2407 = vpack.c.b16 %v2377, %v2376
        %v2408 = vpack.c.b16 %v2379, %v2378
        %v2409 = vpack.c.b16 %v2381, %v2380
        %v2410 = vpack.c.b16 %v2383, %v2382
        %v2411 = vpack.c.b16 %v2385, %v2384
        %v2412 = vpack.c.b16 %v2387, %v2386
        %v2413 = vpack.c.b16 %v2389, %v2388
        %v2414 = vpack.c.b16 %v2391, %v2390
        %v2415 = vpack.c.b16 %v2393, %v2392
        %v2416 = vpack.c.b16 %v2395, %v2394
        %v2417 = vpack.c.b16 %v2397, %v2396
        %v2418 = vpack.c.b16 %v2399, %v2398
        %v2419 = vpack.c.b16 %v2401, %v2400
        %v2428 = vunpack.c.l.b16 %v2358
        %v2429 = vunpack.c.l.b16 %v2359
        %v2430 = vunpack.c.l.b16 %v2360
        %v2431 = vunpack.c.l.b16 %v2361
        %v2432 = vunpack.c.l.b16 %v2362
        %v2433 = vunpack.c.l.b16 %v2363
        %v2434 = vunpack.c.l.b16 %v2364
        %v2435 = vunpack.c.l.b16 %v2365
        %v2436 = vpack.c.b16 %v2429, %v2428
        %v2437 = vpack.c.b16 %v2431, %v2430
        %v2438 = vpack.c.b16 %v2433, %v2432
        %v2439 = vpack.c.b16 %v2435, %v2434
        %v2445 = vsel %vm1597, %v2402, 0
        %v2448 = vsel %vm1597, %v2403, 0
        %v2451 = vsel %vm1597, %v2404, 0
        %v2454 = vsel %vm1597, %v2405, 0
        %v2457 = vsel %vm1597, %v2406, 0
        %v2460 = vsel %vm1597, %v2407, 0
        %v2463 = vsel %vm1597, %v2408, 0
        %v2466 = vsel %vm1597, %v2409, 0
        %v2469 = vsel %vm1597, %v2410, 0
        %v2472 = vsel %vm1597, %v2411, 0
        %v2475 = vsel %vm1597, %v2412, 0
        %v2478 = vsel %vm1597, %v2413, 0
        %v2481 = vsel %vm1597, %v2414, 0
        %v2484 = vsel %vm1597, %v2415, 0
        %v2487 = vsel %vm1597, %v2416, 0
        %v2490 = vsel %vm1597, %v2417, 0
        %v2493 = vsel %vm1597, %v2418, 0
        %v2496 = vsel %vm1597, %v2419, 0
        %2498 = vmatprep.subr.bf16.mxu0 0
        %2499 = vmatpush1.bf16.msra.mxu0 %v2436
        %2500 = vmatprep.subr.bf16.mxu0 0
        %2501 = vmatpush1.bf16.msra.mxu0 %v2437
        %2502 = vmatprep.subr.bf16.mxu0 0
        %2503 = vmatpush1.bf16.msra.mxu0 %v2438
        %2504 = vmatprep.subr.bf16.mxu0 0
        %2505 = vmatpush1.bf16.msra.mxu0 %v2439
        %2506 = vmatprep.subr.bf16.mxu0 0
        %2507 = vmatpush1.bf16.msra.mxu0 0
        %2508 = vmatprep.subr.bf16.mxu0 0
        %2509 = vmatpush1.bf16.msra.mxu0 0
        %2510 = vmatprep.subr.bf16.mxu0 0
        %2511 = vmatpush1.bf16.msra.mxu0 0
        %2512 = vmatprep.subr.bf16.mxu0 0
        %2513 = vmatpush1.bf16.msra.mxu0 0
        %2514 = vmatprep.subr.bf16.mxu0 0
        %2515 = vmatpush1.bf16.msra.mxu0 0
        %2516 = vmatprep.subr.bf16.mxu0 0
        %2517 = vmatpush1.bf16.msra.mxu0 0
        %2518 = vmatprep.subr.bf16.mxu0 0
        %2519 = vmatpush1.bf16.msra.mxu0 0
        %2520 = vmatprep.subr.bf16.mxu0 0
        %2521 = vmatpush1.bf16.msra.mxu0 0
        %2522 = vmatprep.subr.bf16.mxu0 0
        %2523 = vmatpush1.bf16.msra.mxu0 0
        %2524 = vmatprep.subr.bf16.mxu0 0
        %2525 = vmatpush1.bf16.msra.mxu0 0
        %2526 = vmatprep.subr.bf16.mxu0 0
        %2527 = vmatpush1.bf16.msra.mxu0 0
        %2528 = vmatprep.subr.bf16.mxu0 0
        %2529 = vmatpush1.bf16.msra.mxu0 0
        %2530 = vmatprep.mubr.bf16.mxu0 0
        %2531 = vmatmul.mubr.bf16.gmra.mrb[0].mxu0 %v2445
        %v2532 = vpop.f32.mrb[0].mxu0
        %v2533 = vadd.f32 0.0, %v2532
        %v2534 = vpop.f32.mrb[0].mxu0
        %v2535 = vpop.f32.mrb[0].mxu0
        %v2536 = vadd.f32 0.0, %v2535
        %v2537 = vpop.f32.mrb[0].mxu0
        %2538 = vmatprep.mubr.bf16.mxu0 0
        %2539 = vmatmul.mubr.bf16.gmra.mrb[0].mxu0 %v2448
        %v2540 = vpop.f32.mrb[0].mxu0
        %v2541 = vadd.f32 0.0, %v2540
        %v2542 = vpop.f32.mrb[0].mxu0
        %v2543 = vpop.f32.mrb[0].mxu0
        %v2544 = vadd.f32 0.0, %v2543
        %v2545 = vpop.f32.mrb[0].mxu0
        %2546 = vmatprep.mubr.bf16.mxu0 0
        %2547 = vmatmul.mubr.bf16.gmra.mrb[0].mxu0 %v2451
        %v2548 = vpop.f32.mrb[0].mxu0
        %v2549 = vadd.f32 0.0, %v2548
        %v2550 = vpop.f32.mrb[0].mxu0
        %v2551 = vpop.f32.mrb[0].mxu0
        %v2552 = vadd.f32 0.0, %v2551
        %v2553 = vpop.f32.mrb[0].mxu0
        %2554 = vmatprep.mubr.bf16.mxu0 0
        %2555 = vmatmul.mubr.bf16.gmra.mrb[0].mxu0 %v2454
        %v2556 = vpop.f32.mrb[0].mxu0
        %v2557 = vadd.f32 0.0, %v2556
        %v2558 = vpop.f32.mrb[0].mxu0
        %v2559 = vpop.f32.mrb[0].mxu0
        %v2560 = vadd.f32 0.0, %v2559
        %v2561 = vpop.f32.mrb[0].mxu0
        %2562 = vmatprep.mubr.bf16.mxu0 0
        %2563 = vmatmul.mubr.bf16.gmra.mrb[0].mxu0 %v2457
        %v2564 = vpop.f32.mrb[0].mxu0
        %v2565 = vadd.f32 0.0, %v2564
        %v2566 = vpop.f32.mrb[0].mxu0
        %v2567 = vpop.f32.mrb[0].mxu0
        %v2568 = vadd.f32 0.0, %v2567
        %v2569 = vpop.f32.mrb[0].mxu0
        %2570 = vmatprep.mubr.bf16.mxu0 0
        %2571 = vmatmul.mubr.bf16.gmra.mrb[0].mxu0 %v2460
        %v2572 = vpop.f32.mrb[0].mxu0
        %v2573 = vadd.f32 0.0, %v2572
        %v2574 = vpop.f32.mrb[0].mxu0
        %v2575 = vpop.f32.mrb[0].mxu0
        %v2576 = vadd.f32 0.0, %v2575
        %v2577 = vpop.f32.mrb[0].mxu0
        %2578 = vmatprep.mubr.bf16.mxu0 0
        %2579 = vmatmul.mubr.bf16.gmra.mrb[0].mxu0 %v2463
        %v2580 = vpop.f32.mrb[0].mxu0
        %v2581 = vadd.f32 0.0, %v2580
        %v2582 = vpop.f32.mrb[0].mxu0
        %v2583 = vpop.f32.mrb[0].mxu0
        %v2584 = vadd.f32 0.0, %v2583
        %v2585 = vpop.f32.mrb[0].mxu0
        %2586 = vmatprep.mubr.bf16.mxu0 0
        %2587 = vmatmul.mubr.bf16.gmra.mrb[0].mxu0 %v2466
        %v2588 = vpop.f32.mrb[0].mxu0
        %v2589 = vadd.f32 0.0, %v2588
        %v2590 = vpop.f32.mrb[0].mxu0
        %v2591 = vpop.f32.mrb[0].mxu0
        %v2592 = vadd.f32 0.0, %v2591
        %v2593 = vpop.f32.mrb[0].mxu0
        %2594 = vmatprep.mubr.bf16.mxu0 0
        %2595 = vmatmul.mubr.bf16.gmra.mrb[0].mxu0 %v2469
        %v2596 = vpop.f32.mrb[0].mxu0
        %v2597 = vadd.f32 0.0, %v2596
        %v2598 = vpop.f32.mrb[0].mxu0
        %v2599 = vpop.f32.mrb[0].mxu0
        %v2600 = vadd.f32 0.0, %v2599
        %v2601 = vpop.f32.mrb[0].mxu0
        %2602 = vmatprep.mubr.bf16.mxu0 0
        %2603 = vmatmul.mubr.bf16.gmra.mrb[0].mxu0 %v2472
        %v2604 = vpop.f32.mrb[0].mxu0
        %v2605 = vadd.f32 0.0, %v2604
        %v2606 = vpop.f32.mrb[0].mxu0
        %v2607 = vpop.f32.mrb[0].mxu0
        %v2608 = vadd.f32 0.0, %v2607
        %v2609 = vpop.f32.mrb[0].mxu0
        %2610 = vmatprep.mubr.bf16.mxu0 0
        %2611 = vmatmul.mubr.bf16.gmra.mrb[0].mxu0 %v2475
        %v2612 = vpop.f32.mrb[0].mxu0
        %v2613 = vadd.f32 0.0, %v2612
        %v2614 = vpop.f32.mrb[0].mxu0
        %v2615 = vpop.f32.mrb[0].mxu0
        %v2616 = vadd.f32 0.0, %v2615
        %v2617 = vpop.f32.mrb[0].mxu0
        %2618 = vmatprep.mubr.bf16.mxu0 0
        %2619 = vmatmul.mubr.bf16.gmra.mrb[0].mxu0 %v2478
        %v2620 = vpop.f32.mrb[0].mxu0
        %v2621 = vadd.f32 0.0, %v2620
        %v2622 = vpop.f32.mrb[0].mxu0
        %v2623 = vpop.f32.mrb[0].mxu0
        %v2624 = vadd.f32 0.0, %v2623
        %v2625 = vpop.f32.mrb[0].mxu0
        %2626 = vmatprep.mubr.bf16.mxu0 0
        %2627 = vmatmul.mubr.bf16.gmra.mrb[0].mxu0 %v2481
        %v2628 = vpop.f32.mrb[0].mxu0
        %v2629 = vadd.f32 0.0, %v2628
        %v2630 = vpop.f32.mrb[0].mxu0
        %v2631 = vpop.f32.mrb[0].mxu0
        %v2632 = vadd.f32 0.0, %v2631
        %v2633 = vpop.f32.mrb[0].mxu0
        %2634 = vmatprep.mubr.bf16.mxu0 0
        %2635 = vmatmul.mubr.bf16.gmra.mrb[0].mxu0 %v2484
        %v2636 = vpop.f32.mrb[0].mxu0
        %v2637 = vadd.f32 0.0, %v2636
        %v2638 = vpop.f32.mrb[0].mxu0
        %v2639 = vpop.f32.mrb[0].mxu0
        %v2640 = vadd.f32 0.0, %v2639
        %v2641 = vpop.f32.mrb[0].mxu0
        %2642 = vmatprep.mubr.bf16.mxu0 0
        %2643 = vmatmul.mubr.bf16.gmra.mrb[0].mxu0 %v2487
        %v2644 = vpop.f32.mrb[0].mxu0
        %v2645 = vadd.f32 0.0, %v2644
        %v2646 = vpop.f32.mrb[0].mxu0
        %v2647 = vpop.f32.mrb[0].mxu0
        %v2648 = vadd.f32 0.0, %v2647
        %v2649 = vpop.f32.mrb[0].mxu0
        %2650 = vmatprep.mubr.bf16.mxu0 0
        %2651 = vmatmul.mubr.bf16.gmra.mrb[0].mxu0 %v2490
        %v2652 = vpop.f32.mrb[0].mxu0
        %v2653 = vadd.f32 0.0, %v2652
        %v2654 = vpop.f32.mrb[0].mxu0
        %v2655 = vpop.f32.mrb[0].mxu0
        %v2656 = vadd.f32 0.0, %v2655
        %v2657 = vpop.f32.mrb[0].mxu0
        %2658 = vmatprep.mubr.bf16.mxu0 0
        %2659 = vmatmul.mubr.bf16.gmra.mrb[0].mxu0 %v2493
        %v2660 = vpop.f32.mrb[0].mxu0
        %v2661 = vadd.f32 0.0, %v2660
        %v2662 = vpop.f32.mrb[0].mxu0
        %v2663 = vpop.f32.mrb[0].mxu0
        %v2664 = vadd.f32 0.0, %v2663
        %v2665 = vpop.f32.mrb[0].mxu0
        %2666 = vmatprep.mubr.bf16.mxu0 0
        %2667 = vmatmul.mubr.bf16.gmra.mrb[0].mxu0 %v2496
        %v2668 = vpop.f32.mrb[0].mxu0
        %v2669 = vadd.f32 0.0, %v2668
        %v2670 = vpop.f32.mrb[0].mxu0
        %v2671 = vpop.f32.mrb[0].mxu0
        %v2672 = vadd.f32 0.0, %v2671
        %v2673 = vpop.f32.mrb[0].mxu0
        %2674 = vdwg.mxu0
        %v2675 = vadd.f32 %v2032, %v2533
        %v2676 = vadd.f32 %v2035, %v2536
        %v2677 = vadd.f32 %v2040, %v2541
        %v2678 = vadd.f32 %v2043, %v2544
        %v2679 = vadd.f32 %v2048, %v2549
        %v2680 = vadd.f32 %v2051, %v2552
        %v2681 = vadd.f32 %v2056, %v2557
        %v2682 = vadd.f32 %v2059, %v2560
        %v2683 = vadd.f32 %v2064, %v2565
        %v2684 = vadd.f32 %v2067, %v2568
        %v2685 = vadd.f32 %v2072, %v2573
        %v2686 = vadd.f32 %v2075, %v2576
        %v2687 = vadd.f32 %v2080, %v2581
        %v2688 = vadd.f32 %v2083, %v2584
        %v2689 = vadd.f32 %v2088, %v2589
        %v2690 = vadd.f32 %v2091, %v2592
        %v2691 = vadd.f32 %v2096, %v2597
        %v2692 = vadd.f32 %v2099, %v2600
        %v2693 = vadd.f32 %v2104, %v2605
        %v2694 = vadd.f32 %v2107, %v2608
        %v2695 = vadd.f32 %v2112, %v2613
        %v2696 = vadd.f32 %v2115, %v2616
        %v2697 = vadd.f32 %v2120, %v2621
        %v2698 = vadd.f32 %v2123, %v2624
        %v2699 = vadd.f32 %v2128, %v2629
        %v2700 = vadd.f32 %v2131, %v2632
        %v2701 = vadd.f32 %v2136, %v2637
        %v2702 = vadd.f32 %v2139, %v2640
        %v2703 = vadd.f32 %v2144, %v2645
        %v2704 = vadd.f32 %v2147, %v2648
        %v2705 = vadd.f32 %v2152, %v2653
        %v2706 = vadd.f32 %v2155, %v2656
        %v2707 = vadd.f32 %v2160, %v2661
        %v2708 = vadd.f32 %v2163, %v2664
        %v2709 = vadd.f32 %v2168, %v2669
        %v2710 = vadd.f32 %v2171, %v2672
        %s2711 = scalar_lea.vmem [#allocation2], 12
        %v2712 = vld [vmem:[%s2711] sm:$0xf]
        %v2713 = vld [vmem:[%s2711 + $0x4] sm:$0xf]
        %v2714 = vld [vmem:[%s2711 + $0xc] sm:$0xf]
        %v2715 = vld [vmem:[%s2711 + $0x10] sm:$0xf]
        %v2716 = vld [vmem:[%s2711 + $0x18] sm:$0xf]
        %v2717 = vld [vmem:[%s2711 + $0x1c] sm:$0xf]
        %v2718 = vld [vmem:[%s2711 + $0x24] sm:$0xf]
        %v2719 = vld [vmem:[%s2711 + $0x28] sm:$0xf]
        %v2720 = vld [vmem:[%s2711 + $0x30] sm:$0xf]
        %v2721 = vld [vmem:[%s2711 + $0x34] sm:$0xf]
        %v2722 = vld [vmem:[%s2711 + $0x3c] sm:$0xf]
        %v2723 = vld [vmem:[%s2711 + $0x40] sm:$0xf]
        %v2724 = vld [vmem:[%s2711 + $0x48] sm:$0xf]
        %v2725 = vld [vmem:[%s2711 + $0x4c] sm:$0xf]
        %v2726 = vld [vmem:[%s2711 + $0x54] sm:$0xf]
        %v2727 = vld [vmem:[%s2711 + $0x58] sm:$0xf]
        %v2728 = vld [vmem:[%s2711 + $0x60] sm:$0xf]
        %v2729 = vld [vmem:[%s2711 + $0x64] sm:$0xf]
        %v2730 = vld [vmem:[%s2711 + $0x6c] sm:$0xf]
        %v2731 = vld [vmem:[%s2711 + $0x70] sm:$0xf]
        %v2732 = vld [vmem:[%s2711 + $0x78] sm:$0xf]
        %v2733 = vld [vmem:[%s2711 + $0x7c] sm:$0xf]
        %v2734 = vld [vmem:[%s2711 + $0x84] sm:$0xf]
        %v2735 = vld [vmem:[%s2711 + $0x88] sm:$0xf]
        %v2736 = vld [vmem:[%s2711 + $0x90] sm:$0xf]
        %v2737 = vld [vmem:[%s2711 + $0x94] sm:$0xf]
        %v2738 = vld [vmem:[%s2711 + $0x9c] sm:$0xf]
        %v2739 = vld [vmem:[%s2711 + $0xa0] sm:$0xf]
        %v2740 = vld [vmem:[%s2711 + $0xa8] sm:$0xf]
        %v2741 = vld [vmem:[%s2711 + $0xac] sm:$0xf]
        %v2742 = vld [vmem:[%s2711 + $0xb4] sm:$0xf]
        %v2743 = vld [vmem:[%s2711 + $0xb8] sm:$0xf]
        %v2744 = vld [vmem:[%s2711 + $0xc0] sm:$0xf]
        %v2745 = vld [vmem:[%s2711 + $0xc4] sm:$0xf]
        %v2746 = vld [vmem:[%s2711 + $0xcc] sm:$0xf]
        %v2747 = vld [vmem:[%s2711 + $0xd0] sm:$0xf]
        %s2748 = scalar_lea.vmem [#allocation9], 96
        %v2749 = vld [vmem:[%s2748] sm:$0xf]
        %v2750 = vld [vmem:[%s2748 + $0x4] sm:$0xf]
        %v2751 = vld [vmem:[%s2748 + $0x8] sm:$0xf]
        %v2752 = vld [vmem:[%s2748 + $0xc] sm:$0xf]
        %v2753 = vld [vmem:[%s2748 + $0x10] sm:$0xf]
        %v2754 = vld [vmem:[%s2748 + $0x14] sm:$0xf]
        %v2755 = vld [vmem:[%s2748 + $0x18] sm:$0xf]
        %v2756 = vld [vmem:[%s2748 + $0x1c] sm:$0xf]
        %v2793 = vunpack.c.l.b16 %v2712
        %v2794 = vunpack.c.l.b16 %v2713
        %v2795 = vunpack.c.l.b16 %v2714
        %v2796 = vunpack.c.l.b16 %v2715
        %v2797 = vunpack.c.l.b16 %v2716
        %v2798 = vunpack.c.l.b16 %v2717
        %v2799 = vunpack.c.l.b16 %v2718
        %v2800 = vunpack.c.l.b16 %v2719
        %v2801 = vunpack.c.l.b16 %v2720
        %v2802 = vunpack.c.l.b16 %v2721
        %v2803 = vunpack.c.l.b16 %v2722
        %v2804 = vunpack.c.l.b16 %v2723
        %v2805 = vunpack.c.l.b16 %v2724
        %v2806 = vunpack.c.l.b16 %v2725
        %v2807 = vunpack.c.l.b16 %v2726
        %v2808 = vunpack.c.l.b16 %v2727
        %v2809 = vunpack.c.l.b16 %v2728
        %v2810 = vunpack.c.l.b16 %v2729
        %v2811 = vunpack.c.l.b16 %v2730
        %v2812 = vunpack.c.l.b16 %v2731
        %v2813 = vunpack.c.l.b16 %v2732
        %v2814 = vunpack.c.l.b16 %v2733
        %v2815 = vunpack.c.l.b16 %v2734
        %v2816 = vunpack.c.l.b16 %v2735
        %v2817 = vunpack.c.l.b16 %v2736
        %v2818 = vunpack.c.l.b16 %v2737
        %v2819 = vunpack.c.l.b16 %v2738
        %v2820 = vunpack.c.l.b16 %v2739
        %v2821 = vunpack.c.l.b16 %v2740
        %v2822 = vunpack.c.l.b16 %v2741
        %v2823 = vunpack.c.l.b16 %v2742
        %v2824 = vunpack.c.l.b16 %v2743
        %v2825 = vunpack.c.l.b16 %v2744
        %v2826 = vunpack.c.l.b16 %v2745
        %v2827 = vunpack.c.l.b16 %v2746
        %v2828 = vunpack.c.l.b16 %v2747
        %v2829 = vpack.c.b16 %v2794, %v2793
        %v2830 = vpack.c.b16 %v2796, %v2795
        %v2831 = vpack.c.b16 %v2798, %v2797
        %v2832 = vpack.c.b16 %v2800, %v2799
        %v2833 = vpack.c.b16 %v2802, %v2801
        %v2834 = vpack.c.b16 %v2804, %v2803
        %v2835 = vpack.c.b16 %v2806, %v2805
        %v2836 = vpack.c.b16 %v2808, %v2807
        %v2837 = vpack.c.b16 %v2810, %v2809
        %v2838 = vpack.c.b16 %v2812, %v2811
        %v2839 = vpack.c.b16 %v2814, %v2813
        %v2840 = vpack.c.b16 %v2816, %v2815
        %v2841 = vpack.c.b16 %v2818, %v2817
        %v2842 = vpack.c.b16 %v2820, %v2819
        %v2843 = vpack.c.b16 %v2822, %v2821
        %v2844 = vpack.c.b16 %v2824, %v2823
        %v2845 = vpack.c.b16 %v2826, %v2825
        %v2846 = vpack.c.b16 %v2828, %v2827
        %v2855 = vunpack.c.l.b16 %v2749
        %v2856 = vunpack.c.l.b16 %v2750
        %v2857 = vunpack.c.l.b16 %v2751
        %v2858 = vunpack.c.l.b16 %v2752
        %v2859 = vunpack.c.l.b16 %v2753
        %v2860 = vunpack.c.l.b16 %v2754
        %v2861 = vunpack.c.l.b16 %v2755
        %v2862 = vunpack.c.l.b16 %v2756
        %v2863 = vpack.c.b16 %v2856, %v2855
        %v2864 = vpack.c.b16 %v2858, %v2857
        %v2865 = vpack.c.b16 %v2860, %v2859
        %v2866 = vpack.c.b16 %v2862, %v2861
        %v2872 = vsel %vm1597, %v2829, 0
        %v2875 = vsel %vm1597, %v2830, 0
        %v2878 = vsel %vm1597, %v2831, 0
        %v2881 = vsel %vm1597, %v2832, 0
        %v2884 = vsel %vm1597, %v2833, 0
        %v2887 = vsel %vm1597, %v2834, 0
        %v2890 = vsel %vm1597, %v2835, 0
        %v2893 = vsel %vm1597, %v2836, 0
        %v2896 = vsel %vm1597, %v2837, 0
        %v2899 = vsel %vm1597, %v2838, 0
        %v2902 = vsel %vm1597, %v2839, 0
        %v2905 = vsel %vm1597, %v2840, 0
        %v2908 = vsel %vm1597, %v2841, 0
        %v2911 = vsel %vm1597, %v2842, 0
        %v2914 = vsel %vm1597, %v2843, 0
        %v2917 = vsel %vm1597, %v2844, 0
        %v2920 = vsel %vm1597, %v2845, 0
        %v2923 = vsel %vm1597, %v2846, 0
        %2925 = vmatprep.subr.bf16.mxu0 0
        %2926 = vmatpush1.bf16.msra.mxu0 %v2863
        %2927 = vmatprep.subr.bf16.mxu0 0
        %2928 = vmatpush1.bf16.msra.mxu0 %v2864
        %2929 = vmatprep.subr.bf16.mxu0 0
        %2930 = vmatpush1.bf16.msra.mxu0 %v2865
        %2931 = vmatprep.subr.bf16.mxu0 0
        %2932 = vmatpush1.bf16.msra.mxu0 %v2866
        %2933 = vmatprep.subr.bf16.mxu0 0
        %2934 = vmatpush1.bf16.msra.mxu0 0
        %2935 = vmatprep.subr.bf16.mxu0 0
        %2936 = vmatpush1.bf16.msra.mxu0 0
        %2937 = vmatprep.subr.bf16.mxu0 0
        %2938 = vmatpush1.bf16.msra.mxu0 0
        %2939 = vmatprep.subr.bf16.mxu0 0
        %2940 = vmatpush1.bf16.msra.mxu0 0
        %2941 = vmatprep.subr.bf16.mxu0 0
        %2942 = vmatpush1.bf16.msra.mxu0 0
        %2943 = vmatprep.subr.bf16.mxu0 0
        %2944 = vmatpush1.bf16.msra.mxu0 0
        %2945 = vmatprep.subr.bf16.mxu0 0
        %2946 = vmatpush1.bf16.msra.mxu0 0
        %2947 = vmatprep.subr.bf16.mxu0 0
        %2948 = vmatpush1.bf16.msra.mxu0 0
        %2949 = vmatprep.subr.bf16.mxu0 0
        %2950 = vmatpush1.bf16.msra.mxu0 0
        %2951 = vmatprep.subr.bf16.mxu0 0
        %2952 = vmatpush1.bf16.msra.mxu0 0
        %2953 = vmatprep.subr.bf16.mxu0 0
        %2954 = vmatpush1.bf16.msra.mxu0 0
        %2955 = vmatprep.subr.bf16.mxu0 0
        %2956 = vmatpush1.bf16.msra.mxu0 0
        %2957 = vmatprep.mubr.bf16.mxu0 0
        %2958 = vmatmul.mubr.bf16.gmra.mrb[0].mxu0 %v2872
        %v2959 = vpop.f32.mrb[0].mxu0
        %v2960 = vadd.f32 0.0, %v2959
        %v2961 = vpop.f32.mrb[0].mxu0
        %v2962 = vpop.f32.mrb[0].mxu0
        %v2963 = vadd.f32 0.0, %v2962
        %v2964 = vpop.f32.mrb[0].mxu0
        %2965 = vmatprep.mubr.bf16.mxu0 0
        %2966 = vmatmul.mubr.bf16.gmra.mrb[0].mxu0 %v2875
        %v2967 = vpop.f32.mrb[0].mxu0
        %v2968 = vadd.f32 0.0, %v2967
        %v2969 = vpop.f32.mrb[0].mxu0
        %v2970 = vpop.f32.mrb[0].mxu0
        %v2971 = vadd.f32 0.0, %v2970
        %v2972 = vpop.f32.mrb[0].mxu0
        %2973 = vmatprep.mubr.bf16.mxu0 0
        %2974 = vmatmul.mubr.bf16.gmra.mrb[0].mxu0 %v2878
        %v2975 = vpop.f32.mrb[0].mxu0
        %v2976 = vadd.f32 0.0, %v2975
        %v2977 = vpop.f32.mrb[0].mxu0
        %v2978 = vpop.f32.mrb[0].mxu0
        %v2979 = vadd.f32 0.0, %v2978
        %v2980 = vpop.f32.mrb[0].mxu0
        %2981 = vmatprep.mubr.bf16.mxu0 0
        %2982 = vmatmul.mubr.bf16.gmra.mrb[0].mxu0 %v2881
        %v2983 = vpop.f32.mrb[0].mxu0
        %v2984 = vadd.f32 0.0, %v2983
        %v2985 = vpop.f32.mrb[0].mxu0
        %v2986 = vpop.f32.mrb[0].mxu0
        %v2987 = vadd.f32 0.0, %v2986
        %v2988 = vpop.f32.mrb[0].mxu0
        %2989 = vmatprep.mubr.bf16.mxu0 0
        %2990 = vmatmul.mubr.bf16.gmra.mrb[0].mxu0 %v2884
        %v2991 = vpop.f32.mrb[0].mxu0
        %v2992 = vadd.f32 0.0, %v2991
        %v2993 = vpop.f32.mrb[0].mxu0
        %v2994 = vpop.f32.mrb[0].mxu0
        %v2995 = vadd.f32 0.0, %v2994
        %v2996 = vpop.f32.mrb[0].mxu0
        %2997 = vmatprep.mubr.bf16.mxu0 0
        %2998 = vmatmul.mubr.bf16.gmra.mrb[0].mxu0 %v2887
        %v2999 = vpop.f32.mrb[0].mxu0
        %v3000 = vadd.f32 0.0, %v2999
        %v3001 = vpop.f32.mrb[0].mxu0
        %v3002 = vpop.f32.mrb[0].mxu0
        %v3003 = vadd.f32 0.0, %v3002
        %v3004 = vpop.f32.mrb[0].mxu0
        %3005 = vmatprep.mubr.bf16.mxu0 0
        %3006 = vmatmul.mubr.bf16.gmra.mrb[0].mxu0 %v2890
        %v3007 = vpop.f32.mrb[0].mxu0
        %v3008 = vadd.f32 0.0, %v3007
        %v3009 = vpop.f32.mrb[0].mxu0
        %v3010 = vpop.f32.mrb[0].mxu0
        %v3011 = vadd.f32 0.0, %v3010
        %v3012 = vpop.f32.mrb[0].mxu0
        %3013 = vmatprep.mubr.bf16.mxu0 0
        %3014 = vmatmul.mubr.bf16.gmra.mrb[0].mxu0 %v2893
        %v3015 = vpop.f32.mrb[0].mxu0
        %v3016 = vadd.f32 0.0, %v3015
        %v3017 = vpop.f32.mrb[0].mxu0
        %v3018 = vpop.f32.mrb[0].mxu0
        %v3019 = vadd.f32 0.0, %v3018
        %v3020 = vpop.f32.mrb[0].mxu0
        %3021 = vmatprep.mubr.bf16.mxu0 0
        %3022 = vmatmul.mubr.bf16.gmra.mrb[0].mxu0 %v2896
        %v3023 = vpop.f32.mrb[0].mxu0
        %v3024 = vadd.f32 0.0, %v3023
        %v3025 = vpop.f32.mrb[0].mxu0
        %v3026 = vpop.f32.mrb[0].mxu0
        %v3027 = vadd.f32 0.0, %v3026
        %v3028 = vpop.f32.mrb[0].mxu0
        %3029 = vmatprep.mubr.bf16.mxu0 0
        %3030 = vmatmul.mubr.bf16.gmra.mrb[0].mxu0 %v2899
        %v3031 = vpop.f32.mrb[0].mxu0
        %v3032 = vadd.f32 0.0, %v3031
        %v3033 = vpop.f32.mrb[0].mxu0
        %v3034 = vpop.f32.mrb[0].mxu0
        %v3035 = vadd.f32 0.0, %v3034
        %v3036 = vpop.f32.mrb[0].mxu0
        %3037 = vmatprep.mubr.bf16.mxu0 0
        %3038 = vmatmul.mubr.bf16.gmra.mrb[0].mxu0 %v2902
        %v3039 = vpop.f32.mrb[0].mxu0
        %v3040 = vadd.f32 0.0, %v3039
        %v3041 = vpop.f32.mrb[0].mxu0
        %v3042 = vpop.f32.mrb[0].mxu0
        %v3043 = vadd.f32 0.0, %v3042
        %v3044 = vpop.f32.mrb[0].mxu0
        %3045 = vmatprep.mubr.bf16.mxu0 0
        %3046 = vmatmul.mubr.bf16.gmra.mrb[0].mxu0 %v2905
        %v3047 = vpop.f32.mrb[0].mxu0
        %v3048 = vadd.f32 0.0, %v3047
        %v3049 = vpop.f32.mrb[0].mxu0
        %v3050 = vpop.f32.mrb[0].mxu0
        %v3051 = vadd.f32 0.0, %v3050
        %v3052 = vpop.f32.mrb[0].mxu0
        %3053 = vmatprep.mubr.bf16.mxu0 0
        %3054 = vmatmul.mubr.bf16.gmra.mrb[0].mxu0 %v2908
        %v3055 = vpop.f32.mrb[0].mxu0
        %v3056 = vadd.f32 0.0, %v3055
        %v3057 = vpop.f32.mrb[0].mxu0
        %v3058 = vpop.f32.mrb[0].mxu0
        %v3059 = vadd.f32 0.0, %v3058
        %v3060 = vpop.f32.mrb[0].mxu0
        %3061 = vmatprep.mubr.bf16.mxu0 0
        %3062 = vmatmul.mubr.bf16.gmra.mrb[0].mxu0 %v2911
        %v3063 = vpop.f32.mrb[0].mxu0
        %v3064 = vadd.f32 0.0, %v3063
        %v3065 = vpop.f32.mrb[0].mxu0
        %v3066 = vpop.f32.mrb[0].mxu0
        %v3067 = vadd.f32 0.0, %v3066
        %v3068 = vpop.f32.mrb[0].mxu0
        %3069 = vmatprep.mubr.bf16.mxu0 0
        %3070 = vmatmul.mubr.bf16.gmra.mrb[0].mxu0 %v2914
        %v3071 = vpop.f32.mrb[0].mxu0
        %v3072 = vadd.f32 0.0, %v3071
        %v3073 = vpop.f32.mrb[0].mxu0
        %v3074 = vpop.f32.mrb[0].mxu0
        %v3075 = vadd.f32 0.0, %v3074
        %v3076 = vpop.f32.mrb[0].mxu0
        %3077 = vmatprep.mubr.bf16.mxu0 0
        %3078 = vmatmul.mubr.bf16.gmra.mrb[0].mxu0 %v2917
        %v3079 = vpop.f32.mrb[0].mxu0
        %v3080 = vadd.f32 0.0, %v3079
        %v3081 = vpop.f32.mrb[0].mxu0
        %v3082 = vpop.f32.mrb[0].mxu0
        %v3083 = vadd.f32 0.0, %v3082
        %v3084 = vpop.f32.mrb[0].mxu0
        %3085 = vmatprep.mubr.bf16.mxu0 0
        %3086 = vmatmul.mubr.bf16.gmra.mrb[0].mxu0 %v2920
        %v3087 = vpop.f32.mrb[0].mxu0
        %v3088 = vadd.f32 0.0, %v3087
        %v3089 = vpop.f32.mrb[0].mxu0
        %v3090 = vpop.f32.mrb[0].mxu0
        %v3091 = vadd.f32 0.0, %v3090
        %v3092 = vpop.f32.mrb[0].mxu0
        %3093 = vmatprep.mubr.bf16.mxu0 0
        %3094 = vmatmul.mubr.bf16.gmra.mrb[0].mxu0 %v2923
        %v3095 = vpop.f32.mrb[0].mxu0
        %v3096 = vadd.f32 0.0, %v3095
        %v3097 = vpop.f32.mrb[0].mxu0
        %v3098 = vpop.f32.mrb[0].mxu0
        %v3099 = vadd.f32 0.0, %v3098
        %v3100 = vpop.f32.mrb[0].mxu0
        %3101 = vdwg.mxu0
        %v3102 = vadd.f32 %v2675, %v2960
        %v3103 = vadd.f32 %v2676, %v2963
        %v3104 = vadd.f32 %v2677, %v2968
        %v3105 = vadd.f32 %v2678, %v2971
        %v3106 = vadd.f32 %v2679, %v2976
        %v3107 = vadd.f32 %v2680, %v2979
        %v3108 = vadd.f32 %v2681, %v2984
        %v3109 = vadd.f32 %v2682, %v2987
        %v3110 = vadd.f32 %v2683, %v2992
        %v3111 = vadd.f32 %v2684, %v2995
        %v3112 = vadd.f32 %v2685, %v3000
        %v3113 = vadd.f32 %v2686, %v3003
        %v3114 = vadd.f32 %v2687, %v3008
        %v3115 = vadd.f32 %v2688, %v3011
        %v3116 = vadd.f32 %v2689, %v3016
        %v3117 = vadd.f32 %v2690, %v3019
        %v3118 = vadd.f32 %v2691, %v3024
        %v3119 = vadd.f32 %v2692, %v3027
        %v3120 = vadd.f32 %v2693, %v3032
        %v3121 = vadd.f32 %v2694, %v3035
        %v3122 = vadd.f32 %v2695, %v3040
        %v3123 = vadd.f32 %v2696, %v3043
        %v3124 = vadd.f32 %v2697, %v3048
        %v3125 = vadd.f32 %v2698, %v3051
        %v3126 = vadd.f32 %v2699, %v3056
        %v3127 = vadd.f32 %v2700, %v3059
        %v3128 = vadd.f32 %v2701, %v3064
        %v3129 = vadd.f32 %v2702, %v3067
        %v3130 = vadd.f32 %v2703, %v3072
        %v3131 = vadd.f32 %v2704, %v3075
        %v3132 = vadd.f32 %v2705, %v3080
        %v3133 = vadd.f32 %v2706, %v3083
        %v3134 = vadd.f32 %v2707, %v3088
        %v3135 = vadd.f32 %v2708, %v3091
        %v3136 = vadd.f32 %v2709, %v3096
        %v3137 = vadd.f32 %v2710, %v3099
        %v3138 = vld [vmem:[%s2711] sm:$0xf]
        %v3139 = vld [vmem:[%s2711 + $0x4] sm:$0xf]
        %v3140 = vld [vmem:[%s2711 + $0x8] sm:$0x1]
        %v3141 = vld [vmem:[%s2711 + $0xc] sm:$0xf]
        %v3142 = vld [vmem:[%s2711 + $0x10] sm:$0xf]
        %v3143 = vld [vmem:[%s2711 + $0x14] sm:$0x1]
        %v3144 = vld [vmem:[%s2711 + $0x18] sm:$0xf]
        %v3145 = vld [vmem:[%s2711 + $0x1c] sm:$0xf]
        %v3146 = vld [vmem:[%s2711 + $0x20] sm:$0x1]
        %v3147 = vld [vmem:[%s2711 + $0x24] sm:$0xf]
        %v3148 = vld [vmem:[%s2711 + $0x28] sm:$0xf]
        %v3149 = vld [vmem:[%s2711 + $0x2c] sm:$0x1]
        %v3150 = vld [vmem:[%s2711 + $0x30] sm:$0xf]
        %v3151 = vld [vmem:[%s2711 + $0x34] sm:$0xf]
        %v3152 = vld [vmem:[%s2711 + $0x38] sm:$0x1]
        %v3153 = vld [vmem:[%s2711 + $0x3c] sm:$0xf]
        %v3154 = vld [vmem:[%s2711 + $0x40] sm:$0xf]
        %v3155 = vld [vmem:[%s2711 + $0x44] sm:$0x1]
        %v3156 = vld [vmem:[%s2711 + $0x48] sm:$0xf]
        %v3157 = vld [vmem:[%s2711 + $0x4c] sm:$0xf]
        %v3158 = vld [vmem:[%s2711 + $0x50] sm:$0x1]
        %v3159 = vld [vmem:[%s2711 + $0x54] sm:$0xf]
        %v3160 = vld [vmem:[%s2711 + $0x58] sm:$0xf]
        %v3161 = vld [vmem:[%s2711 + $0x5c] sm:$0x1]
        %v3162 = vld [vmem:[%s2711 + $0x60] sm:$0xf]
        %v3163 = vld [vmem:[%s2711 + $0x64] sm:$0xf]
        %v3164 = vld [vmem:[%s2711 + $0x68] sm:$0x1]
        %v3165 = vld [vmem:[%s2711 + $0x6c] sm:$0xf]
        %v3166 = vld [vmem:[%s2711 + $0x70] sm:$0xf]
        %v3167 = vld [vmem:[%s2711 + $0x74] sm:$0x1]
        %v3168 = vld [vmem:[%s2711 + $0x78] sm:$0xf]
        %v3169 = vld [vmem:[%s2711 + $0x7c] sm:$0xf]
        %v3170 = vld [vmem:[%s2711 + $0x80] sm:$0x1]
        %v3171 = vld [vmem:[%s2711 + $0x84] sm:$0xf]
        %v3172 = vld [vmem:[%s2711 + $0x88] sm:$0xf]
        %v3173 = vld [vmem:[%s2711 + $0x8c] sm:$0x1]
        %v3174 = vld [vmem:[%s2711 + $0x90] sm:$0xf]
        %v3175 = vld [vmem:[%s2711 + $0x94] sm:$0xf]
        %v3176 = vld [vmem:[%s2711 + $0x98] sm:$0x1]
        %v3177 = vld [vmem:[%s2711 + $0x9c] sm:$0xf]
        %v3178 = vld [vmem:[%s2711 + $0xa0] sm:$0xf]
        %v3179 = vld [vmem:[%s2711 + $0xa4] sm:$0x1]
        %v3180 = vld [vmem:[%s2711 + $0xa8] sm:$0xf]
        %v3181 = vld [vmem:[%s2711 + $0xac] sm:$0xf]
        %v3182 = vld [vmem:[%s2711 + $0xb0] sm:$0x1]
        %v3183 = vld [vmem:[%s2711 + $0xb4] sm:$0xf]
        %v3184 = vld [vmem:[%s2711 + $0xb8] sm:$0xf]
        %v3185 = vld [vmem:[%s2711 + $0xbc] sm:$0x1]
        %v3186 = vld [vmem:[%s2711 + $0xc0] sm:$0xf]
        %v3187 = vld [vmem:[%s2711 + $0xc4] sm:$0xf]
        %v3188 = vld [vmem:[%s2711 + $0xc8] sm:$0x1]
        %v3189 = vld [vmem:[%s2711 + $0xcc] sm:$0xf]
        %v3190 = vld [vmem:[%s2711 + $0xd0] sm:$0xf]
        %v3191 = vld [vmem:[%s2711 + $0xd4] sm:$0x1]
        %v3193 = vshrl.u32 %v3138, 16
        %v3195 = vrot.slane %v3193, 4
        %v3196 = vshll.u32 %v3138, 16
        %v3198 = vrot.slane %v3196, 5
        %v3199 = vor.u32 %v3195, %v3198
        %v3200 = vrot.slane %v3199, 4
        %v3202 = vshll.u32 %v3139, 16
        %v3204 = vrot.slane %v3202, 5
        %v3205 = vsel %vm1077, %v3200, %v3204
        %v3206 = vshrl.u32 %v3139, 16
        %v3208 = vrot.slane %v3206, 4
        %v3209 = vor.u32 %v3208, %v3204
        %v3210 = vrot.slane %v3209, 4
        %v3212 = vshll.u32 %v3140, 16
        %v3214 = vrot.slane %v3212, 5
        %v3215 = vsel %vm1077, %v3210, %v3214
        %v3217 = vshrl.u32 %v3141, 16
        %v3219 = vrot.slane %v3217, 4
        %v3220 = vshll.u32 %v3141, 16
        %v3222 = vrot.slane %v3220, 5
        %v3223 = vor.u32 %v3219, %v3222
        %v3224 = vrot.slane %v3223, 4
        %v3226 = vshll.u32 %v3142, 16
        %v3228 = vrot.slane %v3226, 5
        %v3229 = vsel %vm1077, %v3224, %v3228
        %v3230 = vshrl.u32 %v3142, 16
        %v3232 = vrot.slane %v3230, 4
        %v3233 = vor.u32 %v3232, %v3228
        %v3234 = vrot.slane %v3233, 4
        %v3236 = vshll.u32 %v3143, 16
        %v3238 = vrot.slane %v3236, 5
        %v3239 = vsel %vm1077, %v3234, %v3238
        %v3241 = vshrl.u32 %v3144, 16
        %v3243 = vrot.slane %v3241, 4
        %v3244 = vshll.u32 %v3144, 16
        %v3246 = vrot.slane %v3244, 5
        %v3247 = vor.u32 %v3243, %v3246
        %v3248 = vrot.slane %v3247, 4
        %v3250 = vshll.u32 %v3145, 16
        %v3252 = vrot.slane %v3250, 5
        %v3253 = vsel %vm1077, %v3248, %v3252
        %v3254 = vshrl.u32 %v3145, 16
        %v3256 = vrot.slane %v3254, 4
        %v3257 = vor.u32 %v3256, %v3252
        %v3258 = vrot.slane %v3257, 4
        %v3260 = vshll.u32 %v3146, 16
        %v3262 = vrot.slane %v3260, 5
        %v3263 = vsel %vm1077, %v3258, %v3262
        %v3265 = vshrl.u32 %v3147, 16
        %v3267 = vrot.slane %v3265, 4
        %v3268 = vshll.u32 %v3147, 16
        %v3270 = vrot.slane %v3268, 5
        %v3271 = vor.u32 %v3267, %v3270
        %v3272 = vrot.slane %v3271, 4
        %v3274 = vshll.u32 %v3148, 16
        %v3276 = vrot.slane %v3274, 5
        %v3277 = vsel %vm1077, %v3272, %v3276
        %v3278 = vshrl.u32 %v3148, 16
        %v3280 = vrot.slane %v3278, 4
        %v3281 = vor.u32 %v3280, %v3276
        %v3282 = vrot.slane %v3281, 4
        %v3284 = vshll.u32 %v3149, 16
        %v3286 = vrot.slane %v3284, 5
        %v3287 = vsel %vm1077, %v3282, %v3286
        %v3289 = vshrl.u32 %v3150, 16
        %v3291 = vrot.slane %v3289, 4
        %v3292 = vshll.u32 %v3150, 16
        %v3294 = vrot.slane %v3292, 5
        %v3295 = vor.u32 %v3291, %v3294
        %v3296 = vrot.slane %v3295, 4
        %v3298 = vshll.u32 %v3151, 16
        %v3300 = vrot.slane %v3298, 5
        %v3301 = vsel %vm1077, %v3296, %v3300
        %v3302 = vshrl.u32 %v3151, 16
        %v3304 = vrot.slane %v3302, 4
        %v3305 = vor.u32 %v3304, %v3300
        %v3306 = vrot.slane %v3305, 4
        %v3308 = vshll.u32 %v3152, 16
        %v3310 = vrot.slane %v3308, 5
        %v3311 = vsel %vm1077, %v3306, %v3310
        %v3313 = vshrl.u32 %v3153, 16
        %v3315 = vrot.slane %v3313, 4
        %v3316 = vshll.u32 %v3153, 16
        %v3318 = vrot.slane %v3316, 5
        %v3319 = vor.u32 %v3315, %v3318
        %v3320 = vrot.slane %v3319, 4
        %v3322 = vshll.u32 %v3154, 16
        %v3324 = vrot.slane %v3322, 5
        %v3325 = vsel %vm1077, %v3320, %v3324
        %v3326 = vshrl.u32 %v3154, 16
        %v3328 = vrot.slane %v3326, 4
        %v3329 = vor.u32 %v3328, %v3324
        %v3330 = vrot.slane %v3329, 4
        %v3332 = vshll.u32 %v3155, 16
        %v3334 = vrot.slane %v3332, 5
        %v3335 = vsel %vm1077, %v3330, %v3334
        %v3337 = vshrl.u32 %v3156, 16
        %v3339 = vrot.slane %v3337, 4
        %v3340 = vshll.u32 %v3156, 16
        %v3342 = vrot.slane %v3340, 5
        %v3343 = vor.u32 %v3339, %v3342
        %v3344 = vrot.slane %v3343, 4
        %v3346 = vshll.u32 %v3157, 16
        %v3348 = vrot.slane %v3346, 5
        %v3349 = vsel %vm1077, %v3344, %v3348
        %v3350 = vshrl.u32 %v3157, 16
        %v3352 = vrot.slane %v3350, 4
        %v3353 = vor.u32 %v3352, %v3348
        %v3354 = vrot.slane %v3353, 4
        %v3356 = vshll.u32 %v3158, 16
        %v3358 = vrot.slane %v3356, 5
        %v3359 = vsel %vm1077, %v3354, %v3358
        %v3361 = vshrl.u32 %v3159, 16
        %v3363 = vrot.slane %v3361, 4
        %v3364 = vshll.u32 %v3159, 16
        %v3366 = vrot.slane %v3364, 5
        %v3367 = vor.u32 %v3363, %v3366
        %v3368 = vrot.slane %v3367, 4
        %v3370 = vshll.u32 %v3160, 16
        %v3372 = vrot.slane %v3370, 5
        %v3373 = vsel %vm1077, %v3368, %v3372
        %v3374 = vshrl.u32 %v3160, 16
        %v3376 = vrot.slane %v3374, 4
        %v3377 = vor.u32 %v3376, %v3372
        %v3378 = vrot.slane %v3377, 4
        %v3380 = vshll.u32 %v3161, 16
        %v3382 = vrot.slane %v3380, 5
        %v3383 = vsel %vm1077, %v3378, %v3382
        %v3385 = vshrl.u32 %v3162, 16
        %v3387 = vrot.slane %v3385, 4
        %v3388 = vshll.u32 %v3162, 16
        %v3390 = vrot.slane %v3388, 5
        %v3391 = vor.u32 %v3387, %v3390
        %v3392 = vrot.slane %v3391, 4
        %v3394 = vshll.u32 %v3163, 16
        %v3396 = vrot.slane %v3394, 5
        %v3397 = vsel %vm1077, %v3392, %v3396
        %v3398 = vshrl.u32 %v3163, 16
        %v3400 = vrot.slane %v3398, 4
        %v3401 = vor.u32 %v3400, %v3396
        %v3402 = vrot.slane %v3401, 4
        %v3404 = vshll.u32 %v3164, 16
        %v3406 = vrot.slane %v3404, 5
        %v3407 = vsel %vm1077, %v3402, %v3406
        %v3409 = vshrl.u32 %v3165, 16
        %v3411 = vrot.slane %v3409, 4
        %v3412 = vshll.u32 %v3165, 16
        %v3414 = vrot.slane %v3412, 5
        %v3415 = vor.u32 %v3411, %v3414
        %v3416 = vrot.slane %v3415, 4
        %v3418 = vshll.u32 %v3166, 16
        %v3420 = vrot.slane %v3418, 5
        %v3421 = vsel %vm1077, %v3416, %v3420
        %v3422 = vshrl.u32 %v3166, 16
        %v3424 = vrot.slane %v3422, 4
        %v3425 = vor.u32 %v3424, %v3420
        %v3426 = vrot.slane %v3425, 4
        %v3428 = vshll.u32 %v3167, 16
        %v3430 = vrot.slane %v3428, 5
        %v3431 = vsel %vm1077, %v3426, %v3430
        %v3433 = vshrl.u32 %v3168, 16
        %v3435 = vrot.slane %v3433, 4
        %v3436 = vshll.u32 %v3168, 16
        %v3438 = vrot.slane %v3436, 5
        %v3439 = vor.u32 %v3435, %v3438
        %v3440 = vrot.slane %v3439, 4
        %v3442 = vshll.u32 %v3169, 16
        %v3444 = vrot.slane %v3442, 5
        %v3445 = vsel %vm1077, %v3440, %v3444
        %v3446 = vshrl.u32 %v3169, 16
        %v3448 = vrot.slane %v3446, 4
        %v3449 = vor.u32 %v3448, %v3444
        %v3450 = vrot.slane %v3449, 4
        %v3452 = vshll.u32 %v3170, 16
        %v3454 = vrot.slane %v3452, 5
        %v3455 = vsel %vm1077, %v3450, %v3454
        %v3457 = vshrl.u32 %v3171, 16
        %v3459 = vrot.slane %v3457, 4
        %v3460 = vshll.u32 %v3171, 16
        %v3462 = vrot.slane %v3460, 5
        %v3463 = vor.u32 %v3459, %v3462
        %v3464 = vrot.slane %v3463, 4
        %v3466 = vshll.u32 %v3172, 16
        %v3468 = vrot.slane %v3466, 5
        %v3469 = vsel %vm1077, %v3464, %v3468
        %v3470 = vshrl.u32 %v3172, 16
        %v3472 = vrot.slane %v3470, 4
        %v3473 = vor.u32 %v3472, %v3468
        %v3474 = vrot.slane %v3473, 4
        %v3476 = vshll.u32 %v3173, 16
        %v3478 = vrot.slane %v3476, 5
        %v3479 = vsel %vm1077, %v3474, %v3478
        %v3481 = vshrl.u32 %v3174, 16
        %v3483 = vrot.slane %v3481, 4
        %v3484 = vshll.u32 %v3174, 16
        %v3486 = vrot.slane %v3484, 5
        %v3487 = vor.u32 %v3483, %v3486
        %v3488 = vrot.slane %v3487, 4
        %v3490 = vshll.u32 %v3175, 16
        %v3492 = vrot.slane %v3490, 5
        %v3493 = vsel %vm1077, %v3488, %v3492
        %v3494 = vshrl.u32 %v3175, 16
        %v3496 = vrot.slane %v3494, 4
        %v3497 = vor.u32 %v3496, %v3492
        %v3498 = vrot.slane %v3497, 4
        %v3500 = vshll.u32 %v3176, 16
        %v3502 = vrot.slane %v3500, 5
        %v3503 = vsel %vm1077, %v3498, %v3502
        %v3505 = vshrl.u32 %v3177, 16
        %v3507 = vrot.slane %v3505, 4
        %v3508 = vshll.u32 %v3177, 16
        %v3510 = vrot.slane %v3508, 5
        %v3511 = vor.u32 %v3507, %v3510
        %v3512 = vrot.slane %v3511, 4
        %v3514 = vshll.u32 %v3178, 16
        %v3516 = vrot.slane %v3514, 5
        %v3517 = vsel %vm1077, %v3512, %v3516
        %v3518 = vshrl.u32 %v3178, 16
        %v3520 = vrot.slane %v3518, 4
        %v3521 = vor.u32 %v3520, %v3516
        %v3522 = vrot.slane %v3521, 4
        %v3524 = vshll.u32 %v3179, 16
        %v3526 = vrot.slane %v3524, 5
        %v3527 = vsel %vm1077, %v3522, %v3526
        %v3529 = vshrl.u32 %v3180, 16
        %v3531 = vrot.slane %v3529, 4
        %v3532 = vshll.u32 %v3180, 16
        %v3534 = vrot.slane %v3532, 5
        %v3535 = vor.u32 %v3531, %v3534
        %v3536 = vrot.slane %v3535, 4
        %v3538 = vshll.u32 %v3181, 16
        %v3540 = vrot.slane %v3538, 5
        %v3541 = vsel %vm1077, %v3536, %v3540
        %v3542 = vshrl.u32 %v3181, 16
        %v3544 = vrot.slane %v3542, 4
        %v3545 = vor.u32 %v3544, %v3540
        %v3546 = vrot.slane %v3545, 4
        %v3548 = vshll.u32 %v3182, 16
        %v3550 = vrot.slane %v3548, 5
        %v3551 = vsel %vm1077, %v3546, %v3550
        %v3553 = vshrl.u32 %v3183, 16
        %v3555 = vrot.slane %v3553, 4
        %v3556 = vshll.u32 %v3183, 16
        %v3558 = vrot.slane %v3556, 5
        %v3559 = vor.u32 %v3555, %v3558
        %v3560 = vrot.slane %v3559, 4
        %v3562 = vshll.u32 %v3184, 16
        %v3564 = vrot.slane %v3562, 5
        %v3565 = vsel %vm1077, %v3560, %v3564
        %v3566 = vshrl.u32 %v3184, 16
        %v3568 = vrot.slane %v3566, 4
        %v3569 = vor.u32 %v3568, %v3564
        %v3570 = vrot.slane %v3569, 4
        %v3572 = vshll.u32 %v3185, 16
        %v3574 = vrot.slane %v3572, 5
        %v3575 = vsel %vm1077, %v3570, %v3574
        %v3577 = vshrl.u32 %v3186, 16
        %v3579 = vrot.slane %v3577, 4
        %v3580 = vshll.u32 %v3186, 16
        %v3582 = vrot.slane %v3580, 5
        %v3583 = vor.u32 %v3579, %v3582
        %v3584 = vrot.slane %v3583, 4
        %v3586 = vshll.u32 %v3187, 16
        %v3588 = vrot.slane %v3586, 5
        %v3589 = vsel %vm1077, %v3584, %v3588
        %v3590 = vshrl.u32 %v3187, 16
        %v3592 = vrot.slane %v3590, 4
        %v3593 = vor.u32 %v3592, %v3588
        %v3594 = vrot.slane %v3593, 4
        %v3596 = vshll.u32 %v3188, 16
        %v3598 = vrot.slane %v3596, 5
        %v3599 = vsel %vm1077, %v3594, %v3598
        %v3601 = vshrl.u32 %v3189, 16
        %v3603 = vrot.slane %v3601, 4
        %v3604 = vshll.u32 %v3189, 16
        %v3606 = vrot.slane %v3604, 5
        %v3607 = vor.u32 %v3603, %v3606
        %v3608 = vrot.slane %v3607, 4
        %v3610 = vshll.u32 %v3190, 16
        %v3612 = vrot.slane %v3610, 5
        %v3613 = vsel %vm1077, %v3608, %v3612
        %v3614 = vshrl.u32 %v3190, 16
        %v3616 = vrot.slane %v3614, 4
        %v3617 = vor.u32 %v3616, %v3612
        %v3618 = vrot.slane %v3617, 4
        %v3620 = vshll.u32 %v3191, 16
        %v3622 = vrot.slane %v3620, 5
        %v3623 = vsel %vm1077, %v3618, %v3622
        %s3624 = scalar_lea.vmem [#allocation9], 128
        %v3625 = vld [vmem:[%s3624] sm:$0xf]
        %v3626 = vld [vmem:[%s3624 + $0x4] sm:$0xf]
        %v3627 = vld [vmem:[%s3624 + $0x8] sm:$0xf]
        %v3628 = vld [vmem:[%s3624 + $0xc] sm:$0xf]
        %v3629 = vld [vmem:[%s3624 + $0x10] sm:$0xf]
        %v3630 = vld [vmem:[%s3624 + $0x14] sm:$0xf]
        %v3631 = vld [vmem:[%s3624 + $0x18] sm:$0xf]
        %v3632 = vld [vmem:[%s3624 + $0x1c] sm:$0xf]
        %v3633 = vunpack.c.l.b16 %v3205
        %v3634 = vunpack.c.l.b16 %v3215
        %v3635 = vunpack.c.l.b16 %v3229
        %v3636 = vunpack.c.l.b16 %v3239
        %v3637 = vunpack.c.l.b16 %v3253
        %v3638 = vunpack.c.l.b16 %v3263
        %v3639 = vunpack.c.l.b16 %v3277
        %v3640 = vunpack.c.l.b16 %v3287
        %v3641 = vunpack.c.l.b16 %v3301
        %v3642 = vunpack.c.l.b16 %v3311
        %v3643 = vunpack.c.l.b16 %v3325
        %v3644 = vunpack.c.l.b16 %v3335
        %v3645 = vunpack.c.l.b16 %v3349
        %v3646 = vunpack.c.l.b16 %v3359
        %v3647 = vunpack.c.l.b16 %v3373
        %v3648 = vunpack.c.l.b16 %v3383
        %v3649 = vunpack.c.l.b16 %v3397
        %v3650 = vunpack.c.l.b16 %v3407
        %v3651 = vunpack.c.l.b16 %v3421
        %v3652 = vunpack.c.l.b16 %v3431
        %v3653 = vunpack.c.l.b16 %v3445
        %v3654 = vunpack.c.l.b16 %v3455
        %v3655 = vunpack.c.l.b16 %v3469
        %v3656 = vunpack.c.l.b16 %v3479
        %v3657 = vunpack.c.l.b16 %v3493
        %v3658 = vunpack.c.l.b16 %v3503
        %v3659 = vunpack.c.l.b16 %v3517
        %v3660 = vunpack.c.l.b16 %v3527
        %v3661 = vunpack.c.l.b16 %v3541
        %v3662 = vunpack.c.l.b16 %v3551
        %v3663 = vunpack.c.l.b16 %v3565
        %v3664 = vunpack.c.l.b16 %v3575
        %v3665 = vunpack.c.l.b16 %v3589
        %v3666 = vunpack.c.l.b16 %v3599
        %v3667 = vunpack.c.l.b16 %v3613
        %v3668 = vunpack.c.l.b16 %v3623
        %v3669 = vpack.c.b16 %v3634, %v3633
        %v3670 = vpack.c.b16 %v3636, %v3635
        %v3671 = vpack.c.b16 %v3638, %v3637
        %v3672 = vpack.c.b16 %v3640, %v3639
        %v3673 = vpack.c.b16 %v3642, %v3641
        %v3674 = vpack.c.b16 %v3644, %v3643
        %v3675 = vpack.c.b16 %v3646, %v3645
        %v3676 = vpack.c.b16 %v3648, %v3647
        %v3677 = vpack.c.b16 %v3650, %v3649
        %v3678 = vpack.c.b16 %v3652, %v3651
        %v3679 = vpack.c.b16 %v3654, %v3653
        %v3680 = vpack.c.b16 %v3656, %v3655
        %v3681 = vpack.c.b16 %v3658, %v3657
        %v3682 = vpack.c.b16 %v3660, %v3659
        %v3683 = vpack.c.b16 %v3662, %v3661
        %v3684 = vpack.c.b16 %v3664, %v3663
        %v3685 = vpack.c.b16 %v3666, %v3665
        %v3686 = vpack.c.b16 %v3668, %v3667
        %v3695 = vunpack.c.l.b16 %v3625
        %v3696 = vunpack.c.l.b16 %v3626
        %v3697 = vunpack.c.l.b16 %v3627
        %v3698 = vunpack.c.l.b16 %v3628
        %v3699 = vunpack.c.l.b16 %v3629
        %v3700 = vunpack.c.l.b16 %v3630
        %v3701 = vunpack.c.l.b16 %v3631
        %v3702 = vunpack.c.l.b16 %v3632
        %v3703 = vpack.c.b16 %v3696, %v3695
        %v3704 = vpack.c.b16 %v3698, %v3697
        %v3705 = vpack.c.b16 %v3700, %v3699
        %v3706 = vpack.c.b16 %v3702, %v3701
        %v3712 = vsel %vm1597, %v3669, 0
        %v3715 = vsel %vm1597, %v3670, 0
        %v3718 = vsel %vm1597, %v3671, 0
        %v3721 = vsel %vm1597, %v3672, 0
        %v3724 = vsel %vm1597, %v3673, 0
        %v3727 = vsel %vm1597, %v3674, 0
        %v3730 = vsel %vm1597, %v3675, 0
        %v3733 = vsel %vm1597, %v3676, 0
        %v3736 = vsel %vm1597, %v3677, 0
        %v3739 = vsel %vm1597, %v3678, 0
        %v3742 = vsel %vm1597, %v3679, 0
        %v3745 = vsel %vm1597, %v3680, 0
        %v3748 = vsel %vm1597, %v3681, 0
        %v3751 = vsel %vm1597, %v3682, 0
        %v3754 = vsel %vm1597, %v3683, 0
        %v3757 = vsel %vm1597, %v3684, 0
        %v3760 = vsel %vm1597, %v3685, 0
        %v3763 = vsel %vm1597, %v3686, 0
        %3765 = vmatprep.subr.bf16.mxu0 0
        %3766 = vmatpush1.bf16.msra.mxu0 %v3703
        %3767 = vmatprep.subr.bf16.mxu0 0
        %3768 = vmatpush1.bf16.msra.mxu0 %v3704
        %3769 = vmatprep.subr.bf16.mxu0 0
        %3770 = vmatpush1.bf16.msra.mxu0 %v3705
        %3771 = vmatprep.subr.bf16.mxu0 0
        %3772 = vmatpush1.bf16.msra.mxu0 %v3706
        %3773 = vmatprep.subr.bf16.mxu0 0
        %3774 = vmatpush1.bf16.msra.mxu0 0
        %3775 = vmatprep.subr.bf16.mxu0 0
        %3776 = vmatpush1.bf16.msra.mxu0 0
        %3777 = vmatprep.subr.bf16.mxu0 0
        %3778 = vmatpush1.bf16.msra.mxu0 0
        %3779 = vmatprep.subr.bf16.mxu0 0
        %3780 = vmatpush1.bf16.msra.mxu0 0
        %3781 = vmatprep.subr.bf16.mxu0 0
        %3782 = vmatpush1.bf16.msra.mxu0 0
        %3783 = vmatprep.subr.bf16.mxu0 0
        %3784 = vmatpush1.bf16.msra.mxu0 0
        %3785 = vmatprep.subr.bf16.mxu0 0
        %3786 = vmatpush1.bf16.msra.mxu0 0
        %3787 = vmatprep.subr.bf16.mxu0 0
        %3788 = vmatpush1.bf16.msra.mxu0 0
        %3789 = vmatprep.subr.bf16.mxu0 0
        %3790 = vmatpush1.bf16.msra.mxu0 0
        %3791 = vmatprep.subr.bf16.mxu0 0
        %3792 = vmatpush1.bf16.msra.mxu0 0
        %3793 = vmatprep.subr.bf16.mxu0 0
        %3794 = vmatpush1.bf16.msra.mxu0 0
        %3795 = vmatprep.subr.bf16.mxu0 0
        %3796 = vmatpush1.bf16.msra.mxu0 0
        %3797 = vmatprep.mubr.bf16.mxu0 0
        %3798 = vmatmul.mubr.bf16.gmra.mrb[0].mxu0 %v3712
        %v3799 = vpop.f32.mrb[0].mxu0
        %v3800 = vadd.f32 0.0, %v3799
        %v3801 = vpop.f32.mrb[0].mxu0
        %v3802 = vpop.f32.mrb[0].mxu0
        %v3803 = vadd.f32 0.0, %v3802
        %v3804 = vpop.f32.mrb[0].mxu0
        %3805 = vmatprep.mubr.bf16.mxu0 0
        %3806 = vmatmul.mubr.bf16.gmra.mrb[0].mxu0 %v3715
        %v3807 = vpop.f32.mrb[0].mxu0
        %v3808 = vadd.f32 0.0, %v3807
        %v3809 = vpop.f32.mrb[0].mxu0
        %v3810 = vpop.f32.mrb[0].mxu0
        %v3811 = vadd.f32 0.0, %v3810
        %v3812 = vpop.f32.mrb[0].mxu0
        %3813 = vmatprep.mubr.bf16.mxu0 0
        %3814 = vmatmul.mubr.bf16.gmra.mrb[0].mxu0 %v3718
        %v3815 = vpop.f32.mrb[0].mxu0
        %v3816 = vadd.f32 0.0, %v3815
        %v3817 = vpop.f32.mrb[0].mxu0
        %v3818 = vpop.f32.mrb[0].mxu0
        %v3819 = vadd.f32 0.0, %v3818
        %v3820 = vpop.f32.mrb[0].mxu0
        %3821 = vmatprep.mubr.bf16.mxu0 0
        %3822 = vmatmul.mubr.bf16.gmra.mrb[0].mxu0 %v3721
        %v3823 = vpop.f32.mrb[0].mxu0
        %v3824 = vadd.f32 0.0, %v3823
        %v3825 = vpop.f32.mrb[0].mxu0
        %v3826 = vpop.f32.mrb[0].mxu0
        %v3827 = vadd.f32 0.0, %v3826
        %v3828 = vpop.f32.mrb[0].mxu0
        %3829 = vmatprep.mubr.bf16.mxu0 0
        %3830 = vmatmul.mubr.bf16.gmra.mrb[0].mxu0 %v3724
        %v3831 = vpop.f32.mrb[0].mxu0
        %v3832 = vadd.f32 0.0, %v3831
        %v3833 = vpop.f32.mrb[0].mxu0
        %v3834 = vpop.f32.mrb[0].mxu0
        %v3835 = vadd.f32 0.0, %v3834
        %v3836 = vpop.f32.mrb[0].mxu0
        %3837 = vmatprep.mubr.bf16.mxu0 0
        %3838 = vmatmul.mubr.bf16.gmra.mrb[0].mxu0 %v3727
        %v3839 = vpop.f32.mrb[0].mxu0
        %v3840 = vadd.f32 0.0, %v3839
        %v3841 = vpop.f32.mrb[0].mxu0
        %v3842 = vpop.f32.mrb[0].mxu0
        %v3843 = vadd.f32 0.0, %v3842
        %v3844 = vpop.f32.mrb[0].mxu0
        %3845 = vmatprep.mubr.bf16.mxu0 0
        %3846 = vmatmul.mubr.bf16.gmra.mrb[0].mxu0 %v3730
        %v3847 = vpop.f32.mrb[0].mxu0
        %v3848 = vadd.f32 0.0, %v3847
        %v3849 = vpop.f32.mrb[0].mxu0
        %v3850 = vpop.f32.mrb[0].mxu0
        %v3851 = vadd.f32 0.0, %v3850
        %v3852 = vpop.f32.mrb[0].mxu0
        %3853 = vmatprep.mubr.bf16.mxu0 0
        %3854 = vmatmul.mubr.bf16.gmra.mrb[0].mxu0 %v3733
        %v3855 = vpop.f32.mrb[0].mxu0
        %v3856 = vadd.f32 0.0, %v3855
        %v3857 = vpop.f32.mrb[0].mxu0
        %v3858 = vpop.f32.mrb[0].mxu0
        %v3859 = vadd.f32 0.0, %v3858
        %v3860 = vpop.f32.mrb[0].mxu0
        %3861 = vmatprep.mubr.bf16.mxu0 0
        %3862 = vmatmul.mubr.bf16.gmra.mrb[0].mxu0 %v3736
        %v3863 = vpop.f32.mrb[0].mxu0
        %v3864 = vadd.f32 0.0, %v3863
        %v3865 = vpop.f32.mrb[0].mxu0
        %v3866 = vpop.f32.mrb[0].mxu0
        %v3867 = vadd.f32 0.0, %v3866
        %v3868 = vpop.f32.mrb[0].mxu0
        %3869 = vmatprep.mubr.bf16.mxu0 0
        %3870 = vmatmul.mubr.bf16.gmra.mrb[0].mxu0 %v3739
        %v3871 = vpop.f32.mrb[0].mxu0
        %v3872 = vadd.f32 0.0, %v3871
        %v3873 = vpop.f32.mrb[0].mxu0
        %v3874 = vpop.f32.mrb[0].mxu0
        %v3875 = vadd.f32 0.0, %v3874
        %v3876 = vpop.f32.mrb[0].mxu0
        %3877 = vmatprep.mubr.bf16.mxu0 0
        %3878 = vmatmul.mubr.bf16.gmra.mrb[0].mxu0 %v3742
        %v3879 = vpop.f32.mrb[0].mxu0
        %v3880 = vadd.f32 0.0, %v3879
        %v3881 = vpop.f32.mrb[0].mxu0
        %v3882 = vpop.f32.mrb[0].mxu0
        %v3883 = vadd.f32 0.0, %v3882
        %v3884 = vpop.f32.mrb[0].mxu0
        %3885 = vmatprep.mubr.bf16.mxu0 0
        %3886 = vmatmul.mubr.bf16.gmra.mrb[0].mxu0 %v3745
        %v3887 = vpop.f32.mrb[0].mxu0
        %v3888 = vadd.f32 0.0, %v3887
        %v3889 = vpop.f32.mrb[0].mxu0
        %v3890 = vpop.f32.mrb[0].mxu0
        %v3891 = vadd.f32 0.0, %v3890
        %v3892 = vpop.f32.mrb[0].mxu0
        %3893 = vmatprep.mubr.bf16.mxu0 0
        %3894 = vmatmul.mubr.bf16.gmra.mrb[0].mxu0 %v3748
        %v3895 = vpop.f32.mrb[0].mxu0
        %v3896 = vadd.f32 0.0, %v3895
        %v3897 = vpop.f32.mrb[0].mxu0
        %v3898 = vpop.f32.mrb[0].mxu0
        %v3899 = vadd.f32 0.0, %v3898
        %v3900 = vpop.f32.mrb[0].mxu0
        %3901 = vmatprep.mubr.bf16.mxu0 0
        %3902 = vmatmul.mubr.bf16.gmra.mrb[0].mxu0 %v3751
        %v3903 = vpop.f32.mrb[0].mxu0
        %v3904 = vadd.f32 0.0, %v3903
        %v3905 = vpop.f32.mrb[0].mxu0
        %v3906 = vpop.f32.mrb[0].mxu0
        %v3907 = vadd.f32 0.0, %v3906
        %v3908 = vpop.f32.mrb[0].mxu0
        %3909 = vmatprep.mubr.bf16.mxu0 0
        %3910 = vmatmul.mubr.bf16.gmra.mrb[0].mxu0 %v3754
        %v3911 = vpop.f32.mrb[0].mxu0
        %v3912 = vadd.f32 0.0, %v3911
        %v3913 = vpop.f32.mrb[0].mxu0
        %v3914 = vpop.f32.mrb[0].mxu0
        %v3915 = vadd.f32 0.0, %v3914
        %v3916 = vpop.f32.mrb[0].mxu0
        %3917 = vmatprep.mubr.bf16.mxu0 0
        %3918 = vmatmul.mubr.bf16.gmra.mrb[0].mxu0 %v3757
        %v3919 = vpop.f32.mrb[0].mxu0
        %v3920 = vadd.f32 0.0, %v3919
        %v3921 = vpop.f32.mrb[0].mxu0
        %v3922 = vpop.f32.mrb[0].mxu0
        %v3923 = vadd.f32 0.0, %v3922
        %v3924 = vpop.f32.mrb[0].mxu0
        %3925 = vmatprep.mubr.bf16.mxu0 0
        %3926 = vmatmul.mubr.bf16.gmra.mrb[0].mxu0 %v3760
        %v3927 = vpop.f32.mrb[0].mxu0
        %v3928 = vadd.f32 0.0, %v3927
        %v3929 = vpop.f32.mrb[0].mxu0
        %v3930 = vpop.f32.mrb[0].mxu0
        %v3931 = vadd.f32 0.0, %v3930
        %v3932 = vpop.f32.mrb[0].mxu0
        %3933 = vmatprep.mubr.bf16.mxu0 0
        %3934 = vmatmul.mubr.bf16.gmra.mrb[0].mxu0 %v3763
        %v3935 = vpop.f32.mrb[0].mxu0
        %v3936 = vadd.f32 0.0, %v3935
        %v3937 = vpop.f32.mrb[0].mxu0
        %v3938 = vpop.f32.mrb[0].mxu0
        %v3939 = vadd.f32 0.0, %v3938
        %v3940 = vpop.f32.mrb[0].mxu0
        %3941 = vdwg.mxu0
        %v3942 = vadd.f32 %v3102, %v3800
        %v3943 = vadd.f32 %v3103, %v3803
        %v3944 = vadd.f32 %v3104, %v3808
        %v3945 = vadd.f32 %v3105, %v3811
        %v3946 = vadd.f32 %v3106, %v3816
        %v3947 = vadd.f32 %v3107, %v3819
        %v3948 = vadd.f32 %v3108, %v3824
        %v3949 = vadd.f32 %v3109, %v3827
        %v3950 = vadd.f32 %v3110, %v3832
        %v3951 = vadd.f32 %v3111, %v3835
        %v3952 = vadd.f32 %v3112, %v3840
        %v3953 = vadd.f32 %v3113, %v3843
        %v3954 = vadd.f32 %v3114, %v3848
        %v3955 = vadd.f32 %v3115, %v3851
        %v3956 = vadd.f32 %v3116, %v3856
        %v3957 = vadd.f32 %v3117, %v3859
        %v3958 = vadd.f32 %v3118, %v3864
        %v3959 = vadd.f32 %v3119, %v3867
        %v3960 = vadd.f32 %v3120, %v3872
        %v3961 = vadd.f32 %v3121, %v3875
        %v3962 = vadd.f32 %v3122, %v3880
        %v3963 = vadd.f32 %v3123, %v3883
        %v3964 = vadd.f32 %v3124, %v3888
        %v3965 = vadd.f32 %v3125, %v3891
        %v3966 = vadd.f32 %v3126, %v3896
        %v3967 = vadd.f32 %v3127, %v3899
        %v3968 = vadd.f32 %v3128, %v3904
        %v3969 = vadd.f32 %v3129, %v3907
        %v3970 = vadd.f32 %v3130, %v3912
        %v3971 = vadd.f32 %v3131, %v3915
        %v3972 = vadd.f32 %v3132, %v3920
        %v3973 = vadd.f32 %v3133, %v3923
        %v3974 = vadd.f32 %v3134, %v3928
        %v3975 = vadd.f32 %v3135, %v3931
        %v3976 = vadd.f32 %v3136, %v3936
        %v3977 = vadd.f32 %v3137, %v3939
        %v3978 = vld [vmem:[%s2711] sm:$0xe]
        %v3979 = vld [vmem:[%s2711 + $0xc] sm:$0xe]
        %v3980 = vld [vmem:[%s2711 + $0x18] sm:$0xe]
        %v3981 = vld [vmem:[%s2711 + $0x24] sm:$0xe]
        %v3982 = vld [vmem:[%s2711 + $0x30] sm:$0xe]
        %v3983 = vld [vmem:[%s2711 + $0x3c] sm:$0xe]
        %v3984 = vld [vmem:[%s2711 + $0x48] sm:$0xe]
        %v3985 = vld [vmem:[%s2711 + $0x54] sm:$0xe]
        %v3986 = vld [vmem:[%s2711 + $0x60] sm:$0xe]
        %v3987 = vld [vmem:[%s2711 + $0x6c] sm:$0xe]
        %v3988 = vld [vmem:[%s2711 + $0x78] sm:$0xe]
        %v3989 = vld [vmem:[%s2711 + $0x84] sm:$0xe]
        %v3990 = vld [vmem:[%s2711 + $0x90] sm:$0xe]
        %v3991 = vld [vmem:[%s2711 + $0x9c] sm:$0xe]
        %v3992 = vld [vmem:[%s2711 + $0xa8] sm:$0xe]
        %v3993 = vld [vmem:[%s2711 + $0xb4] sm:$0xe]
        %v3994 = vld [vmem:[%s2711 + $0xc0] sm:$0xe]
        %v3995 = vld [vmem:[%s2711 + $0xcc] sm:$0xe]
        %v4050 = vrot.slane %v3978, 5
        %v4051 = vrot.slane %v4050, 4
        %v4052 = vrot.slane %v3139, 5
        %v4053 = vsel %vm2230, %v4051, %v4052
        %v4054 = vrot.slane %v4052, 4
        %v4055 = vrot.slane %v3140, 5
        %v4056 = vsel %vm2230, %v4054, %v4055
        %v4057 = vrot.slane %v3979, 5
        %v4058 = vrot.slane %v4057, 4
        %v4059 = vrot.slane %v3142, 5
        %v4060 = vsel %vm2230, %v4058, %v4059
        %v4061 = vrot.slane %v4059, 4
        %v4062 = vrot.slane %v3143, 5
        %v4063 = vsel %vm2230, %v4061, %v4062
        %v4064 = vrot.slane %v3980, 5
        %v4065 = vrot.slane %v4064, 4
        %v4066 = vrot.slane %v3145, 5
        %v4067 = vsel %vm2230, %v4065, %v4066
        %v4068 = vrot.slane %v4066, 4
        %v4069 = vrot.slane %v3146, 5
        %v4070 = vsel %vm2230, %v4068, %v4069
        %v4071 = vrot.slane %v3981, 5
        %v4072 = vrot.slane %v4071, 4
        %v4073 = vrot.slane %v3148, 5
        %v4074 = vsel %vm2230, %v4072, %v4073
        %v4075 = vrot.slane %v4073, 4
        %v4076 = vrot.slane %v3149, 5
        %v4077 = vsel %vm2230, %v4075, %v4076
        %v4078 = vrot.slane %v3982, 5
        %v4079 = vrot.slane %v4078, 4
        %v4080 = vrot.slane %v3151, 5
        %v4081 = vsel %vm2230, %v4079, %v4080
        %v4082 = vrot.slane %v4080, 4
        %v4083 = vrot.slane %v3152, 5
        %v4084 = vsel %vm2230, %v4082, %v4083
        %v4085 = vrot.slane %v3983, 5
        %v4086 = vrot.slane %v4085, 4
        %v4087 = vrot.slane %v3154, 5
        %v4088 = vsel %vm2230, %v4086, %v4087
        %v4089 = vrot.slane %v4087, 4
        %v4090 = vrot.slane %v3155, 5
        %v4091 = vsel %vm2230, %v4089, %v4090
        %v4092 = vrot.slane %v3984, 5
        %v4093 = vrot.slane %v4092, 4
        %v4094 = vrot.slane %v3157, 5
        %v4095 = vsel %vm2230, %v4093, %v4094
        %v4096 = vrot.slane %v4094, 4
        %v4097 = vrot.slane %v3158, 5
        %v4098 = vsel %vm2230, %v4096, %v4097
        %v4099 = vrot.slane %v3985, 5
        %v4100 = vrot.slane %v4099, 4
        %v4101 = vrot.slane %v3160, 5
        %v4102 = vsel %vm2230, %v4100, %v4101
        %v4103 = vrot.slane %v4101, 4
        %v4104 = vrot.slane %v3161, 5
        %v4105 = vsel %vm2230, %v4103, %v4104
        %v4106 = vrot.slane %v3986, 5
        %v4107 = vrot.slane %v4106, 4
        %v4108 = vrot.slane %v3163, 5
        %v4109 = vsel %vm2230, %v4107, %v4108
        %v4110 = vrot.slane %v4108, 4
        %v4111 = vrot.slane %v3164, 5
        %v4112 = vsel %vm2230, %v4110, %v4111
        %v4113 = vrot.slane %v3987, 5
        %v4114 = vrot.slane %v4113, 4
        %v4115 = vrot.slane %v3166, 5
        %v4116 = vsel %vm2230, %v4114, %v4115
        %v4117 = vrot.slane %v4115, 4
        %v4118 = vrot.slane %v3167, 5
        %v4119 = vsel %vm2230, %v4117, %v4118
        %v4120 = vrot.slane %v3988, 5
        %v4121 = vrot.slane %v4120, 4
        %v4122 = vrot.slane %v3169, 5
        %v4123 = vsel %vm2230, %v4121, %v4122
        %v4124 = vrot.slane %v4122, 4
        %v4125 = vrot.slane %v3170, 5
        %v4126 = vsel %vm2230, %v4124, %v4125
        %v4127 = vrot.slane %v3989, 5
        %v4128 = vrot.slane %v4127, 4
        %v4129 = vrot.slane %v3172, 5
        %v4130 = vsel %vm2230, %v4128, %v4129
        %v4131 = vrot.slane %v4129, 4
        %v4132 = vrot.slane %v3173, 5
        %v4133 = vsel %vm2230, %v4131, %v4132
        %v4134 = vrot.slane %v3990, 5
        %v4135 = vrot.slane %v4134, 4
        %v4136 = vrot.slane %v3175, 5
        %v4137 = vsel %vm2230, %v4135, %v4136
        %v4138 = vrot.slane %v4136, 4
        %v4139 = vrot.slane %v3176, 5
        %v4140 = vsel %vm2230, %v4138, %v4139
        %v4141 = vrot.slane %v3991, 5
        %v4142 = vrot.slane %v4141, 4
        %v4143 = vrot.slane %v3178, 5
        %v4144 = vsel %vm2230, %v4142, %v4143
        %v4145 = vrot.slane %v4143, 4
        %v4146 = vrot.slane %v3179, 5
        %v4147 = vsel %vm2230, %v4145, %v4146
        %v4148 = vrot.slane %v3992, 5
        %v4149 = vrot.slane %v4148, 4
        %v4150 = vrot.slane %v3181, 5
        %v4151 = vsel %vm2230, %v4149, %v4150
        %v4152 = vrot.slane %v4150, 4
        %v4153 = vrot.slane %v3182, 5
        %v4154 = vsel %vm2230, %v4152, %v4153
        %v4155 = vrot.slane %v3993, 5
        %v4156 = vrot.slane %v4155, 4
        %v4157 = vrot.slane %v3184, 5
        %v4158 = vsel %vm2230, %v4156, %v4157
        %v4159 = vrot.slane %v4157, 4
        %v4160 = vrot.slane %v3185, 5
        %v4161 = vsel %vm2230, %v4159, %v4160
        %v4162 = vrot.slane %v3994, 5
        %v4163 = vrot.slane %v4162, 4
        %v4164 = vrot.slane %v3187, 5
        %v4165 = vsel %vm2230, %v4163, %v4164
        %v4166 = vrot.slane %v4164, 4
        %v4167 = vrot.slane %v3188, 5
        %v4168 = vsel %vm2230, %v4166, %v4167
        %v4169 = vrot.slane %v3995, 5
        %v4170 = vrot.slane %v4169, 4
        %v4171 = vrot.slane %v3190, 5
        %v4172 = vsel %vm2230, %v4170, %v4171
        %v4173 = vrot.slane %v4171, 4
        %v4174 = vrot.slane %v3191, 5
        %v4175 = vsel %vm2230, %v4173, %v4174
        %s4176 = scalar_lea.vmem [#allocation9], 160
        %v4177 = vld [vmem:[%s4176] sm:$0xf]
        %v4178 = vld [vmem:[%s4176 + $0x4] sm:$0xf]
        %v4179 = vld [vmem:[%s4176 + $0x8] sm:$0xf]
        %v4180 = vld [vmem:[%s4176 + $0xc] sm:$0xf]
        %v4181 = vld [vmem:[%s4176 + $0x10] sm:$0xf]
        %v4182 = vld [vmem:[%s4176 + $0x14] sm:$0xf]
        %v4183 = vld [vmem:[%s4176 + $0x18] sm:$0xf]
        %v4184 = vld [vmem:[%s4176 + $0x1c] sm:$0xf]
        %v4185 = vunpack.c.l.b16 %v4053
        %v4186 = vunpack.c.l.b16 %v4056
        %v4187 = vunpack.c.l.b16 %v4060
        %v4188 = vunpack.c.l.b16 %v4063
        %v4189 = vunpack.c.l.b16 %v4067
        %v4190 = vunpack.c.l.b16 %v4070
        %v4191 = vunpack.c.l.b16 %v4074
        %v4192 = vunpack.c.l.b16 %v4077
        %v4193 = vunpack.c.l.b16 %v4081
        %v4194 = vunpack.c.l.b16 %v4084
        %v4195 = vunpack.c.l.b16 %v4088
        %v4196 = vunpack.c.l.b16 %v4091
        %v4197 = vunpack.c.l.b16 %v4095
        %v4198 = vunpack.c.l.b16 %v4098
        %v4199 = vunpack.c.l.b16 %v4102
        %v4200 = vunpack.c.l.b16 %v4105
        %v4201 = vunpack.c.l.b16 %v4109
        %v4202 = vunpack.c.l.b16 %v4112
        %v4203 = vunpack.c.l.b16 %v4116
        %v4204 = vunpack.c.l.b16 %v4119
        %v4205 = vunpack.c.l.b16 %v4123
        %v4206 = vunpack.c.l.b16 %v4126
        %v4207 = vunpack.c.l.b16 %v4130
        %v4208 = vunpack.c.l.b16 %v4133
        %v4209 = vunpack.c.l.b16 %v4137
        %v4210 = vunpack.c.l.b16 %v4140
        %v4211 = vunpack.c.l.b16 %v4144
        %v4212 = vunpack.c.l.b16 %v4147
        %v4213 = vunpack.c.l.b16 %v4151
        %v4214 = vunpack.c.l.b16 %v4154
        %v4215 = vunpack.c.l.b16 %v4158
        %v4216 = vunpack.c.l.b16 %v4161
        %v4217 = vunpack.c.l.b16 %v4165
        %v4218 = vunpack.c.l.b16 %v4168
        %v4219 = vunpack.c.l.b16 %v4172
        %v4220 = vunpack.c.l.b16 %v4175
        %v4221 = vpack.c.b16 %v4186, %v4185
        %v4222 = vpack.c.b16 %v4188, %v4187
        %v4223 = vpack.c.b16 %v4190, %v4189
        %v4224 = vpack.c.b16 %v4192, %v4191
        %v4225 = vpack.c.b16 %v4194, %v4193
        %v4226 = vpack.c.b16 %v4196, %v4195
        %v4227 = vpack.c.b16 %v4198, %v4197
        %v4228 = vpack.c.b16 %v4200, %v4199
        %v4229 = vpack.c.b16 %v4202, %v4201
        %v4230 = vpack.c.b16 %v4204, %v4203
        %v4231 = vpack.c.b16 %v4206, %v4205
        %v4232 = vpack.c.b16 %v4208, %v4207
        %v4233 = vpack.c.b16 %v4210, %v4209
        %v4234 = vpack.c.b16 %v4212, %v4211
        %v4235 = vpack.c.b16 %v4214, %v4213
        %v4236 = vpack.c.b16 %v4216, %v4215
        %v4237 = vpack.c.b16 %v4218, %v4217
        %v4238 = vpack.c.b16 %v4220, %v4219
        %v4247 = vunpack.c.l.b16 %v4177
        %v4248 = vunpack.c.l.b16 %v4178
        %v4249 = vunpack.c.l.b16 %v4179
        %v4250 = vunpack.c.l.b16 %v4180
        %v4251 = vunpack.c.l.b16 %v4181
        %v4252 = vunpack.c.l.b16 %v4182
        %v4253 = vunpack.c.l.b16 %v4183
        %v4254 = vunpack.c.l.b16 %v4184
        %v4255 = vpack.c.b16 %v4248, %v4247
        %v4256 = vpack.c.b16 %v4250, %v4249
        %v4257 = vpack.c.b16 %v4252, %v4251
        %v4258 = vpack.c.b16 %v4254, %v4253
        %v4264 = vsel %vm1597, %v4221, 0
        %v4267 = vsel %vm1597, %v4222, 0
        %v4270 = vsel %vm1597, %v4223, 0
        %v4273 = vsel %vm1597, %v4224, 0
        %v4276 = vsel %vm1597, %v4225, 0
        %v4279 = vsel %vm1597, %v4226, 0
        %v4282 = vsel %vm1597, %v4227, 0
        %v4285 = vsel %vm1597, %v4228, 0
        %v4288 = vsel %vm1597, %v4229, 0
        %v4291 = vsel %vm1597, %v4230, 0
        %v4294 = vsel %vm1597, %v4231, 0
        %v4297 = vsel %vm1597, %v4232, 0
        %v4300 = vsel %vm1597, %v4233, 0
        %v4303 = vsel %vm1597, %v4234, 0
        %v4306 = vsel %vm1597, %v4235, 0
        %v4309 = vsel %vm1597, %v4236, 0
        %v4312 = vsel %vm1597, %v4237, 0
        %v4315 = vsel %vm1597, %v4238, 0
        %4317 = vmatprep.subr.bf16.mxu0 0
        %4318 = vmatpush1.bf16.msra.mxu0 %v4255
        %4319 = vmatprep.subr.bf16.mxu0 0
        %4320 = vmatpush1.bf16.msra.mxu0 %v4256
        %4321 = vmatprep.subr.bf16.mxu0 0
        %4322 = vmatpush1.bf16.msra.mxu0 %v4257
        %4323 = vmatprep.subr.bf16.mxu0 0
        %4324 = vmatpush1.bf16.msra.mxu0 %v4258
        %4325 = vmatprep.subr.bf16.mxu0 0
        %4326 = vmatpush1.bf16.msra.mxu0 0
        %4327 = vmatprep.subr.bf16.mxu0 0
        %4328 = vmatpush1.bf16.msra.mxu0 0
        %4329 = vmatprep.subr.bf16.mxu0 0
        %4330 = vmatpush1.bf16.msra.mxu0 0
        %4331 = vmatprep.subr.bf16.mxu0 0
        %4332 = vmatpush1.bf16.msra.mxu0 0
        %4333 = vmatprep.subr.bf16.mxu0 0
        %4334 = vmatpush1.bf16.msra.mxu0 0
        %4335 = vmatprep.subr.bf16.mxu0 0
        %4336 = vmatpush1.bf16.msra.mxu0 0
        %4337 = vmatprep.subr.bf16.mxu0 0
        %4338 = vmatpush1.bf16.msra.mxu0 0
        %4339 = vmatprep.subr.bf16.mxu0 0
        %4340 = vmatpush1.bf16.msra.mxu0 0
        %4341 = vmatprep.subr.bf16.mxu0 0
        %4342 = vmatpush1.bf16.msra.mxu0 0
        %4343 = vmatprep.subr.bf16.mxu0 0
        %4344 = vmatpush1.bf16.msra.mxu0 0
        %4345 = vmatprep.subr.bf16.mxu0 0
        %4346 = vmatpush1.bf16.msra.mxu0 0
        %4347 = vmatprep.subr.bf16.mxu0 0
        %4348 = vmatpush1.bf16.msra.mxu0 0
        %4349 = vmatprep.mubr.bf16.mxu0 0
        %4350 = vmatmul.mubr.bf16.gmra.mrb[0].mxu0 %v4264
        %v4351 = vpop.f32.mrb[0].mxu0
        %v4352 = vadd.f32 0.0, %v4351
        %v4353 = vpop.f32.mrb[0].mxu0
        %v4354 = vpop.f32.mrb[0].mxu0
        %v4355 = vadd.f32 0.0, %v4354
        %v4356 = vpop.f32.mrb[0].mxu0
        %4357 = vmatprep.mubr.bf16.mxu0 0
        %4358 = vmatmul.mubr.bf16.gmra.mrb[0].mxu0 %v4267
        %v4359 = vpop.f32.mrb[0].mxu0
        %v4360 = vadd.f32 0.0, %v4359
        %v4361 = vpop.f32.mrb[0].mxu0
        %v4362 = vpop.f32.mrb[0].mxu0
        %v4363 = vadd.f32 0.0, %v4362
        %v4364 = vpop.f32.mrb[0].mxu0
        %4365 = vmatprep.mubr.bf16.mxu0 0
        %4366 = vmatmul.mubr.bf16.gmra.mrb[0].mxu0 %v4270
        %v4367 = vpop.f32.mrb[0].mxu0
        %v4368 = vadd.f32 0.0, %v4367
        %v4369 = vpop.f32.mrb[0].mxu0
        %v4370 = vpop.f32.mrb[0].mxu0
        %v4371 = vadd.f32 0.0, %v4370
        %v4372 = vpop.f32.mrb[0].mxu0
        %4373 = vmatprep.mubr.bf16.mxu0 0
        %4374 = vmatmul.mubr.bf16.gmra.mrb[0].mxu0 %v4273
        %v4375 = vpop.f32.mrb[0].mxu0
        %v4376 = vadd.f32 0.0, %v4375
        %v4377 = vpop.f32.mrb[0].mxu0
        %v4378 = vpop.f32.mrb[0].mxu0
        %v4379 = vadd.f32 0.0, %v4378
        %v4380 = vpop.f32.mrb[0].mxu0
        %4381 = vmatprep.mubr.bf16.mxu0 0
        %4382 = vmatmul.mubr.bf16.gmra.mrb[0].mxu0 %v4276
        %v4383 = vpop.f32.mrb[0].mxu0
        %v4384 = vadd.f32 0.0, %v4383
        %v4385 = vpop.f32.mrb[0].mxu0
        %v4386 = vpop.f32.mrb[0].mxu0
        %v4387 = vadd.f32 0.0, %v4386
        %v4388 = vpop.f32.mrb[0].mxu0
        %4389 = vmatprep.mubr.bf16.mxu0 0
        %4390 = vmatmul.mubr.bf16.gmra.mrb[0].mxu0 %v4279
        %v4391 = vpop.f32.mrb[0].mxu0
        %v4392 = vadd.f32 0.0, %v4391
        %v4393 = vpop.f32.mrb[0].mxu0
        %v4394 = vpop.f32.mrb[0].mxu0
        %v4395 = vadd.f32 0.0, %v4394
        %v4396 = vpop.f32.mrb[0].mxu0
        %4397 = vmatprep.mubr.bf16.mxu0 0
        %4398 = vmatmul.mubr.bf16.gmra.mrb[0].mxu0 %v4282
        %v4399 = vpop.f32.mrb[0].mxu0
        %v4400 = vadd.f32 0.0, %v4399
        %v4401 = vpop.f32.mrb[0].mxu0
        %v4402 = vpop.f32.mrb[0].mxu0
        %v4403 = vadd.f32 0.0, %v4402
        %v4404 = vpop.f32.mrb[0].mxu0
        %4405 = vmatprep.mubr.bf16.mxu0 0
        %4406 = vmatmul.mubr.bf16.gmra.mrb[0].mxu0 %v4285
        %v4407 = vpop.f32.mrb[0].mxu0
        %v4408 = vadd.f32 0.0, %v4407
        %v4409 = vpop.f32.mrb[0].mxu0
        %v4410 = vpop.f32.mrb[0].mxu0
        %v4411 = vadd.f32 0.0, %v4410
        %v4412 = vpop.f32.mrb[0].mxu0
        %4413 = vmatprep.mubr.bf16.mxu0 0
        %4414 = vmatmul.mubr.bf16.gmra.mrb[0].mxu0 %v4288
        %v4415 = vpop.f32.mrb[0].mxu0
        %v4416 = vadd.f32 0.0, %v4415
        %v4417 = vpop.f32.mrb[0].mxu0
        %v4418 = vpop.f32.mrb[0].mxu0
        %v4419 = vadd.f32 0.0, %v4418
        %v4420 = vpop.f32.mrb[0].mxu0
        %4421 = vmatprep.mubr.bf16.mxu0 0
        %4422 = vmatmul.mubr.bf16.gmra.mrb[0].mxu0 %v4291
        %v4423 = vpop.f32.mrb[0].mxu0
        %v4424 = vadd.f32 0.0, %v4423
        %v4425 = vpop.f32.mrb[0].mxu0
        %v4426 = vpop.f32.mrb[0].mxu0
        %v4427 = vadd.f32 0.0, %v4426
        %v4428 = vpop.f32.mrb[0].mxu0
        %4429 = vmatprep.mubr.bf16.mxu0 0
        %4430 = vmatmul.mubr.bf16.gmra.mrb[0].mxu0 %v4294
        %v4431 = vpop.f32.mrb[0].mxu0
        %v4432 = vadd.f32 0.0, %v4431
        %v4433 = vpop.f32.mrb[0].mxu0
        %v4434 = vpop.f32.mrb[0].mxu0
        %v4435 = vadd.f32 0.0, %v4434
        %v4436 = vpop.f32.mrb[0].mxu0
        %4437 = vmatprep.mubr.bf16.mxu0 0
        %4438 = vmatmul.mubr.bf16.gmra.mrb[0].mxu0 %v4297
        %v4439 = vpop.f32.mrb[0].mxu0
        %v4440 = vadd.f32 0.0, %v4439
        %v4441 = vpop.f32.mrb[0].mxu0
        %v4442 = vpop.f32.mrb[0].mxu0
        %v4443 = vadd.f32 0.0, %v4442
        %v4444 = vpop.f32.mrb[0].mxu0
        %4445 = vmatprep.mubr.bf16.mxu0 0
        %4446 = vmatmul.mubr.bf16.gmra.mrb[0].mxu0 %v4300
        %v4447 = vpop.f32.mrb[0].mxu0
        %v4448 = vadd.f32 0.0, %v4447
        %v4449 = vpop.f32.mrb[0].mxu0
        %v4450 = vpop.f32.mrb[0].mxu0
        %v4451 = vadd.f32 0.0, %v4450
        %v4452 = vpop.f32.mrb[0].mxu0
        %4453 = vmatprep.mubr.bf16.mxu0 0
        %4454 = vmatmul.mubr.bf16.gmra.mrb[0].mxu0 %v4303
        %v4455 = vpop.f32.mrb[0].mxu0
        %v4456 = vadd.f32 0.0, %v4455
        %v4457 = vpop.f32.mrb[0].mxu0
        %v4458 = vpop.f32.mrb[0].mxu0
        %v4459 = vadd.f32 0.0, %v4458
        %v4460 = vpop.f32.mrb[0].mxu0
        %4461 = vmatprep.mubr.bf16.mxu0 0
        %4462 = vmatmul.mubr.bf16.gmra.mrb[0].mxu0 %v4306
        %v4463 = vpop.f32.mrb[0].mxu0
        %v4464 = vadd.f32 0.0, %v4463
        %v4465 = vpop.f32.mrb[0].mxu0
        %v4466 = vpop.f32.mrb[0].mxu0
        %v4467 = vadd.f32 0.0, %v4466
        %v4468 = vpop.f32.mrb[0].mxu0
        %4469 = vmatprep.mubr.bf16.mxu0 0
        %4470 = vmatmul.mubr.bf16.gmra.mrb[0].mxu0 %v4309
        %v4471 = vpop.f32.mrb[0].mxu0
        %v4472 = vadd.f32 0.0, %v4471
        %v4473 = vpop.f32.mrb[0].mxu0
        %v4474 = vpop.f32.mrb[0].mxu0
        %v4475 = vadd.f32 0.0, %v4474
        %v4476 = vpop.f32.mrb[0].mxu0
        %4477 = vmatprep.mubr.bf16.mxu0 0
        %4478 = vmatmul.mubr.bf16.gmra.mrb[0].mxu0 %v4312
        %v4479 = vpop.f32.mrb[0].mxu0
        %v4480 = vadd.f32 0.0, %v4479
        %v4481 = vpop.f32.mrb[0].mxu0
        %v4482 = vpop.f32.mrb[0].mxu0
        %v4483 = vadd.f32 0.0, %v4482
        %v4484 = vpop.f32.mrb[0].mxu0
        %4485 = vmatprep.mubr.bf16.mxu0 0
        %4486 = vmatmul.mubr.bf16.gmra.mrb[0].mxu0 %v4315
        %v4487 = vpop.f32.mrb[0].mxu0
        %v4488 = vadd.f32 0.0, %v4487
        %v4489 = vpop.f32.mrb[0].mxu0
        %v4490 = vpop.f32.mrb[0].mxu0
        %v4491 = vadd.f32 0.0, %v4490
        %v4492 = vpop.f32.mrb[0].mxu0
        %4493 = vdwg.mxu0
        %v4494 = vadd.f32 %v3942, %v4352
        %v4495 = vadd.f32 %v3943, %v4355
        %v4496 = vadd.f32 %v3944, %v4360
        %v4497 = vadd.f32 %v3945, %v4363
        %v4498 = vadd.f32 %v3946, %v4368
        %v4499 = vadd.f32 %v3947, %v4371
        %v4500 = vadd.f32 %v3948, %v4376
        %v4501 = vadd.f32 %v3949, %v4379
        %v4502 = vadd.f32 %v3950, %v4384
        %v4503 = vadd.f32 %v3951, %v4387
        %v4504 = vadd.f32 %v3952, %v4392
        %v4505 = vadd.f32 %v3953, %v4395
        %v4506 = vadd.f32 %v3954, %v4400
        %v4507 = vadd.f32 %v3955, %v4403
        %v4508 = vadd.f32 %v3956, %v4408
        %v4509 = vadd.f32 %v3957, %v4411
        %v4510 = vadd.f32 %v3958, %v4416
        %v4511 = vadd.f32 %v3959, %v4419
        %v4512 = vadd.f32 %v3960, %v4424
        %v4513 = vadd.f32 %v3961, %v4427
        %v4514 = vadd.f32 %v3962, %v4432
        %v4515 = vadd.f32 %v3963, %v4435
        %v4516 = vadd.f32 %v3964, %v4440
        %v4517 = vadd.f32 %v3965, %v4443
        %v4518 = vadd.f32 %v3966, %v4448
        %v4519 = vadd.f32 %v3967, %v4451
        %v4520 = vadd.f32 %v3968, %v4456
        %v4521 = vadd.f32 %v3969, %v4459
        %v4522 = vadd.f32 %v3970, %v4464
        %v4523 = vadd.f32 %v3971, %v4467
        %v4524 = vadd.f32 %v3972, %v4472
        %v4525 = vadd.f32 %v3973, %v4475
        %v4526 = vadd.f32 %v3974, %v4480
        %v4527 = vadd.f32 %v3975, %v4483
        %v4528 = vadd.f32 %v3976, %v4488
        %v4529 = vadd.f32 %v3977, %v4491
        %v4530 = vld [vmem:[%s895] sm:$0xf]
        %v4531 = vld [vmem:[%s895 + $0x4] sm:$0xf]
        %v4532 = vld [vmem:[%s895 + $0xc] sm:$0xf]
        %v4533 = vld [vmem:[%s895 + $0x10] sm:$0xf]
        %v4534 = vld [vmem:[%s895 + $0x18] sm:$0xf]
        %v4535 = vld [vmem:[%s895 + $0x1c] sm:$0xf]
        %v4536 = vld [vmem:[%s895 + $0x24] sm:$0xf]
        %v4537 = vld [vmem:[%s895 + $0x28] sm:$0xf]
        %v4538 = vld [vmem:[%s895 + $0x30] sm:$0xf]
        %v4539 = vld [vmem:[%s895 + $0x34] sm:$0xf]
        %v4540 = vld [vmem:[%s895 + $0x3c] sm:$0xf]
        %v4541 = vld [vmem:[%s895 + $0x40] sm:$0xf]
        %v4542 = vld [vmem:[%s895 + $0x48] sm:$0xf]
        %v4543 = vld [vmem:[%s895 + $0x4c] sm:$0xf]
        %v4544 = vld [vmem:[%s895 + $0x54] sm:$0xf]
        %v4545 = vld [vmem:[%s895 + $0x58] sm:$0xf]
        %v4546 = vld [vmem:[%s895 + $0x60] sm:$0xf]
        %v4547 = vld [vmem:[%s895 + $0x64] sm:$0xf]
        %v4548 = vld [vmem:[%s895 + $0x6c] sm:$0xf]
        %v4549 = vld [vmem:[%s895 + $0x70] sm:$0xf]
        %v4550 = vld [vmem:[%s895 + $0x78] sm:$0xf]
        %v4551 = vld [vmem:[%s895 + $0x7c] sm:$0xf]
        %v4552 = vld [vmem:[%s895 + $0x84] sm:$0xf]
        %v4553 = vld [vmem:[%s895 + $0x88] sm:$0xf]
        %v4554 = vld [vmem:[%s895 + $0x90] sm:$0xf]
        %v4555 = vld [vmem:[%s895 + $0x94] sm:$0xf]
        %v4556 = vld [vmem:[%s895 + $0x9c] sm:$0xf]
        %v4557 = vld [vmem:[%s895 + $0xa0] sm:$0xf]
        %v4558 = vld [vmem:[%s895 + $0xa8] sm:$0xf]
        %v4559 = vld [vmem:[%s895 + $0xac] sm:$0xf]
        %v4560 = vld [vmem:[%s895 + $0xb4] sm:$0xf]
        %v4561 = vld [vmem:[%s895 + $0xb8] sm:$0xf]
        %v4562 = vld [vmem:[%s895 + $0xc0] sm:$0xf]
        %v4563 = vld [vmem:[%s895 + $0xc4] sm:$0xf]
        %v4564 = vld [vmem:[%s895 + $0xcc] sm:$0xf]
        %v4565 = vld [vmem:[%s895 + $0xd0] sm:$0xf]
        %s4566 = scalar_lea.vmem [#allocation9], 192
        %v4567 = vld [vmem:[%s4566] sm:$0xf]
        %v4568 = vld [vmem:[%s4566 + $0x4] sm:$0xf]
        %v4569 = vld [vmem:[%s4566 + $0x8] sm:$0xf]
        %v4570 = vld [vmem:[%s4566 + $0xc] sm:$0xf]
        %v4571 = vld [vmem:[%s4566 + $0x10] sm:$0xf]
        %v4572 = vld [vmem:[%s4566 + $0x14] sm:$0xf]
        %v4573 = vld [vmem:[%s4566 + $0x18] sm:$0xf]
        %v4574 = vld [vmem:[%s4566 + $0x1c] sm:$0xf]
        %v4611 = vunpack.c.l.b16 %v4530
        %v4612 = vunpack.c.l.b16 %v4531
        %v4613 = vunpack.c.l.b16 %v4532
        %v4614 = vunpack.c.l.b16 %v4533
        %v4615 = vunpack.c.l.b16 %v4534
        %v4616 = vunpack.c.l.b16 %v4535
        %v4617 = vunpack.c.l.b16 %v4536
        %v4618 = vunpack.c.l.b16 %v4537
        %v4619 = vunpack.c.l.b16 %v4538
        %v4620 = vunpack.c.l.b16 %v4539
        %v4621 = vunpack.c.l.b16 %v4540
        %v4622 = vunpack.c.l.b16 %v4541
        %v4623 = vunpack.c.l.b16 %v4542
        %v4624 = vunpack.c.l.b16 %v4543
        %v4625 = vunpack.c.l.b16 %v4544
        %v4626 = vunpack.c.l.b16 %v4545
        %v4627 = vunpack.c.l.b16 %v4546
        %v4628 = vunpack.c.l.b16 %v4547
        %v4629 = vunpack.c.l.b16 %v4548
        %v4630 = vunpack.c.l.b16 %v4549
        %v4631 = vunpack.c.l.b16 %v4550
        %v4632 = vunpack.c.l.b16 %v4551
        %v4633 = vunpack.c.l.b16 %v4552
        %v4634 = vunpack.c.l.b16 %v4553
        %v4635 = vunpack.c.l.b16 %v4554
        %v4636 = vunpack.c.l.b16 %v4555
        %v4637 = vunpack.c.l.b16 %v4556
        %v4638 = vunpack.c.l.b16 %v4557
        %v4639 = vunpack.c.l.b16 %v4558
        %v4640 = vunpack.c.l.b16 %v4559
        %v4641 = vunpack.c.l.b16 %v4560
        %v4642 = vunpack.c.l.b16 %v4561
        %v4643 = vunpack.c.l.b16 %v4562
        %v4644 = vunpack.c.l.b16 %v4563
        %v4645 = vunpack.c.l.b16 %v4564
        %v4646 = vunpack.c.l.b16 %v4565
        %v4647 = vpack.c.b16 %v4612, %v4611
        %v4648 = vpack.c.b16 %v4614, %v4613
        %v4649 = vpack.c.b16 %v4616, %v4615
        %v4650 = vpack.c.b16 %v4618, %v4617
        %v4651 = vpack.c.b16 %v4620, %v4619
        %v4652 = vpack.c.b16 %v4622, %v4621
        %v4653 = vpack.c.b16 %v4624, %v4623
        %v4654 = vpack.c.b16 %v4626, %v4625
        %v4655 = vpack.c.b16 %v4628, %v4627
        %v4656 = vpack.c.b16 %v4630, %v4629
        %v4657 = vpack.c.b16 %v4632, %v4631
        %v4658 = vpack.c.b16 %v4634, %v4633
        %v4659 = vpack.c.b16 %v4636, %v4635
        %v4660 = vpack.c.b16 %v4638, %v4637
        %v4661 = vpack.c.b16 %v4640, %v4639
        %v4662 = vpack.c.b16 %v4642, %v4641
        %v4663 = vpack.c.b16 %v4644, %v4643
        %v4664 = vpack.c.b16 %v4646, %v4645
        %v4673 = vunpack.c.l.b16 %v4567
        %v4674 = vunpack.c.l.b16 %v4568
        %v4675 = vunpack.c.l.b16 %v4569
        %v4676 = vunpack.c.l.b16 %v4570
        %v4677 = vunpack.c.l.b16 %v4571
        %v4678 = vunpack.c.l.b16 %v4572
        %v4679 = vunpack.c.l.b16 %v4573
        %v4680 = vunpack.c.l.b16 %v4574
        %v4681 = vpack.c.b16 %v4674, %v4673
        %v4682 = vpack.c.b16 %v4676, %v4675
        %v4683 = vpack.c.b16 %v4678, %v4677
        %v4684 = vpack.c.b16 %v4680, %v4679
        %v4690 = vsel %vm1597, %v4647, 0
        %v4693 = vsel %vm1597, %v4648, 0
        %v4696 = vsel %vm1597, %v4649, 0
        %v4699 = vsel %vm1597, %v4650, 0
        %v4702 = vsel %vm1597, %v4651, 0
        %v4705 = vsel %vm1597, %v4652, 0
        %v4708 = vsel %vm1597, %v4653, 0
        %v4711 = vsel %vm1597, %v4654, 0
        %v4714 = vsel %vm1597, %v4655, 0
        %v4717 = vsel %vm1597, %v4656, 0
        %v4720 = vsel %vm1597, %v4657, 0
        %v4723 = vsel %vm1597, %v4658, 0
        %v4726 = vsel %vm1597, %v4659, 0
        %v4729 = vsel %vm1597, %v4660, 0
        %v4732 = vsel %vm1597, %v4661, 0
        %v4735 = vsel %vm1597, %v4662, 0
        %v4738 = vsel %vm1597, %v4663, 0
        %v4741 = vsel %vm1597, %v4664, 0
        %4743 = vmatprep.subr.bf16.mxu0 0
        %4744 = vmatpush1.bf16.msra.mxu0 %v4681
        %4745 = vmatprep.subr.bf16.mxu0 0
        %4746 = vmatpush1.bf16.msra.mxu0 %v4682
        %4747 = vmatprep.subr.bf16.mxu0 0
        %4748 = vmatpush1.bf16.msra.mxu0 %v4683
        %4749 = vmatprep.subr.bf16.mxu0 0
        %4750 = vmatpush1.bf16.msra.mxu0 %v4684
        %4751 = vmatprep.subr.bf16.mxu0 0
        %4752 = vmatpush1.bf16.msra.mxu0 0
        %4753 = vmatprep.subr.bf16.mxu0 0
        %4754 = vmatpush1.bf16.msra.mxu0 0
        %4755 = vmatprep.subr.bf16.mxu0 0
        %4756 = vmatpush1.bf16.msra.mxu0 0
        %4757 = vmatprep.subr.bf16.mxu0 0
        %4758 = vmatpush1.bf16.msra.mxu0 0
        %4759 = vmatprep.subr.bf16.mxu0 0
        %4760 = vmatpush1.bf16.msra.mxu0 0
        %4761 = vmatprep.subr.bf16.mxu0 0
        %4762 = vmatpush1.bf16.msra.mxu0 0
        %4763 = vmatprep.subr.bf16.mxu0 0
        %4764 = vmatpush1.bf16.msra.mxu0 0
        %4765 = vmatprep.subr.bf16.mxu0 0
        %4766 = vmatpush1.bf16.msra.mxu0 0
        %4767 = vmatprep.subr.bf16.mxu0 0
        %4768 = vmatpush1.bf16.msra.mxu0 0
        %4769 = vmatprep.subr.bf16.mxu0 0
        %4770 = vmatpush1.bf16.msra.mxu0 0
        %4771 = vmatprep.subr.bf16.mxu0 0
        %4772 = vmatpush1.bf16.msra.mxu0 0
        %4773 = vmatprep.subr.bf16.mxu0 0
        %4774 = vmatpush1.bf16.msra.mxu0 0
        %4775 = vmatprep.mubr.bf16.mxu0 0
        %4776 = vmatmul.mubr.bf16.gmra.mrb[0].mxu0 %v4690
        %v4777 = vpop.f32.mrb[0].mxu0
        %v4778 = vadd.f32 0.0, %v4777
        %v4779 = vpop.f32.mrb[0].mxu0
        %v4780 = vpop.f32.mrb[0].mxu0
        %v4781 = vadd.f32 0.0, %v4780
        %v4782 = vpop.f32.mrb[0].mxu0
        %4783 = vmatprep.mubr.bf16.mxu0 0
        %4784 = vmatmul.mubr.bf16.gmra.mrb[0].mxu0 %v4693
        %v4785 = vpop.f32.mrb[0].mxu0
        %v4786 = vadd.f32 0.0, %v4785
        %v4787 = vpop.f32.mrb[0].mxu0
        %v4788 = vpop.f32.mrb[0].mxu0
        %v4789 = vadd.f32 0.0, %v4788
        %v4790 = vpop.f32.mrb[0].mxu0
        %4791 = vmatprep.mubr.bf16.mxu0 0
        %4792 = vmatmul.mubr.bf16.gmra.mrb[0].mxu0 %v4696
        %v4793 = vpop.f32.mrb[0].mxu0
        %v4794 = vadd.f32 0.0, %v4793
        %v4795 = vpop.f32.mrb[0].mxu0
        %v4796 = vpop.f32.mrb[0].mxu0
        %v4797 = vadd.f32 0.0, %v4796
        %v4798 = vpop.f32.mrb[0].mxu0
        %4799 = vmatprep.mubr.bf16.mxu0 0
        %4800 = vmatmul.mubr.bf16.gmra.mrb[0].mxu0 %v4699
        %v4801 = vpop.f32.mrb[0].mxu0
        %v4802 = vadd.f32 0.0, %v4801
        %v4803 = vpop.f32.mrb[0].mxu0
        %v4804 = vpop.f32.mrb[0].mxu0
        %v4805 = vadd.f32 0.0, %v4804
        %v4806 = vpop.f32.mrb[0].mxu0
        %4807 = vmatprep.mubr.bf16.mxu0 0
        %4808 = vmatmul.mubr.bf16.gmra.mrb[0].mxu0 %v4702
        %v4809 = vpop.f32.mrb[0].mxu0
        %v4810 = vadd.f32 0.0, %v4809
        %v4811 = vpop.f32.mrb[0].mxu0
        %v4812 = vpop.f32.mrb[0].mxu0
        %v4813 = vadd.f32 0.0, %v4812
        %v4814 = vpop.f32.mrb[0].mxu0
        %4815 = vmatprep.mubr.bf16.mxu0 0
        %4816 = vmatmul.mubr.bf16.gmra.mrb[0].mxu0 %v4705
        %v4817 = vpop.f32.mrb[0].mxu0
        %v4818 = vadd.f32 0.0, %v4817
        %v4819 = vpop.f32.mrb[0].mxu0
        %v4820 = vpop.f32.mrb[0].mxu0
        %v4821 = vadd.f32 0.0, %v4820
        %v4822 = vpop.f32.mrb[0].mxu0
        %4823 = vmatprep.mubr.bf16.mxu0 0
        %4824 = vmatmul.mubr.bf16.gmra.mrb[0].mxu0 %v4708
        %v4825 = vpop.f32.mrb[0].mxu0
        %v4826 = vadd.f32 0.0, %v4825
        %v4827 = vpop.f32.mrb[0].mxu0
        %v4828 = vpop.f32.mrb[0].mxu0
        %v4829 = vadd.f32 0.0, %v4828
        %v4830 = vpop.f32.mrb[0].mxu0
        %4831 = vmatprep.mubr.bf16.mxu0 0
        %4832 = vmatmul.mubr.bf16.gmra.mrb[0].mxu0 %v4711
        %v4833 = vpop.f32.mrb[0].mxu0
        %v4834 = vadd.f32 0.0, %v4833
        %v4835 = vpop.f32.mrb[0].mxu0
        %v4836 = vpop.f32.mrb[0].mxu0
        %v4837 = vadd.f32 0.0, %v4836
        %v4838 = vpop.f32.mrb[0].mxu0
        %4839 = vmatprep.mubr.bf16.mxu0 0
        %4840 = vmatmul.mubr.bf16.gmra.mrb[0].mxu0 %v4714
        %v4841 = vpop.f32.mrb[0].mxu0
        %v4842 = vadd.f32 0.0, %v4841
        %v4843 = vpop.f32.mrb[0].mxu0
        %v4844 = vpop.f32.mrb[0].mxu0
        %v4845 = vadd.f32 0.0, %v4844
        %v4846 = vpop.f32.mrb[0].mxu0
        %4847 = vmatprep.mubr.bf16.mxu0 0
        %4848 = vmatmul.mubr.bf16.gmra.mrb[0].mxu0 %v4717
        %v4849 = vpop.f32.mrb[0].mxu0
        %v4850 = vadd.f32 0.0, %v4849
        %v4851 = vpop.f32.mrb[0].mxu0
        %v4852 = vpop.f32.mrb[0].mxu0
        %v4853 = vadd.f32 0.0, %v4852
        %v4854 = vpop.f32.mrb[0].mxu0
        %4855 = vmatprep.mubr.bf16.mxu0 0
        %4856 = vmatmul.mubr.bf16.gmra.mrb[0].mxu0 %v4720
        %v4857 = vpop.f32.mrb[0].mxu0
        %v4858 = vadd.f32 0.0, %v4857
        %v4859 = vpop.f32.mrb[0].mxu0
        %v4860 = vpop.f32.mrb[0].mxu0
        %v4861 = vadd.f32 0.0, %v4860
        %v4862 = vpop.f32.mrb[0].mxu0
        %4863 = vmatprep.mubr.bf16.mxu0 0
        %4864 = vmatmul.mubr.bf16.gmra.mrb[0].mxu0 %v4723
        %v4865 = vpop.f32.mrb[0].mxu0
        %v4866 = vadd.f32 0.0, %v4865
        %v4867 = vpop.f32.mrb[0].mxu0
        %v4868 = vpop.f32.mrb[0].mxu0
        %v4869 = vadd.f32 0.0, %v4868
        %v4870 = vpop.f32.mrb[0].mxu0
        %4871 = vmatprep.mubr.bf16.mxu0 0
        %4872 = vmatmul.mubr.bf16.gmra.mrb[0].mxu0 %v4726
        %v4873 = vpop.f32.mrb[0].mxu0
        %v4874 = vadd.f32 0.0, %v4873
        %v4875 = vpop.f32.mrb[0].mxu0
        %v4876 = vpop.f32.mrb[0].mxu0
        %v4877 = vadd.f32 0.0, %v4876
        %v4878 = vpop.f32.mrb[0].mxu0
        %4879 = vmatprep.mubr.bf16.mxu0 0
        %4880 = vmatmul.mubr.bf16.gmra.mrb[0].mxu0 %v4729
        %v4881 = vpop.f32.mrb[0].mxu0
        %v4882 = vadd.f32 0.0, %v4881
        %v4883 = vpop.f32.mrb[0].mxu0
        %v4884 = vpop.f32.mrb[0].mxu0
        %v4885 = vadd.f32 0.0, %v4884
        %v4886 = vpop.f32.mrb[0].mxu0
        %4887 = vmatprep.mubr.bf16.mxu0 0
        %4888 = vmatmul.mubr.bf16.gmra.mrb[0].mxu0 %v4732
        %v4889 = vpop.f32.mrb[0].mxu0
        %v4890 = vadd.f32 0.0, %v4889
        %v4891 = vpop.f32.mrb[0].mxu0
        %v4892 = vpop.f32.mrb[0].mxu0
        %v4893 = vadd.f32 0.0, %v4892
        %v4894 = vpop.f32.mrb[0].mxu0
        %4895 = vmatprep.mubr.bf16.mxu0 0
        %4896 = vmatmul.mubr.bf16.gmra.mrb[0].mxu0 %v4735
        %v4897 = vpop.f32.mrb[0].mxu0
        %v4898 = vadd.f32 0.0, %v4897
        %v4899 = vpop.f32.mrb[0].mxu0
        %v4900 = vpop.f32.mrb[0].mxu0
        %v4901 = vadd.f32 0.0, %v4900
        %v4902 = vpop.f32.mrb[0].mxu0
        %4903 = vmatprep.mubr.bf16.mxu0 0
        %4904 = vmatmul.mubr.bf16.gmra.mrb[0].mxu0 %v4738
        %v4905 = vpop.f32.mrb[0].mxu0
        %v4906 = vadd.f32 0.0, %v4905
        %v4907 = vpop.f32.mrb[0].mxu0
        %v4908 = vpop.f32.mrb[0].mxu0
        %v4909 = vadd.f32 0.0, %v4908
        %v4910 = vpop.f32.mrb[0].mxu0
        %4911 = vmatprep.mubr.bf16.mxu0 0
        %4912 = vmatmul.mubr.bf16.gmra.mrb[0].mxu0 %v4741
        %v4913 = vpop.f32.mrb[0].mxu0
        %v4914 = vadd.f32 0.0, %v4913
        %v4915 = vpop.f32.mrb[0].mxu0
        %v4916 = vpop.f32.mrb[0].mxu0
        %v4917 = vadd.f32 0.0, %v4916
        %v4918 = vpop.f32.mrb[0].mxu0
        %4919 = vdwg.mxu0
        %v4920 = vadd.f32 %v4494, %v4778
        %v4921 = vadd.f32 %v4495, %v4781
        %v4922 = vadd.f32 %v4496, %v4786
        %v4923 = vadd.f32 %v4497, %v4789
        %v4924 = vadd.f32 %v4498, %v4794
        %v4925 = vadd.f32 %v4499, %v4797
        %v4926 = vadd.f32 %v4500, %v4802
        %v4927 = vadd.f32 %v4501, %v4805
        %v4928 = vadd.f32 %v4502, %v4810
        %v4929 = vadd.f32 %v4503, %v4813
        %v4930 = vadd.f32 %v4504, %v4818
        %v4931 = vadd.f32 %v4505, %v4821
        %v4932 = vadd.f32 %v4506, %v4826
        %v4933 = vadd.f32 %v4507, %v4829
        %v4934 = vadd.f32 %v4508, %v4834
        %v4935 = vadd.f32 %v4509, %v4837
        %v4936 = vadd.f32 %v4510, %v4842
        %v4937 = vadd.f32 %v4511, %v4845
        %v4938 = vadd.f32 %v4512, %v4850
        %v4939 = vadd.f32 %v4513, %v4853
        %v4940 = vadd.f32 %v4514, %v4858
        %v4941 = vadd.f32 %v4515, %v4861
        %v4942 = vadd.f32 %v4516, %v4866
        %v4943 = vadd.f32 %v4517, %v4869
        %v4944 = vadd.f32 %v4518, %v4874
        %v4945 = vadd.f32 %v4519, %v4877
        %v4946 = vadd.f32 %v4520, %v4882
        %v4947 = vadd.f32 %v4521, %v4885
        %v4948 = vadd.f32 %v4522, %v4890
        %v4949 = vadd.f32 %v4523, %v4893
        %v4950 = vadd.f32 %v4524, %v4898
        %v4951 = vadd.f32 %v4525, %v4901
        %v4952 = vadd.f32 %v4526, %v4906
        %v4953 = vadd.f32 %v4527, %v4909
        %v4954 = vadd.f32 %v4528, %v4914
        %v4955 = vadd.f32 %v4529, %v4917
        %v4956 = vld [vmem:[%s895] sm:$0xf]
        %v4957 = vld [vmem:[%s895 + $0x4] sm:$0xf]
        %v4958 = vld [vmem:[%s895 + $0x8] sm:$0x1]
        %v4959 = vld [vmem:[%s895 + $0xc] sm:$0xf]
        %v4960 = vld [vmem:[%s895 + $0x10] sm:$0xf]
        %v4961 = vld [vmem:[%s895 + $0x14] sm:$0x1]
        %v4962 = vld [vmem:[%s895 + $0x18] sm:$0xf]
        %v4963 = vld [vmem:[%s895 + $0x1c] sm:$0xf]
        %v4964 = vld [vmem:[%s895 + $0x20] sm:$0x1]
        %v4965 = vld [vmem:[%s895 + $0x24] sm:$0xf]
        %v4966 = vld [vmem:[%s895 + $0x28] sm:$0xf]
        %v4967 = vld [vmem:[%s895 + $0x2c] sm:$0x1]
        %v4968 = vld [vmem:[%s895 + $0x30] sm:$0xf]
        %v4969 = vld [vmem:[%s895 + $0x34] sm:$0xf]
        %v4970 = vld [vmem:[%s895 + $0x38] sm:$0x1]
        %v4971 = vld [vmem:[%s895 + $0x3c] sm:$0xf]
        %v4972 = vld [vmem:[%s895 + $0x40] sm:$0xf]
        %v4973 = vld [vmem:[%s895 + $0x44] sm:$0x1]
        %v4974 = vld [vmem:[%s895 + $0x48] sm:$0xf]
        %v4975 = vld [vmem:[%s895 + $0x4c] sm:$0xf]
        %v4976 = vld [vmem:[%s895 + $0x50] sm:$0x1]
        %v4977 = vld [vmem:[%s895 + $0x54] sm:$0xf]
        %v4978 = vld [vmem:[%s895 + $0x58] sm:$0xf]
        %v4979 = vld [vmem:[%s895 + $0x5c] sm:$0x1]
        %v4980 = vld [vmem:[%s895 + $0x60] sm:$0xf]
        %v4981 = vld [vmem:[%s895 + $0x64] sm:$0xf]
        %v4982 = vld [vmem:[%s895 + $0x68] sm:$0x1]
        %v4983 = vld [vmem:[%s895 + $0x6c] sm:$0xf]
        %v4984 = vld [vmem:[%s895 + $0x70] sm:$0xf]
        %v4985 = vld [vmem:[%s895 + $0x74] sm:$0x1]
        %v4986 = vld [vmem:[%s895 + $0x78] sm:$0xf]
        %v4987 = vld [vmem:[%s895 + $0x7c] sm:$0xf]
        %v4988 = vld [vmem:[%s895 + $0x80] sm:$0x1]
        %v4989 = vld [vmem:[%s895 + $0x84] sm:$0xf]
        %v4990 = vld [vmem:[%s895 + $0x88] sm:$0xf]
        %v4991 = vld [vmem:[%s895 + $0x8c] sm:$0x1]
        %v4992 = vld [vmem:[%s895 + $0x90] sm:$0xf]
        %v4993 = vld [vmem:[%s895 + $0x94] sm:$0xf]
        %v4994 = vld [vmem:[%s895 + $0x98] sm:$0x1]
        %v4995 = vld [vmem:[%s895 + $0x9c] sm:$0xf]
        %v4996 = vld [vmem:[%s895 + $0xa0] sm:$0xf]
        %v4997 = vld [vmem:[%s895 + $0xa4] sm:$0x1]
        %v4998 = vld [vmem:[%s895 + $0xa8] sm:$0xf]
        %v4999 = vld [vmem:[%s895 + $0xac] sm:$0xf]
        %v5000 = vld [vmem:[%s895 + $0xb0] sm:$0x1]
        %v5001 = vld [vmem:[%s895 + $0xb4] sm:$0xf]
        %v5002 = vld [vmem:[%s895 + $0xb8] sm:$0xf]
        %v5003 = vld [vmem:[%s895 + $0xbc] sm:$0x1]
        %v5004 = vld [vmem:[%s895 + $0xc0] sm:$0xf]
        %v5005 = vld [vmem:[%s895 + $0xc4] sm:$0xf]
        %v5006 = vld [vmem:[%s895 + $0xc8] sm:$0x1]
        %v5007 = vld [vmem:[%s895 + $0xcc] sm:$0xf]
        %v5008 = vld [vmem:[%s895 + $0xd0] sm:$0xf]
        %v5009 = vld [vmem:[%s895 + $0xd4] sm:$0x1]
        %v5011 = vshrl.u32 %v4956, 16
        %v5013 = vrot.slane %v5011, 4
        %v5014 = vshll.u32 %v4956, 16
        %v5016 = vrot.slane %v5014, 5
        %v5017 = vor.u32 %v5013, %v5016
        %v5018 = vrot.slane %v5017, 4
        %v5020 = vshll.u32 %v4957, 16
        %v5022 = vrot.slane %v5020, 5
        %v5023 = vsel %vm1077, %v5018, %v5022
        %v5024 = vshrl.u32 %v4957, 16
        %v5026 = vrot.slane %v5024, 4
        %v5027 = vor.u32 %v5026, %v5022
        %v5028 = vrot.slane %v5027, 4
        %v5030 = vshll.u32 %v4958, 16
        %v5032 = vrot.slane %v5030, 5
        %v5033 = vsel %vm1077, %v5028, %v5032
        %v5035 = vshrl.u32 %v4959, 16
        %v5037 = vrot.slane %v5035, 4
        %v5038 = vshll.u32 %v4959, 16
        %v5040 = vrot.slane %v5038, 5
        %v5041 = vor.u32 %v5037, %v5040
        %v5042 = vrot.slane %v5041, 4
        %v5044 = vshll.u32 %v4960, 16
        %v5046 = vrot.slane %v5044, 5
        %v5047 = vsel %vm1077, %v5042, %v5046
        %v5048 = vshrl.u32 %v4960, 16
        %v5050 = vrot.slane %v5048, 4
        %v5051 = vor.u32 %v5050, %v5046
        %v5052 = vrot.slane %v5051, 4
        %v5054 = vshll.u32 %v4961, 16
        %v5056 = vrot.slane %v5054, 5
        %v5057 = vsel %vm1077, %v5052, %v5056
        %v5059 = vshrl.u32 %v4962, 16
        %v5061 = vrot.slane %v5059, 4
        %v5062 = vshll.u32 %v4962, 16
        %v5064 = vrot.slane %v5062, 5
        %v5065 = vor.u32 %v5061, %v5064
        %v5066 = vrot.slane %v5065, 4
        %v5068 = vshll.u32 %v4963, 16
        %v5070 = vrot.slane %v5068, 5
        %v5071 = vsel %vm1077, %v5066, %v5070
        %v5072 = vshrl.u32 %v4963, 16
        %v5074 = vrot.slane %v5072, 4
        %v5075 = vor.u32 %v5074, %v5070
        %v5076 = vrot.slane %v5075, 4
        %v5078 = vshll.u32 %v4964, 16
        %v5080 = vrot.slane %v5078, 5
        %v5081 = vsel %vm1077, %v5076, %v5080
        %v5083 = vshrl.u32 %v4965, 16
        %v5085 = vrot.slane %v5083, 4
        %v5086 = vshll.u32 %v4965, 16
        %v5088 = vrot.slane %v5086, 5
        %v5089 = vor.u32 %v5085, %v5088
        %v5090 = vrot.slane %v5089, 4
        %v5092 = vshll.u32 %v4966, 16
        %v5094 = vrot.slane %v5092, 5
        %v5095 = vsel %vm1077, %v5090, %v5094
        %v5096 = vshrl.u32 %v4966, 16
        %v5098 = vrot.slane %v5096, 4
        %v5099 = vor.u32 %v5098, %v5094
        %v5100 = vrot.slane %v5099, 4
        %v5102 = vshll.u32 %v4967, 16
        %v5104 = vrot.slane %v5102, 5
        %v5105 = vsel %vm1077, %v5100, %v5104
        %v5107 = vshrl.u32 %v4968, 16
        %v5109 = vrot.slane %v5107, 4
        %v5110 = vshll.u32 %v4968, 16
        %v5112 = vrot.slane %v5110, 5
        %v5113 = vor.u32 %v5109, %v5112
        %v5114 = vrot.slane %v5113, 4
        %v5116 = vshll.u32 %v4969, 16
        %v5118 = vrot.slane %v5116, 5
        %v5119 = vsel %vm1077, %v5114, %v5118
        %v5120 = vshrl.u32 %v4969, 16
        %v5122 = vrot.slane %v5120, 4
        %v5123 = vor.u32 %v5122, %v5118
        %v5124 = vrot.slane %v5123, 4
        %v5126 = vshll.u32 %v4970, 16
        %v5128 = vrot.slane %v5126, 5
        %v5129 = vsel %vm1077, %v5124, %v5128
        %v5131 = vshrl.u32 %v4971, 16
        %v5133 = vrot.slane %v5131, 4
        %v5134 = vshll.u32 %v4971, 16
        %v5136 = vrot.slane %v5134, 5
        %v5137 = vor.u32 %v5133, %v5136
        %v5138 = vrot.slane %v5137, 4
        %v5140 = vshll.u32 %v4972, 16
        %v5142 = vrot.slane %v5140, 5
        %v5143 = vsel %vm1077, %v5138, %v5142
        %v5144 = vshrl.u32 %v4972, 16
        %v5146 = vrot.slane %v5144, 4
        %v5147 = vor.u32 %v5146, %v5142
        %v5148 = vrot.slane %v5147, 4
        %v5150 = vshll.u32 %v4973, 16
        %v5152 = vrot.slane %v5150, 5
        %v5153 = vsel %vm1077, %v5148, %v5152
        %v5155 = vshrl.u32 %v4974, 16
        %v5157 = vrot.slane %v5155, 4
        %v5158 = vshll.u32 %v4974, 16
        %v5160 = vrot.slane %v5158, 5
        %v5161 = vor.u32 %v5157, %v5160
        %v5162 = vrot.slane %v5161, 4
        %v5164 = vshll.u32 %v4975, 16
        %v5166 = vrot.slane %v5164, 5
        %v5167 = vsel %vm1077, %v5162, %v5166
        %v5168 = vshrl.u32 %v4975, 16
        %v5170 = vrot.slane %v5168, 4
        %v5171 = vor.u32 %v5170, %v5166
        %v5172 = vrot.slane %v5171, 4
        %v5174 = vshll.u32 %v4976, 16
        %v5176 = vrot.slane %v5174, 5
        %v5177 = vsel %vm1077, %v5172, %v5176
        %v5179 = vshrl.u32 %v4977, 16
        %v5181 = vrot.slane %v5179, 4
        %v5182 = vshll.u32 %v4977, 16
        %v5184 = vrot.slane %v5182, 5
        %v5185 = vor.u32 %v5181, %v5184
        %v5186 = vrot.slane %v5185, 4
        %v5188 = vshll.u32 %v4978, 16
        %v5190 = vrot.slane %v5188, 5
        %v5191 = vsel %vm1077, %v5186, %v5190
        %v5192 = vshrl.u32 %v4978, 16
        %v5194 = vrot.slane %v5192, 4
        %v5195 = vor.u32 %v5194, %v5190
        %v5196 = vrot.slane %v5195, 4
        %v5198 = vshll.u32 %v4979, 16
        %v5200 = vrot.slane %v5198, 5
        %v5201 = vsel %vm1077, %v5196, %v5200
        %v5203 = vshrl.u32 %v4980, 16
        %v5205 = vrot.slane %v5203, 4
        %v5206 = vshll.u32 %v4980, 16
        %v5208 = vrot.slane %v5206, 5
        %v5209 = vor.u32 %v5205, %v5208
        %v5210 = vrot.slane %v5209, 4
        %v5212 = vshll.u32 %v4981, 16
        %v5214 = vrot.slane %v5212, 5
        %v5215 = vsel %vm1077, %v5210, %v5214
        %v5216 = vshrl.u32 %v4981, 16
        %v5218 = vrot.slane %v5216, 4
        %v5219 = vor.u32 %v5218, %v5214
        %v5220 = vrot.slane %v5219, 4
        %v5222 = vshll.u32 %v4982, 16
        %v5224 = vrot.slane %v5222, 5
        %v5225 = vsel %vm1077, %v5220, %v5224
        %v5227 = vshrl.u32 %v4983, 16
        %v5229 = vrot.slane %v5227, 4
        %v5230 = vshll.u32 %v4983, 16
        %v5232 = vrot.slane %v5230, 5
        %v5233 = vor.u32 %v5229, %v5232
        %v5234 = vrot.slane %v5233, 4
        %v5236 = vshll.u32 %v4984, 16
        %v5238 = vrot.slane %v5236, 5
        %v5239 = vsel %vm1077, %v5234, %v5238
        %v5240 = vshrl.u32 %v4984, 16
        %v5242 = vrot.slane %v5240, 4
        %v5243 = vor.u32 %v5242, %v5238
        %v5244 = vrot.slane %v5243, 4
        %v5246 = vshll.u32 %v4985, 16
        %v5248 = vrot.slane %v5246, 5
        %v5249 = vsel %vm1077, %v5244, %v5248
        %v5251 = vshrl.u32 %v4986, 16
        %v5253 = vrot.slane %v5251, 4
        %v5254 = vshll.u32 %v4986, 16
        %v5256 = vrot.slane %v5254, 5
        %v5257 = vor.u32 %v5253, %v5256
        %v5258 = vrot.slane %v5257, 4
        %v5260 = vshll.u32 %v4987, 16
        %v5262 = vrot.slane %v5260, 5
        %v5263 = vsel %vm1077, %v5258, %v5262
        %v5264 = vshrl.u32 %v4987, 16
        %v5266 = vrot.slane %v5264, 4
        %v5267 = vor.u32 %v5266, %v5262
        %v5268 = vrot.slane %v5267, 4
        %v5270 = vshll.u32 %v4988, 16
        %v5272 = vrot.slane %v5270, 5
        %v5273 = vsel %vm1077, %v5268, %v5272
        %v5275 = vshrl.u32 %v4989, 16
        %v5277 = vrot.slane %v5275, 4
        %v5278 = vshll.u32 %v4989, 16
        %v5280 = vrot.slane %v5278, 5
        %v5281 = vor.u32 %v5277, %v5280
        %v5282 = vrot.slane %v5281, 4
        %v5284 = vshll.u32 %v4990, 16
        %v5286 = vrot.slane %v5284, 5
        %v5287 = vsel %vm1077, %v5282, %v5286
        %v5288 = vshrl.u32 %v4990, 16
        %v5290 = vrot.slane %v5288, 4
        %v5291 = vor.u32 %v5290, %v5286
        %v5292 = vrot.slane %v5291, 4
        %v5294 = vshll.u32 %v4991, 16
        %v5296 = vrot.slane %v5294, 5
        %v5297 = vsel %vm1077, %v5292, %v5296
        %v5299 = vshrl.u32 %v4992, 16
        %v5301 = vrot.slane %v5299, 4
        %v5302 = vshll.u32 %v4992, 16
        %v5304 = vrot.slane %v5302, 5
        %v5305 = vor.u32 %v5301, %v5304
        %v5306 = vrot.slane %v5305, 4
        %v5308 = vshll.u32 %v4993, 16
        %v5310 = vrot.slane %v5308, 5
        %v5311 = vsel %vm1077, %v5306, %v5310
        %v5312 = vshrl.u32 %v4993, 16
        %v5314 = vrot.slane %v5312, 4
        %v5315 = vor.u32 %v5314, %v5310
        %v5316 = vrot.slane %v5315, 4
        %v5318 = vshll.u32 %v4994, 16
        %v5320 = vrot.slane %v5318, 5
        %v5321 = vsel %vm1077, %v5316, %v5320
        %v5323 = vshrl.u32 %v4995, 16
        %v5325 = vrot.slane %v5323, 4
        %v5326 = vshll.u32 %v4995, 16
        %v5328 = vrot.slane %v5326, 5
        %v5329 = vor.u32 %v5325, %v5328
        %v5330 = vrot.slane %v5329, 4
        %v5332 = vshll.u32 %v4996, 16
        %v5334 = vrot.slane %v5332, 5
        %v5335 = vsel %vm1077, %v5330, %v5334
        %v5336 = vshrl.u32 %v4996, 16
        %v5338 = vrot.slane %v5336, 4
        %v5339 = vor.u32 %v5338, %v5334
        %v5340 = vrot.slane %v5339, 4
        %v5342 = vshll.u32 %v4997, 16
        %v5344 = vrot.slane %v5342, 5
        %v5345 = vsel %vm1077, %v5340, %v5344
        %v5347 = vshrl.u32 %v4998, 16
        %v5349 = vrot.slane %v5347, 4
        %v5350 = vshll.u32 %v4998, 16
        %v5352 = vrot.slane %v5350, 5
        %v5353 = vor.u32 %v5349, %v5352
        %v5354 = vrot.slane %v5353, 4
        %v5356 = vshll.u32 %v4999, 16
        %v5358 = vrot.slane %v5356, 5
        %v5359 = vsel %vm1077, %v5354, %v5358
        %v5360 = vshrl.u32 %v4999, 16
        %v5362 = vrot.slane %v5360, 4
        %v5363 = vor.u32 %v5362, %v5358
        %v5364 = vrot.slane %v5363, 4
        %v5366 = vshll.u32 %v5000, 16
        %v5368 = vrot.slane %v5366, 5
        %v5369 = vsel %vm1077, %v5364, %v5368
        %v5371 = vshrl.u32 %v5001, 16
        %v5373 = vrot.slane %v5371, 4
        %v5374 = vshll.u32 %v5001, 16
        %v5376 = vrot.slane %v5374, 5
        %v5377 = vor.u32 %v5373, %v5376
        %v5378 = vrot.slane %v5377, 4
        %v5380 = vshll.u32 %v5002, 16
        %v5382 = vrot.slane %v5380, 5
        %v5383 = vsel %vm1077, %v5378, %v5382
        %v5384 = vshrl.u32 %v5002, 16
        %v5386 = vrot.slane %v5384, 4
        %v5387 = vor.u32 %v5386, %v5382
        %v5388 = vrot.slane %v5387, 4
        %v5390 = vshll.u32 %v5003, 16
        %v5392 = vrot.slane %v5390, 5
        %v5393 = vsel %vm1077, %v5388, %v5392
        %v5395 = vshrl.u32 %v5004, 16
        %v5397 = vrot.slane %v5395, 4
        %v5398 = vshll.u32 %v5004, 16
        %v5400 = vrot.slane %v5398, 5
        %v5401 = vor.u32 %v5397, %v5400
        %v5402 = vrot.slane %v5401, 4
        %v5404 = vshll.u32 %v5005, 16
        %v5406 = vrot.slane %v5404, 5
        %v5407 = vsel %vm1077, %v5402, %v5406
        %v5408 = vshrl.u32 %v5005, 16
        %v5410 = vrot.slane %v5408, 4
        %v5411 = vor.u32 %v5410, %v5406
        %v5412 = vrot.slane %v5411, 4
        %v5414 = vshll.u32 %v5006, 16
        %v5416 = vrot.slane %v5414, 5
        %v5417 = vsel %vm1077, %v5412, %v5416
        %v5419 = vshrl.u32 %v5007, 16
        %v5421 = vrot.slane %v5419, 4
        %v5422 = vshll.u32 %v5007, 16
        %v5424 = vrot.slane %v5422, 5
        %v5425 = vor.u32 %v5421, %v5424
        %v5426 = vrot.slane %v5425, 4
        %v5428 = vshll.u32 %v5008, 16
        %v5430 = vrot.slane %v5428, 5
        %v5431 = vsel %vm1077, %v5426, %v5430
        %v5432 = vshrl.u32 %v5008, 16
        %v5434 = vrot.slane %v5432, 4
        %v5435 = vor.u32 %v5434, %v5430
        %v5436 = vrot.slane %v5435, 4
        %v5438 = vshll.u32 %v5009, 16
        %v5440 = vrot.slane %v5438, 5
        %v5441 = vsel %vm1077, %v5436, %v5440
        %s5442 = scalar_lea.vmem [#allocation9], 224
        %v5443 = vld [vmem:[%s5442] sm:$0xf]
        %v5444 = vld [vmem:[%s5442 + $0x4] sm:$0xf]
        %v5445 = vld [vmem:[%s5442 + $0x8] sm:$0xf]
        %v5446 = vld [vmem:[%s5442 + $0xc] sm:$0xf]
        %v5447 = vld [vmem:[%s5442 + $0x10] sm:$0xf]
        %v5448 = vld [vmem:[%s5442 + $0x14] sm:$0xf]
        %v5449 = vld [vmem:[%s5442 + $0x18] sm:$0xf]
        %v5450 = vld [vmem:[%s5442 + $0x1c] sm:$0xf]
        %v5451 = vunpack.c.l.b16 %v5023
        %v5452 = vunpack.c.l.b16 %v5033
        %v5453 = vunpack.c.l.b16 %v5047
        %v5454 = vunpack.c.l.b16 %v5057
        %v5455 = vunpack.c.l.b16 %v5071
        %v5456 = vunpack.c.l.b16 %v5081
        %v5457 = vunpack.c.l.b16 %v5095
        %v5458 = vunpack.c.l.b16 %v5105
        %v5459 = vunpack.c.l.b16 %v5119
        %v5460 = vunpack.c.l.b16 %v5129
        %v5461 = vunpack.c.l.b16 %v5143
        %v5462 = vunpack.c.l.b16 %v5153
        %v5463 = vunpack.c.l.b16 %v5167
        %v5464 = vunpack.c.l.b16 %v5177
        %v5465 = vunpack.c.l.b16 %v5191
        %v5466 = vunpack.c.l.b16 %v5201
        %v5467 = vunpack.c.l.b16 %v5215
        %v5468 = vunpack.c.l.b16 %v5225
        %v5469 = vunpack.c.l.b16 %v5239
        %v5470 = vunpack.c.l.b16 %v5249
        %v5471 = vunpack.c.l.b16 %v5263
        %v5472 = vunpack.c.l.b16 %v5273
        %v5473 = vunpack.c.l.b16 %v5287
        %v5474 = vunpack.c.l.b16 %v5297
        %v5475 = vunpack.c.l.b16 %v5311
        %v5476 = vunpack.c.l.b16 %v5321
        %v5477 = vunpack.c.l.b16 %v5335
        %v5478 = vunpack.c.l.b16 %v5345
        %v5479 = vunpack.c.l.b16 %v5359
        %v5480 = vunpack.c.l.b16 %v5369
        %v5481 = vunpack.c.l.b16 %v5383
        %v5482 = vunpack.c.l.b16 %v5393
        %v5483 = vunpack.c.l.b16 %v5407
        %v5484 = vunpack.c.l.b16 %v5417
        %v5485 = vunpack.c.l.b16 %v5431
        %v5486 = vunpack.c.l.b16 %v5441
        %v5487 = vpack.c.b16 %v5452, %v5451
        %v5488 = vpack.c.b16 %v5454, %v5453
        %v5489 = vpack.c.b16 %v5456, %v5455
        %v5490 = vpack.c.b16 %v5458, %v5457
        %v5491 = vpack.c.b16 %v5460, %v5459
        %v5492 = vpack.c.b16 %v5462, %v5461
        %v5493 = vpack.c.b16 %v5464, %v5463
        %v5494 = vpack.c.b16 %v5466, %v5465
        %v5495 = vpack.c.b16 %v5468, %v5467
        %v5496 = vpack.c.b16 %v5470, %v5469
        %v5497 = vpack.c.b16 %v5472, %v5471
        %v5498 = vpack.c.b16 %v5474, %v5473
        %v5499 = vpack.c.b16 %v5476, %v5475
        %v5500 = vpack.c.b16 %v5478, %v5477
        %v5501 = vpack.c.b16 %v5480, %v5479
        %v5502 = vpack.c.b16 %v5482, %v5481
        %v5503 = vpack.c.b16 %v5484, %v5483
        %v5504 = vpack.c.b16 %v5486, %v5485
        %v5513 = vunpack.c.l.b16 %v5443
        %v5514 = vunpack.c.l.b16 %v5444
        %v5515 = vunpack.c.l.b16 %v5445
        %v5516 = vunpack.c.l.b16 %v5446
        %v5517 = vunpack.c.l.b16 %v5447
        %v5518 = vunpack.c.l.b16 %v5448
        %v5519 = vunpack.c.l.b16 %v5449
        %v5520 = vunpack.c.l.b16 %v5450
        %v5521 = vpack.c.b16 %v5514, %v5513
        %v5522 = vpack.c.b16 %v5516, %v5515
        %v5523 = vpack.c.b16 %v5518, %v5517
        %v5524 = vpack.c.b16 %v5520, %v5519
        %v5530 = vsel %vm1597, %v5487, 0
        %v5533 = vsel %vm1597, %v5488, 0
        %v5536 = vsel %vm1597, %v5489, 0
        %v5539 = vsel %vm1597, %v5490, 0
        %v5542 = vsel %vm1597, %v5491, 0
        %v5545 = vsel %vm1597, %v5492, 0
        %v5548 = vsel %vm1597, %v5493, 0
        %v5551 = vsel %vm1597, %v5494, 0
        %v5554 = vsel %vm1597, %v5495, 0
        %v5557 = vsel %vm1597, %v5496, 0
        %v5560 = vsel %vm1597, %v5497, 0
        %v5563 = vsel %vm1597, %v5498, 0
        %v5566 = vsel %vm1597, %v5499, 0
        %v5569 = vsel %vm1597, %v5500, 0
        %v5572 = vsel %vm1597, %v5501, 0
        %v5575 = vsel %vm1597, %v5502, 0
        %v5578 = vsel %vm1597, %v5503, 0
        %v5581 = vsel %vm1597, %v5504, 0
        %5583 = vmatprep.subr.bf16.mxu0 0
        %5584 = vmatpush1.bf16.msra.mxu0 %v5521
        %5585 = vmatprep.subr.bf16.mxu0 0
        %5586 = vmatpush1.bf16.msra.mxu0 %v5522
        %5587 = vmatprep.subr.bf16.mxu0 0
        %5588 = vmatpush1.bf16.msra.mxu0 %v5523
        %5589 = vmatprep.subr.bf16.mxu0 0
        %5590 = vmatpush1.bf16.msra.mxu0 %v5524
        %5591 = vmatprep.subr.bf16.mxu0 0
        %5592 = vmatpush1.bf16.msra.mxu0 0
        %5593 = vmatprep.subr.bf16.mxu0 0
        %5594 = vmatpush1.bf16.msra.mxu0 0
        %5595 = vmatprep.subr.bf16.mxu0 0
        %5596 = vmatpush1.bf16.msra.mxu0 0
        %5597 = vmatprep.subr.bf16.mxu0 0
        %5598 = vmatpush1.bf16.msra.mxu0 0
        %5599 = vmatprep.subr.bf16.mxu0 0
        %5600 = vmatpush1.bf16.msra.mxu0 0
        %5601 = vmatprep.subr.bf16.mxu0 0
        %5602 = vmatpush1.bf16.msra.mxu0 0
        %5603 = vmatprep.subr.bf16.mxu0 0
        %5604 = vmatpush1.bf16.msra.mxu0 0
        %5605 = vmatprep.subr.bf16.mxu0 0
        %5606 = vmatpush1.bf16.msra.mxu0 0
        %5607 = vmatprep.subr.bf16.mxu0 0
        %5608 = vmatpush1.bf16.msra.mxu0 0
        %5609 = vmatprep.subr.bf16.mxu0 0
        %5610 = vmatpush1.bf16.msra.mxu0 0
        %5611 = vmatprep.subr.bf16.mxu0 0
        %5612 = vmatpush1.bf16.msra.mxu0 0
        %5613 = vmatprep.subr.bf16.mxu0 0
        %5614 = vmatpush1.bf16.msra.mxu0 0
        %5615 = vmatprep.mubr.bf16.mxu0 0
        %5616 = vmatmul.mubr.bf16.gmra.mrb[0].mxu0 %v5530
        %v5617 = vpop.f32.mrb[0].mxu0
        %v5618 = vadd.f32 0.0, %v5617
        %v5619 = vpop.f32.mrb[0].mxu0
        %v5620 = vpop.f32.mrb[0].mxu0
        %v5621 = vadd.f32 0.0, %v5620
        %v5622 = vpop.f32.mrb[0].mxu0
        %5623 = vmatprep.mubr.bf16.mxu0 0
        %5624 = vmatmul.mubr.bf16.gmra.mrb[0].mxu0 %v5533
        %v5625 = vpop.f32.mrb[0].mxu0
        %v5626 = vadd.f32 0.0, %v5625
        %v5627 = vpop.f32.mrb[0].mxu0
        %v5628 = vpop.f32.mrb[0].mxu0
        %v5629 = vadd.f32 0.0, %v5628
        %v5630 = vpop.f32.mrb[0].mxu0
        %5631 = vmatprep.mubr.bf16.mxu0 0
        %5632 = vmatmul.mubr.bf16.gmra.mrb[0].mxu0 %v5536
        %v5633 = vpop.f32.mrb[0].mxu0
        %v5634 = vadd.f32 0.0, %v5633
        %v5635 = vpop.f32.mrb[0].mxu0
        %v5636 = vpop.f32.mrb[0].mxu0
        %v5637 = vadd.f32 0.0, %v5636
        %v5638 = vpop.f32.mrb[0].mxu0
        %5639 = vmatprep.mubr.bf16.mxu0 0
        %5640 = vmatmul.mubr.bf16.gmra.mrb[0].mxu0 %v5539
        %v5641 = vpop.f32.mrb[0].mxu0
        %v5642 = vadd.f32 0.0, %v5641
        %v5643 = vpop.f32.mrb[0].mxu0
        %v5644 = vpop.f32.mrb[0].mxu0
        %v5645 = vadd.f32 0.0, %v5644
        %v5646 = vpop.f32.mrb[0].mxu0
        %5647 = vmatprep.mubr.bf16.mxu0 0
        %5648 = vmatmul.mubr.bf16.gmra.mrb[0].mxu0 %v5542
        %v5649 = vpop.f32.mrb[0].mxu0
        %v5650 = vadd.f32 0.0, %v5649
        %v5651 = vpop.f32.mrb[0].mxu0
        %v5652 = vpop.f32.mrb[0].mxu0
        %v5653 = vadd.f32 0.0, %v5652
        %v5654 = vpop.f32.mrb[0].mxu0
        %5655 = vmatprep.mubr.bf16.mxu0 0
        %5656 = vmatmul.mubr.bf16.gmra.mrb[0].mxu0 %v5545
        %v5657 = vpop.f32.mrb[0].mxu0
        %v5658 = vadd.f32 0.0, %v5657
        %v5659 = vpop.f32.mrb[0].mxu0
        %v5660 = vpop.f32.mrb[0].mxu0
        %v5661 = vadd.f32 0.0, %v5660
        %v5662 = vpop.f32.mrb[0].mxu0
        %5663 = vmatprep.mubr.bf16.mxu0 0
        %5664 = vmatmul.mubr.bf16.gmra.mrb[0].mxu0 %v5548
        %v5665 = vpop.f32.mrb[0].mxu0
        %v5666 = vadd.f32 0.0, %v5665
        %v5667 = vpop.f32.mrb[0].mxu0
        %v5668 = vpop.f32.mrb[0].mxu0
        %v5669 = vadd.f32 0.0, %v5668
        %v5670 = vpop.f32.mrb[0].mxu0
        %5671 = vmatprep.mubr.bf16.mxu0 0
        %5672 = vmatmul.mubr.bf16.gmra.mrb[0].mxu0 %v5551
        %v5673 = vpop.f32.mrb[0].mxu0
        %v5674 = vadd.f32 0.0, %v5673
        %v5675 = vpop.f32.mrb[0].mxu0
        %v5676 = vpop.f32.mrb[0].mxu0
        %v5677 = vadd.f32 0.0, %v5676
        %v5678 = vpop.f32.mrb[0].mxu0
        %5679 = vmatprep.mubr.bf16.mxu0 0
        %5680 = vmatmul.mubr.bf16.gmra.mrb[0].mxu0 %v5554
        %v5681 = vpop.f32.mrb[0].mxu0
        %v5682 = vadd.f32 0.0, %v5681
        %v5683 = vpop.f32.mrb[0].mxu0
        %v5684 = vpop.f32.mrb[0].mxu0
        %v5685 = vadd.f32 0.0, %v5684
        %v5686 = vpop.f32.mrb[0].mxu0
        %5687 = vmatprep.mubr.bf16.mxu0 0
        %5688 = vmatmul.mubr.bf16.gmra.mrb[0].mxu0 %v5557
        %v5689 = vpop.f32.mrb[0].mxu0
        %v5690 = vadd.f32 0.0, %v5689
        %v5691 = vpop.f32.mrb[0].mxu0
        %v5692 = vpop.f32.mrb[0].mxu0
        %v5693 = vadd.f32 0.0, %v5692
        %v5694 = vpop.f32.mrb[0].mxu0
        %5695 = vmatprep.mubr.bf16.mxu0 0
        %5696 = vmatmul.mubr.bf16.gmra.mrb[0].mxu0 %v5560
        %v5697 = vpop.f32.mrb[0].mxu0
        %v5698 = vadd.f32 0.0, %v5697
        %v5699 = vpop.f32.mrb[0].mxu0
        %v5700 = vpop.f32.mrb[0].mxu0
        %v5701 = vadd.f32 0.0, %v5700
        %v5702 = vpop.f32.mrb[0].mxu0
        %5703 = vmatprep.mubr.bf16.mxu0 0
        %5704 = vmatmul.mubr.bf16.gmra.mrb[0].mxu0 %v5563
        %v5705 = vpop.f32.mrb[0].mxu0
        %v5706 = vadd.f32 0.0, %v5705
        %v5707 = vpop.f32.mrb[0].mxu0
        %v5708 = vpop.f32.mrb[0].mxu0
        %v5709 = vadd.f32 0.0, %v5708
        %v5710 = vpop.f32.mrb[0].mxu0
        %5711 = vmatprep.mubr.bf16.mxu0 0
        %5712 = vmatmul.mubr.bf16.gmra.mrb[0].mxu0 %v5566
        %v5713 = vpop.f32.mrb[0].mxu0
        %v5714 = vadd.f32 0.0, %v5713
        %v5715 = vpop.f32.mrb[0].mxu0
        %v5716 = vpop.f32.mrb[0].mxu0
        %v5717 = vadd.f32 0.0, %v5716
        %v5718 = vpop.f32.mrb[0].mxu0
        %5719 = vmatprep.mubr.bf16.mxu0 0
        %5720 = vmatmul.mubr.bf16.gmra.mrb[0].mxu0 %v5569
        %v5721 = vpop.f32.mrb[0].mxu0
        %v5722 = vadd.f32 0.0, %v5721
        %v5723 = vpop.f32.mrb[0].mxu0
        %v5724 = vpop.f32.mrb[0].mxu0
        %v5725 = vadd.f32 0.0, %v5724
        %v5726 = vpop.f32.mrb[0].mxu0
        %5727 = vmatprep.mubr.bf16.mxu0 0
        %5728 = vmatmul.mubr.bf16.gmra.mrb[0].mxu0 %v5572
        %v5729 = vpop.f32.mrb[0].mxu0
        %v5730 = vadd.f32 0.0, %v5729
        %v5731 = vpop.f32.mrb[0].mxu0
        %v5732 = vpop.f32.mrb[0].mxu0
        %v5733 = vadd.f32 0.0, %v5732
        %v5734 = vpop.f32.mrb[0].mxu0
        %5735 = vmatprep.mubr.bf16.mxu0 0
        %5736 = vmatmul.mubr.bf16.gmra.mrb[0].mxu0 %v5575
        %v5737 = vpop.f32.mrb[0].mxu0
        %v5738 = vadd.f32 0.0, %v5737
        %v5739 = vpop.f32.mrb[0].mxu0
        %v5740 = vpop.f32.mrb[0].mxu0
        %v5741 = vadd.f32 0.0, %v5740
        %v5742 = vpop.f32.mrb[0].mxu0
        %5743 = vmatprep.mubr.bf16.mxu0 0
        %5744 = vmatmul.mubr.bf16.gmra.mrb[0].mxu0 %v5578
        %v5745 = vpop.f32.mrb[0].mxu0
        %v5746 = vadd.f32 0.0, %v5745
        %v5747 = vpop.f32.mrb[0].mxu0
        %v5748 = vpop.f32.mrb[0].mxu0
        %v5749 = vadd.f32 0.0, %v5748
        %v5750 = vpop.f32.mrb[0].mxu0
        %5751 = vmatprep.mubr.bf16.mxu0 0
        %5752 = vmatmul.mubr.bf16.gmra.mrb[0].mxu0 %v5581
        %v5753 = vpop.f32.mrb[0].mxu0
        %v5754 = vadd.f32 0.0, %v5753
        %v5755 = vpop.f32.mrb[0].mxu0
        %v5756 = vpop.f32.mrb[0].mxu0
        %v5757 = vadd.f32 0.0, %v5756
        %v5758 = vpop.f32.mrb[0].mxu0
        %5759 = vdwg.mxu0
        %v5760 = vadd.f32 %v4920, %v5618
        %v5761 = vadd.f32 %v4921, %v5621
        %v5762 = vadd.f32 %v4922, %v5626
        %v5763 = vadd.f32 %v4923, %v5629
        %v5764 = vadd.f32 %v4924, %v5634
        %v5765 = vadd.f32 %v4925, %v5637
        %v5766 = vadd.f32 %v4926, %v5642
        %v5767 = vadd.f32 %v4927, %v5645
        %v5768 = vadd.f32 %v4928, %v5650
        %v5769 = vadd.f32 %v4929, %v5653
        %v5770 = vadd.f32 %v4930, %v5658
        %v5771 = vadd.f32 %v4931, %v5661
        %v5772 = vadd.f32 %v4932, %v5666
        %v5773 = vadd.f32 %v4933, %v5669
        %v5774 = vadd.f32 %v4934, %v5674
        %v5775 = vadd.f32 %v4935, %v5677
        %v5776 = vadd.f32 %v4936, %v5682
        %v5777 = vadd.f32 %v4937, %v5685
        %v5778 = vadd.f32 %v4938, %v5690
        %v5779 = vadd.f32 %v4939, %v5693
        %v5780 = vadd.f32 %v4940, %v5698
        %v5781 = vadd.f32 %v4941, %v5701
        %v5782 = vadd.f32 %v4942, %v5706
        %v5783 = vadd.f32 %v4943, %v5709
        %v5784 = vadd.f32 %v4944, %v5714
        %v5785 = vadd.f32 %v4945, %v5717
        %v5786 = vadd.f32 %v4946, %v5722
        %v5787 = vadd.f32 %v4947, %v5725
        %v5788 = vadd.f32 %v4948, %v5730
        %v5789 = vadd.f32 %v4949, %v5733
        %v5790 = vadd.f32 %v4950, %v5738
        %v5791 = vadd.f32 %v4951, %v5741
        %v5792 = vadd.f32 %v4952, %v5746
        %v5793 = vadd.f32 %v4953, %v5749
        %v5794 = vadd.f32 %v4954, %v5754
        %v5795 = vadd.f32 %v4955, %v5757
        %v5796 = vld [vmem:[%s895] sm:$0xe]
        %v5797 = vld [vmem:[%s895 + $0xc] sm:$0xe]
        %v5798 = vld [vmem:[%s895 + $0x18] sm:$0xe]
        %v5799 = vld [vmem:[%s895 + $0x24] sm:$0xe]
        %v5800 = vld [vmem:[%s895 + $0x30] sm:$0xe]
        %v5801 = vld [vmem:[%s895 + $0x3c] sm:$0xe]
        %v5802 = vld [vmem:[%s895 + $0x48] sm:$0xe]
        %v5803 = vld [vmem:[%s895 + $0x54] sm:$0xe]
        %v5804 = vld [vmem:[%s895 + $0x60] sm:$0xe]
        %v5805 = vld [vmem:[%s895 + $0x6c] sm:$0xe]
        %v5806 = vld [vmem:[%s895 + $0x78] sm:$0xe]
        %v5807 = vld [vmem:[%s895 + $0x84] sm:$0xe]
        %v5808 = vld [vmem:[%s895 + $0x90] sm:$0xe]
        %v5809 = vld [vmem:[%s895 + $0x9c] sm:$0xe]
        %v5810 = vld [vmem:[%s895 + $0xa8] sm:$0xe]
        %v5811 = vld [vmem:[%s895 + $0xb4] sm:$0xe]
        %v5812 = vld [vmem:[%s895 + $0xc0] sm:$0xe]
        %v5813 = vld [vmem:[%s895 + $0xcc] sm:$0xe]
        %v5868 = vrot.slane %v5796, 5
        %v5869 = vrot.slane %v5868, 4
        %v5870 = vrot.slane %v4957, 5
        %v5871 = vsel %vm2230, %v5869, %v5870
        %v5872 = vrot.slane %v5870, 4
        %v5873 = vrot.slane %v4958, 5
        %v5874 = vsel %vm2230, %v5872, %v5873
        %v5875 = vrot.slane %v5797, 5
        %v5876 = vrot.slane %v5875, 4
        %v5877 = vrot.slane %v4960, 5
        %v5878 = vsel %vm2230, %v5876, %v5877
        %v5879 = vrot.slane %v5877, 4
        %v5880 = vrot.slane %v4961, 5
        %v5881 = vsel %vm2230, %v5879, %v5880
        %v5882 = vrot.slane %v5798, 5
        %v5883 = vrot.slane %v5882, 4
        %v5884 = vrot.slane %v4963, 5
        %v5885 = vsel %vm2230, %v5883, %v5884
        %v5886 = vrot.slane %v5884, 4
        %v5887 = vrot.slane %v4964, 5
        %v5888 = vsel %vm2230, %v5886, %v5887
        %v5889 = vrot.slane %v5799, 5
        %v5890 = vrot.slane %v5889, 4
        %v5891 = vrot.slane %v4966, 5
        %v5892 = vsel %vm2230, %v5890, %v5891
        %v5893 = vrot.slane %v5891, 4
        %v5894 = vrot.slane %v4967, 5
        %v5895 = vsel %vm2230, %v5893, %v5894
        %v5896 = vrot.slane %v5800, 5
        %v5897 = vrot.slane %v5896, 4
        %v5898 = vrot.slane %v4969, 5
        %v5899 = vsel %vm2230, %v5897, %v5898
        %v5900 = vrot.slane %v5898, 4
        %v5901 = vrot.slane %v4970, 5
        %v5902 = vsel %vm2230, %v5900, %v5901
        %v5903 = vrot.slane %v5801, 5
        %v5904 = vrot.slane %v5903, 4
        %v5905 = vrot.slane %v4972, 5
        %v5906 = vsel %vm2230, %v5904, %v5905
        %v5907 = vrot.slane %v5905, 4
        %v5908 = vrot.slane %v4973, 5
        %v5909 = vsel %vm2230, %v5907, %v5908
        %v5910 = vrot.slane %v5802, 5
        %v5911 = vrot.slane %v5910, 4
        %v5912 = vrot.slane %v4975, 5
        %v5913 = vsel %vm2230, %v5911, %v5912
        %v5914 = vrot.slane %v5912, 4
        %v5915 = vrot.slane %v4976, 5
        %v5916 = vsel %vm2230, %v5914, %v5915
        %v5917 = vrot.slane %v5803, 5
        %v5918 = vrot.slane %v5917, 4
        %v5919 = vrot.slane %v4978, 5
        %v5920 = vsel %vm2230, %v5918, %v5919
        %v5921 = vrot.slane %v5919, 4
        %v5922 = vrot.slane %v4979, 5
        %v5923 = vsel %vm2230, %v5921, %v5922
        %v5924 = vrot.slane %v5804, 5
        %v5925 = vrot.slane %v5924, 4
        %v5926 = vrot.slane %v4981, 5
        %v5927 = vsel %vm2230, %v5925, %v5926
        %v5928 = vrot.slane %v5926, 4
        %v5929 = vrot.slane %v4982, 5
        %v5930 = vsel %vm2230, %v5928, %v5929
        %v5931 = vrot.slane %v5805, 5
        %v5932 = vrot.slane %v5931, 4
        %v5933 = vrot.slane %v4984, 5
        %v5934 = vsel %vm2230, %v5932, %v5933
        %v5935 = vrot.slane %v5933, 4
        %v5936 = vrot.slane %v4985, 5
        %v5937 = vsel %vm2230, %v5935, %v5936
        %v5938 = vrot.slane %v5806, 5
        %v5939 = vrot.slane %v5938, 4
        %v5940 = vrot.slane %v4987, 5
        %v5941 = vsel %vm2230, %v5939, %v5940
        %v5942 = vrot.slane %v5940, 4
        %v5943 = vrot.slane %v4988, 5
        %v5944 = vsel %vm2230, %v5942, %v5943
        %v5945 = vrot.slane %v5807, 5
        %v5946 = vrot.slane %v5945, 4
        %v5947 = vrot.slane %v4990, 5
        %v5948 = vsel %vm2230, %v5946, %v5947
        %v5949 = vrot.slane %v5947, 4
        %v5950 = vrot.slane %v4991, 5
        %v5951 = vsel %vm2230, %v5949, %v5950
        %v5952 = vrot.slane %v5808, 5
        %v5953 = vrot.slane %v5952, 4
        %v5954 = vrot.slane %v4993, 5
        %v5955 = vsel %vm2230, %v5953, %v5954
        %v5956 = vrot.slane %v5954, 4
        %v5957 = vrot.slane %v4994, 5
        %v5958 = vsel %vm2230, %v5956, %v5957
        %v5959 = vrot.slane %v5809, 5
        %v5960 = vrot.slane %v5959, 4
        %v5961 = vrot.slane %v4996, 5
        %v5962 = vsel %vm2230, %v5960, %v5961
        %v5963 = vrot.slane %v5961, 4
        %v5964 = vrot.slane %v4997, 5
        %v5965 = vsel %vm2230, %v5963, %v5964
        %v5966 = vrot.slane %v5810, 5
        %v5967 = vrot.slane %v5966, 4
        %v5968 = vrot.slane %v4999, 5
        %v5969 = vsel %vm2230, %v5967, %v5968
        %v5970 = vrot.slane %v5968, 4
        %v5971 = vrot.slane %v5000, 5
        %v5972 = vsel %vm2230, %v5970, %v5971
        %v5973 = vrot.slane %v5811, 5
        %v5974 = vrot.slane %v5973, 4
        %v5975 = vrot.slane %v5002, 5
        %v5976 = vsel %vm2230, %v5974, %v5975
        %v5977 = vrot.slane %v5975, 4
        %v5978 = vrot.slane %v5003, 5
        %v5979 = vsel %vm2230, %v5977, %v5978
        %v5980 = vrot.slane %v5812, 5
        %v5981 = vrot.slane %v5980, 4
        %v5982 = vrot.slane %v5005, 5
        %v5983 = vsel %vm2230, %v5981, %v5982
        %v5984 = vrot.slane %v5982, 4
        %v5985 = vrot.slane %v5006, 5
        %v5986 = vsel %vm2230, %v5984, %v5985
        %v5987 = vrot.slane %v5813, 5
        %v5988 = vrot.slane %v5987, 4
        %v5989 = vrot.slane %v5008, 5
        %v5990 = vsel %vm2230, %v5988, %v5989
        %v5991 = vrot.slane %v5989, 4
        %v5992 = vrot.slane %v5009, 5
        %v5993 = vsel %vm2230, %v5991, %v5992
        %s5994 = scalar_lea.vmem [#allocation9], 256
        %v5995 = vld [vmem:[%s5994] sm:$0xf]
        %v5996 = vld [vmem:[%s5994 + $0x4] sm:$0xf]
        %v5997 = vld [vmem:[%s5994 + $0x8] sm:$0xf]
        %v5998 = vld [vmem:[%s5994 + $0xc] sm:$0xf]
        %v5999 = vld [vmem:[%s5994 + $0x10] sm:$0xf]
        %v6000 = vld [vmem:[%s5994 + $0x14] sm:$0xf]
        %v6001 = vld [vmem:[%s5994 + $0x18] sm:$0xf]
        %v6002 = vld [vmem:[%s5994 + $0x1c] sm:$0xf]
        %v6003 = vunpack.c.l.b16 %v5871
        %v6004 = vunpack.c.l.b16 %v5874
        %v6005 = vunpack.c.l.b16 %v5878
        %v6006 = vunpack.c.l.b16 %v5881
        %v6007 = vunpack.c.l.b16 %v5885
        %v6008 = vunpack.c.l.b16 %v5888
        %v6009 = vunpack.c.l.b16 %v5892
        %v6010 = vunpack.c.l.b16 %v5895
        %v6011 = vunpack.c.l.b16 %v5899
        %v6012 = vunpack.c.l.b16 %v5902
        %v6013 = vunpack.c.l.b16 %v5906
        %v6014 = vunpack.c.l.b16 %v5909
        %v6015 = vunpack.c.l.b16 %v5913
        %v6016 = vunpack.c.l.b16 %v5916
        %v6017 = vunpack.c.l.b16 %v5920
        %v6018 = vunpack.c.l.b16 %v5923
        %v6019 = vunpack.c.l.b16 %v5927
        %v6020 = vunpack.c.l.b16 %v5930
        %v6021 = vunpack.c.l.b16 %v5934
        %v6022 = vunpack.c.l.b16 %v5937
        %v6023 = vunpack.c.l.b16 %v5941
        %v6024 = vunpack.c.l.b16 %v5944
        %v6025 = vunpack.c.l.b16 %v5948
        %v6026 = vunpack.c.l.b16 %v5951
        %v6027 = vunpack.c.l.b16 %v5955
        %v6028 = vunpack.c.l.b16 %v5958
        %v6029 = vunpack.c.l.b16 %v5962
        %v6030 = vunpack.c.l.b16 %v5965
        %v6031 = vunpack.c.l.b16 %v5969
        %v6032 = vunpack.c.l.b16 %v5972
        %v6033 = vunpack.c.l.b16 %v5976
        %v6034 = vunpack.c.l.b16 %v5979
        %v6035 = vunpack.c.l.b16 %v5983
        %v6036 = vunpack.c.l.b16 %v5986
        %v6037 = vunpack.c.l.b16 %v5990
        %v6038 = vunpack.c.l.b16 %v5993
        %v6039 = vpack.c.b16 %v6004, %v6003
        %v6040 = vpack.c.b16 %v6006, %v6005
        %v6041 = vpack.c.b16 %v6008, %v6007
        %v6042 = vpack.c.b16 %v6010, %v6009
        %v6043 = vpack.c.b16 %v6012, %v6011
        %v6044 = vpack.c.b16 %v6014, %v6013
        %v6045 = vpack.c.b16 %v6016, %v6015
        %v6046 = vpack.c.b16 %v6018, %v6017
        %v6047 = vpack.c.b16 %v6020, %v6019
        %v6048 = vpack.c.b16 %v6022, %v6021
        %v6049 = vpack.c.b16 %v6024, %v6023
        %v6050 = vpack.c.b16 %v6026, %v6025
        %v6051 = vpack.c.b16 %v6028, %v6027
        %v6052 = vpack.c.b16 %v6030, %v6029
        %v6053 = vpack.c.b16 %v6032, %v6031
        %v6054 = vpack.c.b16 %v6034, %v6033
        %v6055 = vpack.c.b16 %v6036, %v6035
        %v6056 = vpack.c.b16 %v6038, %v6037
        %v6065 = vunpack.c.l.b16 %v5995
        %v6066 = vunpack.c.l.b16 %v5996
        %v6067 = vunpack.c.l.b16 %v5997
        %v6068 = vunpack.c.l.b16 %v5998
        %v6069 = vunpack.c.l.b16 %v5999
        %v6070 = vunpack.c.l.b16 %v6000
        %v6071 = vunpack.c.l.b16 %v6001
        %v6072 = vunpack.c.l.b16 %v6002
        %v6073 = vpack.c.b16 %v6066, %v6065
        %v6074 = vpack.c.b16 %v6068, %v6067
        %v6075 = vpack.c.b16 %v6070, %v6069
        %v6076 = vpack.c.b16 %v6072, %v6071
        %v6082 = vsel %vm1597, %v6039, 0
        %v6085 = vsel %vm1597, %v6040, 0
        %v6088 = vsel %vm1597, %v6041, 0
        %v6091 = vsel %vm1597, %v6042, 0
        %v6094 = vsel %vm1597, %v6043, 0
        %v6097 = vsel %vm1597, %v6044, 0
        %v6100 = vsel %vm1597, %v6045, 0
        %v6103 = vsel %vm1597, %v6046, 0
        %v6106 = vsel %vm1597, %v6047, 0
        %v6109 = vsel %vm1597, %v6048, 0
        %v6112 = vsel %vm1597, %v6049, 0
        %v6115 = vsel %vm1597, %v6050, 0
        %v6118 = vsel %vm1597, %v6051, 0
        %v6121 = vsel %vm1597, %v6052, 0
        %v6124 = vsel %vm1597, %v6053, 0
        %v6127 = vsel %vm1597, %v6054, 0
        %v6130 = vsel %vm1597, %v6055, 0
        %v6133 = vsel %vm1597, %v6056, 0
        %6135 = vmatprep.subr.bf16.mxu0 0
        %6136 = vmatpush1.bf16.msra.mxu0 %v6073
        %6137 = vmatprep.subr.bf16.mxu0 0
        %6138 = vmatpush1.bf16.msra.mxu0 %v6074
        %6139 = vmatprep.subr.bf16.mxu0 0
        %6140 = vmatpush1.bf16.msra.mxu0 %v6075
        %6141 = vmatprep.subr.bf16.mxu0 0
        %6142 = vmatpush1.bf16.msra.mxu0 %v6076
        %6143 = vmatprep.subr.bf16.mxu0 0
        %6144 = vmatpush1.bf16.msra.mxu0 0
        %6145 = vmatprep.subr.bf16.mxu0 0
        %6146 = vmatpush1.bf16.msra.mxu0 0
        %6147 = vmatprep.subr.bf16.mxu0 0
        %6148 = vmatpush1.bf16.msra.mxu0 0
        %6149 = vmatprep.subr.bf16.mxu0 0
        %6150 = vmatpush1.bf16.msra.mxu0 0
        %6151 = vmatprep.subr.bf16.mxu0 0
        %6152 = vmatpush1.bf16.msra.mxu0 0
        %6153 = vmatprep.subr.bf16.mxu0 0
        %6154 = vmatpush1.bf16.msra.mxu0 0
        %6155 = vmatprep.subr.bf16.mxu0 0
        %6156 = vmatpush1.bf16.msra.mxu0 0
        %6157 = vmatprep.subr.bf16.mxu0 0
        %6158 = vmatpush1.bf16.msra.mxu0 0
        %6159 = vmatprep.subr.bf16.mxu0 0
        %6160 = vmatpush1.bf16.msra.mxu0 0
        %6161 = vmatprep.subr.bf16.mxu0 0
        %6162 = vmatpush1.bf16.msra.mxu0 0
        %6163 = vmatprep.subr.bf16.mxu0 0
        %6164 = vmatpush1.bf16.msra.mxu0 0
        %6165 = vmatprep.subr.bf16.mxu0 0
        %6166 = vmatpush1.bf16.msra.mxu0 0
        %6167 = vmatprep.mubr.bf16.mxu0 0
        %6168 = vmatmul.mubr.bf16.gmra.mrb[0].mxu0 %v6082
        %v6169 = vpop.f32.mrb[0].mxu0
        %v6170 = vadd.f32 0.0, %v6169
        %v6171 = vpop.f32.mrb[0].mxu0
        %v6172 = vpop.f32.mrb[0].mxu0
        %v6173 = vadd.f32 0.0, %v6172
        %v6174 = vpop.f32.mrb[0].mxu0
        %6175 = vmatprep.mubr.bf16.mxu0 0
        %6176 = vmatmul.mubr.bf16.gmra.mrb[0].mxu0 %v6085
        %v6177 = vpop.f32.mrb[0].mxu0
        %v6178 = vadd.f32 0.0, %v6177
        %v6179 = vpop.f32.mrb[0].mxu0
        %v6180 = vpop.f32.mrb[0].mxu0
        %v6181 = vadd.f32 0.0, %v6180
        %v6182 = vpop.f32.mrb[0].mxu0
        %6183 = vmatprep.mubr.bf16.mxu0 0
        %6184 = vmatmul.mubr.bf16.gmra.mrb[0].mxu0 %v6088
        %v6185 = vpop.f32.mrb[0].mxu0
        %v6186 = vadd.f32 0.0, %v6185
        %v6187 = vpop.f32.mrb[0].mxu0
        %v6188 = vpop.f32.mrb[0].mxu0
        %v6189 = vadd.f32 0.0, %v6188
        %v6190 = vpop.f32.mrb[0].mxu0
        %6191 = vmatprep.mubr.bf16.mxu0 0
        %6192 = vmatmul.mubr.bf16.gmra.mrb[0].mxu0 %v6091
        %v6193 = vpop.f32.mrb[0].mxu0
        %v6194 = vadd.f32 0.0, %v6193
        %v6195 = vpop.f32.mrb[0].mxu0
        %v6196 = vpop.f32.mrb[0].mxu0
        %v6197 = vadd.f32 0.0, %v6196
        %v6198 = vpop.f32.mrb[0].mxu0
        %6199 = vmatprep.mubr.bf16.mxu0 0
        %6200 = vmatmul.mubr.bf16.gmra.mrb[0].mxu0 %v6094
        %v6201 = vpop.f32.mrb[0].mxu0
        %v6202 = vadd.f32 0.0, %v6201
        %v6203 = vpop.f32.mrb[0].mxu0
        %v6204 = vpop.f32.mrb[0].mxu0
        %v6205 = vadd.f32 0.0, %v6204
        %v6206 = vpop.f32.mrb[0].mxu0
        %6207 = vmatprep.mubr.bf16.mxu0 0
        %6208 = vmatmul.mubr.bf16.gmra.mrb[0].mxu0 %v6097
        %v6209 = vpop.f32.mrb[0].mxu0
        %v6210 = vadd.f32 0.0, %v6209
        %v6211 = vpop.f32.mrb[0].mxu0
        %v6212 = vpop.f32.mrb[0].mxu0
        %v6213 = vadd.f32 0.0, %v6212
        %v6214 = vpop.f32.mrb[0].mxu0
        %6215 = vmatprep.mubr.bf16.mxu0 0
        %6216 = vmatmul.mubr.bf16.gmra.mrb[0].mxu0 %v6100
        %v6217 = vpop.f32.mrb[0].mxu0
        %v6218 = vadd.f32 0.0, %v6217
        %v6219 = vpop.f32.mrb[0].mxu0
        %v6220 = vpop.f32.mrb[0].mxu0
        %v6221 = vadd.f32 0.0, %v6220
        %v6222 = vpop.f32.mrb[0].mxu0
        %6223 = vmatprep.mubr.bf16.mxu0 0
        %6224 = vmatmul.mubr.bf16.gmra.mrb[0].mxu0 %v6103
        %v6225 = vpop.f32.mrb[0].mxu0
        %v6226 = vadd.f32 0.0, %v6225
        %v6227 = vpop.f32.mrb[0].mxu0
        %v6228 = vpop.f32.mrb[0].mxu0
        %v6229 = vadd.f32 0.0, %v6228
        %v6230 = vpop.f32.mrb[0].mxu0
        %6231 = vmatprep.mubr.bf16.mxu0 0
        %6232 = vmatmul.mubr.bf16.gmra.mrb[0].mxu0 %v6106
        %v6233 = vpop.f32.mrb[0].mxu0
        %v6234 = vadd.f32 0.0, %v6233
        %v6235 = vpop.f32.mrb[0].mxu0
        %v6236 = vpop.f32.mrb[0].mxu0
        %v6237 = vadd.f32 0.0, %v6236
        %v6238 = vpop.f32.mrb[0].mxu0
        %6239 = vmatprep.mubr.bf16.mxu0 0
        %6240 = vmatmul.mubr.bf16.gmra.mrb[0].mxu0 %v6109
        %v6241 = vpop.f32.mrb[0].mxu0
        %v6242 = vadd.f32 0.0, %v6241
        %v6243 = vpop.f32.mrb[0].mxu0
        %v6244 = vpop.f32.mrb[0].mxu0
        %v6245 = vadd.f32 0.0, %v6244
        %v6246 = vpop.f32.mrb[0].mxu0
        %6247 = vmatprep.mubr.bf16.mxu0 0
        %6248 = vmatmul.mubr.bf16.gmra.mrb[0].mxu0 %v6112
        %v6249 = vpop.f32.mrb[0].mxu0
        %v6250 = vadd.f32 0.0, %v6249
        %v6251 = vpop.f32.mrb[0].mxu0
        %v6252 = vpop.f32.mrb[0].mxu0
        %v6253 = vadd.f32 0.0, %v6252
        %v6254 = vpop.f32.mrb[0].mxu0
        %6255 = vmatprep.mubr.bf16.mxu0 0
        %6256 = vmatmul.mubr.bf16.gmra.mrb[0].mxu0 %v6115
        %v6257 = vpop.f32.mrb[0].mxu0
        %v6258 = vadd.f32 0.0, %v6257
        %v6259 = vpop.f32.mrb[0].mxu0
        %v6260 = vpop.f32.mrb[0].mxu0
        %v6261 = vadd.f32 0.0, %v6260
        %v6262 = vpop.f32.mrb[0].mxu0
        %6263 = vmatprep.mubr.bf16.mxu0 0
        %6264 = vmatmul.mubr.bf16.gmra.mrb[0].mxu0 %v6118
        %v6265 = vpop.f32.mrb[0].mxu0
        %v6266 = vadd.f32 0.0, %v6265
        %v6267 = vpop.f32.mrb[0].mxu0
        %v6268 = vpop.f32.mrb[0].mxu0
        %v6269 = vadd.f32 0.0, %v6268
        %v6270 = vpop.f32.mrb[0].mxu0
        %6271 = vmatprep.mubr.bf16.mxu0 0
        %6272 = vmatmul.mubr.bf16.gmra.mrb[0].mxu0 %v6121
        %v6273 = vpop.f32.mrb[0].mxu0
        %v6274 = vadd.f32 0.0, %v6273
        %v6275 = vpop.f32.mrb[0].mxu0
        %v6276 = vpop.f32.mrb[0].mxu0
        %v6277 = vadd.f32 0.0, %v6276
        %v6278 = vpop.f32.mrb[0].mxu0
        %6279 = vmatprep.mubr.bf16.mxu0 0
        %6280 = vmatmul.mubr.bf16.gmra.mrb[0].mxu0 %v6124
        %v6281 = vpop.f32.mrb[0].mxu0
        %v6282 = vadd.f32 0.0, %v6281
        %v6283 = vpop.f32.mrb[0].mxu0
        %v6284 = vpop.f32.mrb[0].mxu0
        %v6285 = vadd.f32 0.0, %v6284
        %v6286 = vpop.f32.mrb[0].mxu0
        %6287 = vmatprep.mubr.bf16.mxu0 0
        %6288 = vmatmul.mubr.bf16.gmra.mrb[0].mxu0 %v6127
        %v6289 = vpop.f32.mrb[0].mxu0
        %v6290 = vadd.f32 0.0, %v6289
        %v6291 = vpop.f32.mrb[0].mxu0
        %v6292 = vpop.f32.mrb[0].mxu0
        %v6293 = vadd.f32 0.0, %v6292
        %v6294 = vpop.f32.mrb[0].mxu0
        %6295 = vmatprep.mubr.bf16.mxu0 0
        %6296 = vmatmul.mubr.bf16.gmra.mrb[0].mxu0 %v6130
        %v6297 = vpop.f32.mrb[0].mxu0
        %v6298 = vadd.f32 0.0, %v6297
        %v6299 = vpop.f32.mrb[0].mxu0
        %v6300 = vpop.f32.mrb[0].mxu0
        %v6301 = vadd.f32 0.0, %v6300
        %v6302 = vpop.f32.mrb[0].mxu0
        %6303 = vmatprep.mubr.bf16.mxu0 0
        %6304 = vmatmul.mubr.bf16.gmra.mrb[0].mxu0 %v6133
        %v6305 = vpop.f32.mrb[0].mxu0
        %v6306 = vadd.f32 0.0, %v6305
        %v6307 = vpop.f32.mrb[0].mxu0
        %v6308 = vpop.f32.mrb[0].mxu0
        %v6309 = vadd.f32 0.0, %v6308
        %v6310 = vpop.f32.mrb[0].mxu0
        %6311 = vdwg.mxu0
        %v6312 = vadd.f32 %v5760, %v6170
        %v6313 = vadd.f32 %v5761, %v6173
        %v6314 = vadd.f32 %v5762, %v6178
        %v6315 = vadd.f32 %v5763, %v6181
        %v6316 = vadd.f32 %v5764, %v6186
        %v6317 = vadd.f32 %v5765, %v6189
        %v6318 = vadd.f32 %v5766, %v6194
        %v6319 = vadd.f32 %v5767, %v6197
        %v6320 = vadd.f32 %v5768, %v6202
        %v6321 = vadd.f32 %v5769, %v6205
        %v6322 = vadd.f32 %v5770, %v6210
        %v6323 = vadd.f32 %v5771, %v6213
        %v6324 = vadd.f32 %v5772, %v6218
        %v6325 = vadd.f32 %v5773, %v6221
        %v6326 = vadd.f32 %v5774, %v6226
        %v6327 = vadd.f32 %v5775, %v6229
        %v6328 = vadd.f32 %v5776, %v6234
        %v6329 = vadd.f32 %v5777, %v6237
        %v6330 = vadd.f32 %v5778, %v6242
        %v6331 = vadd.f32 %v5779, %v6245
        %v6332 = vadd.f32 %v5780, %v6250
        %v6333 = vadd.f32 %v5781, %v6253
        %v6334 = vadd.f32 %v5782, %v6258
        %v6335 = vadd.f32 %v5783, %v6261
        %v6336 = vadd.f32 %v5784, %v6266
        %v6337 = vadd.f32 %v5785, %v6269
        %v6338 = vadd.f32 %v5786, %v6274
        %v6339 = vadd.f32 %v5787, %v6277
        %v6340 = vadd.f32 %v5788, %v6282
        %v6341 = vadd.f32 %v5789, %v6285
        %v6342 = vadd.f32 %v5790, %v6290
        %v6343 = vadd.f32 %v5791, %v6293
        %v6344 = vadd.f32 %v5792, %v6298
        %v6345 = vadd.f32 %v5793, %v6301
        %v6346 = vadd.f32 %v5794, %v6306
        %v6347 = vadd.f32 %v5795, %v6309
        %v6348 = vld [vmem:[%s3] sm:$0x1]
        %v6350 = vlaneseq
        %v6351 = vshrl.u32 %v6350, 7
        %v6352 = vsub.s32 0, %v6351
        %v6353 = vrot.slane %v6348, %v6352
        %v6355 = vadd.f32 %v6312, %v6353
        %v6356 = vadd.f32 %v6313, %v6353
        %v6357 = vadd.f32 %v6314, %v6353
        %v6358 = vadd.f32 %v6315, %v6353
        %v6359 = vadd.f32 %v6316, %v6353
        %v6360 = vadd.f32 %v6317, %v6353
        %v6361 = vadd.f32 %v6318, %v6353
        %v6362 = vadd.f32 %v6319, %v6353
        %v6363 = vadd.f32 %v6320, %v6353
        %v6364 = vadd.f32 %v6321, %v6353
        %v6365 = vadd.f32 %v6322, %v6353
        %v6366 = vadd.f32 %v6323, %v6353
        %v6367 = vadd.f32 %v6324, %v6353
        %v6368 = vadd.f32 %v6325, %v6353
        %v6369 = vadd.f32 %v6326, %v6353
        %v6370 = vadd.f32 %v6327, %v6353
        %v6371 = vadd.f32 %v6328, %v6353
        %v6372 = vadd.f32 %v6329, %v6353
        %v6373 = vadd.f32 %v6330, %v6353
        %v6374 = vadd.f32 %v6331, %v6353
        %v6375 = vadd.f32 %v6332, %v6353
        %v6376 = vadd.f32 %v6333, %v6353
        %v6377 = vadd.f32 %v6334, %v6353
        %v6378 = vadd.f32 %v6335, %v6353
        %v6379 = vadd.f32 %v6336, %v6353
        %v6380 = vadd.f32 %v6337, %v6353
        %v6381 = vadd.f32 %v6338, %v6353
        %v6382 = vadd.f32 %v6339, %v6353
        %v6383 = vadd.f32 %v6340, %v6353
        %v6384 = vadd.f32 %v6341, %v6353
        %v6385 = vadd.f32 %v6342, %v6353
        %v6386 = vadd.f32 %v6343, %v6353
        %v6387 = vadd.f32 %v6344, %v6353
        %v6388 = vadd.f32 %v6345, %v6353
        %v6389 = vadd.f32 %v6346, %v6353
        %v6390 = vadd.f32 %v6347, %v6353
        %v6391 = vmax.f32 %v6355, 0.0
        %v6392 = vmax.f32 %v6356, 0.0
        %v6393 = vmax.f32 %v6357, 0.0
        %v6394 = vmax.f32 %v6358, 0.0
        %v6395 = vmax.f32 %v6359, 0.0
        %v6396 = vmax.f32 %v6360, 0.0
        %v6397 = vmax.f32 %v6361, 0.0
        %v6398 = vmax.f32 %v6362, 0.0
        %v6399 = vmax.f32 %v6363, 0.0
        %v6400 = vmax.f32 %v6364, 0.0
        %v6401 = vmax.f32 %v6365, 0.0
        %v6402 = vmax.f32 %v6366, 0.0
        %v6403 = vmax.f32 %v6367, 0.0
        %v6404 = vmax.f32 %v6368, 0.0
        %v6405 = vmax.f32 %v6369, 0.0
        %v6406 = vmax.f32 %v6370, 0.0
        %v6407 = vmax.f32 %v6371, 0.0
        %v6408 = vmax.f32 %v6372, 0.0
        %v6409 = vmax.f32 %v6373, 0.0
        %v6410 = vmax.f32 %v6374, 0.0
        %v6411 = vmax.f32 %v6375, 0.0
        %v6412 = vmax.f32 %v6376, 0.0
        %v6413 = vmax.f32 %v6377, 0.0
        %v6414 = vmax.f32 %v6378, 0.0
        %v6415 = vmax.f32 %v6379, 0.0
        %v6416 = vmax.f32 %v6380, 0.0
        %v6417 = vmax.f32 %v6381, 0.0
        %v6418 = vmax.f32 %v6382, 0.0
        %v6419 = vmax.f32 %v6383, 0.0
        %v6420 = vmax.f32 %v6384, 0.0
        %v6421 = vmax.f32 %v6385, 0.0
        %v6422 = vmax.f32 %v6386, 0.0
        %v6423 = vmax.f32 %v6387, 0.0
        %v6424 = vmax.f32 %v6388, 0.0
        %v6425 = vmax.f32 %v6389, 0.0
        %v6426 = vmax.f32 %v6390, 0.0
        %6427 = vst.msk [vmem:[#allocation3] sm:$0xf] %vm382, 0
        %6428 = vst.msk [vmem:[#allocation3 + $0x4] sm:$0xf] %vm382, 0
        %6429 = vst.msk [vmem:[#allocation3 + $0x8] sm:$0x1] %vm385, 0
        %6430 = vst.msk [vmem:[#allocation3 + $0xc] sm:$0xf] %vm382, 0
        %6431 = vst.msk [vmem:[#allocation3 + $0x10] sm:$0xf] %vm382, 0
        %6432 = vst.msk [vmem:[#allocation3 + $0x14] sm:$0x1] %vm385, 0
        %6433 = vst.msk [vmem:[#allocation3 + $0x18] sm:$0xf] %vm382, 0
        %6434 = vst.msk [vmem:[#allocation3 + $0x1c] sm:$0xf] %vm382, 0
        %6435 = vst.msk [vmem:[#allocation3 + $0x20] sm:$0x1] %vm385, 0
        %6436 = vst.msk [vmem:[#allocation3 + $0x24] sm:$0xf] %vm382, 0
        %6437 = vst.msk [vmem:[#allocation3 + $0x28] sm:$0xf] %vm382, 0
        %6438 = vst.msk [vmem:[#allocation3 + $0x2c] sm:$0x1] %vm385, 0
        %6439 = vst.msk [vmem:[#allocation3 + $0x30] sm:$0xf] %vm382, 0
        %6440 = vst.msk [vmem:[#allocation3 + $0x34] sm:$0xf] %vm382, 0
        %6441 = vst.msk [vmem:[#allocation3 + $0x38] sm:$0x1] %vm385, 0
        %6442 = vst.msk [vmem:[#allocation3 + $0x3c] sm:$0xf] %vm382, 0
        %6443 = vst.msk [vmem:[#allocation3 + $0x40] sm:$0xf] %vm382, 0
        %6444 = vst.msk [vmem:[#allocation3 + $0x44] sm:$0x1] %vm385, 0
        %6445 = vst.msk [vmem:[#allocation3 + $0x48] sm:$0xf] %vm382, 0
        %6446 = vst.msk [vmem:[#allocation3 + $0x4c] sm:$0xf] %vm382, 0
        %6447 = vst.msk [vmem:[#allocation3 + $0x50] sm:$0x1] %vm385, 0
        %6448 = vst.msk [vmem:[#allocation3 + $0x54] sm:$0xf] %vm382, 0
        %6449 = vst.msk [vmem:[#allocation3 + $0x58] sm:$0xf] %vm382, 0
        %6450 = vst.msk [vmem:[#allocation3 + $0x5c] sm:$0x1] %vm385, 0
        %6451 = vst.msk [vmem:[#allocation3 + $0x60] sm:$0xf] %vm382, 0
        %6452 = vst.msk [vmem:[#allocation3 + $0x64] sm:$0xf] %vm382, 0
        %6453 = vst.msk [vmem:[#allocation3 + $0x68] sm:$0x1] %vm385, 0
        %6454 = vst.msk [vmem:[#allocation3 + $0x6c] sm:$0xf] %vm382, 0
        %6455 = vst.msk [vmem:[#allocation3 + $0x70] sm:$0xf] %vm382, 0
        %6456 = vst.msk [vmem:[#allocation3 + $0x74] sm:$0x1] %vm385, 0
        %6457 = vst.msk [vmem:[#allocation3 + $0x78] sm:$0xf] %vm382, 0
        %6458 = vst.msk [vmem:[#allocation3 + $0x7c] sm:$0xf] %vm382, 0
        %6459 = vst.msk [vmem:[#allocation3 + $0x80] sm:$0x1] %vm385, 0
        %6460 = vst.msk [vmem:[#allocation3 + $0x84] sm:$0xf] %vm382, 0
        %6461 = vst.msk [vmem:[#allocation3 + $0x88] sm:$0xf] %vm382, 0
        %6462 = vst.msk [vmem:[#allocation3 + $0x8c] sm:$0x1] %vm385, 0
        %6463 = vst.msk [vmem:[#allocation3 + $0x90] sm:$0xf] %vm382, 0
        %6464 = vst.msk [vmem:[#allocation3 + $0x94] sm:$0xf] %vm382, 0
        %6465 = vst.msk [vmem:[#allocation3 + $0x98] sm:$0x1] %vm385, 0
        %6466 = vst.msk [vmem:[#allocation3 + $0x9c] sm:$0xf] %vm382, 0
        %6467 = vst.msk [vmem:[#allocation3 + $0xa0] sm:$0xf] %vm382, 0
        %6468 = vst.msk [vmem:[#allocation3 + $0xa4] sm:$0x1] %vm385, 0
        %6469 = vst.msk [vmem:[#allocation3 + $0xa8] sm:$0xf] %vm382, 0
        %6470 = vst.msk [vmem:[#allocation3 + $0xac] sm:$0xf] %vm382, 0
        %6471 = vst.msk [vmem:[#allocation3 + $0xb0] sm:$0x1] %vm385, 0
        %6472 = vst.msk [vmem:[#allocation3 + $0xb4] sm:$0xf] %vm382, 0
        %6473 = vst.msk [vmem:[#allocation3 + $0xb8] sm:$0xf] %vm382, 0
        %6474 = vst.msk [vmem:[#allocation3 + $0xbc] sm:$0x1] %vm385, 0
        %6475 = vst.msk [vmem:[#allocation3 + $0xc0] sm:$0xf] %vm382, 0
        %6476 = vst.msk [vmem:[#allocation3 + $0xc4] sm:$0xf] %vm382, 0
        %6477 = vst.msk [vmem:[#allocation3 + $0xc8] sm:$0x1] %vm385, 0
        %6478 = vst.msk [vmem:[#allocation3 + $0xcc] sm:$0xf] %vm382, 0
        %6479 = vst.msk [vmem:[#allocation3 + $0xd0] sm:$0xf] %vm382, 0
        %6480 = vst.msk [vmem:[#allocation3 + $0xd4] sm:$0x1] %vm385, 0
        %v6481 = vpack.c.bf16 %v6392, %v6391
        %v6482 = vpack.c.bf16 %v6394, %v6393
        %v6483 = vpack.c.bf16 %v6396, %v6395
        %v6484 = vpack.c.bf16 %v6398, %v6397
        %v6485 = vpack.c.bf16 %v6400, %v6399
        %v6486 = vpack.c.bf16 %v6402, %v6401
        %v6487 = vpack.c.bf16 %v6404, %v6403
        %v6488 = vpack.c.bf16 %v6406, %v6405
        %v6489 = vpack.c.bf16 %v6408, %v6407
        %v6490 = vpack.c.bf16 %v6410, %v6409
        %v6491 = vpack.c.bf16 %v6412, %v6411
        %v6492 = vpack.c.bf16 %v6414, %v6413
        %v6493 = vpack.c.bf16 %v6416, %v6415
        %v6494 = vpack.c.bf16 %v6418, %v6417
        %v6495 = vpack.c.bf16 %v6420, %v6419
        %v6496 = vpack.c.bf16 %v6422, %v6421
        %v6497 = vpack.c.bf16 %v6424, %v6423
        %v6498 = vpack.c.bf16 %v6426, %v6425
        %v6517 = vunpack.c.l.b16 %v6481
        %v6518 = vunpack.c.h.b16 %v6481
        %v6519 = vunpack.c.l.b16 %v6482
        %v6520 = vunpack.c.h.b16 %v6482
        %v6521 = vunpack.c.l.b16 %v6483
        %v6522 = vunpack.c.h.b16 %v6483
        %v6523 = vunpack.c.l.b16 %v6484
        %v6524 = vunpack.c.h.b16 %v6484
        %v6525 = vunpack.c.l.b16 %v6485
        %v6526 = vunpack.c.h.b16 %v6485
        %v6527 = vunpack.c.l.b16 %v6486
        %v6528 = vunpack.c.h.b16 %v6486
        %v6529 = vunpack.c.l.b16 %v6487
        %v6530 = vunpack.c.h.b16 %v6487
        %v6531 = vunpack.c.l.b16 %v6488
        %v6532 = vunpack.c.h.b16 %v6488
        %v6533 = vunpack.c.l.b16 %v6489
        %v6534 = vunpack.c.h.b16 %v6489
        %v6535 = vunpack.c.l.b16 %v6490
        %v6536 = vunpack.c.h.b16 %v6490
        %v6537 = vunpack.c.l.b16 %v6491
        %v6538 = vunpack.c.h.b16 %v6491
        %v6539 = vunpack.c.l.b16 %v6492
        %v6540 = vunpack.c.h.b16 %v6492
        %v6541 = vunpack.c.l.b16 %v6493
        %v6542 = vunpack.c.h.b16 %v6493
        %v6543 = vunpack.c.l.b16 %v6494
        %v6544 = vunpack.c.h.b16 %v6494
        %v6545 = vunpack.c.l.b16 %v6495
        %v6546 = vunpack.c.h.b16 %v6495
        %v6547 = vunpack.c.l.b16 %v6496
        %v6548 = vunpack.c.h.b16 %v6496
        %v6549 = vunpack.c.l.b16 %v6497
        %v6550 = vunpack.c.h.b16 %v6497
        %v6551 = vunpack.c.l.b16 %v6498
        %v6552 = vunpack.c.h.b16 %v6498
        %v6553 = vpack.c.b16 %v6517, %v6517
        %v6554 = vpack.c.b16 %v6518, %v6518
        %v6555 = vpack.c.b16 %v6519, %v6519
        %v6556 = vpack.c.b16 %v6520, %v6520
        %v6557 = vpack.c.b16 %v6521, %v6521
        %v6558 = vpack.c.b16 %v6522, %v6522
        %v6559 = vpack.c.b16 %v6523, %v6523
        %v6560 = vpack.c.b16 %v6524, %v6524
        %v6561 = vpack.c.b16 %v6525, %v6525
        %v6562 = vpack.c.b16 %v6526, %v6526
        %v6563 = vpack.c.b16 %v6527, %v6527
        %v6564 = vpack.c.b16 %v6528, %v6528
        %v6565 = vpack.c.b16 %v6529, %v6529
        %v6566 = vpack.c.b16 %v6530, %v6530
        %v6567 = vpack.c.b16 %v6531, %v6531
        %v6568 = vpack.c.b16 %v6532, %v6532
        %v6569 = vpack.c.b16 %v6533, %v6533
        %v6570 = vpack.c.b16 %v6534, %v6534
        %v6571 = vpack.c.b16 %v6535, %v6535
        %v6572 = vpack.c.b16 %v6536, %v6536
        %v6573 = vpack.c.b16 %v6537, %v6537
        %v6574 = vpack.c.b16 %v6538, %v6538
        %v6575 = vpack.c.b16 %v6539, %v6539
        %v6576 = vpack.c.b16 %v6540, %v6540
        %v6577 = vpack.c.b16 %v6541, %v6541
        %v6578 = vpack.c.b16 %v6542, %v6542
        %v6579 = vpack.c.b16 %v6543, %v6543
        %v6580 = vpack.c.b16 %v6544, %v6544
        %v6581 = vpack.c.b16 %v6545, %v6545
        %v6582 = vpack.c.b16 %v6546, %v6546
        %v6583 = vpack.c.b16 %v6547, %v6547
        %v6584 = vpack.c.b16 %v6548, %v6548
        %v6585 = vpack.c.b16 %v6549, %v6549
        %v6586 = vpack.c.b16 %v6550, %v6550
        %v6587 = vpack.c.b16 %v6551, %v6551
        %v6588 = vpack.c.b16 %v6552, %v6552
        %v6590 = vshrl.u32 %v6553, 16
        %v6592 = vrot.slane %v6590, 7
        %v6593 = vshll.u32 %v6553, 16
        %v6595 = vor.u32 %v6592, %v6593
        %v6596 = vrot.slane %v6592, 4
        %v6598 = vshrl.u32 %v6554, 16
        %v6600 = vrot.slane %v6598, 7
        %v6601 = vshll.u32 %v6554, 16
        %v6603 = vor.u32 %v6600, %v6601
        %v6604 = vsel %vm574, %v6596, %v6603
        %v6605 = vrot.slane %v6600, 4
        %v6607 = vshrl.u32 %v6555, 16
        %v6609 = vrot.slane %v6607, 7
        %v6610 = vshll.u32 %v6555, 16
        %v6612 = vor.u32 %v6609, %v6610
        %v6613 = vrot.slane %v6609, 4
        %v6615 = vshrl.u32 %v6556, 16
        %v6617 = vrot.slane %v6615, 7
        %v6618 = vshll.u32 %v6556, 16
        %v6620 = vor.u32 %v6617, %v6618
        %v6621 = vsel %vm574, %v6613, %v6620
        %v6622 = vrot.slane %v6617, 4
        %v6624 = vshrl.u32 %v6557, 16
        %v6626 = vrot.slane %v6624, 7
        %v6627 = vshll.u32 %v6557, 16
        %v6629 = vor.u32 %v6626, %v6627
        %v6630 = vrot.slane %v6626, 4
        %v6632 = vshrl.u32 %v6558, 16
        %v6634 = vrot.slane %v6632, 7
        %v6635 = vshll.u32 %v6558, 16
        %v6637 = vor.u32 %v6634, %v6635
        %v6638 = vsel %vm574, %v6630, %v6637
        %v6639 = vrot.slane %v6634, 4
        %v6641 = vshrl.u32 %v6559, 16
        %v6643 = vrot.slane %v6641, 7
        %v6644 = vshll.u32 %v6559, 16
        %v6646 = vor.u32 %v6643, %v6644
        %v6647 = vrot.slane %v6643, 4
        %v6649 = vshrl.u32 %v6560, 16
        %v6651 = vrot.slane %v6649, 7
        %v6652 = vshll.u32 %v6560, 16
        %v6654 = vor.u32 %v6651, %v6652
        %v6655 = vsel %vm574, %v6647, %v6654
        %v6656 = vrot.slane %v6651, 4
        %v6658 = vshrl.u32 %v6561, 16
        %v6660 = vrot.slane %v6658, 7
        %v6661 = vshll.u32 %v6561, 16
        %v6663 = vor.u32 %v6660, %v6661
        %v6664 = vrot.slane %v6660, 4
        %v6666 = vshrl.u32 %v6562, 16
        %v6668 = vrot.slane %v6666, 7
        %v6669 = vshll.u32 %v6562, 16
        %v6671 = vor.u32 %v6668, %v6669
        %v6672 = vsel %vm574, %v6664, %v6671
        %v6673 = vrot.slane %v6668, 4
        %v6675 = vshrl.u32 %v6563, 16
        %v6677 = vrot.slane %v6675, 7
        %v6678 = vshll.u32 %v6563, 16
        %v6680 = vor.u32 %v6677, %v6678
        %v6681 = vrot.slane %v6677, 4
        %v6683 = vshrl.u32 %v6564, 16
        %v6685 = vrot.slane %v6683, 7
        %v6686 = vshll.u32 %v6564, 16
        %v6688 = vor.u32 %v6685, %v6686
        %v6689 = vsel %vm574, %v6681, %v6688
        %v6690 = vrot.slane %v6685, 4
        %v6692 = vshrl.u32 %v6565, 16
        %v6694 = vrot.slane %v6692, 7
        %v6695 = vshll.u32 %v6565, 16
        %v6697 = vor.u32 %v6694, %v6695
        %v6698 = vrot.slane %v6694, 4
        %v6700 = vshrl.u32 %v6566, 16
        %v6702 = vrot.slane %v6700, 7
        %v6703 = vshll.u32 %v6566, 16
        %v6705 = vor.u32 %v6702, %v6703
        %v6706 = vsel %vm574, %v6698, %v6705
        %v6707 = vrot.slane %v6702, 4
        %v6709 = vshrl.u32 %v6567, 16
        %v6711 = vrot.slane %v6709, 7
        %v6712 = vshll.u32 %v6567, 16
        %v6714 = vor.u32 %v6711, %v6712
        %v6715 = vrot.slane %v6711, 4
        %v6717 = vshrl.u32 %v6568, 16
        %v6719 = vrot.slane %v6717, 7
        %v6720 = vshll.u32 %v6568, 16
        %v6722 = vor.u32 %v6719, %v6720
        %v6723 = vsel %vm574, %v6715, %v6722
        %v6724 = vrot.slane %v6719, 4
        %v6726 = vshrl.u32 %v6569, 16
        %v6728 = vrot.slane %v6726, 7
        %v6729 = vshll.u32 %v6569, 16
        %v6731 = vor.u32 %v6728, %v6729
        %v6732 = vrot.slane %v6728, 4
        %v6734 = vshrl.u32 %v6570, 16
        %v6736 = vrot.slane %v6734, 7
        %v6737 = vshll.u32 %v6570, 16
        %v6739 = vor.u32 %v6736, %v6737
        %v6740 = vsel %vm574, %v6732, %v6739
        %v6741 = vrot.slane %v6736, 4
        %v6743 = vshrl.u32 %v6571, 16
        %v6745 = vrot.slane %v6743, 7
        %v6746 = vshll.u32 %v6571, 16
        %v6748 = vor.u32 %v6745, %v6746
        %v6749 = vrot.slane %v6745, 4
        %v6751 = vshrl.u32 %v6572, 16
        %v6753 = vrot.slane %v6751, 7
        %v6754 = vshll.u32 %v6572, 16
        %v6756 = vor.u32 %v6753, %v6754
        %v6757 = vsel %vm574, %v6749, %v6756
        %v6758 = vrot.slane %v6753, 4
        %v6760 = vshrl.u32 %v6573, 16
        %v6762 = vrot.slane %v6760, 7
        %v6763 = vshll.u32 %v6573, 16
        %v6765 = vor.u32 %v6762, %v6763
        %v6766 = vrot.slane %v6762, 4
        %v6768 = vshrl.u32 %v6574, 16
        %v6770 = vrot.slane %v6768, 7
        %v6771 = vshll.u32 %v6574, 16
        %v6773 = vor.u32 %v6770, %v6771
        %v6774 = vsel %vm574, %v6766, %v6773
        %v6775 = vrot.slane %v6770, 4
        %v6777 = vshrl.u32 %v6575, 16
        %v6779 = vrot.slane %v6777, 7
        %v6780 = vshll.u32 %v6575, 16
        %v6782 = vor.u32 %v6779, %v6780
        %v6783 = vrot.slane %v6779, 4
        %v6785 = vshrl.u32 %v6576, 16
        %v6787 = vrot.slane %v6785, 7
        %v6788 = vshll.u32 %v6576, 16
        %v6790 = vor.u32 %v6787, %v6788
        %v6791 = vsel %vm574, %v6783, %v6790
        %v6792 = vrot.slane %v6787, 4
        %v6794 = vshrl.u32 %v6577, 16
        %v6796 = vrot.slane %v6794, 7
        %v6797 = vshll.u32 %v6577, 16
        %v6799 = vor.u32 %v6796, %v6797
        %v6800 = vrot.slane %v6796, 4
        %v6802 = vshrl.u32 %v6578, 16
        %v6804 = vrot.slane %v6802, 7
        %v6805 = vshll.u32 %v6578, 16
        %v6807 = vor.u32 %v6804, %v6805
        %v6808 = vsel %vm574, %v6800, %v6807
        %v6809 = vrot.slane %v6804, 4
        %v6811 = vshrl.u32 %v6579, 16
        %v6813 = vrot.slane %v6811, 7
        %v6814 = vshll.u32 %v6579, 16
        %v6816 = vor.u32 %v6813, %v6814
        %v6817 = vrot.slane %v6813, 4
        %v6819 = vshrl.u32 %v6580, 16
        %v6821 = vrot.slane %v6819, 7
        %v6822 = vshll.u32 %v6580, 16
        %v6824 = vor.u32 %v6821, %v6822
        %v6825 = vsel %vm574, %v6817, %v6824
        %v6826 = vrot.slane %v6821, 4
        %v6828 = vshrl.u32 %v6581, 16
        %v6830 = vrot.slane %v6828, 7
        %v6831 = vshll.u32 %v6581, 16
        %v6833 = vor.u32 %v6830, %v6831
        %v6834 = vrot.slane %v6830, 4
        %v6836 = vshrl.u32 %v6582, 16
        %v6838 = vrot.slane %v6836, 7
        %v6839 = vshll.u32 %v6582, 16
        %v6841 = vor.u32 %v6838, %v6839
        %v6842 = vsel %vm574, %v6834, %v6841
        %v6843 = vrot.slane %v6838, 4
        %v6845 = vshrl.u32 %v6583, 16
        %v6847 = vrot.slane %v6845, 7
        %v6848 = vshll.u32 %v6583, 16
        %v6850 = vor.u32 %v6847, %v6848
        %v6851 = vrot.slane %v6847, 4
        %v6853 = vshrl.u32 %v6584, 16
        %v6855 = vrot.slane %v6853, 7
        %v6856 = vshll.u32 %v6584, 16
        %v6858 = vor.u32 %v6855, %v6856
        %v6859 = vsel %vm574, %v6851, %v6858
        %v6860 = vrot.slane %v6855, 4
        %v6862 = vshrl.u32 %v6585, 16
        %v6864 = vrot.slane %v6862, 7
        %v6865 = vshll.u32 %v6585, 16
        %v6867 = vor.u32 %v6864, %v6865
        %v6868 = vrot.slane %v6864, 4
        %v6870 = vshrl.u32 %v6586, 16
        %v6872 = vrot.slane %v6870, 7
        %v6873 = vshll.u32 %v6586, 16
        %v6875 = vor.u32 %v6872, %v6873
        %v6876 = vsel %vm574, %v6868, %v6875
        %v6877 = vrot.slane %v6872, 4
        %v6879 = vshrl.u32 %v6587, 16
        %v6881 = vrot.slane %v6879, 7
        %v6882 = vshll.u32 %v6587, 16
        %v6884 = vor.u32 %v6881, %v6882
        %v6885 = vrot.slane %v6881, 4
        %v6887 = vshrl.u32 %v6588, 16
        %v6889 = vrot.slane %v6887, 7
        %v6890 = vshll.u32 %v6588, 16
        %v6892 = vor.u32 %v6889, %v6890
        %v6893 = vsel %vm574, %v6885, %v6892
        %v6894 = vrot.slane %v6889, 4
        %v6949 = vld [vmem:[#allocation3] sm:$0xf]
        %v6950 = vsel %vm898, %v6595, %v6949
        %6951 = vst [vmem:[#allocation3] sm:$0xf] %v6950
        %6952 = vst.msk [vmem:[#allocation3 + $0x4] sm:$0xf] %vm382, %v6604
        %v6953 = vld [vmem:[#allocation3 + $0x8] sm:$0x1]
        %v6954 = vsel %vm904, %v6605, %v6953
        %6955 = vst [vmem:[#allocation3 + $0x8] sm:$0x1] %v6954
        %v6956 = vld [vmem:[#allocation3 + $0xc] sm:$0xf]
        %v6957 = vsel %vm898, %v6612, %v6956
        %6958 = vst [vmem:[#allocation3 + $0xc] sm:$0xf] %v6957
        %6959 = vst.msk [vmem:[#allocation3 + $0x10] sm:$0xf] %vm382, %v6621
        %v6960 = vld [vmem:[#allocation3 + $0x14] sm:$0x1]
        %v6961 = vsel %vm904, %v6622, %v6960
        %6962 = vst [vmem:[#allocation3 + $0x14] sm:$0x1] %v6961
        %v6963 = vld [vmem:[#allocation3 + $0x18] sm:$0xf]
        %v6964 = vsel %vm898, %v6629, %v6963
        %6965 = vst [vmem:[#allocation3 + $0x18] sm:$0xf] %v6964
        %6966 = vst.msk [vmem:[#allocation3 + $0x1c] sm:$0xf] %vm382, %v6638
        %v6967 = vld [vmem:[#allocation3 + $0x20] sm:$0x1]
        %v6968 = vsel %vm904, %v6639, %v6967
        %6969 = vst [vmem:[#allocation3 + $0x20] sm:$0x1] %v6968
        %v6970 = vld [vmem:[#allocation3 + $0x24] sm:$0xf]
        %v6971 = vsel %vm898, %v6646, %v6970
        %6972 = vst [vmem:[#allocation3 + $0x24] sm:$0xf] %v6971
        %6973 = vst.msk [vmem:[#allocation3 + $0x28] sm:$0xf] %vm382, %v6655
        %v6974 = vld [vmem:[#allocation3 + $0x2c] sm:$0x1]
        %v6975 = vsel %vm904, %v6656, %v6974
        %6976 = vst [vmem:[#allocation3 + $0x2c] sm:$0x1] %v6975
        %v6977 = vld [vmem:[#allocation3 + $0x30] sm:$0xf]
        %v6978 = vsel %vm898, %v6663, %v6977
        %6979 = vst [vmem:[#allocation3 + $0x30] sm:$0xf] %v6978
        %6980 = vst.msk [vmem:[#allocation3 + $0x34] sm:$0xf] %vm382, %v6672
        %v6981 = vld [vmem:[#allocation3 + $0x38] sm:$0x1]
        %v6982 = vsel %vm904, %v6673, %v6981
        %6983 = vst [vmem:[#allocation3 + $0x38] sm:$0x1] %v6982
        %v6984 = vld [vmem:[#allocation3 + $0x3c] sm:$0xf]
        %v6985 = vsel %vm898, %v6680, %v6984
        %6986 = vst [vmem:[#allocation3 + $0x3c] sm:$0xf] %v6985
        %6987 = vst.msk [vmem:[#allocation3 + $0x40] sm:$0xf] %vm382, %v6689
        %v6988 = vld [vmem:[#allocation3 + $0x44] sm:$0x1]
        %v6989 = vsel %vm904, %v6690, %v6988
        %6990 = vst [vmem:[#allocation3 + $0x44] sm:$0x1] %v6989
        %v6991 = vld [vmem:[#allocation3 + $0x48] sm:$0xf]
        %v6992 = vsel %vm898, %v6697, %v6991
        %6993 = vst [vmem:[#allocation3 + $0x48] sm:$0xf] %v6992
        %6994 = vst.msk [vmem:[#allocation3 + $0x4c] sm:$0xf] %vm382, %v6706
        %v6995 = vld [vmem:[#allocation3 + $0x50] sm:$0x1]
        %v6996 = vsel %vm904, %v6707, %v6995
        %6997 = vst [vmem:[#allocation3 + $0x50] sm:$0x1] %v6996
        %v6998 = vld [vmem:[#allocation3 + $0x54] sm:$0xf]
        %v6999 = vsel %vm898, %v6714, %v6998
        %7000 = vst [vmem:[#allocation3 + $0x54] sm:$0xf] %v6999
        %7001 = vst.msk [vmem:[#allocation3 + $0x58] sm:$0xf] %vm382, %v6723
        %v7002 = vld [vmem:[#allocation3 + $0x5c] sm:$0x1]
        %v7003 = vsel %vm904, %v6724, %v7002
        %7004 = vst [vmem:[#allocation3 + $0x5c] sm:$0x1] %v7003
        %v7005 = vld [vmem:[#allocation3 + $0x60] sm:$0xf]
        %v7006 = vsel %vm898, %v6731, %v7005
        %7007 = vst [vmem:[#allocation3 + $0x60] sm:$0xf] %v7006
        %7008 = vst.msk [vmem:[#allocation3 + $0x64] sm:$0xf] %vm382, %v6740
        %v7009 = vld [vmem:[#allocation3 + $0x68] sm:$0x1]
        %v7010 = vsel %vm904, %v6741, %v7009
        %7011 = vst [vmem:[#allocation3 + $0x68] sm:$0x1] %v7010
        %v7012 = vld [vmem:[#allocation3 + $0x6c] sm:$0xf]
        %v7013 = vsel %vm898, %v6748, %v7012
        %7014 = vst [vmem:[#allocation3 + $0x6c] sm:$0xf] %v7013
        %7015 = vst.msk [vmem:[#allocation3 + $0x70] sm:$0xf] %vm382, %v6757
        %v7016 = vld [vmem:[#allocation3 + $0x74] sm:$0x1]
        %v7017 = vsel %vm904, %v6758, %v7016
        %7018 = vst [vmem:[#allocation3 + $0x74] sm:$0x1] %v7017
        %v7019 = vld [vmem:[#allocation3 + $0x78] sm:$0xf]
        %v7020 = vsel %vm898, %v6765, %v7019
        %7021 = vst [vmem:[#allocation3 + $0x78] sm:$0xf] %v7020
        %7022 = vst.msk [vmem:[#allocation3 + $0x7c] sm:$0xf] %vm382, %v6774
        %v7023 = vld [vmem:[#allocation3 + $0x80] sm:$0x1]
        %v7024 = vsel %vm904, %v6775, %v7023
        %7025 = vst [vmem:[#allocation3 + $0x80] sm:$0x1] %v7024
        %v7026 = vld [vmem:[#allocation3 + $0x84] sm:$0xf]
        %v7027 = vsel %vm898, %v6782, %v7026
        %7028 = vst [vmem:[#allocation3 + $0x84] sm:$0xf] %v7027
        %7029 = vst.msk [vmem:[#allocation3 + $0x88] sm:$0xf] %vm382, %v6791
        %v7030 = vld [vmem:[#allocation3 + $0x8c] sm:$0x1]
        %v7031 = vsel %vm904, %v6792, %v7030
        %7032 = vst [vmem:[#allocation3 + $0x8c] sm:$0x1] %v7031
        %v7033 = vld [vmem:[#allocation3 + $0x90] sm:$0xf]
        %v7034 = vsel %vm898, %v6799, %v7033
        %7035 = vst [vmem:[#allocation3 + $0x90] sm:$0xf] %v7034
        %7036 = vst.msk [vmem:[#allocation3 + $0x94] sm:$0xf] %vm382, %v6808
        %v7037 = vld [vmem:[#allocation3 + $0x98] sm:$0x1]
        %v7038 = vsel %vm904, %v6809, %v7037
        %7039 = vst [vmem:[#allocation3 + $0x98] sm:$0x1] %v7038
        %v7040 = vld [vmem:[#allocation3 + $0x9c] sm:$0xf]
        %v7041 = vsel %vm898, %v6816, %v7040
        %7042 = vst [vmem:[#allocation3 + $0x9c] sm:$0xf] %v7041
        %7043 = vst.msk [vmem:[#allocation3 + $0xa0] sm:$0xf] %vm382, %v6825
        %v7044 = vld [vmem:[#allocation3 + $0xa4] sm:$0x1]
        %v7045 = vsel %vm904, %v6826, %v7044
        %7046 = vst [vmem:[#allocation3 + $0xa4] sm:$0x1] %v7045
        %v7047 = vld [vmem:[#allocation3 + $0xa8] sm:$0xf]
        %v7048 = vsel %vm898, %v6833, %v7047
        %7049 = vst [vmem:[#allocation3 + $0xa8] sm:$0xf] %v7048
        %7050 = vst.msk [vmem:[#allocation3 + $0xac] sm:$0xf] %vm382, %v6842
        %v7051 = vld [vmem:[#allocation3 + $0xb0] sm:$0x1]
        %v7052 = vsel %vm904, %v6843, %v7051
        %7053 = vst [vmem:[#allocation3 + $0xb0] sm:$0x1] %v7052
        %v7054 = vld [vmem:[#allocation3 + $0xb4] sm:$0xf]
        %v7055 = vsel %vm898, %v6850, %v7054
        %7056 = vst [vmem:[#allocation3 + $0xb4] sm:$0xf] %v7055
        %7057 = vst.msk [vmem:[#allocation3 + $0xb8] sm:$0xf] %vm382, %v6859
        %v7058 = vld [vmem:[#allocation3 + $0xbc] sm:$0x1]
        %v7059 = vsel %vm904, %v6860, %v7058
        %7060 = vst [vmem:[#allocation3 + $0xbc] sm:$0x1] %v7059
        %v7061 = vld [vmem:[#allocation3 + $0xc0] sm:$0xf]
        %v7062 = vsel %vm898, %v6867, %v7061
        %7063 = vst [vmem:[#allocation3 + $0xc0] sm:$0xf] %v7062
        %7064 = vst.msk [vmem:[#allocation3 + $0xc4] sm:$0xf] %vm382, %v6876
        %v7065 = vld [vmem:[#allocation3 + $0xc8] sm:$0x1]
        %v7066 = vsel %vm904, %v6877, %v7065
        %7067 = vst [vmem:[#allocation3 + $0xc8] sm:$0x1] %v7066
        %v7068 = vld [vmem:[#allocation3 + $0xcc] sm:$0xf]
        %v7069 = vsel %vm898, %v6884, %v7068
        %7070 = vst [vmem:[#allocation3 + $0xcc] sm:$0xf] %v7069
        %7071 = vst.msk [vmem:[#allocation3 + $0xd0] sm:$0xf] %vm382, %v6893
        %v7072 = vld [vmem:[#allocation3 + $0xd4] sm:$0x1]
        %v7073 = vsel %vm904, %v6894, %v7072
        %7074 = vst [vmem:[#allocation3 + $0xd4] sm:$0x1] %v7073
        %7075 = vst.msk [vmem:[#allocation3] sm:$0xf] %vm382, 0
        %7076 = vst.msk [vmem:[#allocation3 + $0x4] sm:$0xf] %vm382, 0
        %7077 = vst.msk [vmem:[#allocation3 + $0x8] sm:$0x1] %vm385, 0
        %s7078 = scalar_lea.vmem [#allocation3], 204
        %7079 = vst.msk [vmem:[%s7078] sm:$0xf] %vm382, 0
        %7080 = vst.msk [vmem:[%s7078 + $0x4] sm:$0xf] %vm382, 0
        %7081 = vst.msk [vmem:[%s7078 + $0x8] sm:$0x1] %vm385, 0
        %v7082 = vld [vmem:[#allocation3] sm:$0xf]
        %v7083 = vld [vmem:[#allocation3 + $0x4] sm:$0xf]
        %v7084 = vld [vmem:[#allocation3 + $0xc] sm:$0xf]
        %v7085 = vld [vmem:[#allocation3 + $0x10] sm:$0xf]
        %v7086 = vld [vmem:[#allocation3 + $0x18] sm:$0xf]
        %v7087 = vld [vmem:[#allocation3 + $0x1c] sm:$0xf]
        %v7088 = vld [vmem:[#allocation3 + $0x24] sm:$0xf]
        %v7089 = vld [vmem:[#allocation3 + $0x28] sm:$0xf]
        %v7090 = vld [vmem:[#allocation3 + $0x30] sm:$0xf]
        %v7091 = vld [vmem:[#allocation3 + $0x34] sm:$0xf]
        %v7092 = vld [vmem:[#allocation3 + $0x3c] sm:$0xf]
        %v7093 = vld [vmem:[#allocation3 + $0x40] sm:$0xf]
        %v7094 = vld [vmem:[#allocation3 + $0x48] sm:$0xf]
        %v7095 = vld [vmem:[#allocation3 + $0x4c] sm:$0xf]
        %v7096 = vld [vmem:[#allocation3 + $0x54] sm:$0xf]
        %v7097 = vld [vmem:[#allocation3 + $0x58] sm:$0xf]
        %v7098 = vld [vmem:[#allocation3 + $0x60] sm:$0xf]
        %v7099 = vld [vmem:[#allocation3 + $0x64] sm:$0xf]
        %v7100 = vld [vmem:[#allocation3 + $0x6c] sm:$0xf]
        %v7101 = vld [vmem:[#allocation3 + $0x70] sm:$0xf]
        %v7102 = vld [vmem:[#allocation3 + $0x78] sm:$0xf]
        %v7103 = vld [vmem:[#allocation3 + $0x7c] sm:$0xf]
        %v7104 = vld [vmem:[#allocation3 + $0x84] sm:$0xf]
        %v7105 = vld [vmem:[#allocation3 + $0x88] sm:$0xf]
        %v7106 = vld [vmem:[#allocation3 + $0x90] sm:$0xf]
        %v7107 = vld [vmem:[#allocation3 + $0x94] sm:$0xf]
        %v7108 = vld [vmem:[#allocation3 + $0x9c] sm:$0xf]
        %v7109 = vld [vmem:[#allocation3 + $0xa0] sm:$0xf]
        %v7110 = vld [vmem:[#allocation3 + $0xa8] sm:$0xf]
        %v7111 = vld [vmem:[#allocation3 + $0xac] sm:$0xf]
        %v7112 = vld [vmem:[#allocation3 + $0xb4] sm:$0xf]
        %v7113 = vld [vmem:[#allocation3 + $0xb8] sm:$0xf]
        %v7114 = vld [vmem:[#allocation10] sm:$0xf]
        %v7115 = vld [vmem:[#allocation10 + $0x4] sm:$0xf]
        %v7116 = vld [vmem:[#allocation10 + $0x8] sm:$0xf]
        %v7117 = vld [vmem:[#allocation10 + $0xc] sm:$0xf]
        %v7118 = vld [vmem:[#allocation10 + $0x10] sm:$0xf]
        %v7119 = vld [vmem:[#allocation10 + $0x14] sm:$0xf]
        %v7120 = vld [vmem:[#allocation10 + $0x18] sm:$0xf]
        %v7121 = vld [vmem:[#allocation10 + $0x1c] sm:$0xf]
        %v7122 = vld [vmem:[#allocation3 + $0x8] sm:$0x1]
        %v7123 = vld [vmem:[#allocation3 + $0x14] sm:$0x1]
        %v7124 = vld [vmem:[#allocation3 + $0x20] sm:$0x1]
        %v7125 = vld [vmem:[#allocation3 + $0x2c] sm:$0x1]
        %v7126 = vld [vmem:[#allocation3 + $0x38] sm:$0x1]
        %v7127 = vld [vmem:[#allocation3 + $0x44] sm:$0x1]
        %v7128 = vld [vmem:[#allocation3 + $0x50] sm:$0x1]
        %v7129 = vld [vmem:[#allocation3 + $0x5c] sm:$0x1]
        %v7130 = vld [vmem:[#allocation3 + $0x68] sm:$0x1]
        %v7131 = vld [vmem:[#allocation3 + $0x74] sm:$0x1]
        %v7132 = vld [vmem:[#allocation3 + $0x80] sm:$0x1]
        %v7133 = vld [vmem:[#allocation3 + $0x8c] sm:$0x1]
        %v7134 = vld [vmem:[#allocation3 + $0x98] sm:$0x1]
        %v7135 = vld [vmem:[#allocation3 + $0xa4] sm:$0x1]
        %v7136 = vld [vmem:[#allocation3 + $0xb0] sm:$0x1]
        %v7137 = vld [vmem:[#allocation3 + $0xbc] sm:$0x1]
        %v7139 = vshrl.u32 %v7082, 16
        %v7141 = vrot.slane %v7139, 4
        %v7142 = vshll.u32 %v7082, 16
        %v7144 = vrot.slane %v7142, 5
        %v7145 = vor.u32 %v7141, %v7144
        %v7146 = vrot.slane %v7145, 4
        %v7148 = vshll.u32 %v7083, 16
        %v7150 = vrot.slane %v7148, 5
        %v7151 = vsel %vm1077, %v7146, %v7150
        %v7152 = vshrl.u32 %v7083, 16
        %v7154 = vrot.slane %v7152, 4
        %v7155 = vor.u32 %v7154, %v7150
        %v7156 = vrot.slane %v7155, 4
        %v7158 = vshll.u32 %v7122, 16
        %v7160 = vrot.slane %v7158, 5
        %v7161 = vsel %vm1077, %v7156, %v7160
        %v7163 = vshrl.u32 %v7084, 16
        %v7165 = vrot.slane %v7163, 4
        %v7166 = vshll.u32 %v7084, 16
        %v7168 = vrot.slane %v7166, 5
        %v7169 = vor.u32 %v7165, %v7168
        %v7170 = vrot.slane %v7169, 4
        %v7172 = vshll.u32 %v7085, 16
        %v7174 = vrot.slane %v7172, 5
        %v7175 = vsel %vm1077, %v7170, %v7174
        %v7176 = vshrl.u32 %v7085, 16
        %v7178 = vrot.slane %v7176, 4
        %v7179 = vor.u32 %v7178, %v7174
        %v7180 = vrot.slane %v7179, 4
        %v7182 = vshll.u32 %v7123, 16
        %v7184 = vrot.slane %v7182, 5
        %v7185 = vsel %vm1077, %v7180, %v7184
        %v7187 = vshrl.u32 %v7086, 16
        %v7189 = vrot.slane %v7187, 4
        %v7190 = vshll.u32 %v7086, 16
        %v7192 = vrot.slane %v7190, 5
        %v7193 = vor.u32 %v7189, %v7192
        %v7194 = vrot.slane %v7193, 4
        %v7196 = vshll.u32 %v7087, 16
        %v7198 = vrot.slane %v7196, 5
        %v7199 = vsel %vm1077, %v7194, %v7198
        %v7200 = vshrl.u32 %v7087, 16
        %v7202 = vrot.slane %v7200, 4
        %v7203 = vor.u32 %v7202, %v7198
        %v7204 = vrot.slane %v7203, 4
        %v7206 = vshll.u32 %v7124, 16
        %v7208 = vrot.slane %v7206, 5
        %v7209 = vsel %vm1077, %v7204, %v7208
        %v7211 = vshrl.u32 %v7088, 16
        %v7213 = vrot.slane %v7211, 4
        %v7214 = vshll.u32 %v7088, 16
        %v7216 = vrot.slane %v7214, 5
        %v7217 = vor.u32 %v7213, %v7216
        %v7218 = vrot.slane %v7217, 4
        %v7220 = vshll.u32 %v7089, 16
        %v7222 = vrot.slane %v7220, 5
        %v7223 = vsel %vm1077, %v7218, %v7222
        %v7224 = vshrl.u32 %v7089, 16
        %v7226 = vrot.slane %v7224, 4
        %v7227 = vor.u32 %v7226, %v7222
        %v7228 = vrot.slane %v7227, 4
        %v7230 = vshll.u32 %v7125, 16
        %v7232 = vrot.slane %v7230, 5
        %v7233 = vsel %vm1077, %v7228, %v7232
        %v7235 = vshrl.u32 %v7090, 16
        %v7237 = vrot.slane %v7235, 4
        %v7238 = vshll.u32 %v7090, 16
        %v7240 = vrot.slane %v7238, 5
        %v7241 = vor.u32 %v7237, %v7240
        %v7242 = vrot.slane %v7241, 4
        %v7244 = vshll.u32 %v7091, 16
        %v7246 = vrot.slane %v7244, 5
        %v7247 = vsel %vm1077, %v7242, %v7246
        %v7248 = vshrl.u32 %v7091, 16
        %v7250 = vrot.slane %v7248, 4
        %v7251 = vor.u32 %v7250, %v7246
        %v7252 = vrot.slane %v7251, 4
        %v7254 = vshll.u32 %v7126, 16
        %v7256 = vrot.slane %v7254, 5
        %v7257 = vsel %vm1077, %v7252, %v7256
        %v7259 = vshrl.u32 %v7092, 16
        %v7261 = vrot.slane %v7259, 4
        %v7262 = vshll.u32 %v7092, 16
        %v7264 = vrot.slane %v7262, 5
        %v7265 = vor.u32 %v7261, %v7264
        %v7266 = vrot.slane %v7265, 4
        %v7268 = vshll.u32 %v7093, 16
        %v7270 = vrot.slane %v7268, 5
        %v7271 = vsel %vm1077, %v7266, %v7270
        %v7272 = vshrl.u32 %v7093, 16
        %v7274 = vrot.slane %v7272, 4
        %v7275 = vor.u32 %v7274, %v7270
        %v7276 = vrot.slane %v7275, 4
        %v7278 = vshll.u32 %v7127, 16
        %v7280 = vrot.slane %v7278, 5
        %v7281 = vsel %vm1077, %v7276, %v7280
        %v7283 = vshrl.u32 %v7094, 16
        %v7285 = vrot.slane %v7283, 4
        %v7286 = vshll.u32 %v7094, 16
        %v7288 = vrot.slane %v7286, 5
        %v7289 = vor.u32 %v7285, %v7288
        %v7290 = vrot.slane %v7289, 4
        %v7292 = vshll.u32 %v7095, 16
        %v7294 = vrot.slane %v7292, 5
        %v7295 = vsel %vm1077, %v7290, %v7294
        %v7296 = vshrl.u32 %v7095, 16
        %v7298 = vrot.slane %v7296, 4
        %v7299 = vor.u32 %v7298, %v7294
        %v7300 = vrot.slane %v7299, 4
        %v7302 = vshll.u32 %v7128, 16
        %v7304 = vrot.slane %v7302, 5
        %v7305 = vsel %vm1077, %v7300, %v7304
        %v7307 = vshrl.u32 %v7096, 16
        %v7309 = vrot.slane %v7307, 4
        %v7310 = vshll.u32 %v7096, 16
        %v7312 = vrot.slane %v7310, 5
        %v7313 = vor.u32 %v7309, %v7312
        %v7314 = vrot.slane %v7313, 4
        %v7316 = vshll.u32 %v7097, 16
        %v7318 = vrot.slane %v7316, 5
        %v7319 = vsel %vm1077, %v7314, %v7318
        %v7320 = vshrl.u32 %v7097, 16
        %v7322 = vrot.slane %v7320, 4
        %v7323 = vor.u32 %v7322, %v7318
        %v7324 = vrot.slane %v7323, 4
        %v7326 = vshll.u32 %v7129, 16
        %v7328 = vrot.slane %v7326, 5
        %v7329 = vsel %vm1077, %v7324, %v7328
        %v7331 = vshrl.u32 %v7098, 16
        %v7333 = vrot.slane %v7331, 4
        %v7334 = vshll.u32 %v7098, 16
        %v7336 = vrot.slane %v7334, 5
        %v7337 = vor.u32 %v7333, %v7336
        %v7338 = vrot.slane %v7337, 4
        %v7340 = vshll.u32 %v7099, 16
        %v7342 = vrot.slane %v7340, 5
        %v7343 = vsel %vm1077, %v7338, %v7342
        %v7344 = vshrl.u32 %v7099, 16
        %v7346 = vrot.slane %v7344, 4
        %v7347 = vor.u32 %v7346, %v7342
        %v7348 = vrot.slane %v7347, 4
        %v7350 = vshll.u32 %v7130, 16
        %v7352 = vrot.slane %v7350, 5
        %v7353 = vsel %vm1077, %v7348, %v7352
        %v7355 = vshrl.u32 %v7100, 16
        %v7357 = vrot.slane %v7355, 4
        %v7358 = vshll.u32 %v7100, 16
        %v7360 = vrot.slane %v7358, 5
        %v7361 = vor.u32 %v7357, %v7360
        %v7362 = vrot.slane %v7361, 4
        %v7364 = vshll.u32 %v7101, 16
        %v7366 = vrot.slane %v7364, 5
        %v7367 = vsel %vm1077, %v7362, %v7366
        %v7368 = vshrl.u32 %v7101, 16
        %v7370 = vrot.slane %v7368, 4
        %v7371 = vor.u32 %v7370, %v7366
        %v7372 = vrot.slane %v7371, 4
        %v7374 = vshll.u32 %v7131, 16
        %v7376 = vrot.slane %v7374, 5
        %v7377 = vsel %vm1077, %v7372, %v7376
        %v7379 = vshrl.u32 %v7102, 16
        %v7381 = vrot.slane %v7379, 4
        %v7382 = vshll.u32 %v7102, 16
        %v7384 = vrot.slane %v7382, 5
        %v7385 = vor.u32 %v7381, %v7384
        %v7386 = vrot.slane %v7385, 4
        %v7388 = vshll.u32 %v7103, 16
        %v7390 = vrot.slane %v7388, 5
        %v7391 = vsel %vm1077, %v7386, %v7390
        %v7392 = vshrl.u32 %v7103, 16
        %v7394 = vrot.slane %v7392, 4
        %v7395 = vor.u32 %v7394, %v7390
        %v7396 = vrot.slane %v7395, 4
        %v7398 = vshll.u32 %v7132, 16
        %v7400 = vrot.slane %v7398, 5
        %v7401 = vsel %vm1077, %v7396, %v7400
        %v7403 = vshrl.u32 %v7104, 16
        %v7405 = vrot.slane %v7403, 4
        %v7406 = vshll.u32 %v7104, 16
        %v7408 = vrot.slane %v7406, 5
        %v7409 = vor.u32 %v7405, %v7408
        %v7410 = vrot.slane %v7409, 4
        %v7412 = vshll.u32 %v7105, 16
        %v7414 = vrot.slane %v7412, 5
        %v7415 = vsel %vm1077, %v7410, %v7414
        %v7416 = vshrl.u32 %v7105, 16
        %v7418 = vrot.slane %v7416, 4
        %v7419 = vor.u32 %v7418, %v7414
        %v7420 = vrot.slane %v7419, 4
        %v7422 = vshll.u32 %v7133, 16
        %v7424 = vrot.slane %v7422, 5
        %v7425 = vsel %vm1077, %v7420, %v7424
        %v7427 = vshrl.u32 %v7106, 16
        %v7429 = vrot.slane %v7427, 4
        %v7430 = vshll.u32 %v7106, 16
        %v7432 = vrot.slane %v7430, 5
        %v7433 = vor.u32 %v7429, %v7432
        %v7434 = vrot.slane %v7433, 4
        %v7436 = vshll.u32 %v7107, 16
        %v7438 = vrot.slane %v7436, 5
        %v7439 = vsel %vm1077, %v7434, %v7438
        %v7440 = vshrl.u32 %v7107, 16
        %v7442 = vrot.slane %v7440, 4
        %v7443 = vor.u32 %v7442, %v7438
        %v7444 = vrot.slane %v7443, 4
        %v7446 = vshll.u32 %v7134, 16
        %v7448 = vrot.slane %v7446, 5
        %v7449 = vsel %vm1077, %v7444, %v7448
        %v7451 = vshrl.u32 %v7108, 16
        %v7453 = vrot.slane %v7451, 4
        %v7454 = vshll.u32 %v7108, 16
        %v7456 = vrot.slane %v7454, 5
        %v7457 = vor.u32 %v7453, %v7456
        %v7458 = vrot.slane %v7457, 4
        %v7460 = vshll.u32 %v7109, 16
        %v7462 = vrot.slane %v7460, 5
        %v7463 = vsel %vm1077, %v7458, %v7462
        %v7464 = vshrl.u32 %v7109, 16
        %v7466 = vrot.slane %v7464, 4
        %v7467 = vor.u32 %v7466, %v7462
        %v7468 = vrot.slane %v7467, 4
        %v7470 = vshll.u32 %v7135, 16
        %v7472 = vrot.slane %v7470, 5
        %v7473 = vsel %vm1077, %v7468, %v7472
        %v7475 = vshrl.u32 %v7110, 16
        %v7477 = vrot.slane %v7475, 4
        %v7478 = vshll.u32 %v7110, 16
        %v7480 = vrot.slane %v7478, 5
        %v7481 = vor.u32 %v7477, %v7480
        %v7482 = vrot.slane %v7481, 4
        %v7484 = vshll.u32 %v7111, 16
        %v7486 = vrot.slane %v7484, 5
        %v7487 = vsel %vm1077, %v7482, %v7486
        %v7488 = vshrl.u32 %v7111, 16
        %v7490 = vrot.slane %v7488, 4
        %v7491 = vor.u32 %v7490, %v7486
        %v7492 = vrot.slane %v7491, 4
        %v7494 = vshll.u32 %v7136, 16
        %v7496 = vrot.slane %v7494, 5
        %v7497 = vsel %vm1077, %v7492, %v7496
        %v7499 = vshrl.u32 %v7112, 16
        %v7501 = vrot.slane %v7499, 4
        %v7502 = vshll.u32 %v7112, 16
        %v7504 = vrot.slane %v7502, 5
        %v7505 = vor.u32 %v7501, %v7504
        %v7506 = vrot.slane %v7505, 4
        %v7508 = vshll.u32 %v7113, 16
        %v7510 = vrot.slane %v7508, 5
        %v7511 = vsel %vm1077, %v7506, %v7510
        %v7512 = vshrl.u32 %v7113, 16
        %v7514 = vrot.slane %v7512, 4
        %v7515 = vor.u32 %v7514, %v7510
        %v7516 = vrot.slane %v7515, 4
        %v7518 = vshll.u32 %v7137, 16
        %v7520 = vrot.slane %v7518, 5
        %v7521 = vsel %vm1077, %v7516, %v7520
        %s7522 = scalar_lea.vmem [#allocation10], 32
        %v7523 = vld [vmem:[%s7522] sm:$0xf]
        %v7524 = vld [vmem:[%s7522 + $0x4] sm:$0xf]
        %v7525 = vld [vmem:[%s7522 + $0x8] sm:$0xf]
        %v7526 = vld [vmem:[%s7522 + $0xc] sm:$0xf]
        %v7527 = vld [vmem:[%s7522 + $0x10] sm:$0xf]
        %v7528 = vld [vmem:[%s7522 + $0x14] sm:$0xf]
        %v7529 = vld [vmem:[%s7522 + $0x18] sm:$0xf]
        %v7530 = vld [vmem:[%s7522 + $0x1c] sm:$0xf]
        %v7531 = vunpack.c.l.b16 %v7151
        %v7532 = vunpack.c.l.b16 %v7161
        %v7533 = vunpack.c.l.b16 %v7175
        %v7534 = vunpack.c.l.b16 %v7185
        %v7535 = vunpack.c.l.b16 %v7199
        %v7536 = vunpack.c.l.b16 %v7209
        %v7537 = vunpack.c.l.b16 %v7223
        %v7538 = vunpack.c.l.b16 %v7233
        %v7539 = vunpack.c.l.b16 %v7247
        %v7540 = vunpack.c.l.b16 %v7257
        %v7541 = vunpack.c.l.b16 %v7271
        %v7542 = vunpack.c.l.b16 %v7281
        %v7543 = vunpack.c.l.b16 %v7295
        %v7544 = vunpack.c.l.b16 %v7305
        %v7545 = vunpack.c.l.b16 %v7319
        %v7546 = vunpack.c.l.b16 %v7329
        %v7547 = vunpack.c.l.b16 %v7343
        %v7548 = vunpack.c.l.b16 %v7353
        %v7549 = vunpack.c.l.b16 %v7367
        %v7550 = vunpack.c.l.b16 %v7377
        %v7551 = vunpack.c.l.b16 %v7391
        %v7552 = vunpack.c.l.b16 %v7401
        %v7553 = vunpack.c.l.b16 %v7415
        %v7554 = vunpack.c.l.b16 %v7425
        %v7555 = vunpack.c.l.b16 %v7439
        %v7556 = vunpack.c.l.b16 %v7449
        %v7557 = vunpack.c.l.b16 %v7463
        %v7558 = vunpack.c.l.b16 %v7473
        %v7559 = vunpack.c.l.b16 %v7487
        %v7560 = vunpack.c.l.b16 %v7497
        %v7561 = vunpack.c.l.b16 %v7511
        %v7562 = vunpack.c.l.b16 %v7521
        %v7563 = vpack.c.b16 %v7532, %v7531
        %v7564 = vpack.c.b16 %v7534, %v7533
        %v7565 = vpack.c.b16 %v7536, %v7535
        %v7566 = vpack.c.b16 %v7538, %v7537
        %v7567 = vpack.c.b16 %v7540, %v7539
        %v7568 = vpack.c.b16 %v7542, %v7541
        %v7569 = vpack.c.b16 %v7544, %v7543
        %v7570 = vpack.c.b16 %v7546, %v7545
        %v7571 = vpack.c.b16 %v7548, %v7547
        %v7572 = vpack.c.b16 %v7550, %v7549
        %v7573 = vpack.c.b16 %v7552, %v7551
        %v7574 = vpack.c.b16 %v7554, %v7553
        %v7575 = vpack.c.b16 %v7556, %v7555
        %v7576 = vpack.c.b16 %v7558, %v7557
        %v7577 = vpack.c.b16 %v7560, %v7559
        %v7578 = vpack.c.b16 %v7562, %v7561
        %v7587 = vunpack.c.l.b16 %v7523
        %v7588 = vunpack.c.l.b16 %v7524
        %v7589 = vunpack.c.l.b16 %v7525
        %v7590 = vunpack.c.l.b16 %v7526
        %v7591 = vunpack.c.l.b16 %v7527
        %v7592 = vunpack.c.l.b16 %v7528
        %v7593 = vunpack.c.l.b16 %v7529
        %v7594 = vunpack.c.l.b16 %v7530
        %v7595 = vpack.c.b16 %v7588, %v7587
        %v7596 = vpack.c.b16 %v7590, %v7589
        %v7597 = vpack.c.b16 %v7592, %v7591
        %v7598 = vpack.c.b16 %v7594, %v7593
        %v7604 = vsel %vm1597, %v7563, 0
        %v7607 = vsel %vm1597, %v7564, 0
        %v7610 = vsel %vm1597, %v7565, 0
        %v7613 = vsel %vm1597, %v7566, 0
        %v7616 = vsel %vm1597, %v7567, 0
        %v7619 = vsel %vm1597, %v7568, 0
        %v7622 = vsel %vm1597, %v7569, 0
        %v7625 = vsel %vm1597, %v7570, 0
        %v7628 = vsel %vm1597, %v7571, 0
        %v7631 = vsel %vm1597, %v7572, 0
        %v7634 = vsel %vm1597, %v7573, 0
        %v7637 = vsel %vm1597, %v7574, 0
        %v7640 = vsel %vm1597, %v7575, 0
        %v7643 = vsel %vm1597, %v7576, 0
        %v7646 = vsel %vm1597, %v7577, 0
        %v7649 = vsel %vm1597, %v7578, 0
        %7651 = vmatprep.subr.bf16.mxu0 0
        %7652 = vmatpush1.bf16.msra.mxu0 %v7595
        %7653 = vmatprep.subr.bf16.mxu0 0
        %7654 = vmatpush1.bf16.msra.mxu0 %v7596
        %7655 = vmatprep.subr.bf16.mxu0 0
        %7656 = vmatpush1.bf16.msra.mxu0 %v7597
        %7657 = vmatprep.subr.bf16.mxu0 0
        %7658 = vmatpush1.bf16.msra.mxu0 %v7598
        %7659 = vmatprep.subr.bf16.mxu0 0
        %7660 = vmatpush1.bf16.msra.mxu0 0
        %7661 = vmatprep.subr.bf16.mxu0 0
        %7662 = vmatpush1.bf16.msra.mxu0 0
        %7663 = vmatprep.subr.bf16.mxu0 0
        %7664 = vmatpush1.bf16.msra.mxu0 0
        %7665 = vmatprep.subr.bf16.mxu0 0
        %7666 = vmatpush1.bf16.msra.mxu0 0
        %7667 = vmatprep.subr.bf16.mxu0 0
        %7668 = vmatpush1.bf16.msra.mxu0 0
        %7669 = vmatprep.subr.bf16.mxu0 0
        %7670 = vmatpush1.bf16.msra.mxu0 0
        %7671 = vmatprep.subr.bf16.mxu0 0
        %7672 = vmatpush1.bf16.msra.mxu0 0
        %7673 = vmatprep.subr.bf16.mxu0 0
        %7674 = vmatpush1.bf16.msra.mxu0 0
        %7675 = vmatprep.subr.bf16.mxu0 0
        %7676 = vmatpush1.bf16.msra.mxu0 0
        %7677 = vmatprep.subr.bf16.mxu0 0
        %7678 = vmatpush1.bf16.msra.mxu0 0
        %7679 = vmatprep.subr.bf16.mxu0 0
        %7680 = vmatpush1.bf16.msra.mxu0 0
        %7681 = vmatprep.subr.bf16.mxu0 0
        %7682 = vmatpush1.bf16.msra.mxu0 0
        %7683 = vmatprep.mubr.bf16.mxu0 0
        %7684 = vmatmul.mubr.bf16.gmra.mrb[0].mxu0 %v7604
        %v7685 = vpop.f32.mrb[0].mxu0
        %v7686 = vadd.f32 0.0, %v7685
        %v7687 = vpop.f32.mrb[0].mxu0
        %v7688 = vpop.f32.mrb[0].mxu0
        %v7689 = vadd.f32 0.0, %v7688
        %v7690 = vpop.f32.mrb[0].mxu0
        %7691 = vmatprep.mubr.bf16.mxu0 0
        %7692 = vmatmul.mubr.bf16.gmra.mrb[0].mxu0 %v7607
        %v7693 = vpop.f32.mrb[0].mxu0
        %v7694 = vadd.f32 0.0, %v7693
        %v7695 = vpop.f32.mrb[0].mxu0
        %v7696 = vpop.f32.mrb[0].mxu0
        %v7697 = vadd.f32 0.0, %v7696
        %v7698 = vpop.f32.mrb[0].mxu0
        %7699 = vmatprep.mubr.bf16.mxu0 0
        %7700 = vmatmul.mubr.bf16.gmra.mrb[0].mxu0 %v7610
        %v7701 = vpop.f32.mrb[0].mxu0
        %v7702 = vadd.f32 0.0, %v7701
        %v7703 = vpop.f32.mrb[0].mxu0
        %v7704 = vpop.f32.mrb[0].mxu0
        %v7705 = vadd.f32 0.0, %v7704
        %v7706 = vpop.f32.mrb[0].mxu0
        %7707 = vmatprep.mubr.bf16.mxu0 0
        %7708 = vmatmul.mubr.bf16.gmra.mrb[0].mxu0 %v7613
        %v7709 = vpop.f32.mrb[0].mxu0
        %v7710 = vadd.f32 0.0, %v7709
        %v7711 = vpop.f32.mrb[0].mxu0
        %v7712 = vpop.f32.mrb[0].mxu0
        %v7713 = vadd.f32 0.0, %v7712
        %v7714 = vpop.f32.mrb[0].mxu0
        %7715 = vmatprep.mubr.bf16.mxu0 0
        %7716 = vmatmul.mubr.bf16.gmra.mrb[0].mxu0 %v7616
        %v7717 = vpop.f32.mrb[0].mxu0
        %v7718 = vadd.f32 0.0, %v7717
        %v7719 = vpop.f32.mrb[0].mxu0
        %v7720 = vpop.f32.mrb[0].mxu0
        %v7721 = vadd.f32 0.0, %v7720
        %v7722 = vpop.f32.mrb[0].mxu0
        %7723 = vmatprep.mubr.bf16.mxu0 0
        %7724 = vmatmul.mubr.bf16.gmra.mrb[0].mxu0 %v7619
        %v7725 = vpop.f32.mrb[0].mxu0
        %v7726 = vadd.f32 0.0, %v7725
        %v7727 = vpop.f32.mrb[0].mxu0
        %v7728 = vpop.f32.mrb[0].mxu0
        %v7729 = vadd.f32 0.0, %v7728
        %v7730 = vpop.f32.mrb[0].mxu0
        %7731 = vmatprep.mubr.bf16.mxu0 0
        %7732 = vmatmul.mubr.bf16.gmra.mrb[0].mxu0 %v7622
        %v7733 = vpop.f32.mrb[0].mxu0
        %v7734 = vadd.f32 0.0, %v7733
        %v7735 = vpop.f32.mrb[0].mxu0
        %v7736 = vpop.f32.mrb[0].mxu0
        %v7737 = vadd.f32 0.0, %v7736
        %v7738 = vpop.f32.mrb[0].mxu0
        %7739 = vmatprep.mubr.bf16.mxu0 0
        %7740 = vmatmul.mubr.bf16.gmra.mrb[0].mxu0 %v7625
        %v7741 = vpop.f32.mrb[0].mxu0
        %v7742 = vadd.f32 0.0, %v7741
        %v7743 = vpop.f32.mrb[0].mxu0
        %v7744 = vpop.f32.mrb[0].mxu0
        %v7745 = vadd.f32 0.0, %v7744
        %v7746 = vpop.f32.mrb[0].mxu0
        %7747 = vmatprep.mubr.bf16.mxu0 0
        %7748 = vmatmul.mubr.bf16.gmra.mrb[0].mxu0 %v7628
        %v7749 = vpop.f32.mrb[0].mxu0
        %v7750 = vadd.f32 0.0, %v7749
        %v7751 = vpop.f32.mrb[0].mxu0
        %v7752 = vpop.f32.mrb[0].mxu0
        %v7753 = vadd.f32 0.0, %v7752
        %v7754 = vpop.f32.mrb[0].mxu0
        %7755 = vmatprep.mubr.bf16.mxu0 0
        %7756 = vmatmul.mubr.bf16.gmra.mrb[0].mxu0 %v7631
        %v7757 = vpop.f32.mrb[0].mxu0
        %v7758 = vadd.f32 0.0, %v7757
        %v7759 = vpop.f32.mrb[0].mxu0
        %v7760 = vpop.f32.mrb[0].mxu0
        %v7761 = vadd.f32 0.0, %v7760
        %v7762 = vpop.f32.mrb[0].mxu0
        %7763 = vmatprep.mubr.bf16.mxu0 0
        %7764 = vmatmul.mubr.bf16.gmra.mrb[0].mxu0 %v7634
        %v7765 = vpop.f32.mrb[0].mxu0
        %v7766 = vadd.f32 0.0, %v7765
        %v7767 = vpop.f32.mrb[0].mxu0
        %v7768 = vpop.f32.mrb[0].mxu0
        %v7769 = vadd.f32 0.0, %v7768
        %v7770 = vpop.f32.mrb[0].mxu0
        %7771 = vmatprep.mubr.bf16.mxu0 0
        %7772 = vmatmul.mubr.bf16.gmra.mrb[0].mxu0 %v7637
        %v7773 = vpop.f32.mrb[0].mxu0
        %v7774 = vadd.f32 0.0, %v7773
        %v7775 = vpop.f32.mrb[0].mxu0
        %v7776 = vpop.f32.mrb[0].mxu0
        %v7777 = vadd.f32 0.0, %v7776
        %v7778 = vpop.f32.mrb[0].mxu0
        %7779 = vmatprep.mubr.bf16.mxu0 0
        %7780 = vmatmul.mubr.bf16.gmra.mrb[0].mxu0 %v7640
        %v7781 = vpop.f32.mrb[0].mxu0
        %v7782 = vadd.f32 0.0, %v7781
        %v7783 = vpop.f32.mrb[0].mxu0
        %v7784 = vpop.f32.mrb[0].mxu0
        %v7785 = vadd.f32 0.0, %v7784
        %v7786 = vpop.f32.mrb[0].mxu0
        %7787 = vmatprep.mubr.bf16.mxu0 0
        %7788 = vmatmul.mubr.bf16.gmra.mrb[0].mxu0 %v7643
        %v7789 = vpop.f32.mrb[0].mxu0
        %v7790 = vadd.f32 0.0, %v7789
        %v7791 = vpop.f32.mrb[0].mxu0
        %v7792 = vpop.f32.mrb[0].mxu0
        %v7793 = vadd.f32 0.0, %v7792
        %v7794 = vpop.f32.mrb[0].mxu0
        %7795 = vmatprep.mubr.bf16.mxu0 0
        %7796 = vmatmul.mubr.bf16.gmra.mrb[0].mxu0 %v7646
        %v7797 = vpop.f32.mrb[0].mxu0
        %v7798 = vadd.f32 0.0, %v7797
        %v7799 = vpop.f32.mrb[0].mxu0
        %v7800 = vpop.f32.mrb[0].mxu0
        %v7801 = vadd.f32 0.0, %v7800
        %v7802 = vpop.f32.mrb[0].mxu0
        %7803 = vmatprep.mubr.bf16.mxu0 0
        %7804 = vmatmul.mubr.bf16.gmra.mrb[0].mxu0 %v7649
        %v7805 = vpop.f32.mrb[0].mxu0
        %v7806 = vadd.f32 0.0, %v7805
        %v7807 = vpop.f32.mrb[0].mxu0
        %v7808 = vpop.f32.mrb[0].mxu0
        %v7809 = vadd.f32 0.0, %v7808
        %v7810 = vpop.f32.mrb[0].mxu0
        %7811 = vdwg.mxu0
        %v7844 = vunpack.c.l.b16 %v7082
        %v7845 = vunpack.c.l.b16 %v7083
        %v7846 = vunpack.c.l.b16 %v7084
        %v7847 = vunpack.c.l.b16 %v7085
        %v7848 = vunpack.c.l.b16 %v7086
        %v7849 = vunpack.c.l.b16 %v7087
        %v7850 = vunpack.c.l.b16 %v7088
        %v7851 = vunpack.c.l.b16 %v7089
        %v7852 = vunpack.c.l.b16 %v7090
        %v7853 = vunpack.c.l.b16 %v7091
        %v7854 = vunpack.c.l.b16 %v7092
        %v7855 = vunpack.c.l.b16 %v7093
        %v7856 = vunpack.c.l.b16 %v7094
        %v7857 = vunpack.c.l.b16 %v7095
        %v7858 = vunpack.c.l.b16 %v7096
        %v7859 = vunpack.c.l.b16 %v7097
        %v7860 = vunpack.c.l.b16 %v7098
        %v7861 = vunpack.c.l.b16 %v7099
        %v7862 = vunpack.c.l.b16 %v7100
        %v7863 = vunpack.c.l.b16 %v7101
        %v7864 = vunpack.c.l.b16 %v7102
        %v7865 = vunpack.c.l.b16 %v7103
        %v7866 = vunpack.c.l.b16 %v7104
        %v7867 = vunpack.c.l.b16 %v7105
        %v7868 = vunpack.c.l.b16 %v7106
        %v7869 = vunpack.c.l.b16 %v7107
        %v7870 = vunpack.c.l.b16 %v7108
        %v7871 = vunpack.c.l.b16 %v7109
        %v7872 = vunpack.c.l.b16 %v7110
        %v7873 = vunpack.c.l.b16 %v7111
        %v7874 = vunpack.c.l.b16 %v7112
        %v7875 = vunpack.c.l.b16 %v7113
        %v7876 = vpack.c.b16 %v7845, %v7844
        %v7877 = vpack.c.b16 %v7847, %v7846
        %v7878 = vpack.c.b16 %v7849, %v7848
        %v7879 = vpack.c.b16 %v7851, %v7850
        %v7880 = vpack.c.b16 %v7853, %v7852
        %v7881 = vpack.c.b16 %v7855, %v7854
        %v7882 = vpack.c.b16 %v7857, %v7856
        %v7883 = vpack.c.b16 %v7859, %v7858
        %v7884 = vpack.c.b16 %v7861, %v7860
        %v7885 = vpack.c.b16 %v7863, %v7862
        %v7886 = vpack.c.b16 %v7865, %v7864
        %v7887 = vpack.c.b16 %v7867, %v7866
        %v7888 = vpack.c.b16 %v7869, %v7868
        %v7889 = vpack.c.b16 %v7871, %v7870
        %v7890 = vpack.c.b16 %v7873, %v7872
        %v7891 = vpack.c.b16 %v7875, %v7874
        %v7900 = vunpack.c.l.b16 %v7114
        %v7901 = vunpack.c.l.b16 %v7115
        %v7902 = vunpack.c.l.b16 %v7116
        %v7903 = vunpack.c.l.b16 %v7117
        %v7904 = vunpack.c.l.b16 %v7118
        %v7905 = vunpack.c.l.b16 %v7119
        %v7906 = vunpack.c.l.b16 %v7120
        %v7907 = vunpack.c.l.b16 %v7121
        %v7908 = vpack.c.b16 %v7901, %v7900
        %v7909 = vpack.c.b16 %v7903, %v7902
        %v7910 = vpack.c.b16 %v7905, %v7904
        %v7911 = vpack.c.b16 %v7907, %v7906
        %v7917 = vsel %vm1597, %v7876, 0
        %v7920 = vsel %vm1597, %v7877, 0
        %v7923 = vsel %vm1597, %v7878, 0
        %v7926 = vsel %vm1597, %v7879, 0
        %v7929 = vsel %vm1597, %v7880, 0
        %v7932 = vsel %vm1597, %v7881, 0
        %v7935 = vsel %vm1597, %v7882, 0
        %v7938 = vsel %vm1597, %v7883, 0
        %v7941 = vsel %vm1597, %v7884, 0
        %v7944 = vsel %vm1597, %v7885, 0
        %v7947 = vsel %vm1597, %v7886, 0
        %v7950 = vsel %vm1597, %v7887, 0
        %v7953 = vsel %vm1597, %v7888, 0
        %v7956 = vsel %vm1597, %v7889, 0
        %v7959 = vsel %vm1597, %v7890, 0
        %v7962 = vsel %vm1597, %v7891, 0
        %7964 = vmatprep.subr.bf16.mxu0 0
        %7965 = vmatpush1.bf16.msra.mxu0 %v7908
        %7966 = vmatprep.subr.bf16.mxu0 0
        %7967 = vmatpush1.bf16.msra.mxu0 %v7909
        %7968 = vmatprep.subr.bf16.mxu0 0
        %7969 = vmatpush1.bf16.msra.mxu0 %v7910
        %7970 = vmatprep.subr.bf16.mxu0 0
        %7971 = vmatpush1.bf16.msra.mxu0 %v7911
        %7972 = vmatprep.subr.bf16.mxu0 0
        %7973 = vmatpush1.bf16.msra.mxu0 0
        %7974 = vmatprep.subr.bf16.mxu0 0
        %7975 = vmatpush1.bf16.msra.mxu0 0
        %7976 = vmatprep.subr.bf16.mxu0 0
        %7977 = vmatpush1.bf16.msra.mxu0 0
        %7978 = vmatprep.subr.bf16.mxu0 0
        %7979 = vmatpush1.bf16.msra.mxu0 0
        %7980 = vmatprep.subr.bf16.mxu0 0
        %7981 = vmatpush1.bf16.msra.mxu0 0
        %7982 = vmatprep.subr.bf16.mxu0 0
        %7983 = vmatpush1.bf16.msra.mxu0 0
        %7984 = vmatprep.subr.bf16.mxu0 0
        %7985 = vmatpush1.bf16.msra.mxu0 0
        %7986 = vmatprep.subr.bf16.mxu0 0
        %7987 = vmatpush1.bf16.msra.mxu0 0
        %7988 = vmatprep.subr.bf16.mxu0 0
        %7989 = vmatpush1.bf16.msra.mxu0 0
        %7990 = vmatprep.subr.bf16.mxu0 0
        %7991 = vmatpush1.bf16.msra.mxu0 0
        %7992 = vmatprep.subr.bf16.mxu0 0
        %7993 = vmatpush1.bf16.msra.mxu0 0
        %7994 = vmatprep.subr.bf16.mxu0 0
        %7995 = vmatpush1.bf16.msra.mxu0 0
        %7996 = vmatprep.mubr.bf16.mxu0 0
        %7997 = vmatmul.mubr.bf16.gmra.mrb[0].mxu0 %v7917
        %v7998 = vpop.f32.mrb[0].mxu0
        %v7999 = vadd.f32 %v7686, %v7998
        %v8000 = vpop.f32.mrb[0].mxu0
        %v8001 = vpop.f32.mrb[0].mxu0
        %v8002 = vadd.f32 %v7689, %v8001
        %v8003 = vpop.f32.mrb[0].mxu0
        %8004 = vmatprep.mubr.bf16.mxu0 0
        %8005 = vmatmul.mubr.bf16.gmra.mrb[0].mxu0 %v7920
        %v8006 = vpop.f32.mrb[0].mxu0
        %v8007 = vadd.f32 %v7694, %v8006
        %v8008 = vpop.f32.mrb[0].mxu0
        %v8009 = vpop.f32.mrb[0].mxu0
        %v8010 = vadd.f32 %v7697, %v8009
        %v8011 = vpop.f32.mrb[0].mxu0
        %8012 = vmatprep.mubr.bf16.mxu0 0
        %8013 = vmatmul.mubr.bf16.gmra.mrb[0].mxu0 %v7923
        %v8014 = vpop.f32.mrb[0].mxu0
        %v8015 = vadd.f32 %v7702, %v8014
        %v8016 = vpop.f32.mrb[0].mxu0
        %v8017 = vpop.f32.mrb[0].mxu0
        %v8018 = vadd.f32 %v7705, %v8017
        %v8019 = vpop.f32.mrb[0].mxu0
        %8020 = vmatprep.mubr.bf16.mxu0 0
        %8021 = vmatmul.mubr.bf16.gmra.mrb[0].mxu0 %v7926
        %v8022 = vpop.f32.mrb[0].mxu0
        %v8023 = vadd.f32 %v7710, %v8022
        %v8024 = vpop.f32.mrb[0].mxu0
        %v8025 = vpop.f32.mrb[0].mxu0
        %v8026 = vadd.f32 %v7713, %v8025
        %v8027 = vpop.f32.mrb[0].mxu0
        %8028 = vmatprep.mubr.bf16.mxu0 0
        %8029 = vmatmul.mubr.bf16.gmra.mrb[0].mxu0 %v7929
        %v8030 = vpop.f32.mrb[0].mxu0
        %v8031 = vadd.f32 %v7718, %v8030
        %v8032 = vpop.f32.mrb[0].mxu0
        %v8033 = vpop.f32.mrb[0].mxu0
        %v8034 = vadd.f32 %v7721, %v8033
        %v8035 = vpop.f32.mrb[0].mxu0
        %8036 = vmatprep.mubr.bf16.mxu0 0
        %8037 = vmatmul.mubr.bf16.gmra.mrb[0].mxu0 %v7932
        %v8038 = vpop.f32.mrb[0].mxu0
        %v8039 = vadd.f32 %v7726, %v8038
        %v8040 = vpop.f32.mrb[0].mxu0
        %v8041 = vpop.f32.mrb[0].mxu0
        %v8042 = vadd.f32 %v7729, %v8041
        %v8043 = vpop.f32.mrb[0].mxu0
        %8044 = vmatprep.mubr.bf16.mxu0 0
        %8045 = vmatmul.mubr.bf16.gmra.mrb[0].mxu0 %v7935
        %v8046 = vpop.f32.mrb[0].mxu0
        %v8047 = vadd.f32 %v7734, %v8046
        %v8048 = vpop.f32.mrb[0].mxu0
        %v8049 = vpop.f32.mrb[0].mxu0
        %v8050 = vadd.f32 %v7737, %v8049
        %v8051 = vpop.f32.mrb[0].mxu0
        %8052 = vmatprep.mubr.bf16.mxu0 0
        %8053 = vmatmul.mubr.bf16.gmra.mrb[0].mxu0 %v7938
        %v8054 = vpop.f32.mrb[0].mxu0
        %v8055 = vadd.f32 %v7742, %v8054
        %v8056 = vpop.f32.mrb[0].mxu0
        %v8057 = vpop.f32.mrb[0].mxu0
        %v8058 = vadd.f32 %v7745, %v8057
        %v8059 = vpop.f32.mrb[0].mxu0
        %8060 = vmatprep.mubr.bf16.mxu0 0
        %8061 = vmatmul.mubr.bf16.gmra.mrb[0].mxu0 %v7941
        %v8062 = vpop.f32.mrb[0].mxu0
        %v8063 = vadd.f32 %v7750, %v8062
        %v8064 = vpop.f32.mrb[0].mxu0
        %v8065 = vpop.f32.mrb[0].mxu0
        %v8066 = vadd.f32 %v7753, %v8065
        %v8067 = vpop.f32.mrb[0].mxu0
        %8068 = vmatprep.mubr.bf16.mxu0 0
        %8069 = vmatmul.mubr.bf16.gmra.mrb[0].mxu0 %v7944
        %v8070 = vpop.f32.mrb[0].mxu0
        %v8071 = vadd.f32 %v7758, %v8070
        %v8072 = vpop.f32.mrb[0].mxu0
        %v8073 = vpop.f32.mrb[0].mxu0
        %v8074 = vadd.f32 %v7761, %v8073
        %v8075 = vpop.f32.mrb[0].mxu0
        %8076 = vmatprep.mubr.bf16.mxu0 0
        %8077 = vmatmul.mubr.bf16.gmra.mrb[0].mxu0 %v7947
        %v8078 = vpop.f32.mrb[0].mxu0
        %v8079 = vadd.f32 %v7766, %v8078
        %v8080 = vpop.f32.mrb[0].mxu0
        %v8081 = vpop.f32.mrb[0].mxu0
        %v8082 = vadd.f32 %v7769, %v8081
        %v8083 = vpop.f32.mrb[0].mxu0
        %8084 = vmatprep.mubr.bf16.mxu0 0
        %8085 = vmatmul.mubr.bf16.gmra.mrb[0].mxu0 %v7950
        %v8086 = vpop.f32.mrb[0].mxu0
        %v8087 = vadd.f32 %v7774, %v8086
        %v8088 = vpop.f32.mrb[0].mxu0
        %v8089 = vpop.f32.mrb[0].mxu0
        %v8090 = vadd.f32 %v7777, %v8089
        %v8091 = vpop.f32.mrb[0].mxu0
        %8092 = vmatprep.mubr.bf16.mxu0 0
        %8093 = vmatmul.mubr.bf16.gmra.mrb[0].mxu0 %v7953
        %v8094 = vpop.f32.mrb[0].mxu0
        %v8095 = vadd.f32 %v7782, %v8094
        %v8096 = vpop.f32.mrb[0].mxu0
        %v8097 = vpop.f32.mrb[0].mxu0
        %v8098 = vadd.f32 %v7785, %v8097
        %v8099 = vpop.f32.mrb[0].mxu0
        %8100 = vmatprep.mubr.bf16.mxu0 0
        %8101 = vmatmul.mubr.bf16.gmra.mrb[0].mxu0 %v7956
        %v8102 = vpop.f32.mrb[0].mxu0
        %v8103 = vadd.f32 %v7790, %v8102
        %v8104 = vpop.f32.mrb[0].mxu0
        %v8105 = vpop.f32.mrb[0].mxu0
        %v8106 = vadd.f32 %v7793, %v8105
        %v8107 = vpop.f32.mrb[0].mxu0
        %8108 = vmatprep.mubr.bf16.mxu0 0
        %8109 = vmatmul.mubr.bf16.gmra.mrb[0].mxu0 %v7959
        %v8110 = vpop.f32.mrb[0].mxu0
        %v8111 = vadd.f32 %v7798, %v8110
        %v8112 = vpop.f32.mrb[0].mxu0
        %v8113 = vpop.f32.mrb[0].mxu0
        %v8114 = vadd.f32 %v7801, %v8113
        %v8115 = vpop.f32.mrb[0].mxu0
        %8116 = vmatprep.mubr.bf16.mxu0 0
        %8117 = vmatmul.mubr.bf16.gmra.mrb[0].mxu0 %v7962
        %v8118 = vpop.f32.mrb[0].mxu0
        %v8119 = vadd.f32 %v7806, %v8118
        %v8120 = vpop.f32.mrb[0].mxu0
        %v8121 = vpop.f32.mrb[0].mxu0
        %v8122 = vadd.f32 %v7809, %v8121
        %v8123 = vpop.f32.mrb[0].mxu0
        %8124 = vdwg.mxu0
        %v8125 = vld [vmem:[#allocation3] sm:$0xe]
        %v8126 = vld [vmem:[#allocation3 + $0xc] sm:$0xe]
        %v8127 = vld [vmem:[#allocation3 + $0x18] sm:$0xe]
        %v8128 = vld [vmem:[#allocation3 + $0x24] sm:$0xe]
        %v8129 = vld [vmem:[#allocation3 + $0x30] sm:$0xe]
        %v8130 = vld [vmem:[#allocation3 + $0x3c] sm:$0xe]
        %v8131 = vld [vmem:[#allocation3 + $0x48] sm:$0xe]
        %v8132 = vld [vmem:[#allocation3 + $0x54] sm:$0xe]
        %v8133 = vld [vmem:[#allocation3 + $0x60] sm:$0xe]
        %v8134 = vld [vmem:[#allocation3 + $0x6c] sm:$0xe]
        %v8135 = vld [vmem:[#allocation3 + $0x78] sm:$0xe]
        %v8136 = vld [vmem:[#allocation3 + $0x84] sm:$0xe]
        %v8137 = vld [vmem:[#allocation3 + $0x90] sm:$0xe]
        %v8138 = vld [vmem:[#allocation3 + $0x9c] sm:$0xe]
        %v8139 = vld [vmem:[#allocation3 + $0xa8] sm:$0xe]
        %v8140 = vld [vmem:[#allocation3 + $0xb4] sm:$0xe]
        %v8173 = vrot.slane %v8125, 5
        %v8174 = vrot.slane %v8173, 4
        %v8175 = vrot.slane %v7083, 5
        %v8176 = vsel %vm2230, %v8174, %v8175
        %v8177 = vrot.slane %v8175, 4
        %v8178 = vrot.slane %v7122, 5
        %v8179 = vsel %vm2230, %v8177, %v8178
        %v8180 = vrot.slane %v8126, 5
        %v8181 = vrot.slane %v8180, 4
        %v8182 = vrot.slane %v7085, 5
        %v8183 = vsel %vm2230, %v8181, %v8182
        %v8184 = vrot.slane %v8182, 4
        %v8185 = vrot.slane %v7123, 5
        %v8186 = vsel %vm2230, %v8184, %v8185
        %v8187 = vrot.slane %v8127, 5
        %v8188 = vrot.slane %v8187, 4
        %v8189 = vrot.slane %v7087, 5
        %v8190 = vsel %vm2230, %v8188, %v8189
        %v8191 = vrot.slane %v8189, 4
        %v8192 = vrot.slane %v7124, 5
        %v8193 = vsel %vm2230, %v8191, %v8192
        %v8194 = vrot.slane %v8128, 5
        %v8195 = vrot.slane %v8194, 4
        %v8196 = vrot.slane %v7089, 5
        %v8197 = vsel %vm2230, %v8195, %v8196
        %v8198 = vrot.slane %v8196, 4
        %v8199 = vrot.slane %v7125, 5
        %v8200 = vsel %vm2230, %v8198, %v8199
        %v8201 = vrot.slane %v8129, 5
        %v8202 = vrot.slane %v8201, 4
        %v8203 = vrot.slane %v7091, 5
        %v8204 = vsel %vm2230, %v8202, %v8203
        %v8205 = vrot.slane %v8203, 4
        %v8206 = vrot.slane %v7126, 5
        %v8207 = vsel %vm2230, %v8205, %v8206
        %v8208 = vrot.slane %v8130, 5
        %v8209 = vrot.slane %v8208, 4
        %v8210 = vrot.slane %v7093, 5
        %v8211 = vsel %vm2230, %v8209, %v8210
        %v8212 = vrot.slane %v8210, 4
        %v8213 = vrot.slane %v7127, 5
        %v8214 = vsel %vm2230, %v8212, %v8213
        %v8215 = vrot.slane %v8131, 5
        %v8216 = vrot.slane %v8215, 4
        %v8217 = vrot.slane %v7095, 5
        %v8218 = vsel %vm2230, %v8216, %v8217
        %v8219 = vrot.slane %v8217, 4
        %v8220 = vrot.slane %v7128, 5
        %v8221 = vsel %vm2230, %v8219, %v8220
        %v8222 = vrot.slane %v8132, 5
        %v8223 = vrot.slane %v8222, 4
        %v8224 = vrot.slane %v7097, 5
        %v8225 = vsel %vm2230, %v8223, %v8224
        %v8226 = vrot.slane %v8224, 4
        %v8227 = vrot.slane %v7129, 5
        %v8228 = vsel %vm2230, %v8226, %v8227
        %v8229 = vrot.slane %v8133, 5
        %v8230 = vrot.slane %v8229, 4
        %v8231 = vrot.slane %v7099, 5
        %v8232 = vsel %vm2230, %v8230, %v8231
        %v8233 = vrot.slane %v8231, 4
        %v8234 = vrot.slane %v7130, 5
        %v8235 = vsel %vm2230, %v8233, %v8234
        %v8236 = vrot.slane %v8134, 5
        %v8237 = vrot.slane %v8236, 4
        %v8238 = vrot.slane %v7101, 5
        %v8239 = vsel %vm2230, %v8237, %v8238
        %v8240 = vrot.slane %v8238, 4
        %v8241 = vrot.slane %v7131, 5
        %v8242 = vsel %vm2230, %v8240, %v8241
        %v8243 = vrot.slane %v8135, 5
        %v8244 = vrot.slane %v8243, 4
        %v8245 = vrot.slane %v7103, 5
        %v8246 = vsel %vm2230, %v8244, %v8245
        %v8247 = vrot.slane %v8245, 4
        %v8248 = vrot.slane %v7132, 5
        %v8249 = vsel %vm2230, %v8247, %v8248
        %v8250 = vrot.slane %v8136, 5
        %v8251 = vrot.slane %v8250, 4
        %v8252 = vrot.slane %v7105, 5
        %v8253 = vsel %vm2230, %v8251, %v8252
        %v8254 = vrot.slane %v8252, 4
        %v8255 = vrot.slane %v7133, 5
        %v8256 = vsel %vm2230, %v8254, %v8255
        %v8257 = vrot.slane %v8137, 5
        %v8258 = vrot.slane %v8257, 4
        %v8259 = vrot.slane %v7107, 5
        %v8260 = vsel %vm2230, %v8258, %v8259
        %v8261 = vrot.slane %v8259, 4
        %v8262 = vrot.slane %v7134, 5
        %v8263 = vsel %vm2230, %v8261, %v8262
        %v8264 = vrot.slane %v8138, 5
        %v8265 = vrot.slane %v8264, 4
        %v8266 = vrot.slane %v7109, 5
        %v8267 = vsel %vm2230, %v8265, %v8266
        %v8268 = vrot.slane %v8266, 4
        %v8269 = vrot.slane %v7135, 5
        %v8270 = vsel %vm2230, %v8268, %v8269
        %v8271 = vrot.slane %v8139, 5
        %v8272 = vrot.slane %v8271, 4
        %v8273 = vrot.slane %v7111, 5
        %v8274 = vsel %vm2230, %v8272, %v8273
        %v8275 = vrot.slane %v8273, 4
        %v8276 = vrot.slane %v7136, 5
        %v8277 = vsel %vm2230, %v8275, %v8276
        %v8278 = vrot.slane %v8140, 5
        %v8279 = vrot.slane %v8278, 4
        %v8280 = vrot.slane %v7113, 5
        %v8281 = vsel %vm2230, %v8279, %v8280
        %v8282 = vrot.slane %v8280, 4
        %v8283 = vrot.slane %v7137, 5
        %v8284 = vsel %vm2230, %v8282, %v8283
        %s8285 = scalar_lea.vmem [#allocation10], 64
        %v8286 = vld [vmem:[%s8285] sm:$0xf]
        %v8287 = vld [vmem:[%s8285 + $0x4] sm:$0xf]
        %v8288 = vld [vmem:[%s8285 + $0x8] sm:$0xf]
        %v8289 = vld [vmem:[%s8285 + $0xc] sm:$0xf]
        %v8290 = vld [vmem:[%s8285 + $0x10] sm:$0xf]
        %v8291 = vld [vmem:[%s8285 + $0x14] sm:$0xf]
        %v8292 = vld [vmem:[%s8285 + $0x18] sm:$0xf]
        %v8293 = vld [vmem:[%s8285 + $0x1c] sm:$0xf]
        %v8294 = vunpack.c.l.b16 %v8176
        %v8295 = vunpack.c.l.b16 %v8179
        %v8296 = vunpack.c.l.b16 %v8183
        %v8297 = vunpack.c.l.b16 %v8186
        %v8298 = vunpack.c.l.b16 %v8190
        %v8299 = vunpack.c.l.b16 %v8193
        %v8300 = vunpack.c.l.b16 %v8197
        %v8301 = vunpack.c.l.b16 %v8200
        %v8302 = vunpack.c.l.b16 %v8204
        %v8303 = vunpack.c.l.b16 %v8207
        %v8304 = vunpack.c.l.b16 %v8211
        %v8305 = vunpack.c.l.b16 %v8214
        %v8306 = vunpack.c.l.b16 %v8218
        %v8307 = vunpack.c.l.b16 %v8221
        %v8308 = vunpack.c.l.b16 %v8225
        %v8309 = vunpack.c.l.b16 %v8228
        %v8310 = vunpack.c.l.b16 %v8232
        %v8311 = vunpack.c.l.b16 %v8235
        %v8312 = vunpack.c.l.b16 %v8239
        %v8313 = vunpack.c.l.b16 %v8242
        %v8314 = vunpack.c.l.b16 %v8246
        %v8315 = vunpack.c.l.b16 %v8249
        %v8316 = vunpack.c.l.b16 %v8253
        %v8317 = vunpack.c.l.b16 %v8256
        %v8318 = vunpack.c.l.b16 %v8260
        %v8319 = vunpack.c.l.b16 %v8263
        %v8320 = vunpack.c.l.b16 %v8267
        %v8321 = vunpack.c.l.b16 %v8270
        %v8322 = vunpack.c.l.b16 %v8274
        %v8323 = vunpack.c.l.b16 %v8277
        %v8324 = vunpack.c.l.b16 %v8281
        %v8325 = vunpack.c.l.b16 %v8284
        %v8326 = vpack.c.b16 %v8295, %v8294
        %v8327 = vpack.c.b16 %v8297, %v8296
        %v8328 = vpack.c.b16 %v8299, %v8298
        %v8329 = vpack.c.b16 %v8301, %v8300
        %v8330 = vpack.c.b16 %v8303, %v8302
        %v8331 = vpack.c.b16 %v8305, %v8304
        %v8332 = vpack.c.b16 %v8307, %v8306
        %v8333 = vpack.c.b16 %v8309, %v8308
        %v8334 = vpack.c.b16 %v8311, %v8310
        %v8335 = vpack.c.b16 %v8313, %v8312
        %v8336 = vpack.c.b16 %v8315, %v8314
        %v8337 = vpack.c.b16 %v8317, %v8316
        %v8338 = vpack.c.b16 %v8319, %v8318
        %v8339 = vpack.c.b16 %v8321, %v8320
        %v8340 = vpack.c.b16 %v8323, %v8322
        %v8341 = vpack.c.b16 %v8325, %v8324
        %v8350 = vunpack.c.l.b16 %v8286
        %v8351 = vunpack.c.l.b16 %v8287
        %v8352 = vunpack.c.l.b16 %v8288
        %v8353 = vunpack.c.l.b16 %v8289
        %v8354 = vunpack.c.l.b16 %v8290
        %v8355 = vunpack.c.l.b16 %v8291
        %v8356 = vunpack.c.l.b16 %v8292
        %v8357 = vunpack.c.l.b16 %v8293
        %v8358 = vpack.c.b16 %v8351, %v8350
        %v8359 = vpack.c.b16 %v8353, %v8352
        %v8360 = vpack.c.b16 %v8355, %v8354
        %v8361 = vpack.c.b16 %v8357, %v8356
        %v8367 = vsel %vm1597, %v8326, 0
        %v8370 = vsel %vm1597, %v8327, 0
        %v8373 = vsel %vm1597, %v8328, 0
        %v8376 = vsel %vm1597, %v8329, 0
        %v8379 = vsel %vm1597, %v8330, 0
        %v8382 = vsel %vm1597, %v8331, 0
        %v8385 = vsel %vm1597, %v8332, 0
        %v8388 = vsel %vm1597, %v8333, 0
        %v8391 = vsel %vm1597, %v8334, 0
        %v8394 = vsel %vm1597, %v8335, 0
        %v8397 = vsel %vm1597, %v8336, 0
        %v8400 = vsel %vm1597, %v8337, 0
        %v8403 = vsel %vm1597, %v8338, 0
        %v8406 = vsel %vm1597, %v8339, 0
        %v8409 = vsel %vm1597, %v8340, 0
        %v8412 = vsel %vm1597, %v8341, 0
        %8414 = vmatprep.subr.bf16.mxu0 0
        %8415 = vmatpush1.bf16.msra.mxu0 %v8358
        %8416 = vmatprep.subr.bf16.mxu0 0
        %8417 = vmatpush1.bf16.msra.mxu0 %v8359
        %8418 = vmatprep.subr.bf16.mxu0 0
        %8419 = vmatpush1.bf16.msra.mxu0 %v8360
        %8420 = vmatprep.subr.bf16.mxu0 0
        %8421 = vmatpush1.bf16.msra.mxu0 %v8361
        %8422 = vmatprep.subr.bf16.mxu0 0
        %8423 = vmatpush1.bf16.msra.mxu0 0
        %8424 = vmatprep.subr.bf16.mxu0 0
        %8425 = vmatpush1.bf16.msra.mxu0 0
        %8426 = vmatprep.subr.bf16.mxu0 0
        %8427 = vmatpush1.bf16.msra.mxu0 0
        %8428 = vmatprep.subr.bf16.mxu0 0
        %8429 = vmatpush1.bf16.msra.mxu0 0
        %8430 = vmatprep.subr.bf16.mxu0 0
        %8431 = vmatpush1.bf16.msra.mxu0 0
        %8432 = vmatprep.subr.bf16.mxu0 0
        %8433 = vmatpush1.bf16.msra.mxu0 0
        %8434 = vmatprep.subr.bf16.mxu0 0
        %8435 = vmatpush1.bf16.msra.mxu0 0
        %8436 = vmatprep.subr.bf16.mxu0 0
        %8437 = vmatpush1.bf16.msra.mxu0 0
        %8438 = vmatprep.subr.bf16.mxu0 0
        %8439 = vmatpush1.bf16.msra.mxu0 0
        %8440 = vmatprep.subr.bf16.mxu0 0
        %8441 = vmatpush1.bf16.msra.mxu0 0
        %8442 = vmatprep.subr.bf16.mxu0 0
        %8443 = vmatpush1.bf16.msra.mxu0 0
        %8444 = vmatprep.subr.bf16.mxu0 0
        %8445 = vmatpush1.bf16.msra.mxu0 0
        %8446 = vmatprep.mubr.bf16.mxu0 0
        %8447 = vmatmul.mubr.bf16.gmra.mrb[0].mxu0 %v8367
        %v8448 = vpop.f32.mrb[0].mxu0
        %v8449 = vadd.f32 0.0, %v8448
        %v8450 = vpop.f32.mrb[0].mxu0
        %v8451 = vpop.f32.mrb[0].mxu0
        %v8452 = vadd.f32 0.0, %v8451
        %v8453 = vpop.f32.mrb[0].mxu0
        %8454 = vmatprep.mubr.bf16.mxu0 0
        %8455 = vmatmul.mubr.bf16.gmra.mrb[0].mxu0 %v8370
        %v8456 = vpop.f32.mrb[0].mxu0
        %v8457 = vadd.f32 0.0, %v8456
        %v8458 = vpop.f32.mrb[0].mxu0
        %v8459 = vpop.f32.mrb[0].mxu0
        %v8460 = vadd.f32 0.0, %v8459
        %v8461 = vpop.f32.mrb[0].mxu0
        %8462 = vmatprep.mubr.bf16.mxu0 0
        %8463 = vmatmul.mubr.bf16.gmra.mrb[0].mxu0 %v8373
        %v8464 = vpop.f32.mrb[0].mxu0
        %v8465 = vadd.f32 0.0, %v8464
        %v8466 = vpop.f32.mrb[0].mxu0
        %v8467 = vpop.f32.mrb[0].mxu0
        %v8468 = vadd.f32 0.0, %v8467
        %v8469 = vpop.f32.mrb[0].mxu0
        %8470 = vmatprep.mubr.bf16.mxu0 0
        %8471 = vmatmul.mubr.bf16.gmra.mrb[0].mxu0 %v8376
        %v8472 = vpop.f32.mrb[0].mxu0
        %v8473 = vadd.f32 0.0, %v8472
        %v8474 = vpop.f32.mrb[0].mxu0
        %v8475 = vpop.f32.mrb[0].mxu0
        %v8476 = vadd.f32 0.0, %v8475
        %v8477 = vpop.f32.mrb[0].mxu0
        %8478 = vmatprep.mubr.bf16.mxu0 0
        %8479 = vmatmul.mubr.bf16.gmra.mrb[0].mxu0 %v8379
        %v8480 = vpop.f32.mrb[0].mxu0
        %v8481 = vadd.f32 0.0, %v8480
        %v8482 = vpop.f32.mrb[0].mxu0
        %v8483 = vpop.f32.mrb[0].mxu0
        %v8484 = vadd.f32 0.0, %v8483
        %v8485 = vpop.f32.mrb[0].mxu0
        %8486 = vmatprep.mubr.bf16.mxu0 0
        %8487 = vmatmul.mubr.bf16.gmra.mrb[0].mxu0 %v8382
        %v8488 = vpop.f32.mrb[0].mxu0
        %v8489 = vadd.f32 0.0, %v8488
        %v8490 = vpop.f32.mrb[0].mxu0
        %v8491 = vpop.f32.mrb[0].mxu0
        %v8492 = vadd.f32 0.0, %v8491
        %v8493 = vpop.f32.mrb[0].mxu0
        %8494 = vmatprep.mubr.bf16.mxu0 0
        %8495 = vmatmul.mubr.bf16.gmra.mrb[0].mxu0 %v8385
        %v8496 = vpop.f32.mrb[0].mxu0
        %v8497 = vadd.f32 0.0, %v8496
        %v8498 = vpop.f32.mrb[0].mxu0
        %v8499 = vpop.f32.mrb[0].mxu0
        %v8500 = vadd.f32 0.0, %v8499
        %v8501 = vpop.f32.mrb[0].mxu0
        %8502 = vmatprep.mubr.bf16.mxu0 0
        %8503 = vmatmul.mubr.bf16.gmra.mrb[0].mxu0 %v8388
        %v8504 = vpop.f32.mrb[0].mxu0
        %v8505 = vadd.f32 0.0, %v8504
        %v8506 = vpop.f32.mrb[0].mxu0
        %v8507 = vpop.f32.mrb[0].mxu0
        %v8508 = vadd.f32 0.0, %v8507
        %v8509 = vpop.f32.mrb[0].mxu0
        %8510 = vmatprep.mubr.bf16.mxu0 0
        %8511 = vmatmul.mubr.bf16.gmra.mrb[0].mxu0 %v8391
        %v8512 = vpop.f32.mrb[0].mxu0
        %v8513 = vadd.f32 0.0, %v8512
        %v8514 = vpop.f32.mrb[0].mxu0
        %v8515 = vpop.f32.mrb[0].mxu0
        %v8516 = vadd.f32 0.0, %v8515
        %v8517 = vpop.f32.mrb[0].mxu0
        %8518 = vmatprep.mubr.bf16.mxu0 0
        %8519 = vmatmul.mubr.bf16.gmra.mrb[0].mxu0 %v8394
        %v8520 = vpop.f32.mrb[0].mxu0
        %v8521 = vadd.f32 0.0, %v8520
        %v8522 = vpop.f32.mrb[0].mxu0
        %v8523 = vpop.f32.mrb[0].mxu0
        %v8524 = vadd.f32 0.0, %v8523
        %v8525 = vpop.f32.mrb[0].mxu0
        %8526 = vmatprep.mubr.bf16.mxu0 0
        %8527 = vmatmul.mubr.bf16.gmra.mrb[0].mxu0 %v8397
        %v8528 = vpop.f32.mrb[0].mxu0
        %v8529 = vadd.f32 0.0, %v8528
        %v8530 = vpop.f32.mrb[0].mxu0
        %v8531 = vpop.f32.mrb[0].mxu0
        %v8532 = vadd.f32 0.0, %v8531
        %v8533 = vpop.f32.mrb[0].mxu0
        %8534 = vmatprep.mubr.bf16.mxu0 0
        %8535 = vmatmul.mubr.bf16.gmra.mrb[0].mxu0 %v8400
        %v8536 = vpop.f32.mrb[0].mxu0
        %v8537 = vadd.f32 0.0, %v8536
        %v8538 = vpop.f32.mrb[0].mxu0
        %v8539 = vpop.f32.mrb[0].mxu0
        %v8540 = vadd.f32 0.0, %v8539
        %v8541 = vpop.f32.mrb[0].mxu0
        %8542 = vmatprep.mubr.bf16.mxu0 0
        %8543 = vmatmul.mubr.bf16.gmra.mrb[0].mxu0 %v8403
        %v8544 = vpop.f32.mrb[0].mxu0
        %v8545 = vadd.f32 0.0, %v8544
        %v8546 = vpop.f32.mrb[0].mxu0
        %v8547 = vpop.f32.mrb[0].mxu0
        %v8548 = vadd.f32 0.0, %v8547
        %v8549 = vpop.f32.mrb[0].mxu0
        %8550 = vmatprep.mubr.bf16.mxu0 0
        %8551 = vmatmul.mubr.bf16.gmra.mrb[0].mxu0 %v8406
        %v8552 = vpop.f32.mrb[0].mxu0
        %v8553 = vadd.f32 0.0, %v8552
        %v8554 = vpop.f32.mrb[0].mxu0
        %v8555 = vpop.f32.mrb[0].mxu0
        %v8556 = vadd.f32 0.0, %v8555
        %v8557 = vpop.f32.mrb[0].mxu0
        %8558 = vmatprep.mubr.bf16.mxu0 0
        %8559 = vmatmul.mubr.bf16.gmra.mrb[0].mxu0 %v8409
        %v8560 = vpop.f32.mrb[0].mxu0
        %v8561 = vadd.f32 0.0, %v8560
        %v8562 = vpop.f32.mrb[0].mxu0
        %v8563 = vpop.f32.mrb[0].mxu0
        %v8564 = vadd.f32 0.0, %v8563
        %v8565 = vpop.f32.mrb[0].mxu0
        %8566 = vmatprep.mubr.bf16.mxu0 0
        %8567 = vmatmul.mubr.bf16.gmra.mrb[0].mxu0 %v8412
        %v8568 = vpop.f32.mrb[0].mxu0
        %v8569 = vadd.f32 0.0, %v8568
        %v8570 = vpop.f32.mrb[0].mxu0
        %v8571 = vpop.f32.mrb[0].mxu0
        %v8572 = vadd.f32 0.0, %v8571
        %v8573 = vpop.f32.mrb[0].mxu0
        %8574 = vdwg.mxu0
        %v8575 = vadd.f32 %v7999, %v8449
        %v8576 = vadd.f32 %v8002, %v8452
        %v8577 = vadd.f32 %v8007, %v8457
        %v8578 = vadd.f32 %v8010, %v8460
        %v8579 = vadd.f32 %v8015, %v8465
        %v8580 = vadd.f32 %v8018, %v8468
        %v8581 = vadd.f32 %v8023, %v8473
        %v8582 = vadd.f32 %v8026, %v8476
        %v8583 = vadd.f32 %v8031, %v8481
        %v8584 = vadd.f32 %v8034, %v8484
        %v8585 = vadd.f32 %v8039, %v8489
        %v8586 = vadd.f32 %v8042, %v8492
        %v8587 = vadd.f32 %v8047, %v8497
        %v8588 = vadd.f32 %v8050, %v8500
        %v8589 = vadd.f32 %v8055, %v8505
        %v8590 = vadd.f32 %v8058, %v8508
        %v8591 = vadd.f32 %v8063, %v8513
        %v8592 = vadd.f32 %v8066, %v8516
        %v8593 = vadd.f32 %v8071, %v8521
        %v8594 = vadd.f32 %v8074, %v8524
        %v8595 = vadd.f32 %v8079, %v8529
        %v8596 = vadd.f32 %v8082, %v8532
        %v8597 = vadd.f32 %v8087, %v8537
        %v8598 = vadd.f32 %v8090, %v8540
        %v8599 = vadd.f32 %v8095, %v8545
        %v8600 = vadd.f32 %v8098, %v8548
        %v8601 = vadd.f32 %v8103, %v8553
        %v8602 = vadd.f32 %v8106, %v8556
        %v8603 = vadd.f32 %v8111, %v8561
        %v8604 = vadd.f32 %v8114, %v8564
        %v8605 = vadd.f32 %v8119, %v8569
        %v8606 = vadd.f32 %v8122, %v8572
        %s8607 = scalar_lea.vmem [#allocation3], 12
        %v8608 = vld [vmem:[%s8607] sm:$0xf]
        %v8609 = vld [vmem:[%s8607 + $0x4] sm:$0xf]
        %v8610 = vld [vmem:[%s8607 + $0xc] sm:$0xf]
        %v8611 = vld [vmem:[%s8607 + $0x10] sm:$0xf]
        %v8612 = vld [vmem:[%s8607 + $0x18] sm:$0xf]
        %v8613 = vld [vmem:[%s8607 + $0x1c] sm:$0xf]
        %v8614 = vld [vmem:[%s8607 + $0x24] sm:$0xf]
        %v8615 = vld [vmem:[%s8607 + $0x28] sm:$0xf]
        %v8616 = vld [vmem:[%s8607 + $0x30] sm:$0xf]
        %v8617 = vld [vmem:[%s8607 + $0x34] sm:$0xf]
        %v8618 = vld [vmem:[%s8607 + $0x3c] sm:$0xf]
        %v8619 = vld [vmem:[%s8607 + $0x40] sm:$0xf]
        %v8620 = vld [vmem:[%s8607 + $0x48] sm:$0xf]
        %v8621 = vld [vmem:[%s8607 + $0x4c] sm:$0xf]
        %v8622 = vld [vmem:[%s8607 + $0x54] sm:$0xf]
        %v8623 = vld [vmem:[%s8607 + $0x58] sm:$0xf]
        %v8624 = vld [vmem:[%s8607 + $0x60] sm:$0xf]
        %v8625 = vld [vmem:[%s8607 + $0x64] sm:$0xf]
        %v8626 = vld [vmem:[%s8607 + $0x6c] sm:$0xf]
        %v8627 = vld [vmem:[%s8607 + $0x70] sm:$0xf]
        %v8628 = vld [vmem:[%s8607 + $0x78] sm:$0xf]
        %v8629 = vld [vmem:[%s8607 + $0x7c] sm:$0xf]
        %v8630 = vld [vmem:[%s8607 + $0x84] sm:$0xf]
        %v8631 = vld [vmem:[%s8607 + $0x88] sm:$0xf]
        %v8632 = vld [vmem:[%s8607 + $0x90] sm:$0xf]
        %v8633 = vld [vmem:[%s8607 + $0x94] sm:$0xf]
        %v8634 = vld [vmem:[%s8607 + $0x9c] sm:$0xf]
        %v8635 = vld [vmem:[%s8607 + $0xa0] sm:$0xf]
        %v8636 = vld [vmem:[%s8607 + $0xa8] sm:$0xf]
        %v8637 = vld [vmem:[%s8607 + $0xac] sm:$0xf]
        %v8638 = vld [vmem:[%s8607 + $0xb4] sm:$0xf]
        %v8639 = vld [vmem:[%s8607 + $0xb8] sm:$0xf]
        %s8640 = scalar_lea.vmem [#allocation10], 96
        %v8641 = vld [vmem:[%s8640] sm:$0xf]
        %v8642 = vld [vmem:[%s8640 + $0x4] sm:$0xf]
        %v8643 = vld [vmem:[%s8640 + $0x8] sm:$0xf]
        %v8644 = vld [vmem:[%s8640 + $0xc] sm:$0xf]
        %v8645 = vld [vmem:[%s8640 + $0x10] sm:$0xf]
        %v8646 = vld [vmem:[%s8640 + $0x14] sm:$0xf]
        %v8647 = vld [vmem:[%s8640 + $0x18] sm:$0xf]
        %v8648 = vld [vmem:[%s8640 + $0x1c] sm:$0xf]
        %v8681 = vunpack.c.l.b16 %v8608
        %v8682 = vunpack.c.l.b16 %v8609
        %v8683 = vunpack.c.l.b16 %v8610
        %v8684 = vunpack.c.l.b16 %v8611
        %v8685 = vunpack.c.l.b16 %v8612
        %v8686 = vunpack.c.l.b16 %v8613
        %v8687 = vunpack.c.l.b16 %v8614
        %v8688 = vunpack.c.l.b16 %v8615
        %v8689 = vunpack.c.l.b16 %v8616
        %v8690 = vunpack.c.l.b16 %v8617
        %v8691 = vunpack.c.l.b16 %v8618
        %v8692 = vunpack.c.l.b16 %v8619
        %v8693 = vunpack.c.l.b16 %v8620
        %v8694 = vunpack.c.l.b16 %v8621
        %v8695 = vunpack.c.l.b16 %v8622
        %v8696 = vunpack.c.l.b16 %v8623
        %v8697 = vunpack.c.l.b16 %v8624
        %v8698 = vunpack.c.l.b16 %v8625
        %v8699 = vunpack.c.l.b16 %v8626
        %v8700 = vunpack.c.l.b16 %v8627
        %v8701 = vunpack.c.l.b16 %v8628
        %v8702 = vunpack.c.l.b16 %v8629
        %v8703 = vunpack.c.l.b16 %v8630
        %v8704 = vunpack.c.l.b16 %v8631
        %v8705 = vunpack.c.l.b16 %v8632
        %v8706 = vunpack.c.l.b16 %v8633
        %v8707 = vunpack.c.l.b16 %v8634
        %v8708 = vunpack.c.l.b16 %v8635
        %v8709 = vunpack.c.l.b16 %v8636
        %v8710 = vunpack.c.l.b16 %v8637
        %v8711 = vunpack.c.l.b16 %v8638
        %v8712 = vunpack.c.l.b16 %v8639
        %v8713 = vpack.c.b16 %v8682, %v8681
        %v8714 = vpack.c.b16 %v8684, %v8683
        %v8715 = vpack.c.b16 %v8686, %v8685
        %v8716 = vpack.c.b16 %v8688, %v8687
        %v8717 = vpack.c.b16 %v8690, %v8689
        %v8718 = vpack.c.b16 %v8692, %v8691
        %v8719 = vpack.c.b16 %v8694, %v8693
        %v8720 = vpack.c.b16 %v8696, %v8695
        %v8721 = vpack.c.b16 %v8698, %v8697
        %v8722 = vpack.c.b16 %v8700, %v8699
        %v8723 = vpack.c.b16 %v8702, %v8701
        %v8724 = vpack.c.b16 %v8704, %v8703
        %v8725 = vpack.c.b16 %v8706, %v8705
        %v8726 = vpack.c.b16 %v8708, %v8707
        %v8727 = vpack.c.b16 %v8710, %v8709
        %v8728 = vpack.c.b16 %v8712, %v8711
        %v8737 = vunpack.c.l.b16 %v8641
        %v8738 = vunpack.c.l.b16 %v8642
        %v8739 = vunpack.c.l.b16 %v8643
        %v8740 = vunpack.c.l.b16 %v8644
        %v8741 = vunpack.c.l.b16 %v8645
        %v8742 = vunpack.c.l.b16 %v8646
        %v8743 = vunpack.c.l.b16 %v8647
        %v8744 = vunpack.c.l.b16 %v8648
        %v8745 = vpack.c.b16 %v8738, %v8737
        %v8746 = vpack.c.b16 %v8740, %v8739
        %v8747 = vpack.c.b16 %v8742, %v8741
        %v8748 = vpack.c.b16 %v8744, %v8743
        %v8754 = vsel %vm1597, %v8713, 0
        %v8757 = vsel %vm1597, %v8714, 0
        %v8760 = vsel %vm1597, %v8715, 0
        %v8763 = vsel %vm1597, %v8716, 0
        %v8766 = vsel %vm1597, %v8717, 0
        %v8769 = vsel %vm1597, %v8718, 0
        %v8772 = vsel %vm1597, %v8719, 0
        %v8775 = vsel %vm1597, %v8720, 0
        %v8778 = vsel %vm1597, %v8721, 0
        %v8781 = vsel %vm1597, %v8722, 0
        %v8784 = vsel %vm1597, %v8723, 0
        %v8787 = vsel %vm1597, %v8724, 0
        %v8790 = vsel %vm1597, %v8725, 0
        %v8793 = vsel %vm1597, %v8726, 0
        %v8796 = vsel %vm1597, %v8727, 0
        %v8799 = vsel %vm1597, %v8728, 0
        %8801 = vmatprep.subr.bf16.mxu0 0
        %8802 = vmatpush1.bf16.msra.mxu0 %v8745
        %8803 = vmatprep.subr.bf16.mxu0 0
        %8804 = vmatpush1.bf16.msra.mxu0 %v8746
        %8805 = vmatprep.subr.bf16.mxu0 0
        %8806 = vmatpush1.bf16.msra.mxu0 %v8747
        %8807 = vmatprep.subr.bf16.mxu0 0
        %8808 = vmatpush1.bf16.msra.mxu0 %v8748
        %8809 = vmatprep.subr.bf16.mxu0 0
        %8810 = vmatpush1.bf16.msra.mxu0 0
        %8811 = vmatprep.subr.bf16.mxu0 0
        %8812 = vmatpush1.bf16.msra.mxu0 0
        %8813 = vmatprep.subr.bf16.mxu0 0
        %8814 = vmatpush1.bf16.msra.mxu0 0
        %8815 = vmatprep.subr.bf16.mxu0 0
        %8816 = vmatpush1.bf16.msra.mxu0 0
        %8817 = vmatprep.subr.bf16.mxu0 0
        %8818 = vmatpush1.bf16.msra.mxu0 0
        %8819 = vmatprep.subr.bf16.mxu0 0
        %8820 = vmatpush1.bf16.msra.mxu0 0
        %8821 = vmatprep.subr.bf16.mxu0 0
        %8822 = vmatpush1.bf16.msra.mxu0 0
        %8823 = vmatprep.subr.bf16.mxu0 0
        %8824 = vmatpush1.bf16.msra.mxu0 0
        %8825 = vmatprep.subr.bf16.mxu0 0
        %8826 = vmatpush1.bf16.msra.mxu0 0
        %8827 = vmatprep.subr.bf16.mxu0 0
        %8828 = vmatpush1.bf16.msra.mxu0 0
        %8829 = vmatprep.subr.bf16.mxu0 0
        %8830 = vmatpush1.bf16.msra.mxu0 0
        %8831 = vmatprep.subr.bf16.mxu0 0
        %8832 = vmatpush1.bf16.msra.mxu0 0
        %8833 = vmatprep.mubr.bf16.mxu0 0
        %8834 = vmatmul.mubr.bf16.gmra.mrb[0].mxu0 %v8754
        %v8835 = vpop.f32.mrb[0].mxu0
        %v8836 = vadd.f32 0.0, %v8835
        %v8837 = vpop.f32.mrb[0].mxu0
        %v8838 = vpop.f32.mrb[0].mxu0
        %v8839 = vadd.f32 0.0, %v8838
        %v8840 = vpop.f32.mrb[0].mxu0
        %8841 = vmatprep.mubr.bf16.mxu0 0
        %8842 = vmatmul.mubr.bf16.gmra.mrb[0].mxu0 %v8757
        %v8843 = vpop.f32.mrb[0].mxu0
        %v8844 = vadd.f32 0.0, %v8843
        %v8845 = vpop.f32.mrb[0].mxu0
        %v8846 = vpop.f32.mrb[0].mxu0
        %v8847 = vadd.f32 0.0, %v8846
        %v8848 = vpop.f32.mrb[0].mxu0
        %8849 = vmatprep.mubr.bf16.mxu0 0
        %8850 = vmatmul.mubr.bf16.gmra.mrb[0].mxu0 %v8760
        %v8851 = vpop.f32.mrb[0].mxu0
        %v8852 = vadd.f32 0.0, %v8851
        %v8853 = vpop.f32.mrb[0].mxu0
        %v8854 = vpop.f32.mrb[0].mxu0
        %v8855 = vadd.f32 0.0, %v8854
        %v8856 = vpop.f32.mrb[0].mxu0
        %8857 = vmatprep.mubr.bf16.mxu0 0
        %8858 = vmatmul.mubr.bf16.gmra.mrb[0].mxu0 %v8763
        %v8859 = vpop.f32.mrb[0].mxu0
        %v8860 = vadd.f32 0.0, %v8859
        %v8861 = vpop.f32.mrb[0].mxu0
        %v8862 = vpop.f32.mrb[0].mxu0
        %v8863 = vadd.f32 0.0, %v8862
        %v8864 = vpop.f32.mrb[0].mxu0
        %8865 = vmatprep.mubr.bf16.mxu0 0
        %8866 = vmatmul.mubr.bf16.gmra.mrb[0].mxu0 %v8766
        %v8867 = vpop.f32.mrb[0].mxu0
        %v8868 = vadd.f32 0.0, %v8867
        %v8869 = vpop.f32.mrb[0].mxu0
        %v8870 = vpop.f32.mrb[0].mxu0
        %v8871 = vadd.f32 0.0, %v8870
        %v8872 = vpop.f32.mrb[0].mxu0
        %8873 = vmatprep.mubr.bf16.mxu0 0
        %8874 = vmatmul.mubr.bf16.gmra.mrb[0].mxu0 %v8769
        %v8875 = vpop.f32.mrb[0].mxu0
        %v8876 = vadd.f32 0.0, %v8875
        %v8877 = vpop.f32.mrb[0].mxu0
        %v8878 = vpop.f32.mrb[0].mxu0
        %v8879 = vadd.f32 0.0, %v8878
        %v8880 = vpop.f32.mrb[0].mxu0
        %8881 = vmatprep.mubr.bf16.mxu0 0
        %8882 = vmatmul.mubr.bf16.gmra.mrb[0].mxu0 %v8772
        %v8883 = vpop.f32.mrb[0].mxu0
        %v8884 = vadd.f32 0.0, %v8883
        %v8885 = vpop.f32.mrb[0].mxu0
        %v8886 = vpop.f32.mrb[0].mxu0
        %v8887 = vadd.f32 0.0, %v8886
        %v8888 = vpop.f32.mrb[0].mxu0
        %8889 = vmatprep.mubr.bf16.mxu0 0
        %8890 = vmatmul.mubr.bf16.gmra.mrb[0].mxu0 %v8775
        %v8891 = vpop.f32.mrb[0].mxu0
        %v8892 = vadd.f32 0.0, %v8891
        %v8893 = vpop.f32.mrb[0].mxu0
        %v8894 = vpop.f32.mrb[0].mxu0
        %v8895 = vadd.f32 0.0, %v8894
        %v8896 = vpop.f32.mrb[0].mxu0
        %8897 = vmatprep.mubr.bf16.mxu0 0
        %8898 = vmatmul.mubr.bf16.gmra.mrb[0].mxu0 %v8778
        %v8899 = vpop.f32.mrb[0].mxu0
        %v8900 = vadd.f32 0.0, %v8899
        %v8901 = vpop.f32.mrb[0].mxu0
        %v8902 = vpop.f32.mrb[0].mxu0
        %v8903 = vadd.f32 0.0, %v8902
        %v8904 = vpop.f32.mrb[0].mxu0
        %8905 = vmatprep.mubr.bf16.mxu0 0
        %8906 = vmatmul.mubr.bf16.gmra.mrb[0].mxu0 %v8781
        %v8907 = vpop.f32.mrb[0].mxu0
        %v8908 = vadd.f32 0.0, %v8907
        %v8909 = vpop.f32.mrb[0].mxu0
        %v8910 = vpop.f32.mrb[0].mxu0
        %v8911 = vadd.f32 0.0, %v8910
        %v8912 = vpop.f32.mrb[0].mxu0
        %8913 = vmatprep.mubr.bf16.mxu0 0
        %8914 = vmatmul.mubr.bf16.gmra.mrb[0].mxu0 %v8784
        %v8915 = vpop.f32.mrb[0].mxu0
        %v8916 = vadd.f32 0.0, %v8915
        %v8917 = vpop.f32.mrb[0].mxu0
        %v8918 = vpop.f32.mrb[0].mxu0
        %v8919 = vadd.f32 0.0, %v8918
        %v8920 = vpop.f32.mrb[0].mxu0
        %8921 = vmatprep.mubr.bf16.mxu0 0
        %8922 = vmatmul.mubr.bf16.gmra.mrb[0].mxu0 %v8787
        %v8923 = vpop.f32.mrb[0].mxu0
        %v8924 = vadd.f32 0.0, %v8923
        %v8925 = vpop.f32.mrb[0].mxu0
        %v8926 = vpop.f32.mrb[0].mxu0
        %v8927 = vadd.f32 0.0, %v8926
        %v8928 = vpop.f32.mrb[0].mxu0
        %8929 = vmatprep.mubr.bf16.mxu0 0
        %8930 = vmatmul.mubr.bf16.gmra.mrb[0].mxu0 %v8790
        %v8931 = vpop.f32.mrb[0].mxu0
        %v8932 = vadd.f32 0.0, %v8931
        %v8933 = vpop.f32.mrb[0].mxu0
        %v8934 = vpop.f32.mrb[0].mxu0
        %v8935 = vadd.f32 0.0, %v8934
        %v8936 = vpop.f32.mrb[0].mxu0
        %8937 = vmatprep.mubr.bf16.mxu0 0
        %8938 = vmatmul.mubr.bf16.gmra.mrb[0].mxu0 %v8793
        %v8939 = vpop.f32.mrb[0].mxu0
        %v8940 = vadd.f32 0.0, %v8939
        %v8941 = vpop.f32.mrb[0].mxu0
        %v8942 = vpop.f32.mrb[0].mxu0
        %v8943 = vadd.f32 0.0, %v8942
        %v8944 = vpop.f32.mrb[0].mxu0
        %8945 = vmatprep.mubr.bf16.mxu0 0
        %8946 = vmatmul.mubr.bf16.gmra.mrb[0].mxu0 %v8796
        %v8947 = vpop.f32.mrb[0].mxu0
        %v8948 = vadd.f32 0.0, %v8947
        %v8949 = vpop.f32.mrb[0].mxu0
        %v8950 = vpop.f32.mrb[0].mxu0
        %v8951 = vadd.f32 0.0, %v8950
        %v8952 = vpop.f32.mrb[0].mxu0
        %8953 = vmatprep.mubr.bf16.mxu0 0
        %8954 = vmatmul.mubr.bf16.gmra.mrb[0].mxu0 %v8799
        %v8955 = vpop.f32.mrb[0].mxu0
        %v8956 = vadd.f32 0.0, %v8955
        %v8957 = vpop.f32.mrb[0].mxu0
        %v8958 = vpop.f32.mrb[0].mxu0
        %v8959 = vadd.f32 0.0, %v8958
        %v8960 = vpop.f32.mrb[0].mxu0
        %8961 = vdwg.mxu0
        %v8962 = vadd.f32 %v8575, %v8836
        %v8963 = vadd.f32 %v8576, %v8839
        %v8964 = vadd.f32 %v8577, %v8844
        %v8965 = vadd.f32 %v8578, %v8847
        %v8966 = vadd.f32 %v8579, %v8852
        %v8967 = vadd.f32 %v8580, %v8855
        %v8968 = vadd.f32 %v8581, %v8860
        %v8969 = vadd.f32 %v8582, %v8863
        %v8970 = vadd.f32 %v8583, %v8868
        %v8971 = vadd.f32 %v8584, %v8871
        %v8972 = vadd.f32 %v8585, %v8876
        %v8973 = vadd.f32 %v8586, %v8879
        %v8974 = vadd.f32 %v8587, %v8884
        %v8975 = vadd.f32 %v8588, %v8887
        %v8976 = vadd.f32 %v8589, %v8892
        %v8977 = vadd.f32 %v8590, %v8895
        %v8978 = vadd.f32 %v8591, %v8900
        %v8979 = vadd.f32 %v8592, %v8903
        %v8980 = vadd.f32 %v8593, %v8908
        %v8981 = vadd.f32 %v8594, %v8911
        %v8982 = vadd.f32 %v8595, %v8916
        %v8983 = vadd.f32 %v8596, %v8919
        %v8984 = vadd.f32 %v8597, %v8924
        %v8985 = vadd.f32 %v8598, %v8927
        %v8986 = vadd.f32 %v8599, %v8932
        %v8987 = vadd.f32 %v8600, %v8935
        %v8988 = vadd.f32 %v8601, %v8940
        %v8989 = vadd.f32 %v8602, %v8943
        %v8990 = vadd.f32 %v8603, %v8948
        %v8991 = vadd.f32 %v8604, %v8951
        %v8992 = vadd.f32 %v8605, %v8956
        %v8993 = vadd.f32 %v8606, %v8959
        %v8994 = vld [vmem:[%s8607] sm:$0xf]
        %v8995 = vld [vmem:[%s8607 + $0x4] sm:$0xf]
        %v8996 = vld [vmem:[%s8607 + $0x8] sm:$0x1]
        %v8997 = vld [vmem:[%s8607 + $0xc] sm:$0xf]
        %v8998 = vld [vmem:[%s8607 + $0x10] sm:$0xf]
        %v8999 = vld [vmem:[%s8607 + $0x14] sm:$0x1]
        %v9000 = vld [vmem:[%s8607 + $0x18] sm:$0xf]
        %v9001 = vld [vmem:[%s8607 + $0x1c] sm:$0xf]
        %v9002 = vld [vmem:[%s8607 + $0x20] sm:$0x1]
        %v9003 = vld [vmem:[%s8607 + $0x24] sm:$0xf]
        %v9004 = vld [vmem:[%s8607 + $0x28] sm:$0xf]
        %v9005 = vld [vmem:[%s8607 + $0x2c] sm:$0x1]
        %v9006 = vld [vmem:[%s8607 + $0x30] sm:$0xf]
        %v9007 = vld [vmem:[%s8607 + $0x34] sm:$0xf]
        %v9008 = vld [vmem:[%s8607 + $0x38] sm:$0x1]
        %v9009 = vld [vmem:[%s8607 + $0x3c] sm:$0xf]
        %v9010 = vld [vmem:[%s8607 + $0x40] sm:$0xf]
        %v9011 = vld [vmem:[%s8607 + $0x44] sm:$0x1]
        %v9012 = vld [vmem:[%s8607 + $0x48] sm:$0xf]
        %v9013 = vld [vmem:[%s8607 + $0x4c] sm:$0xf]
        %v9014 = vld [vmem:[%s8607 + $0x50] sm:$0x1]
        %v9015 = vld [vmem:[%s8607 + $0x54] sm:$0xf]
        %v9016 = vld [vmem:[%s8607 + $0x58] sm:$0xf]
        %v9017 = vld [vmem:[%s8607 + $0x5c] sm:$0x1]
        %v9018 = vld [vmem:[%s8607 + $0x60] sm:$0xf]
        %v9019 = vld [vmem:[%s8607 + $0x64] sm:$0xf]
        %v9020 = vld [vmem:[%s8607 + $0x68] sm:$0x1]
        %v9021 = vld [vmem:[%s8607 + $0x6c] sm:$0xf]
        %v9022 = vld [vmem:[%s8607 + $0x70] sm:$0xf]
        %v9023 = vld [vmem:[%s8607 + $0x74] sm:$0x1]
        %v9024 = vld [vmem:[%s8607 + $0x78] sm:$0xf]
        %v9025 = vld [vmem:[%s8607 + $0x7c] sm:$0xf]
        %v9026 = vld [vmem:[%s8607 + $0x80] sm:$0x1]
        %v9027 = vld [vmem:[%s8607 + $0x84] sm:$0xf]
        %v9028 = vld [vmem:[%s8607 + $0x88] sm:$0xf]
        %v9029 = vld [vmem:[%s8607 + $0x8c] sm:$0x1]
        %v9030 = vld [vmem:[%s8607 + $0x90] sm:$0xf]
        %v9031 = vld [vmem:[%s8607 + $0x94] sm:$0xf]
        %v9032 = vld [vmem:[%s8607 + $0x98] sm:$0x1]
        %v9033 = vld [vmem:[%s8607 + $0x9c] sm:$0xf]
        %v9034 = vld [vmem:[%s8607 + $0xa0] sm:$0xf]
        %v9035 = vld [vmem:[%s8607 + $0xa4] sm:$0x1]
        %v9036 = vld [vmem:[%s8607 + $0xa8] sm:$0xf]
        %v9037 = vld [vmem:[%s8607 + $0xac] sm:$0xf]
        %v9038 = vld [vmem:[%s8607 + $0xb0] sm:$0x1]
        %v9039 = vld [vmem:[%s8607 + $0xb4] sm:$0xf]
        %v9040 = vld [vmem:[%s8607 + $0xb8] sm:$0xf]
        %v9041 = vld [vmem:[%s8607 + $0xbc] sm:$0x1]
        %v9043 = vshrl.u32 %v8994, 16
        %v9045 = vrot.slane %v9043, 4
        %v9046 = vshll.u32 %v8994, 16
        %v9048 = vrot.slane %v9046, 5
        %v9049 = vor.u32 %v9045, %v9048
        %v9050 = vrot.slane %v9049, 4
        %v9052 = vshll.u32 %v8995, 16
        %v9054 = vrot.slane %v9052, 5
        %v9055 = vsel %vm1077, %v9050, %v9054
        %v9056 = vshrl.u32 %v8995, 16
        %v9058 = vrot.slane %v9056, 4
        %v9059 = vor.u32 %v9058, %v9054
        %v9060 = vrot.slane %v9059, 4
        %v9062 = vshll.u32 %v8996, 16
        %v9064 = vrot.slane %v9062, 5
        %v9065 = vsel %vm1077, %v9060, %v9064
        %v9067 = vshrl.u32 %v8997, 16
        %v9069 = vrot.slane %v9067, 4
        %v9070 = vshll.u32 %v8997, 16
        %v9072 = vrot.slane %v9070, 5
        %v9073 = vor.u32 %v9069, %v9072
        %v9074 = vrot.slane %v9073, 4
        %v9076 = vshll.u32 %v8998, 16
        %v9078 = vrot.slane %v9076, 5
        %v9079 = vsel %vm1077, %v9074, %v9078
        %v9080 = vshrl.u32 %v8998, 16
        %v9082 = vrot.slane %v9080, 4
        %v9083 = vor.u32 %v9082, %v9078
        %v9084 = vrot.slane %v9083, 4
        %v9086 = vshll.u32 %v8999, 16
        %v9088 = vrot.slane %v9086, 5
        %v9089 = vsel %vm1077, %v9084, %v9088
        %v9091 = vshrl.u32 %v9000, 16
        %v9093 = vrot.slane %v9091, 4
        %v9094 = vshll.u32 %v9000, 16
        %v9096 = vrot.slane %v9094, 5
        %v9097 = vor.u32 %v9093, %v9096
        %v9098 = vrot.slane %v9097, 4
        %v9100 = vshll.u32 %v9001, 16
        %v9102 = vrot.slane %v9100, 5
        %v9103 = vsel %vm1077, %v9098, %v9102
        %v9104 = vshrl.u32 %v9001, 16
        %v9106 = vrot.slane %v9104, 4
        %v9107 = vor.u32 %v9106, %v9102
        %v9108 = vrot.slane %v9107, 4
        %v9110 = vshll.u32 %v9002, 16
        %v9112 = vrot.slane %v9110, 5
        %v9113 = vsel %vm1077, %v9108, %v9112
        %v9115 = vshrl.u32 %v9003, 16
        %v9117 = vrot.slane %v9115, 4
        %v9118 = vshll.u32 %v9003, 16
        %v9120 = vrot.slane %v9118, 5
        %v9121 = vor.u32 %v9117, %v9120
        %v9122 = vrot.slane %v9121, 4
        %v9124 = vshll.u32 %v9004, 16
        %v9126 = vrot.slane %v9124, 5
        %v9127 = vsel %vm1077, %v9122, %v9126
        %v9128 = vshrl.u32 %v9004, 16
        %v9130 = vrot.slane %v9128, 4
        %v9131 = vor.u32 %v9130, %v9126
        %v9132 = vrot.slane %v9131, 4
        %v9134 = vshll.u32 %v9005, 16
        %v9136 = vrot.slane %v9134, 5
        %v9137 = vsel %vm1077, %v9132, %v9136
        %v9139 = vshrl.u32 %v9006, 16
        %v9141 = vrot.slane %v9139, 4
        %v9142 = vshll.u32 %v9006, 16
        %v9144 = vrot.slane %v9142, 5
        %v9145 = vor.u32 %v9141, %v9144
        %v9146 = vrot.slane %v9145, 4
        %v9148 = vshll.u32 %v9007, 16
        %v9150 = vrot.slane %v9148, 5
        %v9151 = vsel %vm1077, %v9146, %v9150
        %v9152 = vshrl.u32 %v9007, 16
        %v9154 = vrot.slane %v9152, 4
        %v9155 = vor.u32 %v9154, %v9150
        %v9156 = vrot.slane %v9155, 4
        %v9158 = vshll.u32 %v9008, 16
        %v9160 = vrot.slane %v9158, 5
        %v9161 = vsel %vm1077, %v9156, %v9160
        %v9163 = vshrl.u32 %v9009, 16
        %v9165 = vrot.slane %v9163, 4
        %v9166 = vshll.u32 %v9009, 16
        %v9168 = vrot.slane %v9166, 5
        %v9169 = vor.u32 %v9165, %v9168
        %v9170 = vrot.slane %v9169, 4
        %v9172 = vshll.u32 %v9010, 16
        %v9174 = vrot.slane %v9172, 5
        %v9175 = vsel %vm1077, %v9170, %v9174
        %v9176 = vshrl.u32 %v9010, 16
        %v9178 = vrot.slane %v9176, 4
        %v9179 = vor.u32 %v9178, %v9174
        %v9180 = vrot.slane %v9179, 4
        %v9182 = vshll.u32 %v9011, 16
        %v9184 = vrot.slane %v9182, 5
        %v9185 = vsel %vm1077, %v9180, %v9184
        %v9187 = vshrl.u32 %v9012, 16
        %v9189 = vrot.slane %v9187, 4
        %v9190 = vshll.u32 %v9012, 16
        %v9192 = vrot.slane %v9190, 5
        %v9193 = vor.u32 %v9189, %v9192
        %v9194 = vrot.slane %v9193, 4
        %v9196 = vshll.u32 %v9013, 16
        %v9198 = vrot.slane %v9196, 5
        %v9199 = vsel %vm1077, %v9194, %v9198
        %v9200 = vshrl.u32 %v9013, 16
        %v9202 = vrot.slane %v9200, 4
        %v9203 = vor.u32 %v9202, %v9198
        %v9204 = vrot.slane %v9203, 4
        %v9206 = vshll.u32 %v9014, 16
        %v9208 = vrot.slane %v9206, 5
        %v9209 = vsel %vm1077, %v9204, %v9208
        %v9211 = vshrl.u32 %v9015, 16
        %v9213 = vrot.slane %v9211, 4
        %v9214 = vshll.u32 %v9015, 16
        %v9216 = vrot.slane %v9214, 5
        %v9217 = vor.u32 %v9213, %v9216
        %v9218 = vrot.slane %v9217, 4
        %v9220 = vshll.u32 %v9016, 16
        %v9222 = vrot.slane %v9220, 5
        %v9223 = vsel %vm1077, %v9218, %v9222
        %v9224 = vshrl.u32 %v9016, 16
        %v9226 = vrot.slane %v9224, 4
        %v9227 = vor.u32 %v9226, %v9222
        %v9228 = vrot.slane %v9227, 4
        %v9230 = vshll.u32 %v9017, 16
        %v9232 = vrot.slane %v9230, 5
        %v9233 = vsel %vm1077, %v9228, %v9232
        %v9235 = vshrl.u32 %v9018, 16
        %v9237 = vrot.slane %v9235, 4
        %v9238 = vshll.u32 %v9018, 16
        %v9240 = vrot.slane %v9238, 5
        %v9241 = vor.u32 %v9237, %v9240
        %v9242 = vrot.slane %v9241, 4
        %v9244 = vshll.u32 %v9019, 16
        %v9246 = vrot.slane %v9244, 5
        %v9247 = vsel %vm1077, %v9242, %v9246
        %v9248 = vshrl.u32 %v9019, 16
        %v9250 = vrot.slane %v9248, 4
        %v9251 = vor.u32 %v9250, %v9246
        %v9252 = vrot.slane %v9251, 4
        %v9254 = vshll.u32 %v9020, 16
        %v9256 = vrot.slane %v9254, 5
        %v9257 = vsel %vm1077, %v9252, %v9256
        %v9259 = vshrl.u32 %v9021, 16
        %v9261 = vrot.slane %v9259, 4
        %v9262 = vshll.u32 %v9021, 16
        %v9264 = vrot.slane %v9262, 5
        %v9265 = vor.u32 %v9261, %v9264
        %v9266 = vrot.slane %v9265, 4
        %v9268 = vshll.u32 %v9022, 16
        %v9270 = vrot.slane %v9268, 5
        %v9271 = vsel %vm1077, %v9266, %v9270
        %v9272 = vshrl.u32 %v9022, 16
        %v9274 = vrot.slane %v9272, 4
        %v9275 = vor.u32 %v9274, %v9270
        %v9276 = vrot.slane %v9275, 4
        %v9278 = vshll.u32 %v9023, 16
        %v9280 = vrot.slane %v9278, 5
        %v9281 = vsel %vm1077, %v9276, %v9280
        %v9283 = vshrl.u32 %v9024, 16
        %v9285 = vrot.slane %v9283, 4
        %v9286 = vshll.u32 %v9024, 16
        %v9288 = vrot.slane %v9286, 5
        %v9289 = vor.u32 %v9285, %v9288
        %v9290 = vrot.slane %v9289, 4
        %v9292 = vshll.u32 %v9025, 16
        %v9294 = vrot.slane %v9292, 5
        %v9295 = vsel %vm1077, %v9290, %v9294
        %v9296 = vshrl.u32 %v9025, 16
        %v9298 = vrot.slane %v9296, 4
        %v9299 = vor.u32 %v9298, %v9294
        %v9300 = vrot.slane %v9299, 4
        %v9302 = vshll.u32 %v9026, 16
        %v9304 = vrot.slane %v9302, 5
        %v9305 = vsel %vm1077, %v9300, %v9304
        %v9307 = vshrl.u32 %v9027, 16
        %v9309 = vrot.slane %v9307, 4
        %v9310 = vshll.u32 %v9027, 16
        %v9312 = vrot.slane %v9310, 5
        %v9313 = vor.u32 %v9309, %v9312
        %v9314 = vrot.slane %v9313, 4
        %v9316 = vshll.u32 %v9028, 16
        %v9318 = vrot.slane %v9316, 5
        %v9319 = vsel %vm1077, %v9314, %v9318
        %v9320 = vshrl.u32 %v9028, 16
        %v9322 = vrot.slane %v9320, 4
        %v9323 = vor.u32 %v9322, %v9318
        %v9324 = vrot.slane %v9323, 4
        %v9326 = vshll.u32 %v9029, 16
        %v9328 = vrot.slane %v9326, 5
        %v9329 = vsel %vm1077, %v9324, %v9328
        %v9331 = vshrl.u32 %v9030, 16
        %v9333 = vrot.slane %v9331, 4
        %v9334 = vshll.u32 %v9030, 16
        %v9336 = vrot.slane %v9334, 5
        %v9337 = vor.u32 %v9333, %v9336
        %v9338 = vrot.slane %v9337, 4
        %v9340 = vshll.u32 %v9031, 16
        %v9342 = vrot.slane %v9340, 5
        %v9343 = vsel %vm1077, %v9338, %v9342
        %v9344 = vshrl.u32 %v9031, 16
        %v9346 = vrot.slane %v9344, 4
        %v9347 = vor.u32 %v9346, %v9342
        %v9348 = vrot.slane %v9347, 4
        %v9350 = vshll.u32 %v9032, 16
        %v9352 = vrot.slane %v9350, 5
        %v9353 = vsel %vm1077, %v9348, %v9352
        %v9355 = vshrl.u32 %v9033, 16
        %v9357 = vrot.slane %v9355, 4
        %v9358 = vshll.u32 %v9033, 16
        %v9360 = vrot.slane %v9358, 5
        %v9361 = vor.u32 %v9357, %v9360
        %v9362 = vrot.slane %v9361, 4
        %v9364 = vshll.u32 %v9034, 16
        %v9366 = vrot.slane %v9364, 5
        %v9367 = vsel %vm1077, %v9362, %v9366
        %v9368 = vshrl.u32 %v9034, 16
        %v9370 = vrot.slane %v9368, 4
        %v9371 = vor.u32 %v9370, %v9366
        %v9372 = vrot.slane %v9371, 4
        %v9374 = vshll.u32 %v9035, 16
        %v9376 = vrot.slane %v9374, 5
        %v9377 = vsel %vm1077, %v9372, %v9376
        %v9379 = vshrl.u32 %v9036, 16
        %v9381 = vrot.slane %v9379, 4
        %v9382 = vshll.u32 %v9036, 16
        %v9384 = vrot.slane %v9382, 5
        %v9385 = vor.u32 %v9381, %v9384
        %v9386 = vrot.slane %v9385, 4
        %v9388 = vshll.u32 %v9037, 16
        %v9390 = vrot.slane %v9388, 5
        %v9391 = vsel %vm1077, %v9386, %v9390
        %v9392 = vshrl.u32 %v9037, 16
        %v9394 = vrot.slane %v9392, 4
        %v9395 = vor.u32 %v9394, %v9390
        %v9396 = vrot.slane %v9395, 4
        %v9398 = vshll.u32 %v9038, 16
        %v9400 = vrot.slane %v9398, 5
        %v9401 = vsel %vm1077, %v9396, %v9400
        %v9403 = vshrl.u32 %v9039, 16
        %v9405 = vrot.slane %v9403, 4
        %v9406 = vshll.u32 %v9039, 16
        %v9408 = vrot.slane %v9406, 5
        %v9409 = vor.u32 %v9405, %v9408
        %v9410 = vrot.slane %v9409, 4
        %v9412 = vshll.u32 %v9040, 16
        %v9414 = vrot.slane %v9412, 5
        %v9415 = vsel %vm1077, %v9410, %v9414
        %v9416 = vshrl.u32 %v9040, 16
        %v9418 = vrot.slane %v9416, 4
        %v9419 = vor.u32 %v9418, %v9414
        %v9420 = vrot.slane %v9419, 4
        %v9422 = vshll.u32 %v9041, 16
        %v9424 = vrot.slane %v9422, 5
        %v9425 = vsel %vm1077, %v9420, %v9424
        %s9426 = scalar_lea.vmem [#allocation10], 128
        %v9427 = vld [vmem:[%s9426] sm:$0xf]
        %v9428 = vld [vmem:[%s9426 + $0x4] sm:$0xf]
        %v9429 = vld [vmem:[%s9426 + $0x8] sm:$0xf]
        %v9430 = vld [vmem:[%s9426 + $0xc] sm:$0xf]
        %v9431 = vld [vmem:[%s9426 + $0x10] sm:$0xf]
        %v9432 = vld [vmem:[%s9426 + $0x14] sm:$0xf]
        %v9433 = vld [vmem:[%s9426 + $0x18] sm:$0xf]
        %v9434 = vld [vmem:[%s9426 + $0x1c] sm:$0xf]
        %v9435 = vunpack.c.l.b16 %v9055
        %v9436 = vunpack.c.l.b16 %v9065
        %v9437 = vunpack.c.l.b16 %v9079
        %v9438 = vunpack.c.l.b16 %v9089
        %v9439 = vunpack.c.l.b16 %v9103
        %v9440 = vunpack.c.l.b16 %v9113
        %v9441 = vunpack.c.l.b16 %v9127
        %v9442 = vunpack.c.l.b16 %v9137
        %v9443 = vunpack.c.l.b16 %v9151
        %v9444 = vunpack.c.l.b16 %v9161
        %v9445 = vunpack.c.l.b16 %v9175
        %v9446 = vunpack.c.l.b16 %v9185
        %v9447 = vunpack.c.l.b16 %v9199
        %v9448 = vunpack.c.l.b16 %v9209
        %v9449 = vunpack.c.l.b16 %v9223
        %v9450 = vunpack.c.l.b16 %v9233
        %v9451 = vunpack.c.l.b16 %v9247
        %v9452 = vunpack.c.l.b16 %v9257
        %v9453 = vunpack.c.l.b16 %v9271
        %v9454 = vunpack.c.l.b16 %v9281
        %v9455 = vunpack.c.l.b16 %v9295
        %v9456 = vunpack.c.l.b16 %v9305
        %v9457 = vunpack.c.l.b16 %v9319
        %v9458 = vunpack.c.l.b16 %v9329
        %v9459 = vunpack.c.l.b16 %v9343
        %v9460 = vunpack.c.l.b16 %v9353
        %v9461 = vunpack.c.l.b16 %v9367
        %v9462 = vunpack.c.l.b16 %v9377
        %v9463 = vunpack.c.l.b16 %v9391
        %v9464 = vunpack.c.l.b16 %v9401
        %v9465 = vunpack.c.l.b16 %v9415
        %v9466 = vunpack.c.l.b16 %v9425
        %v9467 = vpack.c.b16 %v9436, %v9435
        %v9468 = vpack.c.b16 %v9438, %v9437
        %v9469 = vpack.c.b16 %v9440, %v9439
        %v9470 = vpack.c.b16 %v9442, %v9441
        %v9471 = vpack.c.b16 %v9444, %v9443
        %v9472 = vpack.c.b16 %v9446, %v9445
        %v9473 = vpack.c.b16 %v9448, %v9447
        %v9474 = vpack.c.b16 %v9450, %v9449
        %v9475 = vpack.c.b16 %v9452, %v9451
        %v9476 = vpack.c.b16 %v9454, %v9453
        %v9477 = vpack.c.b16 %v9456, %v9455
        %v9478 = vpack.c.b16 %v9458, %v9457
        %v9479 = vpack.c.b16 %v9460, %v9459
        %v9480 = vpack.c.b16 %v9462, %v9461
        %v9481 = vpack.c.b16 %v9464, %v9463
        %v9482 = vpack.c.b16 %v9466, %v9465
        %v9491 = vunpack.c.l.b16 %v9427
        %v9492 = vunpack.c.l.b16 %v9428
        %v9493 = vunpack.c.l.b16 %v9429
        %v9494 = vunpack.c.l.b16 %v9430
        %v9495 = vunpack.c.l.b16 %v9431
        %v9496 = vunpack.c.l.b16 %v9432
        %v9497 = vunpack.c.l.b16 %v9433
        %v9498 = vunpack.c.l.b16 %v9434
        %v9499 = vpack.c.b16 %v9492, %v9491
        %v9500 = vpack.c.b16 %v9494, %v9493
        %v9501 = vpack.c.b16 %v9496, %v9495
        %v9502 = vpack.c.b16 %v9498, %v9497
        %v9508 = vsel %vm1597, %v9467, 0
        %v9511 = vsel %vm1597, %v9468, 0
        %v9514 = vsel %vm1597, %v9469, 0
        %v9517 = vsel %vm1597, %v9470, 0
        %v9520 = vsel %vm1597, %v9471, 0
        %v9523 = vsel %vm1597, %v9472, 0
        %v9526 = vsel %vm1597, %v9473, 0
        %v9529 = vsel %vm1597, %v9474, 0
        %v9532 = vsel %vm1597, %v9475, 0
        %v9535 = vsel %vm1597, %v9476, 0
        %v9538 = vsel %vm1597, %v9477, 0
        %v9541 = vsel %vm1597, %v9478, 0
        %v9544 = vsel %vm1597, %v9479, 0
        %v9547 = vsel %vm1597, %v9480, 0
        %v9550 = vsel %vm1597, %v9481, 0
        %v9553 = vsel %vm1597, %v9482, 0
        %9555 = vmatprep.subr.bf16.mxu0 0
        %9556 = vmatpush1.bf16.msra.mxu0 %v9499
        %9557 = vmatprep.subr.bf16.mxu0 0
        %9558 = vmatpush1.bf16.msra.mxu0 %v9500
        %9559 = vmatprep.subr.bf16.mxu0 0
        %9560 = vmatpush1.bf16.msra.mxu0 %v9501
        %9561 = vmatprep.subr.bf16.mxu0 0
        %9562 = vmatpush1.bf16.msra.mxu0 %v9502
        %9563 = vmatprep.subr.bf16.mxu0 0
        %9564 = vmatpush1.bf16.msra.mxu0 0
        %9565 = vmatprep.subr.bf16.mxu0 0
        %9566 = vmatpush1.bf16.msra.mxu0 0
        %9567 = vmatprep.subr.bf16.mxu0 0
        %9568 = vmatpush1.bf16.msra.mxu0 0
        %9569 = vmatprep.subr.bf16.mxu0 0
        %9570 = vmatpush1.bf16.msra.mxu0 0
        %9571 = vmatprep.subr.bf16.mxu0 0
        %9572 = vmatpush1.bf16.msra.mxu0 0
        %9573 = vmatprep.subr.bf16.mxu0 0
        %9574 = vmatpush1.bf16.msra.mxu0 0
        %9575 = vmatprep.subr.bf16.mxu0 0
        %9576 = vmatpush1.bf16.msra.mxu0 0
        %9577 = vmatprep.subr.bf16.mxu0 0
        %9578 = vmatpush1.bf16.msra.mxu0 0
        %9579 = vmatprep.subr.bf16.mxu0 0
        %9580 = vmatpush1.bf16.msra.mxu0 0
        %9581 = vmatprep.subr.bf16.mxu0 0
        %9582 = vmatpush1.bf16.msra.mxu0 0
        %9583 = vmatprep.subr.bf16.mxu0 0
        %9584 = vmatpush1.bf16.msra.mxu0 0
        %9585 = vmatprep.subr.bf16.mxu0 0
        %9586 = vmatpush1.bf16.msra.mxu0 0
        %9587 = vmatprep.mubr.bf16.mxu0 0
        %9588 = vmatmul.mubr.bf16.gmra.mrb[0].mxu0 %v9508
        %v9589 = vpop.f32.mrb[0].mxu0
        %v9590 = vadd.f32 0.0, %v9589
        %v9591 = vpop.f32.mrb[0].mxu0
        %v9592 = vpop.f32.mrb[0].mxu0
        %v9593 = vadd.f32 0.0, %v9592
        %v9594 = vpop.f32.mrb[0].mxu0
        %9595 = vmatprep.mubr.bf16.mxu0 0
        %9596 = vmatmul.mubr.bf16.gmra.mrb[0].mxu0 %v9511
        %v9597 = vpop.f32.mrb[0].mxu0
        %v9598 = vadd.f32 0.0, %v9597
        %v9599 = vpop.f32.mrb[0].mxu0
        %v9600 = vpop.f32.mrb[0].mxu0
        %v9601 = vadd.f32 0.0, %v9600
        %v9602 = vpop.f32.mrb[0].mxu0
        %9603 = vmatprep.mubr.bf16.mxu0 0
        %9604 = vmatmul.mubr.bf16.gmra.mrb[0].mxu0 %v9514
        %v9605 = vpop.f32.mrb[0].mxu0
        %v9606 = vadd.f32 0.0, %v9605
        %v9607 = vpop.f32.mrb[0].mxu0
        %v9608 = vpop.f32.mrb[0].mxu0
        %v9609 = vadd.f32 0.0, %v9608
        %v9610 = vpop.f32.mrb[0].mxu0
        %9611 = vmatprep.mubr.bf16.mxu0 0
        %9612 = vmatmul.mubr.bf16.gmra.mrb[0].mxu0 %v9517
        %v9613 = vpop.f32.mrb[0].mxu0
        %v9614 = vadd.f32 0.0, %v9613
        %v9615 = vpop.f32.mrb[0].mxu0
        %v9616 = vpop.f32.mrb[0].mxu0
        %v9617 = vadd.f32 0.0, %v9616
        %v9618 = vpop.f32.mrb[0].mxu0
        %9619 = vmatprep.mubr.bf16.mxu0 0
        %9620 = vmatmul.mubr.bf16.gmra.mrb[0].mxu0 %v9520
        %v9621 = vpop.f32.mrb[0].mxu0
        %v9622 = vadd.f32 0.0, %v9621
        %v9623 = vpop.f32.mrb[0].mxu0
        %v9624 = vpop.f32.mrb[0].mxu0
        %v9625 = vadd.f32 0.0, %v9624
        %v9626 = vpop.f32.mrb[0].mxu0
        %9627 = vmatprep.mubr.bf16.mxu0 0
        %9628 = vmatmul.mubr.bf16.gmra.mrb[0].mxu0 %v9523
        %v9629 = vpop.f32.mrb[0].mxu0
        %v9630 = vadd.f32 0.0, %v9629
        %v9631 = vpop.f32.mrb[0].mxu0
        %v9632 = vpop.f32.mrb[0].mxu0
        %v9633 = vadd.f32 0.0, %v9632
        %v9634 = vpop.f32.mrb[0].mxu0
        %9635 = vmatprep.mubr.bf16.mxu0 0
        %9636 = vmatmul.mubr.bf16.gmra.mrb[0].mxu0 %v9526
        %v9637 = vpop.f32.mrb[0].mxu0
        %v9638 = vadd.f32 0.0, %v9637
        %v9639 = vpop.f32.mrb[0].mxu0
        %v9640 = vpop.f32.mrb[0].mxu0
        %v9641 = vadd.f32 0.0, %v9640
        %v9642 = vpop.f32.mrb[0].mxu0
        %9643 = vmatprep.mubr.bf16.mxu0 0
        %9644 = vmatmul.mubr.bf16.gmra.mrb[0].mxu0 %v9529
        %v9645 = vpop.f32.mrb[0].mxu0
        %v9646 = vadd.f32 0.0, %v9645
        %v9647 = vpop.f32.mrb[0].mxu0
        %v9648 = vpop.f32.mrb[0].mxu0
        %v9649 = vadd.f32 0.0, %v9648
        %v9650 = vpop.f32.mrb[0].mxu0
        %9651 = vmatprep.mubr.bf16.mxu0 0
        %9652 = vmatmul.mubr.bf16.gmra.mrb[0].mxu0 %v9532
        %v9653 = vpop.f32.mrb[0].mxu0
        %v9654 = vadd.f32 0.0, %v9653
        %v9655 = vpop.f32.mrb[0].mxu0
        %v9656 = vpop.f32.mrb[0].mxu0
        %v9657 = vadd.f32 0.0, %v9656
        %v9658 = vpop.f32.mrb[0].mxu0
        %9659 = vmatprep.mubr.bf16.mxu0 0
        %9660 = vmatmul.mubr.bf16.gmra.mrb[0].mxu0 %v9535
        %v9661 = vpop.f32.mrb[0].mxu0
        %v9662 = vadd.f32 0.0, %v9661
        %v9663 = vpop.f32.mrb[0].mxu0
        %v9664 = vpop.f32.mrb[0].mxu0
        %v9665 = vadd.f32 0.0, %v9664
        %v9666 = vpop.f32.mrb[0].mxu0
        %9667 = vmatprep.mubr.bf16.mxu0 0
        %9668 = vmatmul.mubr.bf16.gmra.mrb[0].mxu0 %v9538
        %v9669 = vpop.f32.mrb[0].mxu0
        %v9670 = vadd.f32 0.0, %v9669
        %v9671 = vpop.f32.mrb[0].mxu0
        %v9672 = vpop.f32.mrb[0].mxu0
        %v9673 = vadd.f32 0.0, %v9672
        %v9674 = vpop.f32.mrb[0].mxu0
        %9675 = vmatprep.mubr.bf16.mxu0 0
        %9676 = vmatmul.mubr.bf16.gmra.mrb[0].mxu0 %v9541
        %v9677 = vpop.f32.mrb[0].mxu0
        %v9678 = vadd.f32 0.0, %v9677
        %v9679 = vpop.f32.mrb[0].mxu0
        %v9680 = vpop.f32.mrb[0].mxu0
        %v9681 = vadd.f32 0.0, %v9680
        %v9682 = vpop.f32.mrb[0].mxu0
        %9683 = vmatprep.mubr.bf16.mxu0 0
        %9684 = vmatmul.mubr.bf16.gmra.mrb[0].mxu0 %v9544
        %v9685 = vpop.f32.mrb[0].mxu0
        %v9686 = vadd.f32 0.0, %v9685
        %v9687 = vpop.f32.mrb[0].mxu0
        %v9688 = vpop.f32.mrb[0].mxu0
        %v9689 = vadd.f32 0.0, %v9688
        %v9690 = vpop.f32.mrb[0].mxu0
        %9691 = vmatprep.mubr.bf16.mxu0 0
        %9692 = vmatmul.mubr.bf16.gmra.mrb[0].mxu0 %v9547
        %v9693 = vpop.f32.mrb[0].mxu0
        %v9694 = vadd.f32 0.0, %v9693
        %v9695 = vpop.f32.mrb[0].mxu0
        %v9696 = vpop.f32.mrb[0].mxu0
        %v9697 = vadd.f32 0.0, %v9696
        %v9698 = vpop.f32.mrb[0].mxu0
        %9699 = vmatprep.mubr.bf16.mxu0 0
        %9700 = vmatmul.mubr.bf16.gmra.mrb[0].mxu0 %v9550
        %v9701 = vpop.f32.mrb[0].mxu0
        %v9702 = vadd.f32 0.0, %v9701
        %v9703 = vpop.f32.mrb[0].mxu0
        %v9704 = vpop.f32.mrb[0].mxu0
        %v9705 = vadd.f32 0.0, %v9704
        %v9706 = vpop.f32.mrb[0].mxu0
        %9707 = vmatprep.mubr.bf16.mxu0 0
        %9708 = vmatmul.mubr.bf16.gmra.mrb[0].mxu0 %v9553
        %v9709 = vpop.f32.mrb[0].mxu0
        %v9710 = vadd.f32 0.0, %v9709
        %v9711 = vpop.f32.mrb[0].mxu0
        %v9712 = vpop.f32.mrb[0].mxu0
        %v9713 = vadd.f32 0.0, %v9712
        %v9714 = vpop.f32.mrb[0].mxu0
        %9715 = vdwg.mxu0
        %v9716 = vadd.f32 %v8962, %v9590
        %v9717 = vadd.f32 %v8963, %v9593
        %v9718 = vadd.f32 %v8964, %v9598
        %v9719 = vadd.f32 %v8965, %v9601
        %v9720 = vadd.f32 %v8966, %v9606
        %v9721 = vadd.f32 %v8967, %v9609
        %v9722 = vadd.f32 %v8968, %v9614
        %v9723 = vadd.f32 %v8969, %v9617
        %v9724 = vadd.f32 %v8970, %v9622
        %v9725 = vadd.f32 %v8971, %v9625
        %v9726 = vadd.f32 %v8972, %v9630
        %v9727 = vadd.f32 %v8973, %v9633
        %v9728 = vadd.f32 %v8974, %v9638
        %v9729 = vadd.f32 %v8975, %v9641
        %v9730 = vadd.f32 %v8976, %v9646
        %v9731 = vadd.f32 %v8977, %v9649
        %v9732 = vadd.f32 %v8978, %v9654
        %v9733 = vadd.f32 %v8979, %v9657
        %v9734 = vadd.f32 %v8980, %v9662
        %v9735 = vadd.f32 %v8981, %v9665
        %v9736 = vadd.f32 %v8982, %v9670
        %v9737 = vadd.f32 %v8983, %v9673
        %v9738 = vadd.f32 %v8984, %v9678
        %v9739 = vadd.f32 %v8985, %v9681
        %v9740 = vadd.f32 %v8986, %v9686
        %v9741 = vadd.f32 %v8987, %v9689
        %v9742 = vadd.f32 %v8988, %v9694
        %v9743 = vadd.f32 %v8989, %v9697
        %v9744 = vadd.f32 %v8990, %v9702
        %v9745 = vadd.f32 %v8991, %v9705
        %v9746 = vadd.f32 %v8992, %v9710
        %v9747 = vadd.f32 %v8993, %v9713
        %v9748 = vld [vmem:[%s8607] sm:$0xe]
        %v9749 = vld [vmem:[%s8607 + $0xc] sm:$0xe]
        %v9750 = vld [vmem:[%s8607 + $0x18] sm:$0xe]
        %v9751 = vld [vmem:[%s8607 + $0x24] sm:$0xe]
        %v9752 = vld [vmem:[%s8607 + $0x30] sm:$0xe]
        %v9753 = vld [vmem:[%s8607 + $0x3c] sm:$0xe]
        %v9754 = vld [vmem:[%s8607 + $0x48] sm:$0xe]
        %v9755 = vld [vmem:[%s8607 + $0x54] sm:$0xe]
        %v9756 = vld [vmem:[%s8607 + $0x60] sm:$0xe]
        %v9757 = vld [vmem:[%s8607 + $0x6c] sm:$0xe]
        %v9758 = vld [vmem:[%s8607 + $0x78] sm:$0xe]
        %v9759 = vld [vmem:[%s8607 + $0x84] sm:$0xe]
        %v9760 = vld [vmem:[%s8607 + $0x90] sm:$0xe]
        %v9761 = vld [vmem:[%s8607 + $0x9c] sm:$0xe]
        %v9762 = vld [vmem:[%s8607 + $0xa8] sm:$0xe]
        %v9763 = vld [vmem:[%s8607 + $0xb4] sm:$0xe]
        %v9812 = vrot.slane %v9748, 5
        %v9813 = vrot.slane %v9812, 4
        %v9814 = vrot.slane %v8995, 5
        %v9815 = vsel %vm2230, %v9813, %v9814
        %v9816 = vrot.slane %v9814, 4
        %v9817 = vrot.slane %v8996, 5
        %v9818 = vsel %vm2230, %v9816, %v9817
        %v9819 = vrot.slane %v9749, 5
        %v9820 = vrot.slane %v9819, 4
        %v9821 = vrot.slane %v8998, 5
        %v9822 = vsel %vm2230, %v9820, %v9821
        %v9823 = vrot.slane %v9821, 4
        %v9824 = vrot.slane %v8999, 5
        %v9825 = vsel %vm2230, %v9823, %v9824
        %v9826 = vrot.slane %v9750, 5
        %v9827 = vrot.slane %v9826, 4
        %v9828 = vrot.slane %v9001, 5
        %v9829 = vsel %vm2230, %v9827, %v9828
        %v9830 = vrot.slane %v9828, 4
        %v9831 = vrot.slane %v9002, 5
        %v9832 = vsel %vm2230, %v9830, %v9831
        %v9833 = vrot.slane %v9751, 5
        %v9834 = vrot.slane %v9833, 4
        %v9835 = vrot.slane %v9004, 5
        %v9836 = vsel %vm2230, %v9834, %v9835
        %v9837 = vrot.slane %v9835, 4
        %v9838 = vrot.slane %v9005, 5
        %v9839 = vsel %vm2230, %v9837, %v9838
        %v9840 = vrot.slane %v9752, 5
        %v9841 = vrot.slane %v9840, 4
        %v9842 = vrot.slane %v9007, 5
        %v9843 = vsel %vm2230, %v9841, %v9842
        %v9844 = vrot.slane %v9842, 4
        %v9845 = vrot.slane %v9008, 5
        %v9846 = vsel %vm2230, %v9844, %v9845
        %v9847 = vrot.slane %v9753, 5
        %v9848 = vrot.slane %v9847, 4
        %v9849 = vrot.slane %v9010, 5
        %v9850 = vsel %vm2230, %v9848, %v9849
        %v9851 = vrot.slane %v9849, 4
        %v9852 = vrot.slane %v9011, 5
        %v9853 = vsel %vm2230, %v9851, %v9852
        %v9854 = vrot.slane %v9754, 5
        %v9855 = vrot.slane %v9854, 4
        %v9856 = vrot.slane %v9013, 5
        %v9857 = vsel %vm2230, %v9855, %v9856
        %v9858 = vrot.slane %v9856, 4
        %v9859 = vrot.slane %v9014, 5
        %v9860 = vsel %vm2230, %v9858, %v9859
        %v9861 = vrot.slane %v9755, 5
        %v9862 = vrot.slane %v9861, 4
        %v9863 = vrot.slane %v9016, 5
        %v9864 = vsel %vm2230, %v9862, %v9863
        %v9865 = vrot.slane %v9863, 4
        %v9866 = vrot.slane %v9017, 5
        %v9867 = vsel %vm2230, %v9865, %v9866
        %v9868 = vrot.slane %v9756, 5
        %v9869 = vrot.slane %v9868, 4
        %v9870 = vrot.slane %v9019, 5
        %v9871 = vsel %vm2230, %v9869, %v9870
        %v9872 = vrot.slane %v9870, 4
        %v9873 = vrot.slane %v9020, 5
        %v9874 = vsel %vm2230, %v9872, %v9873
        %v9875 = vrot.slane %v9757, 5
        %v9876 = vrot.slane %v9875, 4
        %v9877 = vrot.slane %v9022, 5
        %v9878 = vsel %vm2230, %v9876, %v9877
        %v9879 = vrot.slane %v9877, 4
        %v9880 = vrot.slane %v9023, 5
        %v9881 = vsel %vm2230, %v9879, %v9880
        %v9882 = vrot.slane %v9758, 5
        %v9883 = vrot.slane %v9882, 4
        %v9884 = vrot.slane %v9025, 5
        %v9885 = vsel %vm2230, %v9883, %v9884
        %v9886 = vrot.slane %v9884, 4
        %v9887 = vrot.slane %v9026, 5
        %v9888 = vsel %vm2230, %v9886, %v9887
        %v9889 = vrot.slane %v9759, 5
        %v9890 = vrot.slane %v9889, 4
        %v9891 = vrot.slane %v9028, 5
        %v9892 = vsel %vm2230, %v9890, %v9891
        %v9893 = vrot.slane %v9891, 4
        %v9894 = vrot.slane %v9029, 5
        %v9895 = vsel %vm2230, %v9893, %v9894
        %v9896 = vrot.slane %v9760, 5
        %v9897 = vrot.slane %v9896, 4
        %v9898 = vrot.slane %v9031, 5
        %v9899 = vsel %vm2230, %v9897, %v9898
        %v9900 = vrot.slane %v9898, 4
        %v9901 = vrot.slane %v9032, 5
        %v9902 = vsel %vm2230, %v9900, %v9901
        %v9903 = vrot.slane %v9761, 5
        %v9904 = vrot.slane %v9903, 4
        %v9905 = vrot.slane %v9034, 5
        %v9906 = vsel %vm2230, %v9904, %v9905
        %v9907 = vrot.slane %v9905, 4
        %v9908 = vrot.slane %v9035, 5
        %v9909 = vsel %vm2230, %v9907, %v9908
        %v9910 = vrot.slane %v9762, 5
        %v9911 = vrot.slane %v9910, 4
        %v9912 = vrot.slane %v9037, 5
        %v9913 = vsel %vm2230, %v9911, %v9912
        %v9914 = vrot.slane %v9912, 4
        %v9915 = vrot.slane %v9038, 5
        %v9916 = vsel %vm2230, %v9914, %v9915
        %v9917 = vrot.slane %v9763, 5
        %v9918 = vrot.slane %v9917, 4
        %v9919 = vrot.slane %v9040, 5
        %v9920 = vsel %vm2230, %v9918, %v9919
        %v9921 = vrot.slane %v9919, 4
        %v9922 = vrot.slane %v9041, 5
        %v9923 = vsel %vm2230, %v9921, %v9922
        %s9924 = scalar_lea.vmem [#allocation10], 160
        %v9925 = vld [vmem:[%s9924] sm:$0xf]
        %v9926 = vld [vmem:[%s9924 + $0x4] sm:$0xf]
        %v9927 = vld [vmem:[%s9924 + $0x8] sm:$0xf]
        %v9928 = vld [vmem:[%s9924 + $0xc] sm:$0xf]
        %v9929 = vld [vmem:[%s9924 + $0x10] sm:$0xf]
        %v9930 = vld [vmem:[%s9924 + $0x14] sm:$0xf]
        %v9931 = vld [vmem:[%s9924 + $0x18] sm:$0xf]
        %v9932 = vld [vmem:[%s9924 + $0x1c] sm:$0xf]
        %v9933 = vunpack.c.l.b16 %v9815
        %v9934 = vunpack.c.l.b16 %v9818
        %v9935 = vunpack.c.l.b16 %v9822
        %v9936 = vunpack.c.l.b16 %v9825
        %v9937 = vunpack.c.l.b16 %v9829
        %v9938 = vunpack.c.l.b16 %v9832
        %v9939 = vunpack.c.l.b16 %v9836
        %v9940 = vunpack.c.l.b16 %v9839
        %v9941 = vunpack.c.l.b16 %v9843
        %v9942 = vunpack.c.l.b16 %v9846
        %v9943 = vunpack.c.l.b16 %v9850
        %v9944 = vunpack.c.l.b16 %v9853
        %v9945 = vunpack.c.l.b16 %v9857
        %v9946 = vunpack.c.l.b16 %v9860
        %v9947 = vunpack.c.l.b16 %v9864
        %v9948 = vunpack.c.l.b16 %v9867
        %v9949 = vunpack.c.l.b16 %v9871
        %v9950 = vunpack.c.l.b16 %v9874
        %v9951 = vunpack.c.l.b16 %v9878
        %v9952 = vunpack.c.l.b16 %v9881
        %v9953 = vunpack.c.l.b16 %v9885
        %v9954 = vunpack.c.l.b16 %v9888
        %v9955 = vunpack.c.l.b16 %v9892
        %v9956 = vunpack.c.l.b16 %v9895
        %v9957 = vunpack.c.l.b16 %v9899
        %v9958 = vunpack.c.l.b16 %v9902
        %v9959 = vunpack.c.l.b16 %v9906
        %v9960 = vunpack.c.l.b16 %v9909
        %v9961 = vunpack.c.l.b16 %v9913
        %v9962 = vunpack.c.l.b16 %v9916
        %v9963 = vunpack.c.l.b16 %v9920
        %v9964 = vunpack.c.l.b16 %v9923
        %v9965 = vpack.c.b16 %v9934, %v9933
        %v9966 = vpack.c.b16 %v9936, %v9935
        %v9967 = vpack.c.b16 %v9938, %v9937
        %v9968 = vpack.c.b16 %v9940, %v9939
        %v9969 = vpack.c.b16 %v9942, %v9941
        %v9970 = vpack.c.b16 %v9944, %v9943
        %v9971 = vpack.c.b16 %v9946, %v9945
        %v9972 = vpack.c.b16 %v9948, %v9947
        %v9973 = vpack.c.b16 %v9950, %v9949
        %v9974 = vpack.c.b16 %v9952, %v9951
        %v9975 = vpack.c.b16 %v9954, %v9953
        %v9976 = vpack.c.b16 %v9956, %v9955
        %v9977 = vpack.c.b16 %v9958, %v9957
        %v9978 = vpack.c.b16 %v9960, %v9959
        %v9979 = vpack.c.b16 %v9962, %v9961
        %v9980 = vpack.c.b16 %v9964, %v9963
        %v9989 = vunpack.c.l.b16 %v9925
        %v9990 = vunpack.c.l.b16 %v9926
        %v9991 = vunpack.c.l.b16 %v9927
        %v9992 = vunpack.c.l.b16 %v9928
        %v9993 = vunpack.c.l.b16 %v9929
        %v9994 = vunpack.c.l.b16 %v9930
        %v9995 = vunpack.c.l.b16 %v9931
        %v9996 = vunpack.c.l.b16 %v9932
        %v9997 = vpack.c.b16 %v9990, %v9989
        %v9998 = vpack.c.b16 %v9992, %v9991
        %v9999 = vpack.c.b16 %v9994, %v9993
        %v10000 = vpack.c.b16 %v9996, %v9995
        %v10006 = vsel %vm1597, %v9965, 0
        %v10009 = vsel %vm1597, %v9966, 0
        %v10012 = vsel %vm1597, %v9967, 0
        %v10015 = vsel %vm1597, %v9968, 0
        %v10018 = vsel %vm1597, %v9969, 0
        %v10021 = vsel %vm1597, %v9970, 0
        %v10024 = vsel %vm1597, %v9971, 0
        %v10027 = vsel %vm1597, %v9972, 0
        %v10030 = vsel %vm1597, %v9973, 0
        %v10033 = vsel %vm1597, %v9974, 0
        %v10036 = vsel %vm1597, %v9975, 0
        %v10039 = vsel %vm1597, %v9976, 0
        %v10042 = vsel %vm1597, %v9977, 0
        %v10045 = vsel %vm1597, %v9978, 0
        %v10048 = vsel %vm1597, %v9979, 0
        %v10051 = vsel %vm1597, %v9980, 0
        %10053 = vmatprep.subr.bf16.mxu0 0
        %10054 = vmatpush1.bf16.msra.mxu0 %v9997
        %10055 = vmatprep.subr.bf16.mxu0 0
        %10056 = vmatpush1.bf16.msra.mxu0 %v9998
        %10057 = vmatprep.subr.bf16.mxu0 0
        %10058 = vmatpush1.bf16.msra.mxu0 %v9999
        %10059 = vmatprep.subr.bf16.mxu0 0
        %10060 = vmatpush1.bf16.msra.mxu0 %v10000
        %10061 = vmatprep.subr.bf16.mxu0 0
        %10062 = vmatpush1.bf16.msra.mxu0 0
        %10063 = vmatprep.subr.bf16.mxu0 0
        %10064 = vmatpush1.bf16.msra.mxu0 0
        %10065 = vmatprep.subr.bf16.mxu0 0
        %10066 = vmatpush1.bf16.msra.mxu0 0
        %10067 = vmatprep.subr.bf16.mxu0 0
        %10068 = vmatpush1.bf16.msra.mxu0 0
        %10069 = vmatprep.subr.bf16.mxu0 0
        %10070 = vmatpush1.bf16.msra.mxu0 0
        %10071 = vmatprep.subr.bf16.mxu0 0
        %10072 = vmatpush1.bf16.msra.mxu0 0
        %10073 = vmatprep.subr.bf16.mxu0 0
        %10074 = vmatpush1.bf16.msra.mxu0 0
        %10075 = vmatprep.subr.bf16.mxu0 0
        %10076 = vmatpush1.bf16.msra.mxu0 0
        %10077 = vmatprep.subr.bf16.mxu0 0
        %10078 = vmatpush1.bf16.msra.mxu0 0
        %10079 = vmatprep.subr.bf16.mxu0 0
        %10080 = vmatpush1.bf16.msra.mxu0 0
        %10081 = vmatprep.subr.bf16.mxu0 0
        %10082 = vmatpush1.bf16.msra.mxu0 0
        %10083 = vmatprep.subr.bf16.mxu0 0
        %10084 = vmatpush1.bf16.msra.mxu0 0
        %10085 = vmatprep.mubr.bf16.mxu0 0
        %10086 = vmatmul.mubr.bf16.gmra.mrb[0].mxu0 %v10006
        %v10087 = vpop.f32.mrb[0].mxu0
        %v10088 = vadd.f32 0.0, %v10087
        %v10089 = vpop.f32.mrb[0].mxu0
        %v10090 = vpop.f32.mrb[0].mxu0
        %v10091 = vadd.f32 0.0, %v10090
        %v10092 = vpop.f32.mrb[0].mxu0
        %10093 = vmatprep.mubr.bf16.mxu0 0
        %10094 = vmatmul.mubr.bf16.gmra.mrb[0].mxu0 %v10009
        %v10095 = vpop.f32.mrb[0].mxu0
        %v10096 = vadd.f32 0.0, %v10095
        %v10097 = vpop.f32.mrb[0].mxu0
        %v10098 = vpop.f32.mrb[0].mxu0
        %v10099 = vadd.f32 0.0, %v10098
        %v10100 = vpop.f32.mrb[0].mxu0
        %10101 = vmatprep.mubr.bf16.mxu0 0
        %10102 = vmatmul.mubr.bf16.gmra.mrb[0].mxu0 %v10012
        %v10103 = vpop.f32.mrb[0].mxu0
        %v10104 = vadd.f32 0.0, %v10103
        %v10105 = vpop.f32.mrb[0].mxu0
        %v10106 = vpop.f32.mrb[0].mxu0
        %v10107 = vadd.f32 0.0, %v10106
        %v10108 = vpop.f32.mrb[0].mxu0
        %10109 = vmatprep.mubr.bf16.mxu0 0
        %10110 = vmatmul.mubr.bf16.gmra.mrb[0].mxu0 %v10015
        %v10111 = vpop.f32.mrb[0].mxu0
        %v10112 = vadd.f32 0.0, %v10111
        %v10113 = vpop.f32.mrb[0].mxu0
        %v10114 = vpop.f32.mrb[0].mxu0
        %v10115 = vadd.f32 0.0, %v10114
        %v10116 = vpop.f32.mrb[0].mxu0
        %10117 = vmatprep.mubr.bf16.mxu0 0
        %10118 = vmatmul.mubr.bf16.gmra.mrb[0].mxu0 %v10018
        %v10119 = vpop.f32.mrb[0].mxu0
        %v10120 = vadd.f32 0.0, %v10119
        %v10121 = vpop.f32.mrb[0].mxu0
        %v10122 = vpop.f32.mrb[0].mxu0
        %v10123 = vadd.f32 0.0, %v10122
        %v10124 = vpop.f32.mrb[0].mxu0
        %10125 = vmatprep.mubr.bf16.mxu0 0
        %10126 = vmatmul.mubr.bf16.gmra.mrb[0].mxu0 %v10021
        %v10127 = vpop.f32.mrb[0].mxu0
        %v10128 = vadd.f32 0.0, %v10127
        %v10129 = vpop.f32.mrb[0].mxu0
        %v10130 = vpop.f32.mrb[0].mxu0
        %v10131 = vadd.f32 0.0, %v10130
        %v10132 = vpop.f32.mrb[0].mxu0
        %10133 = vmatprep.mubr.bf16.mxu0 0
        %10134 = vmatmul.mubr.bf16.gmra.mrb[0].mxu0 %v10024
        %v10135 = vpop.f32.mrb[0].mxu0
        %v10136 = vadd.f32 0.0, %v10135
        %v10137 = vpop.f32.mrb[0].mxu0
        %v10138 = vpop.f32.mrb[0].mxu0
        %v10139 = vadd.f32 0.0, %v10138
        %v10140 = vpop.f32.mrb[0].mxu0
        %10141 = vmatprep.mubr.bf16.mxu0 0
        %10142 = vmatmul.mubr.bf16.gmra.mrb[0].mxu0 %v10027
        %v10143 = vpop.f32.mrb[0].mxu0
        %v10144 = vadd.f32 0.0, %v10143
        %v10145 = vpop.f32.mrb[0].mxu0
        %v10146 = vpop.f32.mrb[0].mxu0
        %v10147 = vadd.f32 0.0, %v10146
        %v10148 = vpop.f32.mrb[0].mxu0
        %10149 = vmatprep.mubr.bf16.mxu0 0
        %10150 = vmatmul.mubr.bf16.gmra.mrb[0].mxu0 %v10030
        %v10151 = vpop.f32.mrb[0].mxu0
        %v10152 = vadd.f32 0.0, %v10151
        %v10153 = vpop.f32.mrb[0].mxu0
        %v10154 = vpop.f32.mrb[0].mxu0
        %v10155 = vadd.f32 0.0, %v10154
        %v10156 = vpop.f32.mrb[0].mxu0
        %10157 = vmatprep.mubr.bf16.mxu0 0
        %10158 = vmatmul.mubr.bf16.gmra.mrb[0].mxu0 %v10033
        %v10159 = vpop.f32.mrb[0].mxu0
        %v10160 = vadd.f32 0.0, %v10159
        %v10161 = vpop.f32.mrb[0].mxu0
        %v10162 = vpop.f32.mrb[0].mxu0
        %v10163 = vadd.f32 0.0, %v10162
        %v10164 = vpop.f32.mrb[0].mxu0
        %10165 = vmatprep.mubr.bf16.mxu0 0
        %10166 = vmatmul.mubr.bf16.gmra.mrb[0].mxu0 %v10036
        %v10167 = vpop.f32.mrb[0].mxu0
        %v10168 = vadd.f32 0.0, %v10167
        %v10169 = vpop.f32.mrb[0].mxu0
        %v10170 = vpop.f32.mrb[0].mxu0
        %v10171 = vadd.f32 0.0, %v10170
        %v10172 = vpop.f32.mrb[0].mxu0
        %10173 = vmatprep.mubr.bf16.mxu0 0
        %10174 = vmatmul.mubr.bf16.gmra.mrb[0].mxu0 %v10039
        %v10175 = vpop.f32.mrb[0].mxu0
        %v10176 = vadd.f32 0.0, %v10175
        %v10177 = vpop.f32.mrb[0].mxu0
        %v10178 = vpop.f32.mrb[0].mxu0
        %v10179 = vadd.f32 0.0, %v10178
        %v10180 = vpop.f32.mrb[0].mxu0
        %10181 = vmatprep.mubr.bf16.mxu0 0
        %10182 = vmatmul.mubr.bf16.gmra.mrb[0].mxu0 %v10042
        %v10183 = vpop.f32.mrb[0].mxu0
        %v10184 = vadd.f32 0.0, %v10183
        %v10185 = vpop.f32.mrb[0].mxu0
        %v10186 = vpop.f32.mrb[0].mxu0
        %v10187 = vadd.f32 0.0, %v10186
        %v10188 = vpop.f32.mrb[0].mxu0
        %10189 = vmatprep.mubr.bf16.mxu0 0
        %10190 = vmatmul.mubr.bf16.gmra.mrb[0].mxu0 %v10045
        %v10191 = vpop.f32.mrb[0].mxu0
        %v10192 = vadd.f32 0.0, %v10191
        %v10193 = vpop.f32.mrb[0].mxu0
        %v10194 = vpop.f32.mrb[0].mxu0
        %v10195 = vadd.f32 0.0, %v10194
        %v10196 = vpop.f32.mrb[0].mxu0
        %10197 = vmatprep.mubr.bf16.mxu0 0
        %10198 = vmatmul.mubr.bf16.gmra.mrb[0].mxu0 %v10048
        %v10199 = vpop.f32.mrb[0].mxu0
        %v10200 = vadd.f32 0.0, %v10199
        %v10201 = vpop.f32.mrb[0].mxu0
        %v10202 = vpop.f32.mrb[0].mxu0
        %v10203 = vadd.f32 0.0, %v10202
        %v10204 = vpop.f32.mrb[0].mxu0
        %10205 = vmatprep.mubr.bf16.mxu0 0
        %10206 = vmatmul.mubr.bf16.gmra.mrb[0].mxu0 %v10051
        %v10207 = vpop.f32.mrb[0].mxu0
        %v10208 = vadd.f32 0.0, %v10207
        %v10209 = vpop.f32.mrb[0].mxu0
        %v10210 = vpop.f32.mrb[0].mxu0
        %v10211 = vadd.f32 0.0, %v10210
        %v10212 = vpop.f32.mrb[0].mxu0
        %10213 = vdwg.mxu0
        %v10214 = vadd.f32 %v9716, %v10088
        %v10215 = vadd.f32 %v9717, %v10091
        %v10216 = vadd.f32 %v9718, %v10096
        %v10217 = vadd.f32 %v9719, %v10099
        %v10218 = vadd.f32 %v9720, %v10104
        %v10219 = vadd.f32 %v9721, %v10107
        %v10220 = vadd.f32 %v9722, %v10112
        %v10221 = vadd.f32 %v9723, %v10115
        %v10222 = vadd.f32 %v9724, %v10120
        %v10223 = vadd.f32 %v9725, %v10123
        %v10224 = vadd.f32 %v9726, %v10128
        %v10225 = vadd.f32 %v9727, %v10131
        %v10226 = vadd.f32 %v9728, %v10136
        %v10227 = vadd.f32 %v9729, %v10139
        %v10228 = vadd.f32 %v9730, %v10144
        %v10229 = vadd.f32 %v9731, %v10147
        %v10230 = vadd.f32 %v9732, %v10152
        %v10231 = vadd.f32 %v9733, %v10155
        %v10232 = vadd.f32 %v9734, %v10160
        %v10233 = vadd.f32 %v9735, %v10163
        %v10234 = vadd.f32 %v9736, %v10168
        %v10235 = vadd.f32 %v9737, %v10171
        %v10236 = vadd.f32 %v9738, %v10176
        %v10237 = vadd.f32 %v9739, %v10179
        %v10238 = vadd.f32 %v9740, %v10184
        %v10239 = vadd.f32 %v9741, %v10187
        %v10240 = vadd.f32 %v9742, %v10192
        %v10241 = vadd.f32 %v9743, %v10195
        %v10242 = vadd.f32 %v9744, %v10200
        %v10243 = vadd.f32 %v9745, %v10203
        %v10244 = vadd.f32 %v9746, %v10208
        %v10245 = vadd.f32 %v9747, %v10211
        %s10246 = scalar_lea.vmem [#allocation3], 24
        %v10247 = vld [vmem:[%s10246] sm:$0xf]
        %v10248 = vld [vmem:[%s10246 + $0x4] sm:$0xf]
        %v10249 = vld [vmem:[%s10246 + $0xc] sm:$0xf]
        %v10250 = vld [vmem:[%s10246 + $0x10] sm:$0xf]
        %v10251 = vld [vmem:[%s10246 + $0x18] sm:$0xf]
        %v10252 = vld [vmem:[%s10246 + $0x1c] sm:$0xf]
        %v10253 = vld [vmem:[%s10246 + $0x24] sm:$0xf]
        %v10254 = vld [vmem:[%s10246 + $0x28] sm:$0xf]
        %v10255 = vld [vmem:[%s10246 + $0x30] sm:$0xf]
        %v10256 = vld [vmem:[%s10246 + $0x34] sm:$0xf]
        %v10257 = vld [vmem:[%s10246 + $0x3c] sm:$0xf]
        %v10258 = vld [vmem:[%s10246 + $0x40] sm:$0xf]
        %v10259 = vld [vmem:[%s10246 + $0x48] sm:$0xf]
        %v10260 = vld [vmem:[%s10246 + $0x4c] sm:$0xf]
        %v10261 = vld [vmem:[%s10246 + $0x54] sm:$0xf]
        %v10262 = vld [vmem:[%s10246 + $0x58] sm:$0xf]
        %v10263 = vld [vmem:[%s10246 + $0x60] sm:$0xf]
        %v10264 = vld [vmem:[%s10246 + $0x64] sm:$0xf]
        %v10265 = vld [vmem:[%s10246 + $0x6c] sm:$0xf]
        %v10266 = vld [vmem:[%s10246 + $0x70] sm:$0xf]
        %v10267 = vld [vmem:[%s10246 + $0x78] sm:$0xf]
        %v10268 = vld [vmem:[%s10246 + $0x7c] sm:$0xf]
        %v10269 = vld [vmem:[%s10246 + $0x84] sm:$0xf]
        %v10270 = vld [vmem:[%s10246 + $0x88] sm:$0xf]
        %v10271 = vld [vmem:[%s10246 + $0x90] sm:$0xf]
        %v10272 = vld [vmem:[%s10246 + $0x94] sm:$0xf]
        %v10273 = vld [vmem:[%s10246 + $0x9c] sm:$0xf]
        %v10274 = vld [vmem:[%s10246 + $0xa0] sm:$0xf]
        %v10275 = vld [vmem:[%s10246 + $0xa8] sm:$0xf]
        %v10276 = vld [vmem:[%s10246 + $0xac] sm:$0xf]
        %v10277 = vld [vmem:[%s10246 + $0xb4] sm:$0xf]
        %v10278 = vld [vmem:[%s10246 + $0xb8] sm:$0xf]
        %s10279 = scalar_lea.vmem [#allocation10], 192
        %v10280 = vld [vmem:[%s10279] sm:$0xf]
        %v10281 = vld [vmem:[%s10279 + $0x4] sm:$0xf]
        %v10282 = vld [vmem:[%s10279 + $0x8] sm:$0xf]
        %v10283 = vld [vmem:[%s10279 + $0xc] sm:$0xf]
        %v10284 = vld [vmem:[%s10279 + $0x10] sm:$0xf]
        %v10285 = vld [vmem:[%s10279 + $0x14] sm:$0xf]
        %v10286 = vld [vmem:[%s10279 + $0x18] sm:$0xf]
        %v10287 = vld [vmem:[%s10279 + $0x1c] sm:$0xf]
        %v10320 = vunpack.c.l.b16 %v10247
        %v10321 = vunpack.c.l.b16 %v10248
        %v10322 = vunpack.c.l.b16 %v10249
        %v10323 = vunpack.c.l.b16 %v10250
        %v10324 = vunpack.c.l.b16 %v10251
        %v10325 = vunpack.c.l.b16 %v10252
        %v10326 = vunpack.c.l.b16 %v10253
        %v10327 = vunpack.c.l.b16 %v10254
        %v10328 = vunpack.c.l.b16 %v10255
        %v10329 = vunpack.c.l.b16 %v10256
        %v10330 = vunpack.c.l.b16 %v10257
        %v10331 = vunpack.c.l.b16 %v10258
        %v10332 = vunpack.c.l.b16 %v10259
        %v10333 = vunpack.c.l.b16 %v10260
        %v10334 = vunpack.c.l.b16 %v10261
        %v10335 = vunpack.c.l.b16 %v10262
        %v10336 = vunpack.c.l.b16 %v10263
        %v10337 = vunpack.c.l.b16 %v10264
        %v10338 = vunpack.c.l.b16 %v10265
        %v10339 = vunpack.c.l.b16 %v10266
        %v10340 = vunpack.c.l.b16 %v10267
        %v10341 = vunpack.c.l.b16 %v10268
        %v10342 = vunpack.c.l.b16 %v10269
        %v10343 = vunpack.c.l.b16 %v10270
        %v10344 = vunpack.c.l.b16 %v10271
        %v10345 = vunpack.c.l.b16 %v10272
        %v10346 = vunpack.c.l.b16 %v10273
        %v10347 = vunpack.c.l.b16 %v10274
        %v10348 = vunpack.c.l.b16 %v10275
        %v10349 = vunpack.c.l.b16 %v10276
        %v10350 = vunpack.c.l.b16 %v10277
        %v10351 = vunpack.c.l.b16 %v10278
        %v10352 = vpack.c.b16 %v10321, %v10320
        %v10353 = vpack.c.b16 %v10323, %v10322
        %v10354 = vpack.c.b16 %v10325, %v10324
        %v10355 = vpack.c.b16 %v10327, %v10326
        %v10356 = vpack.c.b16 %v10329, %v10328
        %v10357 = vpack.c.b16 %v10331, %v10330
        %v10358 = vpack.c.b16 %v10333, %v10332
        %v10359 = vpack.c.b16 %v10335, %v10334
        %v10360 = vpack.c.b16 %v10337, %v10336
        %v10361 = vpack.c.b16 %v10339, %v10338
        %v10362 = vpack.c.b16 %v10341, %v10340
        %v10363 = vpack.c.b16 %v10343, %v10342
        %v10364 = vpack.c.b16 %v10345, %v10344
        %v10365 = vpack.c.b16 %v10347, %v10346
        %v10366 = vpack.c.b16 %v10349, %v10348
        %v10367 = vpack.c.b16 %v10351, %v10350
        %v10376 = vunpack.c.l.b16 %v10280
        %v10377 = vunpack.c.l.b16 %v10281
        %v10378 = vunpack.c.l.b16 %v10282
        %v10379 = vunpack.c.l.b16 %v10283
        %v10380 = vunpack.c.l.b16 %v10284
        %v10381 = vunpack.c.l.b16 %v10285
        %v10382 = vunpack.c.l.b16 %v10286
        %v10383 = vunpack.c.l.b16 %v10287
        %v10384 = vpack.c.b16 %v10377, %v10376
        %v10385 = vpack.c.b16 %v10379, %v10378
        %v10386 = vpack.c.b16 %v10381, %v10380
        %v10387 = vpack.c.b16 %v10383, %v10382
        %v10393 = vsel %vm1597, %v10352, 0
        %v10396 = vsel %vm1597, %v10353, 0
        %v10399 = vsel %vm1597, %v10354, 0
        %v10402 = vsel %vm1597, %v10355, 0
        %v10405 = vsel %vm1597, %v10356, 0
        %v10408 = vsel %vm1597, %v10357, 0
        %v10411 = vsel %vm1597, %v10358, 0
        %v10414 = vsel %vm1597, %v10359, 0
        %v10417 = vsel %vm1597, %v10360, 0
        %v10420 = vsel %vm1597, %v10361, 0
        %v10423 = vsel %vm1597, %v10362, 0
        %v10426 = vsel %vm1597, %v10363, 0
        %v10429 = vsel %vm1597, %v10364, 0
        %v10432 = vsel %vm1597, %v10365, 0
        %v10435 = vsel %vm1597, %v10366, 0
        %v10438 = vsel %vm1597, %v10367, 0
        %10440 = vmatprep.subr.bf16.mxu0 0
        %10441 = vmatpush1.bf16.msra.mxu0 %v10384
        %10442 = vmatprep.subr.bf16.mxu0 0
        %10443 = vmatpush1.bf16.msra.mxu0 %v10385
        %10444 = vmatprep.subr.bf16.mxu0 0
        %10445 = vmatpush1.bf16.msra.mxu0 %v10386
        %10446 = vmatprep.subr.bf16.mxu0 0
        %10447 = vmatpush1.bf16.msra.mxu0 %v10387
        %10448 = vmatprep.subr.bf16.mxu0 0
        %10449 = vmatpush1.bf16.msra.mxu0 0
        %10450 = vmatprep.subr.bf16.mxu0 0
        %10451 = vmatpush1.bf16.msra.mxu0 0
        %10452 = vmatprep.subr.bf16.mxu0 0
        %10453 = vmatpush1.bf16.msra.mxu0 0
        %10454 = vmatprep.subr.bf16.mxu0 0
        %10455 = vmatpush1.bf16.msra.mxu0 0
        %10456 = vmatprep.subr.bf16.mxu0 0
        %10457 = vmatpush1.bf16.msra.mxu0 0
        %10458 = vmatprep.subr.bf16.mxu0 0
        %10459 = vmatpush1.bf16.msra.mxu0 0
        %10460 = vmatprep.subr.bf16.mxu0 0
        %10461 = vmatpush1.bf16.msra.mxu0 0
        %10462 = vmatprep.subr.bf16.mxu0 0
        %10463 = vmatpush1.bf16.msra.mxu0 0
        %10464 = vmatprep.subr.bf16.mxu0 0
        %10465 = vmatpush1.bf16.msra.mxu0 0
        %10466 = vmatprep.subr.bf16.mxu0 0
        %10467 = vmatpush1.bf16.msra.mxu0 0
        %10468 = vmatprep.subr.bf16.mxu0 0
        %10469 = vmatpush1.bf16.msra.mxu0 0
        %10470 = vmatprep.subr.bf16.mxu0 0
        %10471 = vmatpush1.bf16.msra.mxu0 0
        %10472 = vmatprep.mubr.bf16.mxu0 0
        %10473 = vmatmul.mubr.bf16.gmra.mrb[0].mxu0 %v10393
        %v10474 = vpop.f32.mrb[0].mxu0
        %v10475 = vadd.f32 0.0, %v10474
        %v10476 = vpop.f32.mrb[0].mxu0
        %v10477 = vpop.f32.mrb[0].mxu0
        %v10478 = vadd.f32 0.0, %v10477
        %v10479 = vpop.f32.mrb[0].mxu0
        %10480 = vmatprep.mubr.bf16.mxu0 0
        %10481 = vmatmul.mubr.bf16.gmra.mrb[0].mxu0 %v10396
        %v10482 = vpop.f32.mrb[0].mxu0
        %v10483 = vadd.f32 0.0, %v10482
        %v10484 = vpop.f32.mrb[0].mxu0
        %v10485 = vpop.f32.mrb[0].mxu0
        %v10486 = vadd.f32 0.0, %v10485
        %v10487 = vpop.f32.mrb[0].mxu0
        %10488 = vmatprep.mubr.bf16.mxu0 0
        %10489 = vmatmul.mubr.bf16.gmra.mrb[0].mxu0 %v10399
        %v10490 = vpop.f32.mrb[0].mxu0
        %v10491 = vadd.f32 0.0, %v10490
        %v10492 = vpop.f32.mrb[0].mxu0
        %v10493 = vpop.f32.mrb[0].mxu0
        %v10494 = vadd.f32 0.0, %v10493
        %v10495 = vpop.f32.mrb[0].mxu0
        %10496 = vmatprep.mubr.bf16.mxu0 0
        %10497 = vmatmul.mubr.bf16.gmra.mrb[0].mxu0 %v10402
        %v10498 = vpop.f32.mrb[0].mxu0
        %v10499 = vadd.f32 0.0, %v10498
        %v10500 = vpop.f32.mrb[0].mxu0
        %v10501 = vpop.f32.mrb[0].mxu0
        %v10502 = vadd.f32 0.0, %v10501
        %v10503 = vpop.f32.mrb[0].mxu0
        %10504 = vmatprep.mubr.bf16.mxu0 0
        %10505 = vmatmul.mubr.bf16.gmra.mrb[0].mxu0 %v10405
        %v10506 = vpop.f32.mrb[0].mxu0
        %v10507 = vadd.f32 0.0, %v10506
        %v10508 = vpop.f32.mrb[0].mxu0
        %v10509 = vpop.f32.mrb[0].mxu0
        %v10510 = vadd.f32 0.0, %v10509
        %v10511 = vpop.f32.mrb[0].mxu0
        %10512 = vmatprep.mubr.bf16.mxu0 0
        %10513 = vmatmul.mubr.bf16.gmra.mrb[0].mxu0 %v10408
        %v10514 = vpop.f32.mrb[0].mxu0
        %v10515 = vadd.f32 0.0, %v10514
        %v10516 = vpop.f32.mrb[0].mxu0
        %v10517 = vpop.f32.mrb[0].mxu0
        %v10518 = vadd.f32 0.0, %v10517
        %v10519 = vpop.f32.mrb[0].mxu0
        %10520 = vmatprep.mubr.bf16.mxu0 0
        %10521 = vmatmul.mubr.bf16.gmra.mrb[0].mxu0 %v10411
        %v10522 = vpop.f32.mrb[0].mxu0
        %v10523 = vadd.f32 0.0, %v10522
        %v10524 = vpop.f32.mrb[0].mxu0
        %v10525 = vpop.f32.mrb[0].mxu0
        %v10526 = vadd.f32 0.0, %v10525
        %v10527 = vpop.f32.mrb[0].mxu0
        %10528 = vmatprep.mubr.bf16.mxu0 0
        %10529 = vmatmul.mubr.bf16.gmra.mrb[0].mxu0 %v10414
        %v10530 = vpop.f32.mrb[0].mxu0
        %v10531 = vadd.f32 0.0, %v10530
        %v10532 = vpop.f32.mrb[0].mxu0
        %v10533 = vpop.f32.mrb[0].mxu0
        %v10534 = vadd.f32 0.0, %v10533
        %v10535 = vpop.f32.mrb[0].mxu0
        %10536 = vmatprep.mubr.bf16.mxu0 0
        %10537 = vmatmul.mubr.bf16.gmra.mrb[0].mxu0 %v10417
        %v10538 = vpop.f32.mrb[0].mxu0
        %v10539 = vadd.f32 0.0, %v10538
        %v10540 = vpop.f32.mrb[0].mxu0
        %v10541 = vpop.f32.mrb[0].mxu0
        %v10542 = vadd.f32 0.0, %v10541
        %v10543 = vpop.f32.mrb[0].mxu0
        %10544 = vmatprep.mubr.bf16.mxu0 0
        %10545 = vmatmul.mubr.bf16.gmra.mrb[0].mxu0 %v10420
        %v10546 = vpop.f32.mrb[0].mxu0
        %v10547 = vadd.f32 0.0, %v10546
        %v10548 = vpop.f32.mrb[0].mxu0
        %v10549 = vpop.f32.mrb[0].mxu0
        %v10550 = vadd.f32 0.0, %v10549
        %v10551 = vpop.f32.mrb[0].mxu0
        %10552 = vmatprep.mubr.bf16.mxu0 0
        %10553 = vmatmul.mubr.bf16.gmra.mrb[0].mxu0 %v10423
        %v10554 = vpop.f32.mrb[0].mxu0
        %v10555 = vadd.f32 0.0, %v10554
        %v10556 = vpop.f32.mrb[0].mxu0
        %v10557 = vpop.f32.mrb[0].mxu0
        %v10558 = vadd.f32 0.0, %v10557
        %v10559 = vpop.f32.mrb[0].mxu0
        %10560 = vmatprep.mubr.bf16.mxu0 0
        %10561 = vmatmul.mubr.bf16.gmra.mrb[0].mxu0 %v10426
        %v10562 = vpop.f32.mrb[0].mxu0
        %v10563 = vadd.f32 0.0, %v10562
        %v10564 = vpop.f32.mrb[0].mxu0
        %v10565 = vpop.f32.mrb[0].mxu0
        %v10566 = vadd.f32 0.0, %v10565
        %v10567 = vpop.f32.mrb[0].mxu0
        %10568 = vmatprep.mubr.bf16.mxu0 0
        %10569 = vmatmul.mubr.bf16.gmra.mrb[0].mxu0 %v10429
        %v10570 = vpop.f32.mrb[0].mxu0
        %v10571 = vadd.f32 0.0, %v10570
        %v10572 = vpop.f32.mrb[0].mxu0
        %v10573 = vpop.f32.mrb[0].mxu0
        %v10574 = vadd.f32 0.0, %v10573
        %v10575 = vpop.f32.mrb[0].mxu0
        %10576 = vmatprep.mubr.bf16.mxu0 0
        %10577 = vmatmul.mubr.bf16.gmra.mrb[0].mxu0 %v10432
        %v10578 = vpop.f32.mrb[0].mxu0
        %v10579 = vadd.f32 0.0, %v10578
        %v10580 = vpop.f32.mrb[0].mxu0
        %v10581 = vpop.f32.mrb[0].mxu0
        %v10582 = vadd.f32 0.0, %v10581
        %v10583 = vpop.f32.mrb[0].mxu0
        %10584 = vmatprep.mubr.bf16.mxu0 0
        %10585 = vmatmul.mubr.bf16.gmra.mrb[0].mxu0 %v10435
        %v10586 = vpop.f32.mrb[0].mxu0
        %v10587 = vadd.f32 0.0, %v10586
        %v10588 = vpop.f32.mrb[0].mxu0
        %v10589 = vpop.f32.mrb[0].mxu0
        %v10590 = vadd.f32 0.0, %v10589
        %v10591 = vpop.f32.mrb[0].mxu0
        %10592 = vmatprep.mubr.bf16.mxu0 0
        %10593 = vmatmul.mubr.bf16.gmra.mrb[0].mxu0 %v10438
        %v10594 = vpop.f32.mrb[0].mxu0
        %v10595 = vadd.f32 0.0, %v10594
        %v10596 = vpop.f32.mrb[0].mxu0
        %v10597 = vpop.f32.mrb[0].mxu0
        %v10598 = vadd.f32 0.0, %v10597
        %v10599 = vpop.f32.mrb[0].mxu0
        %10600 = vdwg.mxu0
        %v10601 = vadd.f32 %v10214, %v10475
        %v10602 = vadd.f32 %v10215, %v10478
        %v10603 = vadd.f32 %v10216, %v10483
        %v10604 = vadd.f32 %v10217, %v10486
        %v10605 = vadd.f32 %v10218, %v10491
        %v10606 = vadd.f32 %v10219, %v10494
        %v10607 = vadd.f32 %v10220, %v10499
        %v10608 = vadd.f32 %v10221, %v10502
        %v10609 = vadd.f32 %v10222, %v10507
        %v10610 = vadd.f32 %v10223, %v10510
        %v10611 = vadd.f32 %v10224, %v10515
        %v10612 = vadd.f32 %v10225, %v10518
        %v10613 = vadd.f32 %v10226, %v10523
        %v10614 = vadd.f32 %v10227, %v10526
        %v10615 = vadd.f32 %v10228, %v10531
        %v10616 = vadd.f32 %v10229, %v10534
        %v10617 = vadd.f32 %v10230, %v10539
        %v10618 = vadd.f32 %v10231, %v10542
        %v10619 = vadd.f32 %v10232, %v10547
        %v10620 = vadd.f32 %v10233, %v10550
        %v10621 = vadd.f32 %v10234, %v10555
        %v10622 = vadd.f32 %v10235, %v10558
        %v10623 = vadd.f32 %v10236, %v10563
        %v10624 = vadd.f32 %v10237, %v10566
        %v10625 = vadd.f32 %v10238, %v10571
        %v10626 = vadd.f32 %v10239, %v10574
        %v10627 = vadd.f32 %v10240, %v10579
        %v10628 = vadd.f32 %v10241, %v10582
        %v10629 = vadd.f32 %v10242, %v10587
        %v10630 = vadd.f32 %v10243, %v10590
        %v10631 = vadd.f32 %v10244, %v10595
        %v10632 = vadd.f32 %v10245, %v10598
        %v10633 = vld [vmem:[%s10246] sm:$0xf]
        %v10634 = vld [vmem:[%s10246 + $0x4] sm:$0xf]
        %v10635 = vld [vmem:[%s10246 + $0x8] sm:$0x1]
        %v10636 = vld [vmem:[%s10246 + $0xc] sm:$0xf]
        %v10637 = vld [vmem:[%s10246 + $0x10] sm:$0xf]
        %v10638 = vld [vmem:[%s10246 + $0x14] sm:$0x1]
        %v10639 = vld [vmem:[%s10246 + $0x18] sm:$0xf]
        %v10640 = vld [vmem:[%s10246 + $0x1c] sm:$0xf]
        %v10641 = vld [vmem:[%s10246 + $0x20] sm:$0x1]
        %v10642 = vld [vmem:[%s10246 + $0x24] sm:$0xf]
        %v10643 = vld [vmem:[%s10246 + $0x28] sm:$0xf]
        %v10644 = vld [vmem:[%s10246 + $0x2c] sm:$0x1]
        %v10645 = vld [vmem:[%s10246 + $0x30] sm:$0xf]
        %v10646 = vld [vmem:[%s10246 + $0x34] sm:$0xf]
        %v10647 = vld [vmem:[%s10246 + $0x38] sm:$0x1]
        %v10648 = vld [vmem:[%s10246 + $0x3c] sm:$0xf]
        %v10649 = vld [vmem:[%s10246 + $0x40] sm:$0xf]
        %v10650 = vld [vmem:[%s10246 + $0x44] sm:$0x1]
        %v10651 = vld [vmem:[%s10246 + $0x48] sm:$0xf]
        %v10652 = vld [vmem:[%s10246 + $0x4c] sm:$0xf]
        %v10653 = vld [vmem:[%s10246 + $0x50] sm:$0x1]
        %v10654 = vld [vmem:[%s10246 + $0x54] sm:$0xf]
        %v10655 = vld [vmem:[%s10246 + $0x58] sm:$0xf]
        %v10656 = vld [vmem:[%s10246 + $0x5c] sm:$0x1]
        %v10657 = vld [vmem:[%s10246 + $0x60] sm:$0xf]
        %v10658 = vld [vmem:[%s10246 + $0x64] sm:$0xf]
        %v10659 = vld [vmem:[%s10246 + $0x68] sm:$0x1]
        %v10660 = vld [vmem:[%s10246 + $0x6c] sm:$0xf]
        %v10661 = vld [vmem:[%s10246 + $0x70] sm:$0xf]
        %v10662 = vld [vmem:[%s10246 + $0x74] sm:$0x1]
        %v10663 = vld [vmem:[%s10246 + $0x78] sm:$0xf]
        %v10664 = vld [vmem:[%s10246 + $0x7c] sm:$0xf]
        %v10665 = vld [vmem:[%s10246 + $0x80] sm:$0x1]
        %v10666 = vld [vmem:[%s10246 + $0x84] sm:$0xf]
        %v10667 = vld [vmem:[%s10246 + $0x88] sm:$0xf]
        %v10668 = vld [vmem:[%s10246 + $0x8c] sm:$0x1]
        %v10669 = vld [vmem:[%s10246 + $0x90] sm:$0xf]
        %v10670 = vld [vmem:[%s10246 + $0x94] sm:$0xf]
        %v10671 = vld [vmem:[%s10246 + $0x98] sm:$0x1]
        %v10672 = vld [vmem:[%s10246 + $0x9c] sm:$0xf]
        %v10673 = vld [vmem:[%s10246 + $0xa0] sm:$0xf]
        %v10674 = vld [vmem:[%s10246 + $0xa4] sm:$0x1]
        %v10675 = vld [vmem:[%s10246 + $0xa8] sm:$0xf]
        %v10676 = vld [vmem:[%s10246 + $0xac] sm:$0xf]
        %v10677 = vld [vmem:[%s10246 + $0xb0] sm:$0x1]
        %v10678 = vld [vmem:[%s10246 + $0xb4] sm:$0xf]
        %v10679 = vld [vmem:[%s10246 + $0xb8] sm:$0xf]
        %v10680 = vld [vmem:[%s10246 + $0xbc] sm:$0x1]
        %v10682 = vshrl.u32 %v10633, 16
        %v10684 = vrot.slane %v10682, 4
        %v10685 = vshll.u32 %v10633, 16
        %v10687 = vrot.slane %v10685, 5
        %v10688 = vor.u32 %v10684, %v10687
        %v10689 = vrot.slane %v10688, 4
        %v10691 = vshll.u32 %v10634, 16
        %v10693 = vrot.slane %v10691, 5
        %v10694 = vsel %vm1077, %v10689, %v10693
        %v10695 = vshrl.u32 %v10634, 16
        %v10697 = vrot.slane %v10695, 4
        %v10698 = vor.u32 %v10697, %v10693
        %v10699 = vrot.slane %v10698, 4
        %v10701 = vshll.u32 %v10635, 16
        %v10703 = vrot.slane %v10701, 5
        %v10704 = vsel %vm1077, %v10699, %v10703
        %v10706 = vshrl.u32 %v10636, 16
        %v10708 = vrot.slane %v10706, 4
        %v10709 = vshll.u32 %v10636, 16
        %v10711 = vrot.slane %v10709, 5
        %v10712 = vor.u32 %v10708, %v10711
        %v10713 = vrot.slane %v10712, 4
        %v10715 = vshll.u32 %v10637, 16
        %v10717 = vrot.slane %v10715, 5
        %v10718 = vsel %vm1077, %v10713, %v10717
        %v10719 = vshrl.u32 %v10637, 16
        %v10721 = vrot.slane %v10719, 4
        %v10722 = vor.u32 %v10721, %v10717
        %v10723 = vrot.slane %v10722, 4
        %v10725 = vshll.u32 %v10638, 16
        %v10727 = vrot.slane %v10725, 5
        %v10728 = vsel %vm1077, %v10723, %v10727
        %v10730 = vshrl.u32 %v10639, 16
        %v10732 = vrot.slane %v10730, 4
        %v10733 = vshll.u32 %v10639, 16
        %v10735 = vrot.slane %v10733, 5
        %v10736 = vor.u32 %v10732, %v10735
        %v10737 = vrot.slane %v10736, 4
        %v10739 = vshll.u32 %v10640, 16
        %v10741 = vrot.slane %v10739, 5
        %v10742 = vsel %vm1077, %v10737, %v10741
        %v10743 = vshrl.u32 %v10640, 16
        %v10745 = vrot.slane %v10743, 4
        %v10746 = vor.u32 %v10745, %v10741
        %v10747 = vrot.slane %v10746, 4
        %v10749 = vshll.u32 %v10641, 16
        %v10751 = vrot.slane %v10749, 5
        %v10752 = vsel %vm1077, %v10747, %v10751
        %v10754 = vshrl.u32 %v10642, 16
        %v10756 = vrot.slane %v10754, 4
        %v10757 = vshll.u32 %v10642, 16
        %v10759 = vrot.slane %v10757, 5
        %v10760 = vor.u32 %v10756, %v10759
        %v10761 = vrot.slane %v10760, 4
        %v10763 = vshll.u32 %v10643, 16
        %v10765 = vrot.slane %v10763, 5
        %v10766 = vsel %vm1077, %v10761, %v10765
        %v10767 = vshrl.u32 %v10643, 16
        %v10769 = vrot.slane %v10767, 4
        %v10770 = vor.u32 %v10769, %v10765
        %v10771 = vrot.slane %v10770, 4
        %v10773 = vshll.u32 %v10644, 16
        %v10775 = vrot.slane %v10773, 5
        %v10776 = vsel %vm1077, %v10771, %v10775
        %v10778 = vshrl.u32 %v10645, 16
        %v10780 = vrot.slane %v10778, 4
        %v10781 = vshll.u32 %v10645, 16
        %v10783 = vrot.slane %v10781, 5
        %v10784 = vor.u32 %v10780, %v10783
        %v10785 = vrot.slane %v10784, 4
        %v10787 = vshll.u32 %v10646, 16
        %v10789 = vrot.slane %v10787, 5
        %v10790 = vsel %vm1077, %v10785, %v10789
        %v10791 = vshrl.u32 %v10646, 16
        %v10793 = vrot.slane %v10791, 4
        %v10794 = vor.u32 %v10793, %v10789
        %v10795 = vrot.slane %v10794, 4
        %v10797 = vshll.u32 %v10647, 16
        %v10799 = vrot.slane %v10797, 5
        %v10800 = vsel %vm1077, %v10795, %v10799
        %v10802 = vshrl.u32 %v10648, 16
        %v10804 = vrot.slane %v10802, 4
        %v10805 = vshll.u32 %v10648, 16
        %v10807 = vrot.slane %v10805, 5
        %v10808 = vor.u32 %v10804, %v10807
        %v10809 = vrot.slane %v10808, 4
        %v10811 = vshll.u32 %v10649, 16
        %v10813 = vrot.slane %v10811, 5
        %v10814 = vsel %vm1077, %v10809, %v10813
        %v10815 = vshrl.u32 %v10649, 16
        %v10817 = vrot.slane %v10815, 4
        %v10818 = vor.u32 %v10817, %v10813
        %v10819 = vrot.slane %v10818, 4
        %v10821 = vshll.u32 %v10650, 16
        %v10823 = vrot.slane %v10821, 5
        %v10824 = vsel %vm1077, %v10819, %v10823
        %v10826 = vshrl.u32 %v10651, 16
        %v10828 = vrot.slane %v10826, 4
        %v10829 = vshll.u32 %v10651, 16
        %v10831 = vrot.slane %v10829, 5
        %v10832 = vor.u32 %v10828, %v10831
        %v10833 = vrot.slane %v10832, 4
        %v10835 = vshll.u32 %v10652, 16
        %v10837 = vrot.slane %v10835, 5
        %v10838 = vsel %vm1077, %v10833, %v10837
        %v10839 = vshrl.u32 %v10652, 16
        %v10841 = vrot.slane %v10839, 4
        %v10842 = vor.u32 %v10841, %v10837
        %v10843 = vrot.slane %v10842, 4
        %v10845 = vshll.u32 %v10653, 16
        %v10847 = vrot.slane %v10845, 5
        %v10848 = vsel %vm1077, %v10843, %v10847
        %v10850 = vshrl.u32 %v10654, 16
        %v10852 = vrot.slane %v10850, 4
        %v10853 = vshll.u32 %v10654, 16
        %v10855 = vrot.slane %v10853, 5
        %v10856 = vor.u32 %v10852, %v10855
        %v10857 = vrot.slane %v10856, 4
        %v10859 = vshll.u32 %v10655, 16
        %v10861 = vrot.slane %v10859, 5
        %v10862 = vsel %vm1077, %v10857, %v10861
        %v10863 = vshrl.u32 %v10655, 16
        %v10865 = vrot.slane %v10863, 4
        %v10866 = vor.u32 %v10865, %v10861
        %v10867 = vrot.slane %v10866, 4
        %v10869 = vshll.u32 %v10656, 16
        %v10871 = vrot.slane %v10869, 5
        %v10872 = vsel %vm1077, %v10867, %v10871
        %v10874 = vshrl.u32 %v10657, 16
        %v10876 = vrot.slane %v10874, 4
        %v10877 = vshll.u32 %v10657, 16
        %v10879 = vrot.slane %v10877, 5
        %v10880 = vor.u32 %v10876, %v10879
        %v10881 = vrot.slane %v10880, 4
        %v10883 = vshll.u32 %v10658, 16
        %v10885 = vrot.slane %v10883, 5
        %v10886 = vsel %vm1077, %v10881, %v10885
        %v10887 = vshrl.u32 %v10658, 16
        %v10889 = vrot.slane %v10887, 4
        %v10890 = vor.u32 %v10889, %v10885
        %v10891 = vrot.slane %v10890, 4
        %v10893 = vshll.u32 %v10659, 16
        %v10895 = vrot.slane %v10893, 5
        %v10896 = vsel %vm1077, %v10891, %v10895
        %v10898 = vshrl.u32 %v10660, 16
        %v10900 = vrot.slane %v10898, 4
        %v10901 = vshll.u32 %v10660, 16
        %v10903 = vrot.slane %v10901, 5
        %v10904 = vor.u32 %v10900, %v10903
        %v10905 = vrot.slane %v10904, 4
        %v10907 = vshll.u32 %v10661, 16
        %v10909 = vrot.slane %v10907, 5
        %v10910 = vsel %vm1077, %v10905, %v10909
        %v10911 = vshrl.u32 %v10661, 16
        %v10913 = vrot.slane %v10911, 4
        %v10914 = vor.u32 %v10913, %v10909
        %v10915 = vrot.slane %v10914, 4
        %v10917 = vshll.u32 %v10662, 16
        %v10919 = vrot.slane %v10917, 5
        %v10920 = vsel %vm1077, %v10915, %v10919
        %v10922 = vshrl.u32 %v10663, 16
        %v10924 = vrot.slane %v10922, 4
        %v10925 = vshll.u32 %v10663, 16
        %v10927 = vrot.slane %v10925, 5
        %v10928 = vor.u32 %v10924, %v10927
        %v10929 = vrot.slane %v10928, 4
        %v10931 = vshll.u32 %v10664, 16
        %v10933 = vrot.slane %v10931, 5
        %v10934 = vsel %vm1077, %v10929, %v10933
        %v10935 = vshrl.u32 %v10664, 16
        %v10937 = vrot.slane %v10935, 4
        %v10938 = vor.u32 %v10937, %v10933
        %v10939 = vrot.slane %v10938, 4
        %v10941 = vshll.u32 %v10665, 16
        %v10943 = vrot.slane %v10941, 5
        %v10944 = vsel %vm1077, %v10939, %v10943
        %v10946 = vshrl.u32 %v10666, 16
        %v10948 = vrot.slane %v10946, 4
        %v10949 = vshll.u32 %v10666, 16
        %v10951 = vrot.slane %v10949, 5
        %v10952 = vor.u32 %v10948, %v10951
        %v10953 = vrot.slane %v10952, 4
        %v10955 = vshll.u32 %v10667, 16
        %v10957 = vrot.slane %v10955, 5
        %v10958 = vsel %vm1077, %v10953, %v10957
        %v10959 = vshrl.u32 %v10667, 16
        %v10961 = vrot.slane %v10959, 4
        %v10962 = vor.u32 %v10961, %v10957
        %v10963 = vrot.slane %v10962, 4
        %v10965 = vshll.u32 %v10668, 16
        %v10967 = vrot.slane %v10965, 5
        %v10968 = vsel %vm1077, %v10963, %v10967
        %v10970 = vshrl.u32 %v10669, 16
        %v10972 = vrot.slane %v10970, 4
        %v10973 = vshll.u32 %v10669, 16
        %v10975 = vrot.slane %v10973, 5
        %v10976 = vor.u32 %v10972, %v10975
        %v10977 = vrot.slane %v10976, 4
        %v10979 = vshll.u32 %v10670, 16
        %v10981 = vrot.slane %v10979, 5
        %v10982 = vsel %vm1077, %v10977, %v10981
        %v10983 = vshrl.u32 %v10670, 16
        %v10985 = vrot.slane %v10983, 4
        %v10986 = vor.u32 %v10985, %v10981
        %v10987 = vrot.slane %v10986, 4
        %v10989 = vshll.u32 %v10671, 16
        %v10991 = vrot.slane %v10989, 5
        %v10992 = vsel %vm1077, %v10987, %v10991
        %v10994 = vshrl.u32 %v10672, 16
        %v10996 = vrot.slane %v10994, 4
        %v10997 = vshll.u32 %v10672, 16
        %v10999 = vrot.slane %v10997, 5
        %v11000 = vor.u32 %v10996, %v10999
        %v11001 = vrot.slane %v11000, 4
        %v11003 = vshll.u32 %v10673, 16
        %v11005 = vrot.slane %v11003, 5
        %v11006 = vsel %vm1077, %v11001, %v11005
        %v11007 = vshrl.u32 %v10673, 16
        %v11009 = vrot.slane %v11007, 4
        %v11010 = vor.u32 %v11009, %v11005
        %v11011 = vrot.slane %v11010, 4
        %v11013 = vshll.u32 %v10674, 16
        %v11015 = vrot.slane %v11013, 5
        %v11016 = vsel %vm1077, %v11011, %v11015
        %v11018 = vshrl.u32 %v10675, 16
        %v11020 = vrot.slane %v11018, 4
        %v11021 = vshll.u32 %v10675, 16
        %v11023 = vrot.slane %v11021, 5
        %v11024 = vor.u32 %v11020, %v11023
        %v11025 = vrot.slane %v11024, 4
        %v11027 = vshll.u32 %v10676, 16
        %v11029 = vrot.slane %v11027, 5
        %v11030 = vsel %vm1077, %v11025, %v11029
        %v11031 = vshrl.u32 %v10676, 16
        %v11033 = vrot.slane %v11031, 4
        %v11034 = vor.u32 %v11033, %v11029
        %v11035 = vrot.slane %v11034, 4
        %v11037 = vshll.u32 %v10677, 16
        %v11039 = vrot.slane %v11037, 5
        %v11040 = vsel %vm1077, %v11035, %v11039
        %v11042 = vshrl.u32 %v10678, 16
        %v11044 = vrot.slane %v11042, 4
        %v11045 = vshll.u32 %v10678, 16
        %v11047 = vrot.slane %v11045, 5
        %v11048 = vor.u32 %v11044, %v11047
        %v11049 = vrot.slane %v11048, 4
        %v11051 = vshll.u32 %v10679, 16
        %v11053 = vrot.slane %v11051, 5
        %v11054 = vsel %vm1077, %v11049, %v11053
        %v11055 = vshrl.u32 %v10679, 16
        %v11057 = vrot.slane %v11055, 4
        %v11058 = vor.u32 %v11057, %v11053
        %v11059 = vrot.slane %v11058, 4
        %v11061 = vshll.u32 %v10680, 16
        %v11063 = vrot.slane %v11061, 5
        %v11064 = vsel %vm1077, %v11059, %v11063
        %s11065 = scalar_lea.vmem [#allocation10], 224
        %v11066 = vld [vmem:[%s11065] sm:$0xf]
        %v11067 = vld [vmem:[%s11065 + $0x4] sm:$0xf]
        %v11068 = vld [vmem:[%s11065 + $0x8] sm:$0xf]
        %v11069 = vld [vmem:[%s11065 + $0xc] sm:$0xf]
        %v11070 = vld [vmem:[%s11065 + $0x10] sm:$0xf]
        %v11071 = vld [vmem:[%s11065 + $0x14] sm:$0xf]
        %v11072 = vld [vmem:[%s11065 + $0x18] sm:$0xf]
        %v11073 = vld [vmem:[%s11065 + $0x1c] sm:$0xf]
        %v11074 = vunpack.c.l.b16 %v10694
        %v11075 = vunpack.c.l.b16 %v10704
        %v11076 = vunpack.c.l.b16 %v10718
        %v11077 = vunpack.c.l.b16 %v10728
        %v11078 = vunpack.c.l.b16 %v10742
        %v11079 = vunpack.c.l.b16 %v10752
        %v11080 = vunpack.c.l.b16 %v10766
        %v11081 = vunpack.c.l.b16 %v10776
        %v11082 = vunpack.c.l.b16 %v10790
        %v11083 = vunpack.c.l.b16 %v10800
        %v11084 = vunpack.c.l.b16 %v10814
        %v11085 = vunpack.c.l.b16 %v10824
        %v11086 = vunpack.c.l.b16 %v10838
        %v11087 = vunpack.c.l.b16 %v10848
        %v11088 = vunpack.c.l.b16 %v10862
        %v11089 = vunpack.c.l.b16 %v10872
        %v11090 = vunpack.c.l.b16 %v10886
        %v11091 = vunpack.c.l.b16 %v10896
        %v11092 = vunpack.c.l.b16 %v10910
        %v11093 = vunpack.c.l.b16 %v10920
        %v11094 = vunpack.c.l.b16 %v10934
        %v11095 = vunpack.c.l.b16 %v10944
        %v11096 = vunpack.c.l.b16 %v10958
        %v11097 = vunpack.c.l.b16 %v10968
        %v11098 = vunpack.c.l.b16 %v10982
        %v11099 = vunpack.c.l.b16 %v10992
        %v11100 = vunpack.c.l.b16 %v11006
        %v11101 = vunpack.c.l.b16 %v11016
        %v11102 = vunpack.c.l.b16 %v11030
        %v11103 = vunpack.c.l.b16 %v11040
        %v11104 = vunpack.c.l.b16 %v11054
        %v11105 = vunpack.c.l.b16 %v11064
        %v11106 = vpack.c.b16 %v11075, %v11074
        %v11107 = vpack.c.b16 %v11077, %v11076
        %v11108 = vpack.c.b16 %v11079, %v11078
        %v11109 = vpack.c.b16 %v11081, %v11080
        %v11110 = vpack.c.b16 %v11083, %v11082
        %v11111 = vpack.c.b16 %v11085, %v11084
        %v11112 = vpack.c.b16 %v11087, %v11086
        %v11113 = vpack.c.b16 %v11089, %v11088
        %v11114 = vpack.c.b16 %v11091, %v11090
        %v11115 = vpack.c.b16 %v11093, %v11092
        %v11116 = vpack.c.b16 %v11095, %v11094
        %v11117 = vpack.c.b16 %v11097, %v11096
        %v11118 = vpack.c.b16 %v11099, %v11098
        %v11119 = vpack.c.b16 %v11101, %v11100
        %v11120 = vpack.c.b16 %v11103, %v11102
        %v11121 = vpack.c.b16 %v11105, %v11104
        %v11130 = vunpack.c.l.b16 %v11066
        %v11131 = vunpack.c.l.b16 %v11067
        %v11132 = vunpack.c.l.b16 %v11068
        %v11133 = vunpack.c.l.b16 %v11069
        %v11134 = vunpack.c.l.b16 %v11070
        %v11135 = vunpack.c.l.b16 %v11071
        %v11136 = vunpack.c.l.b16 %v11072
        %v11137 = vunpack.c.l.b16 %v11073
        %v11138 = vpack.c.b16 %v11131, %v11130
        %v11139 = vpack.c.b16 %v11133, %v11132
        %v11140 = vpack.c.b16 %v11135, %v11134
        %v11141 = vpack.c.b16 %v11137, %v11136
        %v11147 = vsel %vm1597, %v11106, 0
        %v11150 = vsel %vm1597, %v11107, 0
        %v11153 = vsel %vm1597, %v11108, 0
        %v11156 = vsel %vm1597, %v11109, 0
        %v11159 = vsel %vm1597, %v11110, 0
        %v11162 = vsel %vm1597, %v11111, 0
        %v11165 = vsel %vm1597, %v11112, 0
        %v11168 = vsel %vm1597, %v11113, 0
        %v11171 = vsel %vm1597, %v11114, 0
        %v11174 = vsel %vm1597, %v11115, 0
        %v11177 = vsel %vm1597, %v11116, 0
        %v11180 = vsel %vm1597, %v11117, 0
        %v11183 = vsel %vm1597, %v11118, 0
        %v11186 = vsel %vm1597, %v11119, 0
        %v11189 = vsel %vm1597, %v11120, 0
        %v11192 = vsel %vm1597, %v11121, 0
        %11194 = vmatprep.subr.bf16.mxu0 0
        %11195 = vmatpush1.bf16.msra.mxu0 %v11138
        %11196 = vmatprep.subr.bf16.mxu0 0
        %11197 = vmatpush1.bf16.msra.mxu0 %v11139
        %11198 = vmatprep.subr.bf16.mxu0 0
        %11199 = vmatpush1.bf16.msra.mxu0 %v11140
        %11200 = vmatprep.subr.bf16.mxu0 0
        %11201 = vmatpush1.bf16.msra.mxu0 %v11141
        %11202 = vmatprep.subr.bf16.mxu0 0
        %11203 = vmatpush1.bf16.msra.mxu0 0
        %11204 = vmatprep.subr.bf16.mxu0 0
        %11205 = vmatpush1.bf16.msra.mxu0 0
        %11206 = vmatprep.subr.bf16.mxu0 0
        %11207 = vmatpush1.bf16.msra.mxu0 0
        %11208 = vmatprep.subr.bf16.mxu0 0
        %11209 = vmatpush1.bf16.msra.mxu0 0
        %11210 = vmatprep.subr.bf16.mxu0 0
        %11211 = vmatpush1.bf16.msra.mxu0 0
        %11212 = vmatprep.subr.bf16.mxu0 0
        %11213 = vmatpush1.bf16.msra.mxu0 0
        %11214 = vmatprep.subr.bf16.mxu0 0
        %11215 = vmatpush1.bf16.msra.mxu0 0
        %11216 = vmatprep.subr.bf16.mxu0 0
        %11217 = vmatpush1.bf16.msra.mxu0 0
        %11218 = vmatprep.subr.bf16.mxu0 0
        %11219 = vmatpush1.bf16.msra.mxu0 0
        %11220 = vmatprep.subr.bf16.mxu0 0
        %11221 = vmatpush1.bf16.msra.mxu0 0
        %11222 = vmatprep.subr.bf16.mxu0 0
        %11223 = vmatpush1.bf16.msra.mxu0 0
        %11224 = vmatprep.subr.bf16.mxu0 0
        %11225 = vmatpush1.bf16.msra.mxu0 0
        %11226 = vmatprep.mubr.bf16.mxu0 0
        %11227 = vmatmul.mubr.bf16.gmra.mrb[0].mxu0 %v11147
        %v11228 = vpop.f32.mrb[0].mxu0
        %v11229 = vadd.f32 0.0, %v11228
        %v11230 = vpop.f32.mrb[0].mxu0
        %v11231 = vpop.f32.mrb[0].mxu0
        %v11232 = vadd.f32 0.0, %v11231
        %v11233 = vpop.f32.mrb[0].mxu0
        %11234 = vmatprep.mubr.bf16.mxu0 0
        %11235 = vmatmul.mubr.bf16.gmra.mrb[0].mxu0 %v11150
        %v11236 = vpop.f32.mrb[0].mxu0
        %v11237 = vadd.f32 0.0, %v11236
        %v11238 = vpop.f32.mrb[0].mxu0
        %v11239 = vpop.f32.mrb[0].mxu0
        %v11240 = vadd.f32 0.0, %v11239
        %v11241 = vpop.f32.mrb[0].mxu0
        %11242 = vmatprep.mubr.bf16.mxu0 0
        %11243 = vmatmul.mubr.bf16.gmra.mrb[0].mxu0 %v11153
        %v11244 = vpop.f32.mrb[0].mxu0
        %v11245 = vadd.f32 0.0, %v11244
        %v11246 = vpop.f32.mrb[0].mxu0
        %v11247 = vpop.f32.mrb[0].mxu0
        %v11248 = vadd.f32 0.0, %v11247
        %v11249 = vpop.f32.mrb[0].mxu0
        %11250 = vmatprep.mubr.bf16.mxu0 0
        %11251 = vmatmul.mubr.bf16.gmra.mrb[0].mxu0 %v11156
        %v11252 = vpop.f32.mrb[0].mxu0
        %v11253 = vadd.f32 0.0, %v11252
        %v11254 = vpop.f32.mrb[0].mxu0
        %v11255 = vpop.f32.mrb[0].mxu0
        %v11256 = vadd.f32 0.0, %v11255
        %v11257 = vpop.f32.mrb[0].mxu0
        %11258 = vmatprep.mubr.bf16.mxu0 0
        %11259 = vmatmul.mubr.bf16.gmra.mrb[0].mxu0 %v11159
        %v11260 = vpop.f32.mrb[0].mxu0
        %v11261 = vadd.f32 0.0, %v11260
        %v11262 = vpop.f32.mrb[0].mxu0
        %v11263 = vpop.f32.mrb[0].mxu0
        %v11264 = vadd.f32 0.0, %v11263
        %v11265 = vpop.f32.mrb[0].mxu0
        %11266 = vmatprep.mubr.bf16.mxu0 0
        %11267 = vmatmul.mubr.bf16.gmra.mrb[0].mxu0 %v11162
        %v11268 = vpop.f32.mrb[0].mxu0
        %v11269 = vadd.f32 0.0, %v11268
        %v11270 = vpop.f32.mrb[0].mxu0
        %v11271 = vpop.f32.mrb[0].mxu0
        %v11272 = vadd.f32 0.0, %v11271
        %v11273 = vpop.f32.mrb[0].mxu0
        %11274 = vmatprep.mubr.bf16.mxu0 0
        %11275 = vmatmul.mubr.bf16.gmra.mrb[0].mxu0 %v11165
        %v11276 = vpop.f32.mrb[0].mxu0
        %v11277 = vadd.f32 0.0, %v11276
        %v11278 = vpop.f32.mrb[0].mxu0
        %v11279 = vpop.f32.mrb[0].mxu0
        %v11280 = vadd.f32 0.0, %v11279
        %v11281 = vpop.f32.mrb[0].mxu0
        %11282 = vmatprep.mubr.bf16.mxu0 0
        %11283 = vmatmul.mubr.bf16.gmra.mrb[0].mxu0 %v11168
        %v11284 = vpop.f32.mrb[0].mxu0
        %v11285 = vadd.f32 0.0, %v11284
        %v11286 = vpop.f32.mrb[0].mxu0
        %v11287 = vpop.f32.mrb[0].mxu0
        %v11288 = vadd.f32 0.0, %v11287
        %v11289 = vpop.f32.mrb[0].mxu0
        %11290 = vmatprep.mubr.bf16.mxu0 0
        %11291 = vmatmul.mubr.bf16.gmra.mrb[0].mxu0 %v11171
        %v11292 = vpop.f32.mrb[0].mxu0
        %v11293 = vadd.f32 0.0, %v11292
        %v11294 = vpop.f32.mrb[0].mxu0
        %v11295 = vpop.f32.mrb[0].mxu0
        %v11296 = vadd.f32 0.0, %v11295
        %v11297 = vpop.f32.mrb[0].mxu0
        %11298 = vmatprep.mubr.bf16.mxu0 0
        %11299 = vmatmul.mubr.bf16.gmra.mrb[0].mxu0 %v11174
        %v11300 = vpop.f32.mrb[0].mxu0
        %v11301 = vadd.f32 0.0, %v11300
        %v11302 = vpop.f32.mrb[0].mxu0
        %v11303 = vpop.f32.mrb[0].mxu0
        %v11304 = vadd.f32 0.0, %v11303
        %v11305 = vpop.f32.mrb[0].mxu0
        %11306 = vmatprep.mubr.bf16.mxu0 0
        %11307 = vmatmul.mubr.bf16.gmra.mrb[0].mxu0 %v11177
        %v11308 = vpop.f32.mrb[0].mxu0
        %v11309 = vadd.f32 0.0, %v11308
        %v11310 = vpop.f32.mrb[0].mxu0
        %v11311 = vpop.f32.mrb[0].mxu0
        %v11312 = vadd.f32 0.0, %v11311
        %v11313 = vpop.f32.mrb[0].mxu0
        %11314 = vmatprep.mubr.bf16.mxu0 0
        %11315 = vmatmul.mubr.bf16.gmra.mrb[0].mxu0 %v11180
        %v11316 = vpop.f32.mrb[0].mxu0
        %v11317 = vadd.f32 0.0, %v11316
        %v11318 = vpop.f32.mrb[0].mxu0
        %v11319 = vpop.f32.mrb[0].mxu0
        %v11320 = vadd.f32 0.0, %v11319
        %v11321 = vpop.f32.mrb[0].mxu0
        %11322 = vmatprep.mubr.bf16.mxu0 0
        %11323 = vmatmul.mubr.bf16.gmra.mrb[0].mxu0 %v11183
        %v11324 = vpop.f32.mrb[0].mxu0
        %v11325 = vadd.f32 0.0, %v11324
        %v11326 = vpop.f32.mrb[0].mxu0
        %v11327 = vpop.f32.mrb[0].mxu0
        %v11328 = vadd.f32 0.0, %v11327
        %v11329 = vpop.f32.mrb[0].mxu0
        %11330 = vmatprep.mubr.bf16.mxu0 0
        %11331 = vmatmul.mubr.bf16.gmra.mrb[0].mxu0 %v11186
        %v11332 = vpop.f32.mrb[0].mxu0
        %v11333 = vadd.f32 0.0, %v11332
        %v11334 = vpop.f32.mrb[0].mxu0
        %v11335 = vpop.f32.mrb[0].mxu0
        %v11336 = vadd.f32 0.0, %v11335
        %v11337 = vpop.f32.mrb[0].mxu0
        %11338 = vmatprep.mubr.bf16.mxu0 0
        %11339 = vmatmul.mubr.bf16.gmra.mrb[0].mxu0 %v11189
        %v11340 = vpop.f32.mrb[0].mxu0
        %v11341 = vadd.f32 0.0, %v11340
        %v11342 = vpop.f32.mrb[0].mxu0
        %v11343 = vpop.f32.mrb[0].mxu0
        %v11344 = vadd.f32 0.0, %v11343
        %v11345 = vpop.f32.mrb[0].mxu0
        %11346 = vmatprep.mubr.bf16.mxu0 0
        %11347 = vmatmul.mubr.bf16.gmra.mrb[0].mxu0 %v11192
        %v11348 = vpop.f32.mrb[0].mxu0
        %v11349 = vadd.f32 0.0, %v11348
        %v11350 = vpop.f32.mrb[0].mxu0
        %v11351 = vpop.f32.mrb[0].mxu0
        %v11352 = vadd.f32 0.0, %v11351
        %v11353 = vpop.f32.mrb[0].mxu0
        %11354 = vdwg.mxu0
        %v11355 = vadd.f32 %v10601, %v11229
        %v11356 = vadd.f32 %v10602, %v11232
        %v11357 = vadd.f32 %v10603, %v11237
        %v11358 = vadd.f32 %v10604, %v11240
        %v11359 = vadd.f32 %v10605, %v11245
        %v11360 = vadd.f32 %v10606, %v11248
        %v11361 = vadd.f32 %v10607, %v11253
        %v11362 = vadd.f32 %v10608, %v11256
        %v11363 = vadd.f32 %v10609, %v11261
        %v11364 = vadd.f32 %v10610, %v11264
        %v11365 = vadd.f32 %v10611, %v11269
        %v11366 = vadd.f32 %v10612, %v11272
        %v11367 = vadd.f32 %v10613, %v11277
        %v11368 = vadd.f32 %v10614, %v11280
        %v11369 = vadd.f32 %v10615, %v11285
        %v11370 = vadd.f32 %v10616, %v11288
        %v11371 = vadd.f32 %v10617, %v11293
        %v11372 = vadd.f32 %v10618, %v11296
        %v11373 = vadd.f32 %v10619, %v11301
        %v11374 = vadd.f32 %v10620, %v11304
        %v11375 = vadd.f32 %v10621, %v11309
        %v11376 = vadd.f32 %v10622, %v11312
        %v11377 = vadd.f32 %v10623, %v11317
        %v11378 = vadd.f32 %v10624, %v11320
        %v11379 = vadd.f32 %v10625, %v11325
        %v11380 = vadd.f32 %v10626, %v11328
        %v11381 = vadd.f32 %v10627, %v11333
        %v11382 = vadd.f32 %v10628, %v11336
        %v11383 = vadd.f32 %v10629, %v11341
        %v11384 = vadd.f32 %v10630, %v11344
        %v11385 = vadd.f32 %v10631, %v11349
        %v11386 = vadd.f32 %v10632, %v11352
        %v11387 = vld [vmem:[%s10246] sm:$0xe]
        %v11388 = vld [vmem:[%s10246 + $0xc] sm:$0xe]
        %v11389 = vld [vmem:[%s10246 + $0x18] sm:$0xe]
        %v11390 = vld [vmem:[%s10246 + $0x24] sm:$0xe]
        %v11391 = vld [vmem:[%s10246 + $0x30] sm:$0xe]
        %v11392 = vld [vmem:[%s10246 + $0x3c] sm:$0xe]
        %v11393 = vld [vmem:[%s10246 + $0x48] sm:$0xe]
        %v11394 = vld [vmem:[%s10246 + $0x54] sm:$0xe]
        %v11395 = vld [vmem:[%s10246 + $0x60] sm:$0xe]
        %v11396 = vld [vmem:[%s10246 + $0x6c] sm:$0xe]
        %v11397 = vld [vmem:[%s10246 + $0x78] sm:$0xe]
        %v11398 = vld [vmem:[%s10246 + $0x84] sm:$0xe]
        %v11399 = vld [vmem:[%s10246 + $0x90] sm:$0xe]
        %v11400 = vld [vmem:[%s10246 + $0x9c] sm:$0xe]
        %v11401 = vld [vmem:[%s10246 + $0xa8] sm:$0xe]
        %v11402 = vld [vmem:[%s10246 + $0xb4] sm:$0xe]
        %v11451 = vrot.slane %v11387, 5
        %v11452 = vrot.slane %v11451, 4
        %v11453 = vrot.slane %v10634, 5
        %v11454 = vsel %vm2230, %v11452, %v11453
        %v11455 = vrot.slane %v11453, 4
        %v11456 = vrot.slane %v10635, 5
        %v11457 = vsel %vm2230, %v11455, %v11456
        %v11458 = vrot.slane %v11388, 5
        %v11459 = vrot.slane %v11458, 4
        %v11460 = vrot.slane %v10637, 5
        %v11461 = vsel %vm2230, %v11459, %v11460
        %v11462 = vrot.slane %v11460, 4
        %v11463 = vrot.slane %v10638, 5
        %v11464 = vsel %vm2230, %v11462, %v11463
        %v11465 = vrot.slane %v11389, 5
        %v11466 = vrot.slane %v11465, 4
        %v11467 = vrot.slane %v10640, 5
        %v11468 = vsel %vm2230, %v11466, %v11467
        %v11469 = vrot.slane %v11467, 4
        %v11470 = vrot.slane %v10641, 5
        %v11471 = vsel %vm2230, %v11469, %v11470
        %v11472 = vrot.slane %v11390, 5
        %v11473 = vrot.slane %v11472, 4
        %v11474 = vrot.slane %v10643, 5
        %v11475 = vsel %vm2230, %v11473, %v11474
        %v11476 = vrot.slane %v11474, 4
        %v11477 = vrot.slane %v10644, 5
        %v11478 = vsel %vm2230, %v11476, %v11477
        %v11479 = vrot.slane %v11391, 5
        %v11480 = vrot.slane %v11479, 4
        %v11481 = vrot.slane %v10646, 5
        %v11482 = vsel %vm2230, %v11480, %v11481
        %v11483 = vrot.slane %v11481, 4
        %v11484 = vrot.slane %v10647, 5
        %v11485 = vsel %vm2230, %v11483, %v11484
        %v11486 = vrot.slane %v11392, 5
        %v11487 = vrot.slane %v11486, 4
        %v11488 = vrot.slane %v10649, 5
        %v11489 = vsel %vm2230, %v11487, %v11488
        %v11490 = vrot.slane %v11488, 4
        %v11491 = vrot.slane %v10650, 5
        %v11492 = vsel %vm2230, %v11490, %v11491
        %v11493 = vrot.slane %v11393, 5
        %v11494 = vrot.slane %v11493, 4
        %v11495 = vrot.slane %v10652, 5
        %v11496 = vsel %vm2230, %v11494, %v11495
        %v11497 = vrot.slane %v11495, 4
        %v11498 = vrot.slane %v10653, 5
        %v11499 = vsel %vm2230, %v11497, %v11498
        %v11500 = vrot.slane %v11394, 5
        %v11501 = vrot.slane %v11500, 4
        %v11502 = vrot.slane %v10655, 5
        %v11503 = vsel %vm2230, %v11501, %v11502
        %v11504 = vrot.slane %v11502, 4
        %v11505 = vrot.slane %v10656, 5
        %v11506 = vsel %vm2230, %v11504, %v11505
        %v11507 = vrot.slane %v11395, 5
        %v11508 = vrot.slane %v11507, 4
        %v11509 = vrot.slane %v10658, 5
        %v11510 = vsel %vm2230, %v11508, %v11509
        %v11511 = vrot.slane %v11509, 4
        %v11512 = vrot.slane %v10659, 5
        %v11513 = vsel %vm2230, %v11511, %v11512
        %v11514 = vrot.slane %v11396, 5
        %v11515 = vrot.slane %v11514, 4
        %v11516 = vrot.slane %v10661, 5
        %v11517 = vsel %vm2230, %v11515, %v11516
        %v11518 = vrot.slane %v11516, 4
        %v11519 = vrot.slane %v10662, 5
        %v11520 = vsel %vm2230, %v11518, %v11519
        %v11521 = vrot.slane %v11397, 5
        %v11522 = vrot.slane %v11521, 4
        %v11523 = vrot.slane %v10664, 5
        %v11524 = vsel %vm2230, %v11522, %v11523
        %v11525 = vrot.slane %v11523, 4
        %v11526 = vrot.slane %v10665, 5
        %v11527 = vsel %vm2230, %v11525, %v11526
        %v11528 = vrot.slane %v11398, 5
        %v11529 = vrot.slane %v11528, 4
        %v11530 = vrot.slane %v10667, 5
        %v11531 = vsel %vm2230, %v11529, %v11530
        %v11532 = vrot.slane %v11530, 4
        %v11533 = vrot.slane %v10668, 5
        %v11534 = vsel %vm2230, %v11532, %v11533
        %v11535 = vrot.slane %v11399, 5
        %v11536 = vrot.slane %v11535, 4
        %v11537 = vrot.slane %v10670, 5
        %v11538 = vsel %vm2230, %v11536, %v11537
        %v11539 = vrot.slane %v11537, 4
        %v11540 = vrot.slane %v10671, 5
        %v11541 = vsel %vm2230, %v11539, %v11540
        %v11542 = vrot.slane %v11400, 5
        %v11543 = vrot.slane %v11542, 4
        %v11544 = vrot.slane %v10673, 5
        %v11545 = vsel %vm2230, %v11543, %v11544
        %v11546 = vrot.slane %v11544, 4
        %v11547 = vrot.slane %v10674, 5
        %v11548 = vsel %vm2230, %v11546, %v11547
        %v11549 = vrot.slane %v11401, 5
        %v11550 = vrot.slane %v11549, 4
        %v11551 = vrot.slane %v10676, 5
        %v11552 = vsel %vm2230, %v11550, %v11551
        %v11553 = vrot.slane %v11551, 4
        %v11554 = vrot.slane %v10677, 5
        %v11555 = vsel %vm2230, %v11553, %v11554
        %v11556 = vrot.slane %v11402, 5
        %v11557 = vrot.slane %v11556, 4
        %v11558 = vrot.slane %v10679, 5
        %v11559 = vsel %vm2230, %v11557, %v11558
        %v11560 = vrot.slane %v11558, 4
        %v11561 = vrot.slane %v10680, 5
        %v11562 = vsel %vm2230, %v11560, %v11561
        %s11563 = scalar_lea.vmem [#allocation10], 256
        %v11564 = vld [vmem:[%s11563] sm:$0xf]
        %v11565 = vld [vmem:[%s11563 + $0x4] sm:$0xf]
        %v11566 = vld [vmem:[%s11563 + $0x8] sm:$0xf]
        %v11567 = vld [vmem:[%s11563 + $0xc] sm:$0xf]
        %v11568 = vld [vmem:[%s11563 + $0x10] sm:$0xf]
        %v11569 = vld [vmem:[%s11563 + $0x14] sm:$0xf]
        %v11570 = vld [vmem:[%s11563 + $0x18] sm:$0xf]
        %v11571 = vld [vmem:[%s11563 + $0x1c] sm:$0xf]
        %v11572 = vunpack.c.l.b16 %v11454
        %v11573 = vunpack.c.l.b16 %v11457
        %v11574 = vunpack.c.l.b16 %v11461
        %v11575 = vunpack.c.l.b16 %v11464
        %v11576 = vunpack.c.l.b16 %v11468
        %v11577 = vunpack.c.l.b16 %v11471
        %v11578 = vunpack.c.l.b16 %v11475
        %v11579 = vunpack.c.l.b16 %v11478
        %v11580 = vunpack.c.l.b16 %v11482
        %v11581 = vunpack.c.l.b16 %v11485
        %v11582 = vunpack.c.l.b16 %v11489
        %v11583 = vunpack.c.l.b16 %v11492
        %v11584 = vunpack.c.l.b16 %v11496
        %v11585 = vunpack.c.l.b16 %v11499
        %v11586 = vunpack.c.l.b16 %v11503
        %v11587 = vunpack.c.l.b16 %v11506
        %v11588 = vunpack.c.l.b16 %v11510
        %v11589 = vunpack.c.l.b16 %v11513
        %v11590 = vunpack.c.l.b16 %v11517
        %v11591 = vunpack.c.l.b16 %v11520
        %v11592 = vunpack.c.l.b16 %v11524
        %v11593 = vunpack.c.l.b16 %v11527
        %v11594 = vunpack.c.l.b16 %v11531
        %v11595 = vunpack.c.l.b16 %v11534
        %v11596 = vunpack.c.l.b16 %v11538
        %v11597 = vunpack.c.l.b16 %v11541
        %v11598 = vunpack.c.l.b16 %v11545
        %v11599 = vunpack.c.l.b16 %v11548
        %v11600 = vunpack.c.l.b16 %v11552
        %v11601 = vunpack.c.l.b16 %v11555
        %v11602 = vunpack.c.l.b16 %v11559
        %v11603 = vunpack.c.l.b16 %v11562
        %v11604 = vpack.c.b16 %v11573, %v11572
        %v11605 = vpack.c.b16 %v11575, %v11574
        %v11606 = vpack.c.b16 %v11577, %v11576
        %v11607 = vpack.c.b16 %v11579, %v11578
        %v11608 = vpack.c.b16 %v11581, %v11580
        %v11609 = vpack.c.b16 %v11583, %v11582
        %v11610 = vpack.c.b16 %v11585, %v11584
        %v11611 = vpack.c.b16 %v11587, %v11586
        %v11612 = vpack.c.b16 %v11589, %v11588
        %v11613 = vpack.c.b16 %v11591, %v11590
        %v11614 = vpack.c.b16 %v11593, %v11592
        %v11615 = vpack.c.b16 %v11595, %v11594
        %v11616 = vpack.c.b16 %v11597, %v11596
        %v11617 = vpack.c.b16 %v11599, %v11598
        %v11618 = vpack.c.b16 %v11601, %v11600
        %v11619 = vpack.c.b16 %v11603, %v11602
        %v11628 = vunpack.c.l.b16 %v11564
        %v11629 = vunpack.c.l.b16 %v11565
        %v11630 = vunpack.c.l.b16 %v11566
        %v11631 = vunpack.c.l.b16 %v11567
        %v11632 = vunpack.c.l.b16 %v11568
        %v11633 = vunpack.c.l.b16 %v11569
        %v11634 = vunpack.c.l.b16 %v11570
        %v11635 = vunpack.c.l.b16 %v11571
        %v11636 = vpack.c.b16 %v11629, %v11628
        %v11637 = vpack.c.b16 %v11631, %v11630
        %v11638 = vpack.c.b16 %v11633, %v11632
        %v11639 = vpack.c.b16 %v11635, %v11634
        %v11645 = vsel %vm1597, %v11604, 0
        %v11648 = vsel %vm1597, %v11605, 0
        %v11651 = vsel %vm1597, %v11606, 0
        %v11654 = vsel %vm1597, %v11607, 0
        %v11657 = vsel %vm1597, %v11608, 0
        %v11660 = vsel %vm1597, %v11609, 0
        %v11663 = vsel %vm1597, %v11610, 0
        %v11666 = vsel %vm1597, %v11611, 0
        %v11669 = vsel %vm1597, %v11612, 0
        %v11672 = vsel %vm1597, %v11613, 0
        %v11675 = vsel %vm1597, %v11614, 0
        %v11678 = vsel %vm1597, %v11615, 0
        %v11681 = vsel %vm1597, %v11616, 0
        %v11684 = vsel %vm1597, %v11617, 0
        %v11687 = vsel %vm1597, %v11618, 0
        %v11690 = vsel %vm1597, %v11619, 0
        %11692 = vmatprep.subr.bf16.mxu0 0
        %11693 = vmatpush1.bf16.msra.mxu0 %v11636
        %11694 = vmatprep.subr.bf16.mxu0 0
        %11695 = vmatpush1.bf16.msra.mxu0 %v11637
        %11696 = vmatprep.subr.bf16.mxu0 0
        %11697 = vmatpush1.bf16.msra.mxu0 %v11638
        %11698 = vmatprep.subr.bf16.mxu0 0
        %11699 = vmatpush1.bf16.msra.mxu0 %v11639
        %11700 = vmatprep.subr.bf16.mxu0 0
        %11701 = vmatpush1.bf16.msra.mxu0 0
        %11702 = vmatprep.subr.bf16.mxu0 0
        %11703 = vmatpush1.bf16.msra.mxu0 0
        %11704 = vmatprep.subr.bf16.mxu0 0
        %11705 = vmatpush1.bf16.msra.mxu0 0
        %11706 = vmatprep.subr.bf16.mxu0 0
        %11707 = vmatpush1.bf16.msra.mxu0 0
        %11708 = vmatprep.subr.bf16.mxu0 0
        %11709 = vmatpush1.bf16.msra.mxu0 0
        %11710 = vmatprep.subr.bf16.mxu0 0
        %11711 = vmatpush1.bf16.msra.mxu0 0
        %11712 = vmatprep.subr.bf16.mxu0 0
        %11713 = vmatpush1.bf16.msra.mxu0 0
        %11714 = vmatprep.subr.bf16.mxu0 0
        %11715 = vmatpush1.bf16.msra.mxu0 0
        %11716 = vmatprep.subr.bf16.mxu0 0
        %11717 = vmatpush1.bf16.msra.mxu0 0
        %11718 = vmatprep.subr.bf16.mxu0 0
        %11719 = vmatpush1.bf16.msra.mxu0 0
        %11720 = vmatprep.subr.bf16.mxu0 0
        %11721 = vmatpush1.bf16.msra.mxu0 0
        %11722 = vmatprep.subr.bf16.mxu0 0
        %11723 = vmatpush1.bf16.msra.mxu0 0
        %11724 = vmatprep.mubr.bf16.mxu0 0
        %11725 = vmatmul.mubr.bf16.gmra.mrb[0].mxu0 %v11645
        %v11726 = vpop.f32.mrb[0].mxu0
        %v11727 = vadd.f32 0.0, %v11726
        %v11728 = vpop.f32.mrb[0].mxu0
        %v11729 = vpop.f32.mrb[0].mxu0
        %v11730 = vadd.f32 0.0, %v11729
        %v11731 = vpop.f32.mrb[0].mxu0
        %11732 = vmatprep.mubr.bf16.mxu0 0
        %11733 = vmatmul.mubr.bf16.gmra.mrb[0].mxu0 %v11648
        %v11734 = vpop.f32.mrb[0].mxu0
        %v11735 = vadd.f32 0.0, %v11734
        %v11736 = vpop.f32.mrb[0].mxu0
        %v11737 = vpop.f32.mrb[0].mxu0
        %v11738 = vadd.f32 0.0, %v11737
        %v11739 = vpop.f32.mrb[0].mxu0
        %11740 = vmatprep.mubr.bf16.mxu0 0
        %11741 = vmatmul.mubr.bf16.gmra.mrb[0].mxu0 %v11651
        %v11742 = vpop.f32.mrb[0].mxu0
        %v11743 = vadd.f32 0.0, %v11742
        %v11744 = vpop.f32.mrb[0].mxu0
        %v11745 = vpop.f32.mrb[0].mxu0
        %v11746 = vadd.f32 0.0, %v11745
        %v11747 = vpop.f32.mrb[0].mxu0
        %11748 = vmatprep.mubr.bf16.mxu0 0
        %11749 = vmatmul.mubr.bf16.gmra.mrb[0].mxu0 %v11654
        %v11750 = vpop.f32.mrb[0].mxu0
        %v11751 = vadd.f32 0.0, %v11750
        %v11752 = vpop.f32.mrb[0].mxu0
        %v11753 = vpop.f32.mrb[0].mxu0
        %v11754 = vadd.f32 0.0, %v11753
        %v11755 = vpop.f32.mrb[0].mxu0
        %11756 = vmatprep.mubr.bf16.mxu0 0
        %11757 = vmatmul.mubr.bf16.gmra.mrb[0].mxu0 %v11657
        %v11758 = vpop.f32.mrb[0].mxu0
        %v11759 = vadd.f32 0.0, %v11758
        %v11760 = vpop.f32.mrb[0].mxu0
        %v11761 = vpop.f32.mrb[0].mxu0
        %v11762 = vadd.f32 0.0, %v11761
        %v11763 = vpop.f32.mrb[0].mxu0
        %11764 = vmatprep.mubr.bf16.mxu0 0
        %11765 = vmatmul.mubr.bf16.gmra.mrb[0].mxu0 %v11660
        %v11766 = vpop.f32.mrb[0].mxu0
        %v11767 = vadd.f32 0.0, %v11766
        %v11768 = vpop.f32.mrb[0].mxu0
        %v11769 = vpop.f32.mrb[0].mxu0
        %v11770 = vadd.f32 0.0, %v11769
        %v11771 = vpop.f32.mrb[0].mxu0
        %11772 = vmatprep.mubr.bf16.mxu0 0
        %11773 = vmatmul.mubr.bf16.gmra.mrb[0].mxu0 %v11663
        %v11774 = vpop.f32.mrb[0].mxu0
        %v11775 = vadd.f32 0.0, %v11774
        %v11776 = vpop.f32.mrb[0].mxu0
        %v11777 = vpop.f32.mrb[0].mxu0
        %v11778 = vadd.f32 0.0, %v11777
        %v11779 = vpop.f32.mrb[0].mxu0
        %11780 = vmatprep.mubr.bf16.mxu0 0
        %11781 = vmatmul.mubr.bf16.gmra.mrb[0].mxu0 %v11666
        %v11782 = vpop.f32.mrb[0].mxu0
        %v11783 = vadd.f32 0.0, %v11782
        %v11784 = vpop.f32.mrb[0].mxu0
        %v11785 = vpop.f32.mrb[0].mxu0
        %v11786 = vadd.f32 0.0, %v11785
        %v11787 = vpop.f32.mrb[0].mxu0
        %11788 = vmatprep.mubr.bf16.mxu0 0
        %11789 = vmatmul.mubr.bf16.gmra.mrb[0].mxu0 %v11669
        %v11790 = vpop.f32.mrb[0].mxu0
        %v11791 = vadd.f32 0.0, %v11790
        %v11792 = vpop.f32.mrb[0].mxu0
        %v11793 = vpop.f32.mrb[0].mxu0
        %v11794 = vadd.f32 0.0, %v11793
        %v11795 = vpop.f32.mrb[0].mxu0
        %11796 = vmatprep.mubr.bf16.mxu0 0
        %11797 = vmatmul.mubr.bf16.gmra.mrb[0].mxu0 %v11672
        %v11798 = vpop.f32.mrb[0].mxu0
        %v11799 = vadd.f32 0.0, %v11798
        %v11800 = vpop.f32.mrb[0].mxu0
        %v11801 = vpop.f32.mrb[0].mxu0
        %v11802 = vadd.f32 0.0, %v11801
        %v11803 = vpop.f32.mrb[0].mxu0
        %11804 = vmatprep.mubr.bf16.mxu0 0
        %11805 = vmatmul.mubr.bf16.gmra.mrb[0].mxu0 %v11675
        %v11806 = vpop.f32.mrb[0].mxu0
        %v11807 = vadd.f32 0.0, %v11806
        %v11808 = vpop.f32.mrb[0].mxu0
        %v11809 = vpop.f32.mrb[0].mxu0
        %v11810 = vadd.f32 0.0, %v11809
        %v11811 = vpop.f32.mrb[0].mxu0
        %11812 = vmatprep.mubr.bf16.mxu0 0
        %11813 = vmatmul.mubr.bf16.gmra.mrb[0].mxu0 %v11678
        %v11814 = vpop.f32.mrb[0].mxu0
        %v11815 = vadd.f32 0.0, %v11814
        %v11816 = vpop.f32.mrb[0].mxu0
        %v11817 = vpop.f32.mrb[0].mxu0
        %v11818 = vadd.f32 0.0, %v11817
        %v11819 = vpop.f32.mrb[0].mxu0
        %11820 = vmatprep.mubr.bf16.mxu0 0
        %11821 = vmatmul.mubr.bf16.gmra.mrb[0].mxu0 %v11681
        %v11822 = vpop.f32.mrb[0].mxu0
        %v11823 = vadd.f32 0.0, %v11822
        %v11824 = vpop.f32.mrb[0].mxu0
        %v11825 = vpop.f32.mrb[0].mxu0
        %v11826 = vadd.f32 0.0, %v11825
        %v11827 = vpop.f32.mrb[0].mxu0
        %11828 = vmatprep.mubr.bf16.mxu0 0
        %11829 = vmatmul.mubr.bf16.gmra.mrb[0].mxu0 %v11684
        %v11830 = vpop.f32.mrb[0].mxu0
        %v11831 = vadd.f32 0.0, %v11830
        %v11832 = vpop.f32.mrb[0].mxu0
        %v11833 = vpop.f32.mrb[0].mxu0
        %v11834 = vadd.f32 0.0, %v11833
        %v11835 = vpop.f32.mrb[0].mxu0
        %11836 = vmatprep.mubr.bf16.mxu0 0
        %11837 = vmatmul.mubr.bf16.gmra.mrb[0].mxu0 %v11687
        %v11838 = vpop.f32.mrb[0].mxu0
        %v11839 = vadd.f32 0.0, %v11838
        %v11840 = vpop.f32.mrb[0].mxu0
        %v11841 = vpop.f32.mrb[0].mxu0
        %v11842 = vadd.f32 0.0, %v11841
        %v11843 = vpop.f32.mrb[0].mxu0
        %11844 = vmatprep.mubr.bf16.mxu0 0
        %11845 = vmatmul.mubr.bf16.gmra.mrb[0].mxu0 %v11690
        %v11846 = vpop.f32.mrb[0].mxu0
        %v11847 = vadd.f32 0.0, %v11846
        %v11848 = vpop.f32.mrb[0].mxu0
        %v11849 = vpop.f32.mrb[0].mxu0
        %v11850 = vadd.f32 0.0, %v11849
        %v11851 = vpop.f32.mrb[0].mxu0
        %11852 = vdwg.mxu0
        %v11853 = vadd.f32 %v11355, %v11727
        %v11854 = vadd.f32 %v11356, %v11730
        %v11855 = vadd.f32 %v11357, %v11735
        %v11856 = vadd.f32 %v11358, %v11738
        %v11857 = vadd.f32 %v11359, %v11743
        %v11858 = vadd.f32 %v11360, %v11746
        %v11859 = vadd.f32 %v11361, %v11751
        %v11860 = vadd.f32 %v11362, %v11754
        %v11861 = vadd.f32 %v11363, %v11759
        %v11862 = vadd.f32 %v11364, %v11762
        %v11863 = vadd.f32 %v11365, %v11767
        %v11864 = vadd.f32 %v11366, %v11770
        %v11865 = vadd.f32 %v11367, %v11775
        %v11866 = vadd.f32 %v11368, %v11778
        %v11867 = vadd.f32 %v11369, %v11783
        %v11868 = vadd.f32 %v11370, %v11786
        %v11869 = vadd.f32 %v11371, %v11791
        %v11870 = vadd.f32 %v11372, %v11794
        %v11871 = vadd.f32 %v11373, %v11799
        %v11872 = vadd.f32 %v11374, %v11802
        %v11873 = vadd.f32 %v11375, %v11807
        %v11874 = vadd.f32 %v11376, %v11810
        %v11875 = vadd.f32 %v11377, %v11815
        %v11876 = vadd.f32 %v11378, %v11818
        %v11877 = vadd.f32 %v11379, %v11823
        %v11878 = vadd.f32 %v11380, %v11826
        %v11879 = vadd.f32 %v11381, %v11831
        %v11880 = vadd.f32 %v11382, %v11834
        %v11881 = vadd.f32 %v11383, %v11839
        %v11882 = vadd.f32 %v11384, %v11842
        %v11883 = vadd.f32 %v11385, %v11847
        %v11884 = vadd.f32 %v11386, %v11850
        %v11885 = vld [vmem:[%s5] sm:$0x1]
        %v11887 = vlaneseq
        %v11888 = vshrl.u32 %v11887, 7
        %v11889 = vsub.s32 0, %v11888
        %v11890 = vrot.slane %v11885, %v11889
        %v11892 = vadd.f32 %v11853, %v11890
        %v11893 = vadd.f32 %v11854, %v11890
        %v11894 = vadd.f32 %v11855, %v11890
        %v11895 = vadd.f32 %v11856, %v11890
        %v11896 = vadd.f32 %v11857, %v11890
        %v11897 = vadd.f32 %v11858, %v11890
        %v11898 = vadd.f32 %v11859, %v11890
        %v11899 = vadd.f32 %v11860, %v11890
        %v11900 = vadd.f32 %v11861, %v11890
        %v11901 = vadd.f32 %v11862, %v11890
        %v11902 = vadd.f32 %v11863, %v11890
        %v11903 = vadd.f32 %v11864, %v11890
        %v11904 = vadd.f32 %v11865, %v11890
        %v11905 = vadd.f32 %v11866, %v11890
        %v11906 = vadd.f32 %v11867, %v11890
        %v11907 = vadd.f32 %v11868, %v11890
        %v11908 = vadd.f32 %v11869, %v11890
        %v11909 = vadd.f32 %v11870, %v11890
        %v11910 = vadd.f32 %v11871, %v11890
        %v11911 = vadd.f32 %v11872, %v11890
        %v11912 = vadd.f32 %v11873, %v11890
        %v11913 = vadd.f32 %v11874, %v11890
        %v11914 = vadd.f32 %v11875, %v11890
        %v11915 = vadd.f32 %v11876, %v11890
        %v11916 = vadd.f32 %v11877, %v11890
        %v11917 = vadd.f32 %v11878, %v11890
        %v11918 = vadd.f32 %v11879, %v11890
        %v11919 = vadd.f32 %v11880, %v11890
        %v11920 = vadd.f32 %v11881, %v11890
        %v11921 = vadd.f32 %v11882, %v11890
        %v11922 = vadd.f32 %v11883, %v11890
        %v11923 = vadd.f32 %v11884, %v11890
        %v11924 = vmax.f32 %v11892, 0.0
        %v11925 = vmax.f32 %v11893, 0.0
        %v11926 = vmax.f32 %v11894, 0.0
        %v11927 = vmax.f32 %v11895, 0.0
        %v11928 = vmax.f32 %v11896, 0.0
        %v11929 = vmax.f32 %v11897, 0.0
        %v11930 = vmax.f32 %v11898, 0.0
        %v11931 = vmax.f32 %v11899, 0.0
        %v11932 = vmax.f32 %v11900, 0.0
        %v11933 = vmax.f32 %v11901, 0.0
        %v11934 = vmax.f32 %v11902, 0.0
        %v11935 = vmax.f32 %v11903, 0.0
        %v11936 = vmax.f32 %v11904, 0.0
        %v11937 = vmax.f32 %v11905, 0.0
        %v11938 = vmax.f32 %v11906, 0.0
        %v11939 = vmax.f32 %v11907, 0.0
        %v11940 = vmax.f32 %v11908, 0.0
        %v11941 = vmax.f32 %v11909, 0.0
        %v11942 = vmax.f32 %v11910, 0.0
        %v11943 = vmax.f32 %v11911, 0.0
        %v11944 = vmax.f32 %v11912, 0.0
        %v11945 = vmax.f32 %v11913, 0.0
        %v11946 = vmax.f32 %v11914, 0.0
        %v11947 = vmax.f32 %v11915, 0.0
        %v11948 = vmax.f32 %v11916, 0.0
        %v11949 = vmax.f32 %v11917, 0.0
        %v11950 = vmax.f32 %v11918, 0.0
        %v11951 = vmax.f32 %v11919, 0.0
        %v11952 = vmax.f32 %v11920, 0.0
        %v11953 = vmax.f32 %v11921, 0.0
        %v11954 = vmax.f32 %v11922, 0.0
        %v11955 = vmax.f32 %v11923, 0.0
        %v11956 = vld [vmem:[#allocation7] sm:$0xff]
        %v11957 = vld [vmem:[#allocation7 + $0x8] sm:$0xff]
        %v11958 = vld [vmem:[#allocation7 + $0x10] sm:$0xff]
        %v11959 = vld [vmem:[#allocation7 + $0x18] sm:$0xff]
        %v11960 = vld [vmem:[#allocation7 + $0x20] sm:$0xff]
        %v11961 = vld [vmem:[#allocation7 + $0x28] sm:$0xff]
        %v11962 = vld [vmem:[#allocation7 + $0x30] sm:$0xff]
        %v11963 = vld [vmem:[#allocation7 + $0x38] sm:$0xff]
        %v11964 = vld [vmem:[#allocation7 + $0x40] sm:$0xff]
        %v11965 = vld [vmem:[#allocation7 + $0x48] sm:$0xff]
        %v11966 = vld [vmem:[#allocation7 + $0x50] sm:$0xff]
        %v11967 = vld [vmem:[#allocation7 + $0x58] sm:$0xff]
        %v11968 = vld [vmem:[#allocation7 + $0x60] sm:$0xff]
        %v11969 = vld [vmem:[#allocation7 + $0x68] sm:$0xff]
        %v11970 = vld [vmem:[#allocation7 + $0x70] sm:$0xff]
        %v11971 = vld [vmem:[#allocation7 + $0x78] sm:$0xff]
        %v11972 = vld [vmem:[#allocation7 + $0x80] sm:$0xff]
        %v11973 = vld [vmem:[#allocation7 + $0x88] sm:$0xff]
        %v11974 = vld [vmem:[#allocation7 + $0x90] sm:$0xff]
        %v11975 = vld [vmem:[#allocation7 + $0x98] sm:$0xff]
        %v11976 = vld [vmem:[#allocation7 + $0xa0] sm:$0xff]
        %v11977 = vld [vmem:[#allocation7 + $0xa8] sm:$0xff]
        %v11978 = vld [vmem:[#allocation7 + $0xb0] sm:$0xff]
        %v11979 = vld [vmem:[#allocation7 + $0xb8] sm:$0xff]
        %v11980 = vld [vmem:[#allocation7 + $0xc0] sm:$0xff]
        %v11981 = vld [vmem:[#allocation7 + $0xc8] sm:$0xff]
        %v11982 = vld [vmem:[#allocation7 + $0xd0] sm:$0xff]
        %v11983 = vld [vmem:[#allocation7 + $0xd8] sm:$0xff]
        %v11984 = vld [vmem:[#allocation7 + $0xe0] sm:$0xff]
        %v11985 = vld [vmem:[#allocation7 + $0xe8] sm:$0xff]
        %v11986 = vld [vmem:[#allocation7 + $0xf0] sm:$0xff]
        %v11987 = vld [vmem:[#allocation7 + $0xf8] sm:$0xff]
        %s11988 = smul.u32 %s381, 16
        %s11989 = scalar_lea.vmem %s329, %s11988 [#allocation4]
        %v11990 = vld [vmem:[%s11989] sm:$0xff]
        %v11991 = vld [vmem:[%s11989 + $0x8] sm:$0xff]
        %v11992 = vld [vmem:[%s11989 + $0x10] sm:$0xff]
        %v11993 = vld [vmem:[%s11989 + $0x18] sm:$0xff]
        %v11994 = vld [vmem:[%s11989 + $0x20] sm:$0xff]
        %v11995 = vld [vmem:[%s11989 + $0x28] sm:$0xff]
        %v11996 = vld [vmem:[%s11989 + $0x30] sm:$0xff]
        %v11997 = vld [vmem:[%s11989 + $0x38] sm:$0xff]
        %v11998 = vld [vmem:[%s11989 + $0x40] sm:$0xff]
        %v11999 = vld [vmem:[%s11989 + $0x48] sm:$0xff]
        %v12000 = vld [vmem:[%s11989 + $0x50] sm:$0xff]
        %v12001 = vld [vmem:[%s11989 + $0x58] sm:$0xff]
        %v12002 = vld [vmem:[%s11989 + $0x60] sm:$0xff]
        %v12003 = vld [vmem:[%s11989 + $0x68] sm:$0xff]
        %v12004 = vld [vmem:[%s11989 + $0x70] sm:$0xff]
        %v12005 = vld [vmem:[%s11989 + $0x78] sm:$0xff]
        %v12006 = vld [vmem:[%s11989 + $0x80] sm:$0xff]
        %v12007 = vld [vmem:[%s11989 + $0x88] sm:$0xff]
        %v12008 = vld [vmem:[%s11989 + $0x90] sm:$0xff]
        %v12009 = vld [vmem:[%s11989 + $0x98] sm:$0xff]
        %v12010 = vld [vmem:[%s11989 + $0xa0] sm:$0xff]
        %v12011 = vld [vmem:[%s11989 + $0xa8] sm:$0xff]
        %v12012 = vld [vmem:[%s11989 + $0xb0] sm:$0xff]
        %v12013 = vld [vmem:[%s11989 + $0xb8] sm:$0xff]
        %v12014 = vld [vmem:[%s11989 + $0xc0] sm:$0xff]
        %v12015 = vld [vmem:[%s11989 + $0xc8] sm:$0xff]
        %v12016 = vld [vmem:[%s11989 + $0xd0] sm:$0xff]
        %v12017 = vld [vmem:[%s11989 + $0xd8] sm:$0xff]
        %v12018 = vld [vmem:[%s11989 + $0xe0] sm:$0xff]
        %v12019 = vld [vmem:[%s11989 + $0xe8] sm:$0xff]
        %v12020 = vld [vmem:[%s11989 + $0xf0] sm:$0xff]
        %v12021 = vld [vmem:[%s11989 + $0xf8] sm:$0xff]
        %v12022 = vmul.f32 %v11956, %v11924
        %v12023 = vmul.f32 %v11957, %v11925
        %v12024 = vmul.f32 %v11958, %v11926
        %v12025 = vmul.f32 %v11959, %v11927
        %v12026 = vmul.f32 %v11960, %v11928
        %v12027 = vmul.f32 %v11961, %v11929
        %v12028 = vmul.f32 %v11962, %v11930
        %v12029 = vmul.f32 %v11963, %v11931
        %v12030 = vmul.f32 %v11964, %v11932
        %v12031 = vmul.f32 %v11965, %v11933
        %v12032 = vmul.f32 %v11966, %v11934
        %v12033 = vmul.f32 %v11967, %v11935
        %v12034 = vmul.f32 %v11968, %v11936
        %v12035 = vmul.f32 %v11969, %v11937
        %v12036 = vmul.f32 %v11970, %v11938
        %v12037 = vmul.f32 %v11971, %v11939
        %v12038 = vmul.f32 %v11972, %v11940
        %v12039 = vmul.f32 %v11973, %v11941
        %v12040 = vmul.f32 %v11974, %v11942
        %v12041 = vmul.f32 %v11975, %v11943
        %v12042 = vmul.f32 %v11976, %v11944
        %v12043 = vmul.f32 %v11977, %v11945
        %v12044 = vmul.f32 %v11978, %v11946
        %v12045 = vmul.f32 %v11979, %v11947
        %v12046 = vmul.f32 %v11980, %v11948
        %v12047 = vmul.f32 %v11981, %v11949
        %v12048 = vmul.f32 %v11982, %v11950
        %v12049 = vmul.f32 %v11983, %v11951
        %v12050 = vmul.f32 %v11984, %v11952
        %v12051 = vmul.f32 %v11985, %v11953
        %v12052 = vmul.f32 %v11986, %v11954
        %v12053 = vmul.f32 %v11987, %v11955
        %12054 = vst.msk [vmem:[%s369] sm:$0xff] %vm1597, %v12022
        %12055 = vst.msk [vmem:[%s369 + $0x8] sm:$0xff] %vm1597, %v12023
        %12056 = vst.msk [vmem:[%s369 + $0x10] sm:$0xff] %vm1597, %v12024
        %12057 = vst.msk [vmem:[%s369 + $0x18] sm:$0xff] %vm1597, %v12025
        %12058 = vst.msk [vmem:[%s369 + $0x20] sm:$0xff] %vm1597, %v12026
        %12059 = vst.msk [vmem:[%s369 + $0x28] sm:$0xff] %vm1597, %v12027
        %12060 = vst.msk [vmem:[%s369 + $0x30] sm:$0xff] %vm1597, %v12028
        %12061 = vst.msk [vmem:[%s369 + $0x38] sm:$0xff] %vm1597, %v12029
        %12062 = vst.msk [vmem:[%s369 + $0x40] sm:$0xff] %vm1597, %v12030
        %12063 = vst.msk [vmem:[%s369 + $0x48] sm:$0xff] %vm1597, %v12031
        %12064 = vst.msk [vmem:[%s369 + $0x50] sm:$0xff] %vm1597, %v12032
        %12065 = vst.msk [vmem:[%s369 + $0x58] sm:$0xff] %vm1597, %v12033
        %12066 = vst.msk [vmem:[%s369 + $0x60] sm:$0xff] %vm1597, %v12034
        %12067 = vst.msk [vmem:[%s369 + $0x68] sm:$0xff] %vm1597, %v12035
        %12068 = vst.msk [vmem:[%s369 + $0x70] sm:$0xff] %vm1597, %v12036
        %12069 = vst.msk [vmem:[%s369 + $0x78] sm:$0xff] %vm1597, %v12037
        %12070 = vst.msk [vmem:[%s369 + $0x80] sm:$0xff] %vm1597, %v12038
        %12071 = vst.msk [vmem:[%s369 + $0x88] sm:$0xff] %vm1597, %v12039
        %12072 = vst.msk [vmem:[%s369 + $0x90] sm:$0xff] %vm1597, %v12040
        %12073 = vst.msk [vmem:[%s369 + $0x98] sm:$0xff] %vm1597, %v12041
        %12074 = vst.msk [vmem:[%s369 + $0xa0] sm:$0xff] %vm1597, %v12042
        %12075 = vst.msk [vmem:[%s369 + $0xa8] sm:$0xff] %vm1597, %v12043
        %12076 = vst.msk [vmem:[%s369 + $0xb0] sm:$0xff] %vm1597, %v12044
        %12077 = vst.msk [vmem:[%s369 + $0xb8] sm:$0xff] %vm1597, %v12045
        %12078 = vst.msk [vmem:[%s369 + $0xc0] sm:$0xff] %vm1597, %v12046
        %12079 = vst.msk [vmem:[%s369 + $0xc8] sm:$0xff] %vm1597, %v12047
        %12080 = vst.msk [vmem:[%s369 + $0xd0] sm:$0xff] %vm1597, %v12048
        %12081 = vst.msk [vmem:[%s369 + $0xd8] sm:$0xff] %vm1597, %v12049
        %12082 = vst.msk [vmem:[%s369 + $0xe0] sm:$0xff] %vm1597, %v12050
        %12083 = vst.msk [vmem:[%s369 + $0xe8] sm:$0xff] %vm1597, %v12051
        %12084 = vst.msk [vmem:[%s369 + $0xf0] sm:$0xff] %vm1597, %v12052
        %12085 = vst.msk [vmem:[%s369 + $0xf8] sm:$0xff] %vm1597, %v12053
        %v12086 = vsub.f32 %v11990, %v12022
        %v12087 = vsub.f32 %v11991, %v12023
        %v12088 = vsub.f32 %v11992, %v12024
        %v12089 = vsub.f32 %v11993, %v12025
        %v12090 = vsub.f32 %v11994, %v12026
        %v12091 = vsub.f32 %v11995, %v12027
        %v12092 = vsub.f32 %v11996, %v12028
        %v12093 = vsub.f32 %v11997, %v12029
        %v12094 = vsub.f32 %v11998, %v12030
        %v12095 = vsub.f32 %v11999, %v12031
        %v12096 = vsub.f32 %v12000, %v12032
        %v12097 = vsub.f32 %v12001, %v12033
        %v12098 = vsub.f32 %v12002, %v12034
        %v12099 = vsub.f32 %v12003, %v12035
        %v12100 = vsub.f32 %v12004, %v12036
        %v12101 = vsub.f32 %v12005, %v12037
        %v12102 = vsub.f32 %v12006, %v12038
        %v12103 = vsub.f32 %v12007, %v12039
        %v12104 = vsub.f32 %v12008, %v12040
        %v12105 = vsub.f32 %v12009, %v12041
        %v12106 = vsub.f32 %v12010, %v12042
        %v12107 = vsub.f32 %v12011, %v12043
        %v12108 = vsub.f32 %v12012, %v12044
        %v12109 = vsub.f32 %v12013, %v12045
        %v12110 = vsub.f32 %v12014, %v12046
        %v12111 = vsub.f32 %v12015, %v12047
        %v12112 = vsub.f32 %v12016, %v12048
        %v12113 = vsub.f32 %v12017, %v12049
        %v12114 = vsub.f32 %v12018, %v12050
        %v12115 = vsub.f32 %v12019, %v12051
        %v12116 = vsub.f32 %v12020, %v12052
        %v12117 = vsub.f32 %v12021, %v12053
        %12118 = vst.msk [vmem:[%s376] sm:$0xff] %vm1597, %v12086
        %12119 = vst.msk [vmem:[%s376 + $0x8] sm:$0xff] %vm1597, %v12087
        %12120 = vst.msk [vmem:[%s376 + $0x10] sm:$0xff] %vm1597, %v12088
        %12121 = vst.msk [vmem:[%s376 + $0x18] sm:$0xff] %vm1597, %v12089
        %12122 = vst.msk [vmem:[%s376 + $0x20] sm:$0xff] %vm1597, %v12090
        %12123 = vst.msk [vmem:[%s376 + $0x28] sm:$0xff] %vm1597, %v12091
        %12124 = vst.msk [vmem:[%s376 + $0x30] sm:$0xff] %vm1597, %v12092
        %12125 = vst.msk [vmem:[%s376 + $0x38] sm:$0xff] %vm1597, %v12093
        %12126 = vst.msk [vmem:[%s376 + $0x40] sm:$0xff] %vm1597, %v12094
        %12127 = vst.msk [vmem:[%s376 + $0x48] sm:$0xff] %vm1597, %v12095
        %12128 = vst.msk [vmem:[%s376 + $0x50] sm:$0xff] %vm1597, %v12096
        %12129 = vst.msk [vmem:[%s376 + $0x58] sm:$0xff] %vm1597, %v12097
        %12130 = vst.msk [vmem:[%s376 + $0x60] sm:$0xff] %vm1597, %v12098
        %12131 = vst.msk [vmem:[%s376 + $0x68] sm:$0xff] %vm1597, %v12099
        %12132 = vst.msk [vmem:[%s376 + $0x70] sm:$0xff] %vm1597, %v12100
        %12133 = vst.msk [vmem:[%s376 + $0x78] sm:$0xff] %vm1597, %v12101
        %12134 = vst.msk [vmem:[%s376 + $0x80] sm:$0xff] %vm1597, %v12102
        %12135 = vst.msk [vmem:[%s376 + $0x88] sm:$0xff] %vm1597, %v12103
        %12136 = vst.msk [vmem:[%s376 + $0x90] sm:$0xff] %vm1597, %v12104
        %12137 = vst.msk [vmem:[%s376 + $0x98] sm:$0xff] %vm1597, %v12105
        %12138 = vst.msk [vmem:[%s376 + $0xa0] sm:$0xff] %vm1597, %v12106
        %12139 = vst.msk [vmem:[%s376 + $0xa8] sm:$0xff] %vm1597, %v12107
        %12140 = vst.msk [vmem:[%s376 + $0xb0] sm:$0xff] %vm1597, %v12108
        %12141 = vst.msk [vmem:[%s376 + $0xb8] sm:$0xff] %vm1597, %v12109
        %12142 = vst.msk [vmem:[%s376 + $0xc0] sm:$0xff] %vm1597, %v12110
        %12143 = vst.msk [vmem:[%s376 + $0xc8] sm:$0xff] %vm1597, %v12111
        %12144 = vst.msk [vmem:[%s376 + $0xd0] sm:$0xff] %vm1597, %v12112
        %12145 = vst.msk [vmem:[%s376 + $0xd8] sm:$0xff] %vm1597, %v12113
        %12146 = vst.msk [vmem:[%s376 + $0xe0] sm:$0xff] %vm1597, %v12114
        %12147 = vst.msk [vmem:[%s376 + $0xe8] sm:$0xff] %vm1597, %v12115
        %12148 = vst.msk [vmem:[%s376 + $0xf0] sm:$0xff] %vm1597, %v12116
        %12149 = vst.msk [vmem:[%s376 + $0xf8] sm:$0xff] %vm1597, %v12117
        %s12150 = sand.u32 %s188, 1
        %s12151 = scalar_lea.sflag [#allocation6], %s12150
        %s12152 = sand.u32 %s188, 1
        %s12153 = smul.addr %s12152, 256
        %s12154 = scalar_lea.vmem [#allocation12], %s12153
        %s12155 = sand.u32 %s216, 1
        %s12156 = scalar_lea.sflag [#allocation14], %s12155
        %s12157 = sand.u32 %s216, 1
        %s12158 = smul.addr %s12157, 256
        %s12159 = scalar_lea.vmem [#allocation13], %s12158
        // Predicated region
        $region61: #{separator_fused.1} parent=43 // pred_check
          %p12160 = pneg %p198
        $region62: #{separator_fused.1} parent=43 // pred_check_branch
          %12162 = sbr.rel (%p12160) target = $region64
        $region63: #{separator_fused.1} parent=43 // pred_region
          %s12163 = smul.u32 16, %s35
          %s12165 = ssub.s32 4096, 4096
          %12166 = vsyncadd %s12151, %s12165
          %s12167 = smul.addr %s12163, 2
          %s12168 = smul.addr %s34, 32
          %s12169 = sadd.s32 %s12167, %s12168
          %s12170 = smul.addr %s12169, 128
          %s12171 = scalar_lea.hbm %s6, %s12170
          %s12172 = sshll.u32 %s12154, 4
          %s12173 = int_to_ptr.vmem [resolvable:$true] %s12172
          %12178 = dma.vmem_to_hbm [thread:$0]  %s12173, 4096, %s12171, %s12151, 128, 128, 8
        $region64: #{separator_fused.1} parent=43 // pred_fallthru
          _
        // Predicated region
        $region65: #{separator_fused.1} parent=43 // pred_check
          %p12179 = pneg %p226
        $region66: #{separator_fused.1} parent=43 // pred_check_branch
          %12181 = sbr.rel (%p12179) target = $region68
        $region67: #{separator_fused.1} parent=43 // pred_region
          %s12182 = smul.u32 16, %s35
          %s12184 = ssub.s32 4096, 4096
          %12185 = vsyncadd %s12156, %s12184
          %s12186 = smul.addr %s12182, 2
          %s12187 = smul.addr %s34, 32
          %s12188 = sadd.s32 %s12186, %s12187
          %s12189 = smul.addr %s12188, 128
          %s12190 = scalar_lea.hbm %s7, %s12189
          %s12191 = sshll.u32 %s12159, 4
          %s12192 = int_to_ptr.vmem [resolvable:$true] %s12191
          %12197 = dma.vmem_to_hbm [thread:$0]  %s12192, 4096, %s12190, %s12156, 128, 128, 8
        $region68: #{separator_fused.1} parent=43 // pred_fallthru
          _
      $region44: #{separator_fused.1} parent=5 // pred_fallthru
        _
      %p12198 = scmp.le.s32.totalorder 2, %s25
      // Predicated region
      $region69: #{separator_fused.1} parent=5 // pred_check
        %p12199 = pneg %p12198
      $region70: #{separator_fused.1} parent=5 // pred_check_branch
        %12201 = sbr.rel (%p12199) target = $region72
      $region71: #{separator_fused.1} parent=5 // pred_region
        %s12202 = ssub.s32 %s25, 2
        // Predicated region
        $region73: #{separator_fused.1} parent=71 // pred_check
          %p12203 = pneg %p204
        $region74: #{separator_fused.1} parent=71 // pred_check_branch
          %12205 = sbr.rel (%p12203) target = $region76
        $region75: #{separator_fused.1} parent=71 // pred_region
          %s12206 = sand.u32 %s189, 1
          %s12207 = scalar_lea.sflag [#allocation6], %s12206
          %s12208 = sand.u32 %s189, 1
          %s12209 = smul.addr %s12208, 256
          %s12210 = scalar_lea.vmem [#allocation12], %s12209
          %12211 = dma.done %s12207, 4096
        $region76: #{separator_fused.1} parent=71 // pred_fallthru
          _
        // Predicated region
        $region77: #{separator_fused.1} parent=71 // pred_check
          %p12212 = pneg %p232
        $region78: #{separator_fused.1} parent=71 // pred_check_branch
          %12214 = sbr.rel (%p12212) target = $region80
        $region79: #{separator_fused.1} parent=71 // pred_region
          %s12215 = sand.u32 %s217, 1
          %s12216 = scalar_lea.sflag [#allocation14], %s12215
          %s12217 = sand.u32 %s217, 1
          %s12218 = smul.addr %s12217, 256
          %s12219 = scalar_lea.vmem [#allocation13], %s12218
          %12220 = dma.done %s12216, 4096
        $region80: #{separator_fused.1} parent=71 // pred_fallthru
          _
      $region72: #{separator_fused.1} parent=5 // pred_fallthru
        _
    $region6: #{separator_fused.1} parent=1 // loop_footer
      %s29 = sadd.s32 1, %s25
    $region7: #{separator_fused.1} parent=1 // loop_footer_branch
      %24 = sbr.rel target = $region3
    $region8: #{separator_fused.1} parent=1 // loop_exit
      _
    %12221 = vsyncpa [#allocation5], 1
    %s12222 = scalar_lea.sflag [#allocation5], 1
    %12223 = vsyncpa %s12222, 1
    %12224 = vsyncpa [#allocation8], 1
    %12225 = vsyncpa [#allocation11], 1
    %12226 = vsyncpa [#allocation6], 1
    %s12227 = scalar_lea.sflag [#allocation6], 1
    %12228 = vsyncpa %s12227, 1
    %12229 = vsyncpa [#allocation14], 1
    %s12230 = scalar_lea.sflag [#allocation14], 1
    %12231 = vsyncpa %s12230, 1

</llo_original>
